<compile_context>
chip_gen: v5e
topology: v5e:2x2
jax: 0.10.0
libtpu: 0.0.40
codegen_flags: <defaults>
</compile_context>

<pallas_src>
import functools

import jax
import jax.numpy as jnp
from jax.experimental import pallas as pl
from jax.experimental.pallas import tpu as pltpu

# Dimensions from the PyTorch module definition.
LATENT_DIM = 64
HIDDEN_DIM3 = 128
HIDDEN_DIM2 = 256
HIDDEN_DIM = 400
OUTPUT_DIM = 512  # output_dim of the Decoder (synthetic choice)

_LANE = 128
_SUBLANE = 8


def _round_up(n, m):
    return ((n + m - 1) // m) * m


# Layer boundary dims, lane-padded to multiples of 128 (incl. latent 64 -> 128, 400 -> 512).
_DIMS = (LATENT_DIM, HIDDEN_DIM3, HIDDEN_DIM2, HIDDEN_DIM, HIDDEN_DIM, OUTPUT_DIM)
_PADDED = tuple(_round_up(d, _LANE) for d in _DIMS)


def decoder_kernel(x_ref,
                   w1_ref, b1_ref,
                   w2_ref, b2_ref,
                   w3_ref, b3_ref,
                   w4_ref, b4_ref,
                   w5_ref, b5_ref,
                   out_ref):
    """Fused 5-layer MLP: 4x (matmul + bias + ReLU), then matmul + bias + sigmoid."""
    cdt = w1_ref.dtype  # MXU operand dtype: bf16 (fast path) or f32 (verification path)

    def dense_relu(h, w_ref, b_ref):
        y = jnp.dot(h, w_ref[...], preferred_element_type=jnp.float32)
        y = y + b_ref[...]                       # bias + ReLU in f32
        return jnp.maximum(y, 0.0).astype(cdt)   # back to MXU operand dtype

    h = dense_relu(x_ref[...], w1_ref, b1_ref)   # FC_hidden
    h = dense_relu(h, w2_ref, b2_ref)            # FC_hidden4
    h = dense_relu(h, w3_ref, b3_ref)            # FC_hidden3
    h = dense_relu(h, w4_ref, b4_ref)            # FC_hidden2

    # FC_output + sigmoid.  sigmoid(y) == 0.5*tanh(0.5*y) + 0.5: one EUP transcendental.
    y = jnp.dot(h, w5_ref[...], preferred_element_type=jnp.float32) + b5_ref[...]
    out_ref[...] = (0.5 * jnp.tanh(0.5 * y) + 0.5).astype(out_ref.dtype)


def prepare_params(params, use_bf16=True):
    """One-time pad + cast of the 5 (W, b) pairs — hoisted out of the per-call forward.

    Weights are stored (in, out) so the kernel computes x @ W + b.  Zero padding of the
    in/out dims to multiples of 128 is exact through matmul/ReLU.  Biases stay f32.
    """
    cdt = jnp.bfloat16 if use_bf16 else jnp.float32
    flat = []
    for idx, (w, b) in enumerate(params):
        pin, pout = _PADDED[idx], _PADDED[idx + 1]
        wi, wo = w.shape
        wp = jnp.pad(w, ((0, pin - wi), (0, pout - wo))).astype(cdt)
        bp = jnp.pad(b.reshape(1, -1), ((0, 0), (0, pout - b.shape[-1]))).astype(jnp.float32)
        flat.extend((wp, bp))
    return tuple(jax.device_put(a) for a in flat)


def _tensorcores_per_chip():
    """2 on v7x (megacore split useful), 1 on v5e/v6e (single big tile is better)."""
    try:
        kind = jax.devices()[0].device_kind.lower()
    except Exception:
        return 1
    return 2 if ("v7" in kind or "7x" in kind) else 1


@functools.partial(jax.jit, static_argnames=("tile",))
def _decoder_forward_impl(x, flat_params, tile):
    B = x.shape[0]
    cdt = flat_params[0].dtype                       # compute dtype from prepared params
    out_dtype = cdt if cdt == jnp.bfloat16 else jnp.float32
    p_in, p_out = _PADDED[0], _PADDED[-1]

    bp = _round_up(B, tile)
    # Zero-pad batch to the tile and lane-pad latent 64 -> 128 (both exact).
    xp = jnp.pad(x, ((0, bp - B), (0, p_in - x.shape[1]))).astype(cdt)

    def full_spec(arr):
        # Grid-invariant parameter, fully VMEM-resident on every grid step.
        return pl.BlockSpec(arr.shape, lambda i: (0, 0))

    grid = (bp // tile,)

    out = pl.pallas_call(
        decoder_kernel,
        out_shape=jax.ShapeDtypeStruct((bp, p_out), out_dtype),
        grid_spec=pl.GridSpec(
            grid=grid,
            in_specs=[pl.BlockSpec((tile, p_in), lambda i: (i, 0))]
                     + [full_spec(a) for a in flat_params],
            out_specs=pl.BlockSpec((tile, p_out), lambda i: (i, 0)),
        ),
        compiler_params=pltpu.CompilerParams(
            dimension_semantics=("parallel",),
            vmem_limit_bytes=48 * 1024 * 1024,
        ),
    )(xp, *flat_params)

    return out[:B, :OUTPUT_DIM]


def decoder_forward(x, prepared_params, batch_tile=1024):
    """Fused decoder forward.  x: (B, LATENT_DIM) float32; prepared_params from prepare_params()."""
    B = x.shape[0]
    if _tensorcores_per_chip() >= 2:
        # v7x: split the batch into two 128-aligned halves so both TensorCores do
        # identical, unmasked, MXU-aligned work.
        tile = min(batch_tile, max(_LANE, _round_up(-(-B // 2), _LANE)))
    else:
        # v5e / v6e: single TensorCore -> one big tile, no extra grid steps.
        # Round to 16 rows (covers bf16 sublane packing).
        tile = min(batch_tile, max(2 * _SUBLANE, _round_up(B, 2 * _SUBLANE)))
    return _decoder_forward_impl(x, prepared_params, tile=tile)


def init_params(key):
    """Deterministic Linear params (PyTorch-style init); weights stored as (in, out)."""
    dims = [
        (LATENT_DIM, HIDDEN_DIM3),   # FC_hidden
        (HIDDEN_DIM3, HIDDEN_DIM2),  # FC_hidden4
        (HIDDEN_DIM2, HIDDEN_DIM),   # FC_hidden3
        (HIDDEN_DIM, HIDDEN_DIM),    # FC_hidden2
        (HIDDEN_DIM, OUTPUT_DIM),    # FC_output
    ]
    params = []
    for (fan_in, fan_out) in dims:
        key, kw, kb = jax.random.split(key, 3)
        scale = 1.0 / jnp.sqrt(jnp.float32(fan_in))
        w = jax.random.uniform(kw, (fan_in, fan_out), jnp.float32,
                               minval=-scale, maxval=scale)
        b = jax.random.uniform(kb, (1, fan_out), jnp.float32,
                               minval=-scale, maxval=scale)
        params.append((w, b))
    return params


def reference_forward(x, params):
    """Plain-JAX f32 reference matching the PyTorch forward semantics."""
    h = x
    for (w, b) in params[:-1]:
        h = jnp.maximum(h @ w + b, 0.0)
    w, b = params[-1]
    return jax.nn.sigmoid(h @ w + b)


if __name__ == "__main__":
    key = jax.random.PRNGKey(0)
    key, kx = jax.random.split(key)

    batch = 256
    x = jax.random.normal(kx, (batch, LATENT_DIM), jnp.float32)
    params = init_params(key)
    ref = reference_forward(x, params)

    # f32 MXU path -- tight numerical check (f32 output).
    params_f32 = prepare_params(params, use_bf16=False)
    out_f32 = jax.block_until_ready(decoder_forward(x, params_f32))
    assert out_f32.shape == (batch, OUTPUT_DIM)
    assert out_f32.dtype == jnp.float32
    assert jnp.allclose(out_f32, ref, atol=1e-4, rtol=1e-4), "f32 mismatch vs reference"

    # bf16-operand / f32-accumulate fast path with bf16 output -- looser check.
    params_bf16 = prepare_params(params, use_bf16=True)
    out_bf16 = jax.block_until_ready(decoder_forward(x, params_bf16))
    assert out_bf16.shape == (batch, OUTPUT_DIM)
    assert jnp.allclose(out_bf16.astype(jnp.float32), ref, atol=2e-2, rtol=2e-2), \
        "bf16 mismatch vs reference"

    # Ragged small batch exercises the batch-padding / slicing and small-tile path.
    out_small = jax.block_until_ready(decoder_forward(x[:6], params_f32))
    assert out_small.shape == (6, OUTPUT_DIM)
    assert jnp.allclose(out_small, ref[:6], atol=1e-4, rtol=1e-4), "ragged mismatch"

    print("KERNEL_OK")
</pallas_src>

<mosaic_0001>
module attributes {stable_mosaic.version = 11 : i64} {
  func.func @decoder_kernel(%arg0: i32, %arg1: memref<256x128xf32, #tpu.memory_space<vmem>>, %arg2: memref<128x128xf32, #tpu.memory_space<vmem>>, %arg3: memref<1x128xf32, #tpu.memory_space<vmem>>, %arg4: memref<128x256xf32, #tpu.memory_space<vmem>>, %arg5: memref<1x256xf32, #tpu.memory_space<vmem>>, %arg6: memref<256x512xf32, #tpu.memory_space<vmem>>, %arg7: memref<1x512xf32, #tpu.memory_space<vmem>>, %arg8: memref<512x512xf32, #tpu.memory_space<vmem>>, %arg9: memref<1x512xf32, #tpu.memory_space<vmem>>, %arg10: memref<512x512xf32, #tpu.memory_space<vmem>>, %arg11: memref<1x512xf32, #tpu.memory_space<vmem>>, %arg12: memref<256x512xf32, #tpu.memory_space<vmem>>) attributes {dimension_semantics = [#tpu.dimension_semantics<parallel>], iteration_bounds = array<i64: 1>, scalar_prefetch = 0 : i64, scratch_operands = 0 : i64, tpu.core_type = #tpu.core_type<tc>, window_params = [{transform_indices = @transform_0, window_bounds = array<i64: 256, 128>}, {pipeline_mode = #tpu.pipeline_mode<synchronous>, transform_indices = @transform_1, window_bounds = array<i64: 128, 128>}, {pipeline_mode = #tpu.pipeline_mode<synchronous>, transform_indices = @transform_2, window_bounds = array<i64: 1, 128>}, {pipeline_mode = #tpu.pipeline_mode<synchronous>, transform_indices = @transform_3, window_bounds = array<i64: 128, 256>}, {pipeline_mode = #tpu.pipeline_mode<synchronous>, transform_indices = @transform_4, window_bounds = array<i64: 1, 256>}, {pipeline_mode = #tpu.pipeline_mode<synchronous>, transform_indices = @transform_5, window_bounds = array<i64: 256, 512>}, {pipeline_mode = #tpu.pipeline_mode<synchronous>, transform_indices = @transform_6, window_bounds = array<i64: 1, 512>}, {pipeline_mode = #tpu.pipeline_mode<synchronous>, transform_indices = @transform_7, window_bounds = array<i64: 512, 512>}, {pipeline_mode = #tpu.pipeline_mode<synchronous>, transform_indices = @transform_8, window_bounds = array<i64: 1, 512>}, {pipeline_mode = #tpu.pipeline_mode<synchronous>, transform_indices = @transform_9, window_bounds = array<i64: 512, 512>}, {pipeline_mode = #tpu.pipeline_mode<synchronous>, transform_indices = @transform_10, window_bounds = array<i64: 1, 512>}, {transform_indices = @transform_11, window_bounds = array<i64: 256, 512>}]} {
    %c0 = arith.constant 0 : index
    %c0_0 = arith.constant 0 : index
    %0 = vector.load %arg1[%c0, %c0_0] : memref<256x128xf32, #tpu.memory_space<vmem>>, vector<256x128xf32>
    %c0_1 = arith.constant 0 : index
    %c0_2 = arith.constant 0 : index
    %1 = vector.load %arg2[%c0_1, %c0_2] : memref<128x128xf32, #tpu.memory_space<vmem>>, vector<128x128xf32>
    %cst = arith.constant dense<0.000000e+00> : vector<256x128xf32>
    %2 = tpu.matmul %0, %1, %cst {dimension_numbers = #tpu.dot_dimension_numbers<[1], [0], [0], [1], [0, 0, 1, 1], [], []>} : vector<256x128xf32>, vector<128x128xf32>, vector<256x128xf32> -> vector<256x128xf32>
    %c0_3 = arith.constant 0 : index
    %c0_4 = arith.constant 0 : index
    %3 = vector.load %arg3[%c0_3, %c0_4] : memref<1x128xf32, #tpu.memory_space<vmem>>, vector<1x128xf32>
    %4 = vector.broadcast %3 : vector<1x128xf32> to vector<256x128xf32>
    %5 = arith.addf %2, %4 : vector<256x128xf32>
    %cst_5 = arith.constant 0.000000e+00 : f32
    %6 = vector.broadcast %cst_5 : f32 to vector<256x128xf32>
    %7 = arith.maximumf %5, %6 : vector<256x128xf32>
    %c0_6 = arith.constant 0 : index
    %c0_7 = arith.constant 0 : index
    %8 = vector.load %arg4[%c0_6, %c0_7] : memref<128x256xf32, #tpu.memory_space<vmem>>, vector<128x256xf32>
    %cst_8 = arith.constant dense<0.000000e+00> : vector<256x256xf32>
    %9 = tpu.matmul %7, %8, %cst_8 {dimension_numbers = #tpu.dot_dimension_numbers<[1], [0], [0], [1], [0, 0, 1, 1], [], []>} : vector<256x128xf32>, vector<128x256xf32>, vector<256x256xf32> -> vector<256x256xf32>
    %c0_9 = arith.constant 0 : index
    %c0_10 = arith.constant 0 : index
    %10 = vector.load %arg5[%c0_9, %c0_10] : memref<1x256xf32, #tpu.memory_space<vmem>>, vector<1x256xf32>
    %11 = vector.broadcast %10 : vector<1x256xf32> to vector<256x256xf32>
    %12 = arith.addf %9, %11 : vector<256x256xf32>
    %cst_11 = arith.constant 0.000000e+00 : f32
    %13 = vector.broadcast %cst_11 : f32 to vector<256x256xf32>
    %14 = arith.maximumf %12, %13 : vector<256x256xf32>
    %c0_12 = arith.constant 0 : index
    %c0_13 = arith.constant 0 : index
    %15 = vector.load %arg6[%c0_12, %c0_13] : memref<256x512xf32, #tpu.memory_space<vmem>>, vector<256x512xf32>
    %cst_14 = arith.constant dense<0.000000e+00> : vector<256x512xf32>
    %16 = tpu.matmul %14, %15, %cst_14 {dimension_numbers = #tpu.dot_dimension_numbers<[1], [0], [0], [1], [0, 0, 1, 1], [], []>} : vector<256x256xf32>, vector<256x512xf32>, vector<256x512xf32> -> vector<256x512xf32>
    %c0_15 = arith.constant 0 : index
    %c0_16 = arith.constant 0 : index
    %17 = vector.load %arg7[%c0_15, %c0_16] : memref<1x512xf32, #tpu.memory_space<vmem>>, vector<1x512xf32>
    %18 = vector.broadcast %17 : vector<1x512xf32> to vector<256x512xf32>
    %19 = arith.addf %16, %18 : vector<256x512xf32>
    %cst_17 = arith.constant 0.000000e+00 : f32
    %20 = vector.broadcast %cst_17 : f32 to vector<256x512xf32>
    %21 = arith.maximumf %19, %20 : vector<256x512xf32>
    %c0_18 = arith.constant 0 : index
    %c0_19 = arith.constant 0 : index
    %22 = vector.load %arg8[%c0_18, %c0_19] : memref<512x512xf32, #tpu.memory_space<vmem>>, vector<512x512xf32>
    %cst_20 = arith.constant dense<0.000000e+00> : vector<256x512xf32>
    %23 = tpu.matmul %21, %22, %cst_20 {dimension_numbers = #tpu.dot_dimension_numbers<[1], [0], [0], [1], [0, 0, 1, 1], [], []>} : vector<256x512xf32>, vector<512x512xf32>, vector<256x512xf32> -> vector<256x512xf32>
    %c0_21 = arith.constant 0 : index
    %c0_22 = arith.constant 0 : index
    %24 = vector.load %arg9[%c0_21, %c0_22] : memref<1x512xf32, #tpu.memory_space<vmem>>, vector<1x512xf32>
    %25 = vector.broadcast %24 : vector<1x512xf32> to vector<256x512xf32>
    %26 = arith.addf %23, %25 : vector<256x512xf32>
    %cst_23 = arith.constant 0.000000e+00 : f32
    %27 = vector.broadcast %cst_23 : f32 to vector<256x512xf32>
    %28 = arith.maximumf %26, %27 : vector<256x512xf32>
    %c0_24 = arith.constant 0 : index
    %c0_25 = arith.constant 0 : index
    %29 = vector.load %arg10[%c0_24, %c0_25] : memref<512x512xf32, #tpu.memory_space<vmem>>, vector<512x512xf32>
    %cst_26 = arith.constant dense<0.000000e+00> : vector<256x512xf32>
    %30 = tpu.matmul %28, %29, %cst_26 {dimension_numbers = #tpu.dot_dimension_numbers<[1], [0], [0], [1], [0, 0, 1, 1], [], []>} : vector<256x512xf32>, vector<512x512xf32>, vector<256x512xf32> -> vector<256x512xf32>
    %c0_27 = arith.constant 0 : index
    %c0_28 = arith.constant 0 : index
    %31 = vector.load %arg11[%c0_27, %c0_28] : memref<1x512xf32, #tpu.memory_space<vmem>>, vector<1x512xf32>
    %32 = vector.broadcast %31 : vector<1x512xf32> to vector<256x512xf32>
    %33 = arith.addf %30, %32 : vector<256x512xf32>
    %cst_29 = arith.constant 5.000000e-01 : f32
    %34 = vector.broadcast %cst_29 : f32 to vector<256x512xf32>
    %35 = arith.mulf %34, %33 : vector<256x512xf32>
    %36 = math.tanh %35 : vector<256x512xf32>
    %cst_30 = arith.constant 5.000000e-01 : f32
    %37 = vector.broadcast %cst_30 : f32 to vector<256x512xf32>
    %38 = arith.mulf %37, %36 : vector<256x512xf32>
    %cst_31 = arith.constant 5.000000e-01 : f32
    %39 = vector.broadcast %cst_31 : f32 to vector<256x512xf32>
    %40 = arith.addf %38, %39 : vector<256x512xf32>
    %c0_32 = arith.constant 0 : index
    %c0_33 = arith.constant 0 : index
    %41 = vector.load %arg12[%c0_32, %c0_33] : memref<256x512xf32, #tpu.memory_space<vmem>>, vector<256x512xf32>
    tpu.vector_store %arg12[%c0_32, %c0_33], %40 {strides = array<i32>} : memref<256x512xf32, #tpu.memory_space<vmem>>, vector<256x512xf32>,
    return
  }
  func.func @transform_0(%arg0: i32) -> (i32, i32) {
    %c0_i32 = arith.constant 0 : i32
    %c0_i32_0 = arith.constant 0 : i32
    return %arg0, %c0_i32 : i32, i32
  }
  func.func @transform_1(%arg0: i32) -> (i32, i32) {
    %c0_i32 = arith.constant 0 : i32
    %c0_i32_0 = arith.constant 0 : i32
    %c0_i32_1 = arith.constant 0 : i32
    return %c0_i32, %c0_i32_0 : i32, i32
  }
  func.func @transform_2(%arg0: i32) -> (i32, i32) {
    %c0_i32 = arith.constant 0 : i32
    %c0_i32_0 = arith.constant 0 : i32
    %c0_i32_1 = arith.constant 0 : i32
    return %c0_i32, %c0_i32_0 : i32, i32
  }
  func.func @transform_3(%arg0: i32) -> (i32, i32) {
    %c0_i32 = arith.constant 0 : i32
    %c0_i32_0 = arith.constant 0 : i32
    %c0_i32_1 = arith.constant 0 : i32
    return %c0_i32, %c0_i32_0 : i32, i32
  }
  func.func @transform_4(%arg0: i32) -> (i32, i32) {
    %c0_i32 = arith.constant 0 : i32
    %c0_i32_0 = arith.constant 0 : i32
    %c0_i32_1 = arith.constant 0 : i32
    return %c0_i32, %c0_i32_0 : i32, i32
  }
  func.func @transform_5(%arg0: i32) -> (i32, i32) {
    %c0_i32 = arith.constant 0 : i32
    %c0_i32_0 = arith.constant 0 : i32
    %c0_i32_1 = arith.constant 0 : i32
    return %c0_i32, %c0_i32_0 : i32, i32
  }
  func.func @transform_6(%arg0: i32) -> (i32, i32) {
    %c0_i32 = arith.constant 0 : i32
    %c0_i32_0 = arith.constant 0 : i32
    %c0_i32_1 = arith.constant 0 : i32
    return %c0_i32, %c0_i32_0 : i32, i32
  }
  func.func @transform_7(%arg0: i32) -> (i32, i32) {
    %c0_i32 = arith.constant 0 : i32
    %c0_i32_0 = arith.constant 0 : i32
    %c0_i32_1 = arith.constant 0 : i32
    return %c0_i32, %c0_i32_0 : i32, i32
  }
  func.func @transform_8(%arg0: i32) -> (i32, i32) {
    %c0_i32 = arith.constant 0 : i32
    %c0_i32_0 = arith.constant 0 : i32
    %c0_i32_1 = arith.constant 0 : i32
    return %c0_i32, %c0_i32_0 : i32, i32
  }
  func.func @transform_9(%arg0: i32) -> (i32, i32) {
    %c0_i32 = arith.constant 0 : i32
    %c0_i32_0 = arith.constant 0 : i32
    %c0_i32_1 = arith.constant 0 : i32
    return %c0_i32, %c0_i32_0 : i32, i32
  }
  func.func @transform_10(%arg0: i32) -> (i32, i32) {
    %c0_i32 = arith.constant 0 : i32
    %c0_i32_0 = arith.constant 0 : i32
    %c0_i32_1 = arith.constant 0 : i32
    return %c0_i32, %c0_i32_0 : i32, i32
  }
  func.func @transform_11(%arg0: i32) -> (i32, i32) {
    %c0_i32 = arith.constant 0 : i32
    %c0_i32_0 = arith.constant 0 : i32
    return %arg0, %c0_i32 : i32, i32
  }
}

</mosaic_0001>

<llo_original>
// kernel: _decoder_forward_impl.1
$region0: #{_decoder_forward_impl.1}
  #allocation0 [shape = 'u32[]', space=smem, size = 0x4, offset = 0x4, fixed_abs, tag = 'smem constant byte address 0x4 - core index']
  #allocation1 [shape = 'u32[72,128]{1,0:T(1,128)}', space=vmem, size = 0x9000, scoped, tag = 'internal scratch']
  %s0 = inlined_call_operand.vmem [shape: f32[256,128], index: 0, kind: input, shape index: {}]
  %s1 = inlined_call_operand.vmem [shape: f32[128,128], index: 1, kind: input, shape index: {}]
  %s2 = inlined_call_operand.vmem [shape: f32[1,128], index: 2, kind: input, shape index: {}]
  %s3 = inlined_call_operand.vmem [shape: f32[128,256], index: 3, kind: input, shape index: {}]
  %s4 = inlined_call_operand.vmem [shape: f32[1,256], index: 4, kind: input, shape index: {}]
  %s5 = inlined_call_operand.hbm [shape: f32[256,512], index: 5, kind: input, shape index: {}]
  %s6 = inlined_call_operand.vmem [shape: f32[1,512], index: 6, kind: input, shape index: {}]
  %s7 = inlined_call_operand.hbm [shape: f32[512,512], index: 7, kind: input, shape index: {}]
  %s8 = inlined_call_operand.vmem [shape: f32[1,512], index: 8, kind: input, shape index: {}]
  %s9 = inlined_call_operand.hbm [shape: f32[512,512], index: 9, kind: input, shape index: {}]
  %s10 = inlined_call_operand.vmem [shape: f32[1,512], index: 10, kind: input, shape index: {}]
  %s11 = inlined_call_operand.hbm [shape: f32[256,512], index: 11, kind: output, shape index: {}]
  %s12 = sld [smem:[#allocation0]]
  $region66: #{_decoder_forward_impl.1} parent=0
    _
  %s14 = ssub.s32 1, %s12
  %s15 = scalar_select 0, %s14, %s12
  $region1: #{_decoder_forward_impl.1} parent=0
    #allocation2 [shape = 'u8[524288]{0}', space=vmem, size = 0x80000, scoped, tag = 'input window, operand 5, single buffered']
    #allocation3 [shape = 's32[1]{0}', space=sflag, size = 0x4, scoped, tag = 'scoped memory for _decoder_forward_impl.1']
    #allocation4 [shape = 's32[1]{0}', space=sflag, size = 0x4, scoped, tag = 'scoped memory for _decoder_forward_impl.1']
    #allocation5 [shape = 'u8[1048576]{0}', space=vmem, size = 0x100000, scoped, tag = 'input window, operand 7, single buffered']
    #allocation6 [shape = 's32[1]{0}', space=sflag, size = 0x4, scoped, tag = 'scoped memory for _decoder_forward_impl.1']
    #allocation7 [shape = 'u8[1048576]{0}', space=vmem, size = 0x100000, scoped, tag = 'input window, operand 9, single buffered']
    #allocation8 [shape = 'u8[524288]{0}', space=vmem, size = 0x80000, scoped, tag = 'output window, operand 0, single buffered']
    %16 = vsyncpa [#allocation3], 0
    %17 = vsyncpa [#allocation6], 0
    %18 = vsyncpa [#allocation4], 0
    // Predicated region
    $region2: #{_decoder_forward_impl.1} parent=1 // pred_check
      _
    $region3: #{_decoder_forward_impl.1} parent=1 // pred_check_branch
      %20 = sbr.rel (0) target = $region5
    $region4: #{_decoder_forward_impl.1} parent=1 // pred_region
      _
    $region5: #{_decoder_forward_impl.1} parent=1 // pred_fallthru
      _
    // Predicated region
    $region6: #{_decoder_forward_impl.1} parent=1 // pred_check
      _
    $region7: #{_decoder_forward_impl.1} parent=1 // pred_check_branch
      %22 = sbr.rel (0) target = $region9
    $region8: #{_decoder_forward_impl.1} parent=1 // pred_region
      _
    $region9: #{_decoder_forward_impl.1} parent=1 // pred_fallthru
      _
    // Predicated region
    $region10: #{_decoder_forward_impl.1} parent=1 // pred_check
      _
    $region11: #{_decoder_forward_impl.1} parent=1 // pred_check_branch
      %24 = sbr.rel (0) target = $region13
    $region12: #{_decoder_forward_impl.1} parent=1 // pred_region
      _
    $region13: #{_decoder_forward_impl.1} parent=1 // pred_fallthru
      _
    // Predicated region
    $region14: #{_decoder_forward_impl.1} parent=1 // pred_check
      _
    $region15: #{_decoder_forward_impl.1} parent=1 // pred_check_branch
      %26 = sbr.rel (0) target = $region17
    $region16: #{_decoder_forward_impl.1} parent=1 // pred_region
      _
    $region17: #{_decoder_forward_impl.1} parent=1 // pred_fallthru
      _
    // Predicated region
    $region18: #{_decoder_forward_impl.1} parent=1 // pred_check
      _
    $region19: #{_decoder_forward_impl.1} parent=1 // pred_check_branch
      %28 = sbr.rel (0) target = $region21
    $region20: #{_decoder_forward_impl.1} parent=1 // pred_region
      _
    $region21: #{_decoder_forward_impl.1} parent=1 // pred_fallthru
      _
    // Predicated region
    $region22: #{_decoder_forward_impl.1} parent=1 // pred_check
      _
    $region23: #{_decoder_forward_impl.1} parent=1 // pred_check_branch
      %30 = sbr.rel (0) target = $region25
    $region24: #{_decoder_forward_impl.1} parent=1 // pred_region
      %32 = vsyncadd [#allocation3], 0
      %s33 = sshll.u32 %s5, 4
      %s34 = int_to_ptr.hbm [resolvable:$true] %s33
      %s35 = sshll.u32 [#allocation2], 4
      %s36 = int_to_ptr.vmem [resolvable:$true] %s35
      %41 = dma.hbm_to_vmem [thread:$0]  %s34, 16384, %s36, [#allocation3], 512, 512, 32
    $region25: #{_decoder_forward_impl.1} parent=1 // pred_fallthru
      _
    // Predicated region
    $region26: #{_decoder_forward_impl.1} parent=1 // pred_check
      _
    $region27: #{_decoder_forward_impl.1} parent=1 // pred_check_branch
      %43 = sbr.rel (0) target = $region29
    $region28: #{_decoder_forward_impl.1} parent=1 // pred_region
      _
    $region29: #{_decoder_forward_impl.1} parent=1 // pred_fallthru
      _
    // Predicated region
    $region30: #{_decoder_forward_impl.1} parent=1 // pred_check
      _
    $region31: #{_decoder_forward_impl.1} parent=1 // pred_check_branch
      %45 = sbr.rel (0) target = $region33
    $region32: #{_decoder_forward_impl.1} parent=1 // pred_region
      %47 = vsyncadd [#allocation6], 0
      %s48 = sshll.u32 %s7, 4
      %s49 = int_to_ptr.hbm [resolvable:$true] %s48
      %s50 = sshll.u32 [#allocation5], 4
      %s51 = int_to_ptr.vmem [resolvable:$true] %s50
      %56 = dma.hbm_to_vmem [thread:$0]  %s49, 32768, %s51, [#allocation6], 512, 512, 32
    $region33: #{_decoder_forward_impl.1} parent=1 // pred_fallthru
      _
    // Predicated region
    $region34: #{_decoder_forward_impl.1} parent=1 // pred_check
      _
    $region35: #{_decoder_forward_impl.1} parent=1 // pred_check_branch
      %58 = sbr.rel (0) target = $region37
    $region36: #{_decoder_forward_impl.1} parent=1 // pred_region
      _
    $region37: #{_decoder_forward_impl.1} parent=1 // pred_fallthru
      _
    // Predicated region
    $region38: #{_decoder_forward_impl.1} parent=1 // pred_check
      _
    $region39: #{_decoder_forward_impl.1} parent=1 // pred_check_branch
      %60 = sbr.rel (0) target = $region41
    $region40: #{_decoder_forward_impl.1} parent=1 // pred_region
      %62 = vsyncadd [#allocation6], 0
      %s63 = sshll.u32 %s9, 4
      %s64 = int_to_ptr.hbm [resolvable:$true] %s63
      %s65 = sshll.u32 [#allocation7], 4
      %s66 = int_to_ptr.vmem [resolvable:$true] %s65
      %71 = dma.hbm_to_vmem [thread:$0]  %s64, 32768, %s66, [#allocation6], 512, 512, 32
    $region41: #{_decoder_forward_impl.1} parent=1 // pred_fallthru
      _
    // Predicated region
    $region42: #{_decoder_forward_impl.1} parent=1 // pred_check
      _
    $region43: #{_decoder_forward_impl.1} parent=1 // pred_check_branch
      %73 = sbr.rel (0) target = $region45
    $region44: #{_decoder_forward_impl.1} parent=1 // pred_region
      _
    $region45: #{_decoder_forward_impl.1} parent=1 // pred_fallthru
      _
    // Predicated region
    $region46: #{_decoder_forward_impl.1} parent=1 // pred_check
      _
    $region47: #{_decoder_forward_impl.1} parent=1 // pred_check_branch
      %75 = sbr.rel (0) target = $region49
    $region48: #{_decoder_forward_impl.1} parent=1 // pred_region
      %77 = dma.done [#allocation3], 16384
    $region49: #{_decoder_forward_impl.1} parent=1 // pred_fallthru
      _
    // Predicated region
    $region50: #{_decoder_forward_impl.1} parent=1 // pred_check
      _
    $region51: #{_decoder_forward_impl.1} parent=1 // pred_check_branch
      %79 = sbr.rel (0) target = $region53
    $region52: #{_decoder_forward_impl.1} parent=1 // pred_region
      %81 = dma.done [#allocation6], 32768
    $region53: #{_decoder_forward_impl.1} parent=1 // pred_fallthru
      _
    // Predicated region
    $region54: #{_decoder_forward_impl.1} parent=1 // pred_check
      _
    $region55: #{_decoder_forward_impl.1} parent=1 // pred_check_branch
      %83 = sbr.rel (0) target = $region57
    $region56: #{_decoder_forward_impl.1} parent=1 // pred_region
      %85 = dma.done [#allocation6], 32768
    $region57: #{_decoder_forward_impl.1} parent=1 // pred_fallthru
      _
    %v86 = vld [vmem:[%s0] sm:$0xff]
    %v87 = vld [vmem:[%s0 + $0x8] sm:$0xff]
    %v88 = vld [vmem:[%s0 + $0x10] sm:$0xff]
    %v89 = vld [vmem:[%s0 + $0x18] sm:$0xff]
    %v90 = vld [vmem:[%s0 + $0x20] sm:$0xff]
    %v91 = vld [vmem:[%s0 + $0x28] sm:$0xff]
    %v92 = vld [vmem:[%s0 + $0x30] sm:$0xff]
    %v93 = vld [vmem:[%s0 + $0x38] sm:$0xff]
    %v94 = vld [vmem:[%s0 + $0x40] sm:$0xff]
    %v95 = vld [vmem:[%s0 + $0x48] sm:$0xff]
    %v96 = vld [vmem:[%s0 + $0x50] sm:$0xff]
    %v97 = vld [vmem:[%s0 + $0x58] sm:$0xff]
    %v98 = vld [vmem:[%s0 + $0x60] sm:$0xff]
    %v99 = vld [vmem:[%s0 + $0x68] sm:$0xff]
    %v100 = vld [vmem:[%s0 + $0x70] sm:$0xff]
    %v101 = vld [vmem:[%s0 + $0x78] sm:$0xff]
    %v102 = vld [vmem:[%s0 + $0x80] sm:$0xff]
    %v103 = vld [vmem:[%s0 + $0x88] sm:$0xff]
    %v104 = vld [vmem:[%s0 + $0x90] sm:$0xff]
    %v105 = vld [vmem:[%s0 + $0x98] sm:$0xff]
    %v106 = vld [vmem:[%s0 + $0xa0] sm:$0xff]
    %v107 = vld [vmem:[%s0 + $0xa8] sm:$0xff]
    %v108 = vld [vmem:[%s0 + $0xb0] sm:$0xff]
    %v109 = vld [vmem:[%s0 + $0xb8] sm:$0xff]
    %v110 = vld [vmem:[%s0 + $0xc0] sm:$0xff]
    %v111 = vld [vmem:[%s0 + $0xc8] sm:$0xff]
    %v112 = vld [vmem:[%s0 + $0xd0] sm:$0xff]
    %v113 = vld [vmem:[%s0 + $0xd8] sm:$0xff]
    %v114 = vld [vmem:[%s0 + $0xe0] sm:$0xff]
    %v115 = vld [vmem:[%s0 + $0xe8] sm:$0xff]
    %v116 = vld [vmem:[%s0 + $0xf0] sm:$0xff]
    %v117 = vld [vmem:[%s0 + $0xf8] sm:$0xff]
    %v118 = vld [vmem:[%s1] sm:$0xff]
    %v119 = vld [vmem:[%s1 + $0x8] sm:$0xff]
    %v120 = vld [vmem:[%s1 + $0x10] sm:$0xff]
    %v121 = vld [vmem:[%s1 + $0x18] sm:$0xff]
    %v122 = vld [vmem:[%s1 + $0x20] sm:$0xff]
    %v123 = vld [vmem:[%s1 + $0x28] sm:$0xff]
    %v124 = vld [vmem:[%s1 + $0x30] sm:$0xff]
    %v125 = vld [vmem:[%s1 + $0x38] sm:$0xff]
    %v126 = vld [vmem:[%s1 + $0x40] sm:$0xff]
    %v127 = vld [vmem:[%s1 + $0x48] sm:$0xff]
    %v128 = vld [vmem:[%s1 + $0x50] sm:$0xff]
    %v129 = vld [vmem:[%s1 + $0x58] sm:$0xff]
    %v130 = vld [vmem:[%s1 + $0x60] sm:$0xff]
    %v131 = vld [vmem:[%s1 + $0x68] sm:$0xff]
    %v132 = vld [vmem:[%s1 + $0x70] sm:$0xff]
    %v133 = vld [vmem:[%s1 + $0x78] sm:$0xff]
    %v134 = vld [vmem:[%s2] sm:$0x1]
    %v136 = vperm.slane %v134, 0
    %138 = vmatpush.msra.mxu0 %v133
    %139 = vmatpush.msra.mxu0 %v132
    %140 = vmatpush.msra.mxu0 %v131
    %141 = vmatpush.msra.mxu0 %v130
    %142 = vmatpush.msra.mxu0 %v129
    %143 = vmatpush.msra.mxu0 %v128
    %144 = vmatpush.msra.mxu0 %v127
    %145 = vmatpush.msra.mxu0 %v126
    %146 = vmatpush.msra.mxu0 %v125
    %147 = vmatpush.msra.mxu0 %v124
    %148 = vmatpush.msra.mxu0 %v123
    %149 = vmatpush.msra.mxu0 %v122
    %150 = vmatpush.msra.mxu0 %v121
    %151 = vmatpush.msra.mxu0 %v120
    %152 = vmatpush.msra.mxu0 %v119
    %153 = vmatpush.msra.mxu0 %v118
    %154 = vmatmul.f32.gmra.mxu0 %v86
    %v155 = vpop.f32.mrf.mxu0
    %v156 = vadd.f32 %v136, %v155
    %157 = vmatmul.f32.gmra.mxu0 %v87
    %v158 = vpop.f32.mrf.mxu0
    %v159 = vadd.f32 %v136, %v158
    %160 = vmatmul.f32.gmra.mxu0 %v88
    %v161 = vpop.f32.mrf.mxu0
    %v162 = vadd.f32 %v136, %v161
    %163 = vmatmul.f32.gmra.mxu0 %v89
    %v164 = vpop.f32.mrf.mxu0
    %v165 = vadd.f32 %v136, %v164
    %166 = vmatmul.f32.gmra.mxu0 %v90
    %v167 = vpop.f32.mrf.mxu0
    %v168 = vadd.f32 %v136, %v167
    %169 = vmatmul.f32.gmra.mxu0 %v91
    %v170 = vpop.f32.mrf.mxu0
    %v171 = vadd.f32 %v136, %v170
    %172 = vmatmul.f32.gmra.mxu0 %v92
    %v173 = vpop.f32.mrf.mxu0
    %v174 = vadd.f32 %v136, %v173
    %175 = vmatmul.f32.gmra.mxu0 %v93
    %v176 = vpop.f32.mrf.mxu0
    %v177 = vadd.f32 %v136, %v176
    %178 = vmatmul.f32.gmra.mxu0 %v94
    %v179 = vpop.f32.mrf.mxu0
    %v180 = vadd.f32 %v136, %v179
    %181 = vmatmul.f32.gmra.mxu0 %v95
    %v182 = vpop.f32.mrf.mxu0
    %v183 = vadd.f32 %v136, %v182
    %184 = vmatmul.f32.gmra.mxu0 %v96
    %v185 = vpop.f32.mrf.mxu0
    %v186 = vadd.f32 %v136, %v185
    %187 = vmatmul.f32.gmra.mxu0 %v97
    %v188 = vpop.f32.mrf.mxu0
    %v189 = vadd.f32 %v136, %v188
    %190 = vmatmul.f32.gmra.mxu0 %v98
    %v191 = vpop.f32.mrf.mxu0
    %v192 = vadd.f32 %v136, %v191
    %193 = vmatmul.f32.gmra.mxu0 %v99
    %v194 = vpop.f32.mrf.mxu0
    %v195 = vadd.f32 %v136, %v194
    %196 = vmatmul.f32.gmra.mxu0 %v100
    %v197 = vpop.f32.mrf.mxu0
    %v198 = vadd.f32 %v136, %v197
    %199 = vmatmul.f32.gmra.mxu0 %v101
    %v200 = vpop.f32.mrf.mxu0
    %v201 = vadd.f32 %v136, %v200
    %202 = vmatmul.f32.gmra.mxu0 %v102
    %v203 = vpop.f32.mrf.mxu0
    %v204 = vadd.f32 %v136, %v203
    %205 = vmatmul.f32.gmra.mxu0 %v103
    %v206 = vpop.f32.mrf.mxu0
    %v207 = vadd.f32 %v136, %v206
    %208 = vmatmul.f32.gmra.mxu0 %v104
    %v209 = vpop.f32.mrf.mxu0
    %v210 = vadd.f32 %v136, %v209
    %211 = vmatmul.f32.gmra.mxu0 %v105
    %v212 = vpop.f32.mrf.mxu0
    %v213 = vadd.f32 %v136, %v212
    %214 = vmatmul.f32.gmra.mxu0 %v106
    %v215 = vpop.f32.mrf.mxu0
    %v216 = vadd.f32 %v136, %v215
    %217 = vmatmul.f32.gmra.mxu0 %v107
    %v218 = vpop.f32.mrf.mxu0
    %v219 = vadd.f32 %v136, %v218
    %220 = vmatmul.f32.gmra.mxu0 %v108
    %v221 = vpop.f32.mrf.mxu0
    %v222 = vadd.f32 %v136, %v221
    %223 = vmatmul.f32.gmra.mxu0 %v109
    %v224 = vpop.f32.mrf.mxu0
    %v225 = vadd.f32 %v136, %v224
    %226 = vmatmul.f32.gmra.mxu0 %v110
    %v227 = vpop.f32.mrf.mxu0
    %v228 = vadd.f32 %v136, %v227
    %229 = vmatmul.f32.gmra.mxu0 %v111
    %v230 = vpop.f32.mrf.mxu0
    %v231 = vadd.f32 %v136, %v230
    %232 = vmatmul.f32.gmra.mxu0 %v112
    %v233 = vpop.f32.mrf.mxu0
    %v234 = vadd.f32 %v136, %v233
    %235 = vmatmul.f32.gmra.mxu0 %v113
    %v236 = vpop.f32.mrf.mxu0
    %v237 = vadd.f32 %v136, %v236
    %238 = vmatmul.f32.gmra.mxu0 %v114
    %v239 = vpop.f32.mrf.mxu0
    %v240 = vadd.f32 %v136, %v239
    %241 = vmatmul.f32.gmra.mxu0 %v115
    %v242 = vpop.f32.mrf.mxu0
    %v243 = vadd.f32 %v136, %v242
    %244 = vmatmul.f32.gmra.mxu0 %v116
    %v245 = vpop.f32.mrf.mxu0
    %v246 = vadd.f32 %v136, %v245
    %247 = vmatmul.f32.gmra.mxu0 %v117
    %v248 = vpop.f32.mrf.mxu0
    %v249 = vadd.f32 %v136, %v248
    %250 = vdwg.mxu0
    %v251 = vmax.f32 %v156, 0.0
    %v252 = vmax.f32 %v159, 0.0
    %v253 = vmax.f32 %v162, 0.0
    %v254 = vmax.f32 %v165, 0.0
    %v255 = vmax.f32 %v168, 0.0
    %v256 = vmax.f32 %v171, 0.0
    %v257 = vmax.f32 %v174, 0.0
    %v258 = vmax.f32 %v177, 0.0
    %v259 = vmax.f32 %v180, 0.0
    %v260 = vmax.f32 %v183, 0.0
    %v261 = vmax.f32 %v186, 0.0
    %v262 = vmax.f32 %v189, 0.0
    %v263 = vmax.f32 %v192, 0.0
    %v264 = vmax.f32 %v195, 0.0
    %v265 = vmax.f32 %v198, 0.0
    %v266 = vmax.f32 %v201, 0.0
    %v267 = vmax.f32 %v204, 0.0
    %v268 = vmax.f32 %v207, 0.0
    %v269 = vmax.f32 %v210, 0.0
    %v270 = vmax.f32 %v213, 0.0
    %v271 = vmax.f32 %v216, 0.0
    %v272 = vmax.f32 %v219, 0.0
    %v273 = vmax.f32 %v222, 0.0
    %v274 = vmax.f32 %v225, 0.0
    %v275 = vmax.f32 %v228, 0.0
    %v276 = vmax.f32 %v231, 0.0
    %v277 = vmax.f32 %v234, 0.0
    %v278 = vmax.f32 %v237, 0.0
    %v279 = vmax.f32 %v240, 0.0
    %v280 = vmax.f32 %v243, 0.0
    %v281 = vmax.f32 %v246, 0.0
    %v282 = vmax.f32 %v249, 0.0
    %v283 = vld [vmem:[%s3] sm:$0xff]
    %v284 = vld [vmem:[%s3 + $0x8] sm:$0xff]
    %v285 = vld [vmem:[%s3 + $0x10] sm:$0xff]
    %v286 = vld [vmem:[%s3 + $0x18] sm:$0xff]
    %v287 = vld [vmem:[%s3 + $0x20] sm:$0xff]
    %v288 = vld [vmem:[%s3 + $0x28] sm:$0xff]
    %v289 = vld [vmem:[%s3 + $0x30] sm:$0xff]
    %v290 = vld [vmem:[%s3 + $0x38] sm:$0xff]
    %v291 = vld [vmem:[%s3 + $0x40] sm:$0xff]
    %v292 = vld [vmem:[%s3 + $0x48] sm:$0xff]
    %v293 = vld [vmem:[%s3 + $0x50] sm:$0xff]
    %v294 = vld [vmem:[%s3 + $0x58] sm:$0xff]
    %v295 = vld [vmem:[%s3 + $0x60] sm:$0xff]
    %v296 = vld [vmem:[%s3 + $0x68] sm:$0xff]
    %v297 = vld [vmem:[%s3 + $0x70] sm:$0xff]
    %v298 = vld [vmem:[%s3 + $0x78] sm:$0xff]
    %v299 = vld [vmem:[%s3 + $0x80] sm:$0xff]
    %v300 = vld [vmem:[%s3 + $0x88] sm:$0xff]
    %v301 = vld [vmem:[%s3 + $0x90] sm:$0xff]
    %v302 = vld [vmem:[%s3 + $0x98] sm:$0xff]
    %v303 = vld [vmem:[%s3 + $0xa0] sm:$0xff]
    %v304 = vld [vmem:[%s3 + $0xa8] sm:$0xff]
    %v305 = vld [vmem:[%s3 + $0xb0] sm:$0xff]
    %v306 = vld [vmem:[%s3 + $0xb8] sm:$0xff]
    %v307 = vld [vmem:[%s3 + $0xc0] sm:$0xff]
    %v308 = vld [vmem:[%s3 + $0xc8] sm:$0xff]
    %v309 = vld [vmem:[%s3 + $0xd0] sm:$0xff]
    %v310 = vld [vmem:[%s3 + $0xd8] sm:$0xff]
    %v311 = vld [vmem:[%s3 + $0xe0] sm:$0xff]
    %v312 = vld [vmem:[%s3 + $0xe8] sm:$0xff]
    %v313 = vld [vmem:[%s3 + $0xf0] sm:$0xff]
    %v314 = vld [vmem:[%s3 + $0xf8] sm:$0xff]
    %v315 = vld [vmem:[%s4] sm:$0x3]
    %v317 = vperm.slane %v315, 0
    %v318 = vperm.slane %v315, 1
    %321 = vmatpush.msra.mxu0 %v313
    %322 = vmatpush.msra.mxu0 %v311
    %323 = vmatpush.msra.mxu0 %v309
    %324 = vmatpush.msra.mxu0 %v307
    %325 = vmatpush.msra.mxu0 %v305
    %326 = vmatpush.msra.mxu0 %v303
    %327 = vmatpush.msra.mxu0 %v301
    %328 = vmatpush.msra.mxu0 %v299
    %329 = vmatpush.msra.mxu0 %v297
    %330 = vmatpush.msra.mxu0 %v295
    %331 = vmatpush.msra.mxu0 %v293
    %332 = vmatpush.msra.mxu0 %v291
    %333 = vmatpush.msra.mxu0 %v289
    %334 = vmatpush.msra.mxu0 %v287
    %335 = vmatpush.msra.mxu0 %v285
    %336 = vmatpush.msra.mxu0 %v283
    %337 = vmatmul.f32.gmra.mxu0 %v251
    %v338 = vpop.f32.mrf.mxu0
    %v339 = vadd.f32 %v317, %v338
    %340 = vmatmul.f32.gmra.mxu0 %v252
    %v341 = vpop.f32.mrf.mxu0
    %v342 = vadd.f32 %v317, %v341
    %343 = vmatmul.f32.gmra.mxu0 %v253
    %v344 = vpop.f32.mrf.mxu0
    %v345 = vadd.f32 %v317, %v344
    %346 = vmatmul.f32.gmra.mxu0 %v254
    %v347 = vpop.f32.mrf.mxu0
    %v348 = vadd.f32 %v317, %v347
    %349 = vmatmul.f32.gmra.mxu0 %v255
    %v350 = vpop.f32.mrf.mxu0
    %v351 = vadd.f32 %v317, %v350
    %352 = vmatmul.f32.gmra.mxu0 %v256
    %v353 = vpop.f32.mrf.mxu0
    %v354 = vadd.f32 %v317, %v353
    %355 = vmatmul.f32.gmra.mxu0 %v257
    %v356 = vpop.f32.mrf.mxu0
    %v357 = vadd.f32 %v317, %v356
    %358 = vmatmul.f32.gmra.mxu0 %v258
    %v359 = vpop.f32.mrf.mxu0
    %v360 = vadd.f32 %v317, %v359
    %361 = vmatmul.f32.gmra.mxu0 %v259
    %v362 = vpop.f32.mrf.mxu0
    %v363 = vadd.f32 %v317, %v362
    %364 = vmatmul.f32.gmra.mxu0 %v260
    %v365 = vpop.f32.mrf.mxu0
    %v366 = vadd.f32 %v317, %v365
    %367 = vmatmul.f32.gmra.mxu0 %v261
    %v368 = vpop.f32.mrf.mxu0
    %v369 = vadd.f32 %v317, %v368
    %370 = vmatmul.f32.gmra.mxu0 %v262
    %v371 = vpop.f32.mrf.mxu0
    %v372 = vadd.f32 %v317, %v371
    %373 = vmatmul.f32.gmra.mxu0 %v263
    %v374 = vpop.f32.mrf.mxu0
    %v375 = vadd.f32 %v317, %v374
    %376 = vmatmul.f32.gmra.mxu0 %v264
    %v377 = vpop.f32.mrf.mxu0
    %v378 = vadd.f32 %v317, %v377
    %379 = vmatmul.f32.gmra.mxu0 %v265
    %v380 = vpop.f32.mrf.mxu0
    %v381 = vadd.f32 %v317, %v380
    %382 = vmatmul.f32.gmra.mxu0 %v266
    %v383 = vpop.f32.mrf.mxu0
    %v384 = vadd.f32 %v317, %v383
    %385 = vmatmul.f32.gmra.mxu0 %v267
    %v386 = vpop.f32.mrf.mxu0
    %v387 = vadd.f32 %v317, %v386
    %388 = vmatmul.f32.gmra.mxu0 %v268
    %v389 = vpop.f32.mrf.mxu0
    %v390 = vadd.f32 %v317, %v389
    %391 = vmatmul.f32.gmra.mxu0 %v269
    %v392 = vpop.f32.mrf.mxu0
    %v393 = vadd.f32 %v317, %v392
    %394 = vmatmul.f32.gmra.mxu0 %v270
    %v395 = vpop.f32.mrf.mxu0
    %v396 = vadd.f32 %v317, %v395
    %397 = vmatmul.f32.gmra.mxu0 %v271
    %v398 = vpop.f32.mrf.mxu0
    %v399 = vadd.f32 %v317, %v398
    %400 = vmatmul.f32.gmra.mxu0 %v272
    %v401 = vpop.f32.mrf.mxu0
    %v402 = vadd.f32 %v317, %v401
    %403 = vmatmul.f32.gmra.mxu0 %v273
    %v404 = vpop.f32.mrf.mxu0
    %v405 = vadd.f32 %v317, %v404
    %406 = vmatmul.f32.gmra.mxu0 %v274
    %v407 = vpop.f32.mrf.mxu0
    %v408 = vadd.f32 %v317, %v407
    %409 = vmatmul.f32.gmra.mxu0 %v275
    %v410 = vpop.f32.mrf.mxu0
    %v411 = vadd.f32 %v317, %v410
    %412 = vmatmul.f32.gmra.mxu0 %v276
    %v413 = vpop.f32.mrf.mxu0
    %v414 = vadd.f32 %v317, %v413
    %415 = vmatmul.f32.gmra.mxu0 %v277
    %v416 = vpop.f32.mrf.mxu0
    %v417 = vadd.f32 %v317, %v416
    %418 = vmatmul.f32.gmra.mxu0 %v278
    %v419 = vpop.f32.mrf.mxu0
    %v420 = vadd.f32 %v317, %v419
    %421 = vmatmul.f32.gmra.mxu0 %v279
    %v422 = vpop.f32.mrf.mxu0
    %v423 = vadd.f32 %v317, %v422
    %424 = vmatmul.f32.gmra.mxu0 %v280
    %v425 = vpop.f32.mrf.mxu0
    %v426 = vadd.f32 %v317, %v425
    %427 = vmatmul.f32.gmra.mxu0 %v281
    %v428 = vpop.f32.mrf.mxu0
    %v429 = vadd.f32 %v317, %v428
    %430 = vmatmul.f32.gmra.mxu0 %v282
    %v431 = vpop.f32.mrf.mxu0
    %v432 = vadd.f32 %v317, %v431
    %433 = vdwg.mxu0
    %434 = vmatpush.msra.mxu0 %v314
    %435 = vmatpush.msra.mxu0 %v312
    %436 = vmatpush.msra.mxu0 %v310
    %437 = vmatpush.msra.mxu0 %v308
    %438 = vmatpush.msra.mxu0 %v306
    %439 = vmatpush.msra.mxu0 %v304
    %440 = vmatpush.msra.mxu0 %v302
    %441 = vmatpush.msra.mxu0 %v300
    %442 = vmatpush.msra.mxu0 %v298
    %443 = vmatpush.msra.mxu0 %v296
    %444 = vmatpush.msra.mxu0 %v294
    %445 = vmatpush.msra.mxu0 %v292
    %446 = vmatpush.msra.mxu0 %v290
    %447 = vmatpush.msra.mxu0 %v288
    %448 = vmatpush.msra.mxu0 %v286
    %449 = vmatpush.msra.mxu0 %v284
    %450 = vmatmul.f32.gmra.mxu0 %v251
    %v451 = vpop.f32.mrf.mxu0
    %v452 = vadd.f32 %v318, %v451
    %453 = vmatmul.f32.gmra.mxu0 %v252
    %v454 = vpop.f32.mrf.mxu0
    %v455 = vadd.f32 %v318, %v454
    %456 = vmatmul.f32.gmra.mxu0 %v253
    %v457 = vpop.f32.mrf.mxu0
    %v458 = vadd.f32 %v318, %v457
    %459 = vmatmul.f32.gmra.mxu0 %v254
    %v460 = vpop.f32.mrf.mxu0
    %v461 = vadd.f32 %v318, %v460
    %462 = vmatmul.f32.gmra.mxu0 %v255
    %v463 = vpop.f32.mrf.mxu0
    %v464 = vadd.f32 %v318, %v463
    %465 = vmatmul.f32.gmra.mxu0 %v256
    %v466 = vpop.f32.mrf.mxu0
    %v467 = vadd.f32 %v318, %v466
    %468 = vmatmul.f32.gmra.mxu0 %v257
    %v469 = vpop.f32.mrf.mxu0
    %v470 = vadd.f32 %v318, %v469
    %471 = vmatmul.f32.gmra.mxu0 %v258
    %v472 = vpop.f32.mrf.mxu0
    %v473 = vadd.f32 %v318, %v472
    %474 = vmatmul.f32.gmra.mxu0 %v259
    %v475 = vpop.f32.mrf.mxu0
    %v476 = vadd.f32 %v318, %v475
    %477 = vmatmul.f32.gmra.mxu0 %v260
    %v478 = vpop.f32.mrf.mxu0
    %v479 = vadd.f32 %v318, %v478
    %480 = vmatmul.f32.gmra.mxu0 %v261
    %v481 = vpop.f32.mrf.mxu0
    %v482 = vadd.f32 %v318, %v481
    %483 = vmatmul.f32.gmra.mxu0 %v262
    %v484 = vpop.f32.mrf.mxu0
    %v485 = vadd.f32 %v318, %v484
    %486 = vmatmul.f32.gmra.mxu0 %v263
    %v487 = vpop.f32.mrf.mxu0
    %v488 = vadd.f32 %v318, %v487
    %489 = vmatmul.f32.gmra.mxu0 %v264
    %v490 = vpop.f32.mrf.mxu0
    %v491 = vadd.f32 %v318, %v490
    %492 = vmatmul.f32.gmra.mxu0 %v265
    %v493 = vpop.f32.mrf.mxu0
    %v494 = vadd.f32 %v318, %v493
    %495 = vmatmul.f32.gmra.mxu0 %v266
    %v496 = vpop.f32.mrf.mxu0
    %v497 = vadd.f32 %v318, %v496
    %498 = vmatmul.f32.gmra.mxu0 %v267
    %v499 = vpop.f32.mrf.mxu0
    %v500 = vadd.f32 %v318, %v499
    %501 = vmatmul.f32.gmra.mxu0 %v268
    %v502 = vpop.f32.mrf.mxu0
    %v503 = vadd.f32 %v318, %v502
    %504 = vmatmul.f32.gmra.mxu0 %v269
    %v505 = vpop.f32.mrf.mxu0
    %v506 = vadd.f32 %v318, %v505
    %507 = vmatmul.f32.gmra.mxu0 %v270
    %v508 = vpop.f32.mrf.mxu0
    %v509 = vadd.f32 %v318, %v508
    %510 = vmatmul.f32.gmra.mxu0 %v271
    %v511 = vpop.f32.mrf.mxu0
    %v512 = vadd.f32 %v318, %v511
    %513 = vmatmul.f32.gmra.mxu0 %v272
    %v514 = vpop.f32.mrf.mxu0
    %v515 = vadd.f32 %v318, %v514
    %516 = vmatmul.f32.gmra.mxu0 %v273
    %v517 = vpop.f32.mrf.mxu0
    %v518 = vadd.f32 %v318, %v517
    %519 = vmatmul.f32.gmra.mxu0 %v274
    %v520 = vpop.f32.mrf.mxu0
    %v521 = vadd.f32 %v318, %v520
    %522 = vmatmul.f32.gmra.mxu0 %v275
    %v523 = vpop.f32.mrf.mxu0
    %v524 = vadd.f32 %v318, %v523
    %525 = vmatmul.f32.gmra.mxu0 %v276
    %v526 = vpop.f32.mrf.mxu0
    %v527 = vadd.f32 %v318, %v526
    %528 = vmatmul.f32.gmra.mxu0 %v277
    %v529 = vpop.f32.mrf.mxu0
    %v530 = vadd.f32 %v318, %v529
    %531 = vmatmul.f32.gmra.mxu0 %v278
    %v532 = vpop.f32.mrf.mxu0
    %v533 = vadd.f32 %v318, %v532
    %534 = vmatmul.f32.gmra.mxu0 %v279
    %v535 = vpop.f32.mrf.mxu0
    %v536 = vadd.f32 %v318, %v535
    %537 = vmatmul.f32.gmra.mxu0 %v280
    %v538 = vpop.f32.mrf.mxu0
    %v539 = vadd.f32 %v318, %v538
    %540 = vmatmul.f32.gmra.mxu0 %v281
    %v541 = vpop.f32.mrf.mxu0
    %v542 = vadd.f32 %v318, %v541
    %543 = vmatmul.f32.gmra.mxu0 %v282
    %v544 = vpop.f32.mrf.mxu0
    %v545 = vadd.f32 %v318, %v544
    %546 = vdwg.mxu0
    %v547 = vmax.f32 %v339, 0.0
    %v548 = vmax.f32 %v452, 0.0
    %v549 = vmax.f32 %v342, 0.0
    %v550 = vmax.f32 %v455, 0.0
    %v551 = vmax.f32 %v345, 0.0
    %v552 = vmax.f32 %v458, 0.0
    %v553 = vmax.f32 %v348, 0.0
    %v554 = vmax.f32 %v461, 0.0
    %v555 = vmax.f32 %v351, 0.0
    %v556 = vmax.f32 %v464, 0.0
    %v557 = vmax.f32 %v354, 0.0
    %v558 = vmax.f32 %v467, 0.0
    %v559 = vmax.f32 %v357, 0.0
    %v560 = vmax.f32 %v470, 0.0
    %v561 = vmax.f32 %v360, 0.0
    %v562 = vmax.f32 %v473, 0.0
    %v563 = vmax.f32 %v363, 0.0
    %v564 = vmax.f32 %v476, 0.0
    %v565 = vmax.f32 %v366, 0.0
    %v566 = vmax.f32 %v479, 0.0
    %v567 = vmax.f32 %v369, 0.0
    %v568 = vmax.f32 %v482, 0.0
    %v569 = vmax.f32 %v372, 0.0
    %v570 = vmax.f32 %v485, 0.0
    %v571 = vmax.f32 %v375, 0.0
    %v572 = vmax.f32 %v488, 0.0
    %v573 = vmax.f32 %v378, 0.0
    %v574 = vmax.f32 %v491, 0.0
    %v575 = vmax.f32 %v381, 0.0
    %v576 = vmax.f32 %v494, 0.0
    %v577 = vmax.f32 %v384, 0.0
    %v578 = vmax.f32 %v497, 0.0
    %v579 = vmax.f32 %v387, 0.0
    %v580 = vmax.f32 %v500, 0.0
    %v581 = vmax.f32 %v390, 0.0
    %v582 = vmax.f32 %v503, 0.0
    %v583 = vmax.f32 %v393, 0.0
    %v584 = vmax.f32 %v506, 0.0
    %v585 = vmax.f32 %v396, 0.0
    %v586 = vmax.f32 %v509, 0.0
    %v587 = vmax.f32 %v399, 0.0
    %v588 = vmax.f32 %v512, 0.0
    %v589 = vmax.f32 %v402, 0.0
    %v590 = vmax.f32 %v515, 0.0
    %v591 = vmax.f32 %v405, 0.0
    %v592 = vmax.f32 %v518, 0.0
    %v593 = vmax.f32 %v408, 0.0
    %v594 = vmax.f32 %v521, 0.0
    %v595 = vmax.f32 %v411, 0.0
    %v596 = vmax.f32 %v524, 0.0
    %v597 = vmax.f32 %v414, 0.0
    %v598 = vmax.f32 %v527, 0.0
    %v599 = vmax.f32 %v417, 0.0
    %v600 = vmax.f32 %v530, 0.0
    %v601 = vmax.f32 %v420, 0.0
    %v602 = vmax.f32 %v533, 0.0
    %v603 = vmax.f32 %v423, 0.0
    %v604 = vmax.f32 %v536, 0.0
    %v605 = vmax.f32 %v426, 0.0
    %v606 = vmax.f32 %v539, 0.0
    %v607 = vmax.f32 %v429, 0.0
    %v608 = vmax.f32 %v542, 0.0
    %v609 = vmax.f32 %v432, 0.0
    %v610 = vmax.f32 %v545, 0.0
    %v611 = vld [vmem:[#allocation2] sm:$0xff]
    %v612 = vld [vmem:[#allocation2 + $0x8] sm:$0xff]
    %v613 = vld [vmem:[#allocation2 + $0x10] sm:$0xff]
    %v614 = vld [vmem:[#allocation2 + $0x18] sm:$0xff]
    %v615 = vld [vmem:[#allocation2 + $0x20] sm:$0xff]
    %v616 = vld [vmem:[#allocation2 + $0x28] sm:$0xff]
    %v617 = vld [vmem:[#allocation2 + $0x30] sm:$0xff]
    %v618 = vld [vmem:[#allocation2 + $0x38] sm:$0xff]
    %v619 = vld [vmem:[#allocation2 + $0x40] sm:$0xff]
    %v620 = vld [vmem:[#allocation2 + $0x48] sm:$0xff]
    %v621 = vld [vmem:[#allocation2 + $0x50] sm:$0xff]
    %v622 = vld [vmem:[#allocation2 + $0x58] sm:$0xff]
    %v623 = vld [vmem:[#allocation2 + $0x60] sm:$0xff]
    %v624 = vld [vmem:[#allocation2 + $0x68] sm:$0xff]
    %v625 = vld [vmem:[#allocation2 + $0x70] sm:$0xff]
    %v626 = vld [vmem:[#allocation2 + $0x78] sm:$0xff]
    %v627 = vld [vmem:[#allocation2 + $0x80] sm:$0xff]
    %v628 = vld [vmem:[#allocation2 + $0x88] sm:$0xff]
    %v629 = vld [vmem:[#allocation2 + $0x90] sm:$0xff]
    %v630 = vld [vmem:[#allocation2 + $0x98] sm:$0xff]
    %v631 = vld [vmem:[#allocation2 + $0xa0] sm:$0xff]
    %v632 = vld [vmem:[#allocation2 + $0xa8] sm:$0xff]
    %v633 = vld [vmem:[#allocation2 + $0xb0] sm:$0xff]
    %v634 = vld [vmem:[#allocation2 + $0xb8] sm:$0xff]
    %v635 = vld [vmem:[#allocation2 + $0xc0] sm:$0xff]
    %v636 = vld [vmem:[#allocation2 + $0xc8] sm:$0xff]
    %v637 = vld [vmem:[#allocation2 + $0xd0] sm:$0xff]
    %v638 = vld [vmem:[#allocation2 + $0xd8] sm:$0xff]
    %v639 = vld [vmem:[#allocation2 + $0xe0] sm:$0xff]
    %v640 = vld [vmem:[#allocation2 + $0xe8] sm:$0xff]
    %v641 = vld [vmem:[#allocation2 + $0xf0] sm:$0xff]
    %v642 = vld [vmem:[#allocation2 + $0xf8] sm:$0xff]
    %v643 = vld [vmem:[#allocation2 + $0x100] sm:$0xff]
    %v644 = vld [vmem:[#allocation2 + $0x108] sm:$0xff]
    %v645 = vld [vmem:[#allocation2 + $0x110] sm:$0xff]
    %v646 = vld [vmem:[#allocation2 + $0x118] sm:$0xff]
    %v647 = vld [vmem:[#allocation2 + $0x120] sm:$0xff]
    %v648 = vld [vmem:[#allocation2 + $0x128] sm:$0xff]
    %v649 = vld [vmem:[#allocation2 + $0x130] sm:$0xff]
    %v650 = vld [vmem:[#allocation2 + $0x138] sm:$0xff]
    %v651 = vld [vmem:[#allocation2 + $0x140] sm:$0xff]
    %v652 = vld [vmem:[#allocation2 + $0x148] sm:$0xff]
    %v653 = vld [vmem:[#allocation2 + $0x150] sm:$0xff]
    %v654 = vld [vmem:[#allocation2 + $0x158] sm:$0xff]
    %v655 = vld [vmem:[#allocation2 + $0x160] sm:$0xff]
    %v656 = vld [vmem:[#allocation2 + $0x168] sm:$0xff]
    %v657 = vld [vmem:[#allocation2 + $0x170] sm:$0xff]
    %v658 = vld [vmem:[#allocation2 + $0x178] sm:$0xff]
    %v659 = vld [vmem:[#allocation2 + $0x180] sm:$0xff]
    %v660 = vld [vmem:[#allocation2 + $0x188] sm:$0xff]
    %v661 = vld [vmem:[#allocation2 + $0x190] sm:$0xff]
    %v662 = vld [vmem:[#allocation2 + $0x198] sm:$0xff]
    %v663 = vld [vmem:[#allocation2 + $0x1a0] sm:$0xff]
    %v664 = vld [vmem:[#allocation2 + $0x1a8] sm:$0xff]
    %v665 = vld [vmem:[#allocation2 + $0x1b0] sm:$0xff]
    %v666 = vld [vmem:[#allocation2 + $0x1b8] sm:$0xff]
    %v667 = vld [vmem:[#allocation2 + $0x1c0] sm:$0xff]
    %v668 = vld [vmem:[#allocation2 + $0x1c8] sm:$0xff]
    %v669 = vld [vmem:[#allocation2 + $0x1d0] sm:$0xff]
    %v670 = vld [vmem:[#allocation2 + $0x1d8] sm:$0xff]
    %v671 = vld [vmem:[#allocation2 + $0x1e0] sm:$0xff]
    %v672 = vld [vmem:[#allocation2 + $0x1e8] sm:$0xff]
    %v673 = vld [vmem:[#allocation2 + $0x1f0] sm:$0xff]
    %v674 = vld [vmem:[#allocation2 + $0x1f8] sm:$0xff]
    %v675 = vld [vmem:[#allocation2 + $0x200] sm:$0xff]
    %v676 = vld [vmem:[#allocation2 + $0x208] sm:$0xff]
    %v677 = vld [vmem:[#allocation2 + $0x210] sm:$0xff]
    %v678 = vld [vmem:[#allocation2 + $0x218] sm:$0xff]
    %v679 = vld [vmem:[#allocation2 + $0x220] sm:$0xff]
    %v680 = vld [vmem:[#allocation2 + $0x228] sm:$0xff]
    %v681 = vld [vmem:[#allocation2 + $0x230] sm:$0xff]
    %v682 = vld [vmem:[#allocation2 + $0x238] sm:$0xff]
    %v683 = vld [vmem:[#allocation2 + $0x240] sm:$0xff]
    %v684 = vld [vmem:[#allocation2 + $0x248] sm:$0xff]
    %v685 = vld [vmem:[#allocation2 + $0x250] sm:$0xff]
    %v686 = vld [vmem:[#allocation2 + $0x258] sm:$0xff]
    %v687 = vld [vmem:[#allocation2 + $0x260] sm:$0xff]
    %v688 = vld [vmem:[#allocation2 + $0x268] sm:$0xff]
    %v689 = vld [vmem:[#allocation2 + $0x270] sm:$0xff]
    %v690 = vld [vmem:[#allocation2 + $0x278] sm:$0xff]
    %v691 = vld [vmem:[#allocation2 + $0x280] sm:$0xff]
    %v692 = vld [vmem:[#allocation2 + $0x288] sm:$0xff]
    %v693 = vld [vmem:[#allocation2 + $0x290] sm:$0xff]
    %v694 = vld [vmem:[#allocation2 + $0x298] sm:$0xff]
    %v695 = vld [vmem:[#allocation2 + $0x2a0] sm:$0xff]
    %v696 = vld [vmem:[#allocation2 + $0x2a8] sm:$0xff]
    %v697 = vld [vmem:[#allocation2 + $0x2b0] sm:$0xff]
    %v698 = vld [vmem:[#allocation2 + $0x2b8] sm:$0xff]
    %v699 = vld [vmem:[#allocation2 + $0x2c0] sm:$0xff]
    %v700 = vld [vmem:[#allocation2 + $0x2c8] sm:$0xff]
    %v701 = vld [vmem:[#allocation2 + $0x2d0] sm:$0xff]
    %v702 = vld [vmem:[#allocation2 + $0x2d8] sm:$0xff]
    %v703 = vld [vmem:[#allocation2 + $0x2e0] sm:$0xff]
    %v704 = vld [vmem:[#allocation2 + $0x2e8] sm:$0xff]
    %v705 = vld [vmem:[#allocation2 + $0x2f0] sm:$0xff]
    %v706 = vld [vmem:[#allocation2 + $0x2f8] sm:$0xff]
    %v707 = vld [vmem:[#allocation2 + $0x300] sm:$0xff]
    %v708 = vld [vmem:[#allocation2 + $0x308] sm:$0xff]
    %v709 = vld [vmem:[#allocation2 + $0x310] sm:$0xff]
    %v710 = vld [vmem:[#allocation2 + $0x318] sm:$0xff]
    %v711 = vld [vmem:[#allocation2 + $0x320] sm:$0xff]
    %v712 = vld [vmem:[#allocation2 + $0x328] sm:$0xff]
    %v713 = vld [vmem:[#allocation2 + $0x330] sm:$0xff]
    %v714 = vld [vmem:[#allocation2 + $0x338] sm:$0xff]
    %v715 = vld [vmem:[#allocation2 + $0x340] sm:$0xff]
    %v716 = vld [vmem:[#allocation2 + $0x348] sm:$0xff]
    %v717 = vld [vmem:[#allocation2 + $0x350] sm:$0xff]
    %v718 = vld [vmem:[#allocation2 + $0x358] sm:$0xff]
    %v719 = vld [vmem:[#allocation2 + $0x360] sm:$0xff]
    %v720 = vld [vmem:[#allocation2 + $0x368] sm:$0xff]
    %v721 = vld [vmem:[#allocation2 + $0x370] sm:$0xff]
    %v722 = vld [vmem:[#allocation2 + $0x378] sm:$0xff]
    %v723 = vld [vmem:[#allocation2 + $0x380] sm:$0xff]
    %v724 = vld [vmem:[#allocation2 + $0x388] sm:$0xff]
    %v725 = vld [vmem:[#allocation2 + $0x390] sm:$0xff]
    %v726 = vld [vmem:[#allocation2 + $0x398] sm:$0xff]
    %v727 = vld [vmem:[#allocation2 + $0x3a0] sm:$0xff]
    %v728 = vld [vmem:[#allocation2 + $0x3a8] sm:$0xff]
    %v729 = vld [vmem:[#allocation2 + $0x3b0] sm:$0xff]
    %v730 = vld [vmem:[#allocation2 + $0x3b8] sm:$0xff]
    %v731 = vld [vmem:[#allocation2 + $0x3c0] sm:$0xff]
    %v732 = vld [vmem:[#allocation2 + $0x3c8] sm:$0xff]
    %v733 = vld [vmem:[#allocation2 + $0x3d0] sm:$0xff]
    %v734 = vld [vmem:[#allocation2 + $0x3d8] sm:$0xff]
    %v735 = vld [vmem:[#allocation2 + $0x3e0] sm:$0xff]
    %v736 = vld [vmem:[#allocation2 + $0x3e8] sm:$0xff]
    %v737 = vld [vmem:[#allocation2 + $0x3f0] sm:$0xff]
    %v738 = vld [vmem:[#allocation2 + $0x3f8] sm:$0xff]
    %v739 = vld [vmem:[%s6] sm:$0xf]
    %v741 = vperm.slane %v739, 0
    %v742 = vperm.slane %v739, 1
    %v743 = vperm.slane %v739, 2
    %v744 = vperm.slane %v739, 3
    %749 = vmatpush.msra.mxu0 %v671
    %750 = vmatpush.msra.mxu0 %v667
    %751 = vmatpush.msra.mxu0 %v663
    %752 = vmatpush.msra.mxu0 %v659
    %753 = vmatpush.msra.mxu0 %v655
    %754 = vmatpush.msra.mxu0 %v651
    %755 = vmatpush.msra.mxu0 %v647
    %756 = vmatpush.msra.mxu0 %v643
    %757 = vmatpush.msra.mxu0 %v639
    %758 = vmatpush.msra.mxu0 %v635
    %759 = vmatpush.msra.mxu0 %v631
    %760 = vmatpush.msra.mxu0 %v627
    %761 = vmatpush.msra.mxu0 %v623
    %762 = vmatpush.msra.mxu0 %v619
    %763 = vmatpush.msra.mxu0 %v615
    %764 = vmatpush.msra.mxu0 %v611
    %765 = vmatmul.f32.gmra.mxu0 %v547
    %v766 = vpop.f32.mrf.mxu0
    %v767 = vadd.f32 %v741, %v766
    %768 = vmatmul.f32.gmra.mxu0 %v549
    %v769 = vpop.f32.mrf.mxu0
    %v770 = vadd.f32 %v741, %v769
    %771 = vmatmul.f32.gmra.mxu0 %v551
    %v772 = vpop.f32.mrf.mxu0
    %v773 = vadd.f32 %v741, %v772
    %774 = vmatmul.f32.gmra.mxu0 %v553
    %v775 = vpop.f32.mrf.mxu0
    %v776 = vadd.f32 %v741, %v775
    %777 = vmatmul.f32.gmra.mxu0 %v555
    %v778 = vpop.f32.mrf.mxu0
    %v779 = vadd.f32 %v741, %v778
    %780 = vmatmul.f32.gmra.mxu0 %v557
    %v781 = vpop.f32.mrf.mxu0
    %v782 = vadd.f32 %v741, %v781
    %783 = vmatmul.f32.gmra.mxu0 %v559
    %v784 = vpop.f32.mrf.mxu0
    %v785 = vadd.f32 %v741, %v784
    %786 = vmatmul.f32.gmra.mxu0 %v561
    %v787 = vpop.f32.mrf.mxu0
    %v788 = vadd.f32 %v741, %v787
    %789 = vmatmul.f32.gmra.mxu0 %v563
    %v790 = vpop.f32.mrf.mxu0
    %v791 = vadd.f32 %v741, %v790
    %792 = vmatmul.f32.gmra.mxu0 %v565
    %v793 = vpop.f32.mrf.mxu0
    %v794 = vadd.f32 %v741, %v793
    %795 = vmatmul.f32.gmra.mxu0 %v567
    %v796 = vpop.f32.mrf.mxu0
    %v797 = vadd.f32 %v741, %v796
    %798 = vmatmul.f32.gmra.mxu0 %v569
    %v799 = vpop.f32.mrf.mxu0
    %v800 = vadd.f32 %v741, %v799
    %801 = vmatmul.f32.gmra.mxu0 %v571
    %v802 = vpop.f32.mrf.mxu0
    %v803 = vadd.f32 %v741, %v802
    %804 = vmatmul.f32.gmra.mxu0 %v573
    %v805 = vpop.f32.mrf.mxu0
    %v806 = vadd.f32 %v741, %v805
    %807 = vmatmul.f32.gmra.mxu0 %v575
    %v808 = vpop.f32.mrf.mxu0
    %v809 = vadd.f32 %v741, %v808
    %810 = vmatmul.f32.gmra.mxu0 %v577
    %v811 = vpop.f32.mrf.mxu0
    %v812 = vadd.f32 %v741, %v811
    %813 = vmatmul.f32.gmra.mxu0 %v579
    %v814 = vpop.f32.mrf.mxu0
    %v815 = vadd.f32 %v741, %v814
    %816 = vmatmul.f32.gmra.mxu0 %v581
    %v817 = vpop.f32.mrf.mxu0
    %v818 = vadd.f32 %v741, %v817
    %819 = vmatmul.f32.gmra.mxu0 %v583
    %v820 = vpop.f32.mrf.mxu0
    %v821 = vadd.f32 %v741, %v820
    %822 = vmatmul.f32.gmra.mxu0 %v585
    %v823 = vpop.f32.mrf.mxu0
    %v824 = vadd.f32 %v741, %v823
    %825 = vmatmul.f32.gmra.mxu0 %v587
    %v826 = vpop.f32.mrf.mxu0
    %v827 = vadd.f32 %v741, %v826
    %828 = vmatmul.f32.gmra.mxu0 %v589
    %v829 = vpop.f32.mrf.mxu0
    %v830 = vadd.f32 %v741, %v829
    %831 = vmatmul.f32.gmra.mxu0 %v591
    %v832 = vpop.f32.mrf.mxu0
    %v833 = vadd.f32 %v741, %v832
    %834 = vmatmul.f32.gmra.mxu0 %v593
    %v835 = vpop.f32.mrf.mxu0
    %v836 = vadd.f32 %v741, %v835
    %837 = vmatmul.f32.gmra.mxu0 %v595
    %v838 = vpop.f32.mrf.mxu0
    %v839 = vadd.f32 %v741, %v838
    %840 = vmatmul.f32.gmra.mxu0 %v597
    %v841 = vpop.f32.mrf.mxu0
    %v842 = vadd.f32 %v741, %v841
    %843 = vmatmul.f32.gmra.mxu0 %v599
    %v844 = vpop.f32.mrf.mxu0
    %v845 = vadd.f32 %v741, %v844
    %846 = vmatmul.f32.gmra.mxu0 %v601
    %v847 = vpop.f32.mrf.mxu0
    %v848 = vadd.f32 %v741, %v847
    %849 = vmatmul.f32.gmra.mxu0 %v603
    %v850 = vpop.f32.mrf.mxu0
    %v851 = vadd.f32 %v741, %v850
    %852 = vmatmul.f32.gmra.mxu0 %v605
    %v853 = vpop.f32.mrf.mxu0
    %v854 = vadd.f32 %v741, %v853
    %855 = vmatmul.f32.gmra.mxu0 %v607
    %v856 = vpop.f32.mrf.mxu0
    %v857 = vadd.f32 %v741, %v856
    %858 = vmatmul.f32.gmra.mxu0 %v609
    %v859 = vpop.f32.mrf.mxu0
    %v860 = vadd.f32 %v741, %v859
    %861 = vdwg.mxu0
    %862 = vmatpush.msra.mxu0 %v735
    %863 = vmatpush.msra.mxu0 %v731
    %864 = vmatpush.msra.mxu0 %v727
    %865 = vmatpush.msra.mxu0 %v723
    %866 = vmatpush.msra.mxu0 %v719
    %867 = vmatpush.msra.mxu0 %v715
    %868 = vmatpush.msra.mxu0 %v711
    %869 = vmatpush.msra.mxu0 %v707
    %870 = vmatpush.msra.mxu0 %v703
    %871 = vmatpush.msra.mxu0 %v699
    %872 = vmatpush.msra.mxu0 %v695
    %873 = vmatpush.msra.mxu0 %v691
    %874 = vmatpush.msra.mxu0 %v687
    %875 = vmatpush.msra.mxu0 %v683
    %876 = vmatpush.msra.mxu0 %v679
    %877 = vmatpush.msra.mxu0 %v675
    %878 = vmatmul.f32.gmra.mxu0 %v548
    %v879 = vpop.f32.mrf.mxu0
    %v880 = vadd.f32 %v767, %v879
    %881 = vmatmul.f32.gmra.mxu0 %v550
    %v882 = vpop.f32.mrf.mxu0
    %v883 = vadd.f32 %v770, %v882
    %884 = vmatmul.f32.gmra.mxu0 %v552
    %v885 = vpop.f32.mrf.mxu0
    %v886 = vadd.f32 %v773, %v885
    %887 = vmatmul.f32.gmra.mxu0 %v554
    %v888 = vpop.f32.mrf.mxu0
    %v889 = vadd.f32 %v776, %v888
    %890 = vmatmul.f32.gmra.mxu0 %v556
    %v891 = vpop.f32.mrf.mxu0
    %v892 = vadd.f32 %v779, %v891
    %893 = vmatmul.f32.gmra.mxu0 %v558
    %v894 = vpop.f32.mrf.mxu0
    %v895 = vadd.f32 %v782, %v894
    %896 = vmatmul.f32.gmra.mxu0 %v560
    %v897 = vpop.f32.mrf.mxu0
    %v898 = vadd.f32 %v785, %v897
    %899 = vmatmul.f32.gmra.mxu0 %v562
    %v900 = vpop.f32.mrf.mxu0
    %v901 = vadd.f32 %v788, %v900
    %902 = vmatmul.f32.gmra.mxu0 %v564
    %v903 = vpop.f32.mrf.mxu0
    %v904 = vadd.f32 %v791, %v903
    %905 = vmatmul.f32.gmra.mxu0 %v566
    %v906 = vpop.f32.mrf.mxu0
    %v907 = vadd.f32 %v794, %v906
    %908 = vmatmul.f32.gmra.mxu0 %v568
    %v909 = vpop.f32.mrf.mxu0
    %v910 = vadd.f32 %v797, %v909
    %911 = vmatmul.f32.gmra.mxu0 %v570
    %v912 = vpop.f32.mrf.mxu0
    %v913 = vadd.f32 %v800, %v912
    %914 = vmatmul.f32.gmra.mxu0 %v572
    %v915 = vpop.f32.mrf.mxu0
    %v916 = vadd.f32 %v803, %v915
    %917 = vmatmul.f32.gmra.mxu0 %v574
    %v918 = vpop.f32.mrf.mxu0
    %v919 = vadd.f32 %v806, %v918
    %920 = vmatmul.f32.gmra.mxu0 %v576
    %v921 = vpop.f32.mrf.mxu0
    %v922 = vadd.f32 %v809, %v921
    %923 = vmatmul.f32.gmra.mxu0 %v578
    %v924 = vpop.f32.mrf.mxu0
    %v925 = vadd.f32 %v812, %v924
    %926 = vmatmul.f32.gmra.mxu0 %v580
    %v927 = vpop.f32.mrf.mxu0
    %v928 = vadd.f32 %v815, %v927
    %929 = vmatmul.f32.gmra.mxu0 %v582
    %v930 = vpop.f32.mrf.mxu0
    %v931 = vadd.f32 %v818, %v930
    %932 = vmatmul.f32.gmra.mxu0 %v584
    %v933 = vpop.f32.mrf.mxu0
    %v934 = vadd.f32 %v821, %v933
    %935 = vmatmul.f32.gmra.mxu0 %v586
    %v936 = vpop.f32.mrf.mxu0
    %v937 = vadd.f32 %v824, %v936
    %938 = vmatmul.f32.gmra.mxu0 %v588
    %v939 = vpop.f32.mrf.mxu0
    %v940 = vadd.f32 %v827, %v939
    %941 = vmatmul.f32.gmra.mxu0 %v590
    %v942 = vpop.f32.mrf.mxu0
    %v943 = vadd.f32 %v830, %v942
    %944 = vmatmul.f32.gmra.mxu0 %v592
    %v945 = vpop.f32.mrf.mxu0
    %v946 = vadd.f32 %v833, %v945
    %947 = vmatmul.f32.gmra.mxu0 %v594
    %v948 = vpop.f32.mrf.mxu0
    %v949 = vadd.f32 %v836, %v948
    %950 = vmatmul.f32.gmra.mxu0 %v596
    %v951 = vpop.f32.mrf.mxu0
    %v952 = vadd.f32 %v839, %v951
    %953 = vmatmul.f32.gmra.mxu0 %v598
    %v954 = vpop.f32.mrf.mxu0
    %v955 = vadd.f32 %v842, %v954
    %956 = vmatmul.f32.gmra.mxu0 %v600
    %v957 = vpop.f32.mrf.mxu0
    %v958 = vadd.f32 %v845, %v957
    %959 = vmatmul.f32.gmra.mxu0 %v602
    %v960 = vpop.f32.mrf.mxu0
    %v961 = vadd.f32 %v848, %v960
    %962 = vmatmul.f32.gmra.mxu0 %v604
    %v963 = vpop.f32.mrf.mxu0
    %v964 = vadd.f32 %v851, %v963
    %965 = vmatmul.f32.gmra.mxu0 %v606
    %v966 = vpop.f32.mrf.mxu0
    %v967 = vadd.f32 %v854, %v966
    %968 = vmatmul.f32.gmra.mxu0 %v608
    %v969 = vpop.f32.mrf.mxu0
    %v970 = vadd.f32 %v857, %v969
    %971 = vmatmul.f32.gmra.mxu0 %v610
    %v972 = vpop.f32.mrf.mxu0
    %v973 = vadd.f32 %v860, %v972
    %974 = vdwg.mxu0
    %975 = vmatpush.msra.mxu0 %v672
    %976 = vmatpush.msra.mxu0 %v668
    %977 = vmatpush.msra.mxu0 %v664
    %978 = vmatpush.msra.mxu0 %v660
    %979 = vmatpush.msra.mxu0 %v656
    %980 = vmatpush.msra.mxu0 %v652
    %981 = vmatpush.msra.mxu0 %v648
    %982 = vmatpush.msra.mxu0 %v644
    %983 = vmatpush.msra.mxu0 %v640
    %984 = vmatpush.msra.mxu0 %v636
    %985 = vmatpush.msra.mxu0 %v632
    %986 = vmatpush.msra.mxu0 %v628
    %987 = vmatpush.msra.mxu0 %v624
    %988 = vmatpush.msra.mxu0 %v620
    %989 = vmatpush.msra.mxu0 %v616
    %990 = vmatpush.msra.mxu0 %v612
    %991 = vmatmul.f32.gmra.mxu0 %v547
    %v992 = vpop.f32.mrf.mxu0
    %v993 = vadd.f32 %v742, %v992
    %994 = vmatmul.f32.gmra.mxu0 %v549
    %v995 = vpop.f32.mrf.mxu0
    %v996 = vadd.f32 %v742, %v995
    %997 = vmatmul.f32.gmra.mxu0 %v551
    %v998 = vpop.f32.mrf.mxu0
    %v999 = vadd.f32 %v742, %v998
    %1000 = vmatmul.f32.gmra.mxu0 %v553
    %v1001 = vpop.f32.mrf.mxu0
    %v1002 = vadd.f32 %v742, %v1001
    %1003 = vmatmul.f32.gmra.mxu0 %v555
    %v1004 = vpop.f32.mrf.mxu0
    %v1005 = vadd.f32 %v742, %v1004
    %1006 = vmatmul.f32.gmra.mxu0 %v557
    %v1007 = vpop.f32.mrf.mxu0
    %v1008 = vadd.f32 %v742, %v1007
    %1009 = vmatmul.f32.gmra.mxu0 %v559
    %v1010 = vpop.f32.mrf.mxu0
    %v1011 = vadd.f32 %v742, %v1010
    %1012 = vmatmul.f32.gmra.mxu0 %v561
    %v1013 = vpop.f32.mrf.mxu0
    %v1014 = vadd.f32 %v742, %v1013
    %1015 = vmatmul.f32.gmra.mxu0 %v563
    %v1016 = vpop.f32.mrf.mxu0
    %v1017 = vadd.f32 %v742, %v1016
    %1018 = vmatmul.f32.gmra.mxu0 %v565
    %v1019 = vpop.f32.mrf.mxu0
    %v1020 = vadd.f32 %v742, %v1019
    %1021 = vmatmul.f32.gmra.mxu0 %v567
    %v1022 = vpop.f32.mrf.mxu0
    %v1023 = vadd.f32 %v742, %v1022
    %1024 = vmatmul.f32.gmra.mxu0 %v569
    %v1025 = vpop.f32.mrf.mxu0
    %v1026 = vadd.f32 %v742, %v1025
    %1027 = vmatmul.f32.gmra.mxu0 %v571
    %v1028 = vpop.f32.mrf.mxu0
    %v1029 = vadd.f32 %v742, %v1028
    %1030 = vmatmul.f32.gmra.mxu0 %v573
    %v1031 = vpop.f32.mrf.mxu0
    %v1032 = vadd.f32 %v742, %v1031
    %1033 = vmatmul.f32.gmra.mxu0 %v575
    %v1034 = vpop.f32.mrf.mxu0
    %v1035 = vadd.f32 %v742, %v1034
    %1036 = vmatmul.f32.gmra.mxu0 %v577
    %v1037 = vpop.f32.mrf.mxu0
    %v1038 = vadd.f32 %v742, %v1037
    %1039 = vmatmul.f32.gmra.mxu0 %v579
    %v1040 = vpop.f32.mrf.mxu0
    %v1041 = vadd.f32 %v742, %v1040
    %1042 = vmatmul.f32.gmra.mxu0 %v581
    %v1043 = vpop.f32.mrf.mxu0
    %v1044 = vadd.f32 %v742, %v1043
    %1045 = vmatmul.f32.gmra.mxu0 %v583
    %v1046 = vpop.f32.mrf.mxu0
    %v1047 = vadd.f32 %v742, %v1046
    %1048 = vmatmul.f32.gmra.mxu0 %v585
    %v1049 = vpop.f32.mrf.mxu0
    %v1050 = vadd.f32 %v742, %v1049
    %1051 = vmatmul.f32.gmra.mxu0 %v587
    %v1052 = vpop.f32.mrf.mxu0
    %v1053 = vadd.f32 %v742, %v1052
    %1054 = vmatmul.f32.gmra.mxu0 %v589
    %v1055 = vpop.f32.mrf.mxu0
    %v1056 = vadd.f32 %v742, %v1055
    %1057 = vmatmul.f32.gmra.mxu0 %v591
    %v1058 = vpop.f32.mrf.mxu0
    %v1059 = vadd.f32 %v742, %v1058
    %1060 = vmatmul.f32.gmra.mxu0 %v593
    %v1061 = vpop.f32.mrf.mxu0
    %v1062 = vadd.f32 %v742, %v1061
    %1063 = vmatmul.f32.gmra.mxu0 %v595
    %v1064 = vpop.f32.mrf.mxu0
    %v1065 = vadd.f32 %v742, %v1064
    %1066 = vmatmul.f32.gmra.mxu0 %v597
    %v1067 = vpop.f32.mrf.mxu0
    %v1068 = vadd.f32 %v742, %v1067
    %1069 = vmatmul.f32.gmra.mxu0 %v599
    %v1070 = vpop.f32.mrf.mxu0
    %v1071 = vadd.f32 %v742, %v1070
    %1072 = vmatmul.f32.gmra.mxu0 %v601
    %v1073 = vpop.f32.mrf.mxu0
    %v1074 = vadd.f32 %v742, %v1073
    %1075 = vmatmul.f32.gmra.mxu0 %v603
    %v1076 = vpop.f32.mrf.mxu0
    %v1077 = vadd.f32 %v742, %v1076
    %1078 = vmatmul.f32.gmra.mxu0 %v605
    %v1079 = vpop.f32.mrf.mxu0
    %v1080 = vadd.f32 %v742, %v1079
    %1081 = vmatmul.f32.gmra.mxu0 %v607
    %v1082 = vpop.f32.mrf.mxu0
    %v1083 = vadd.f32 %v742, %v1082
    %1084 = vmatmul.f32.gmra.mxu0 %v609
    %v1085 = vpop.f32.mrf.mxu0
    %v1086 = vadd.f32 %v742, %v1085
    %1087 = vdwg.mxu0
    %1088 = vmatpush.msra.mxu0 %v736
    %1089 = vmatpush.msra.mxu0 %v732
    %1090 = vmatpush.msra.mxu0 %v728
    %1091 = vmatpush.msra.mxu0 %v724
    %1092 = vmatpush.msra.mxu0 %v720
    %1093 = vmatpush.msra.mxu0 %v716
    %1094 = vmatpush.msra.mxu0 %v712
    %1095 = vmatpush.msra.mxu0 %v708
    %1096 = vmatpush.msra.mxu0 %v704
    %1097 = vmatpush.msra.mxu0 %v700
    %1098 = vmatpush.msra.mxu0 %v696
    %1099 = vmatpush.msra.mxu0 %v692
    %1100 = vmatpush.msra.mxu0 %v688
    %1101 = vmatpush.msra.mxu0 %v684
    %1102 = vmatpush.msra.mxu0 %v680
    %1103 = vmatpush.msra.mxu0 %v676
    %1104 = vmatmul.f32.gmra.mxu0 %v548
    %v1105 = vpop.f32.mrf.mxu0
    %v1106 = vadd.f32 %v993, %v1105
    %1107 = vmatmul.f32.gmra.mxu0 %v550
    %v1108 = vpop.f32.mrf.mxu0
    %v1109 = vadd.f32 %v996, %v1108
    %1110 = vmatmul.f32.gmra.mxu0 %v552
    %v1111 = vpop.f32.mrf.mxu0
    %v1112 = vadd.f32 %v999, %v1111
    %1113 = vmatmul.f32.gmra.mxu0 %v554
    %v1114 = vpop.f32.mrf.mxu0
    %v1115 = vadd.f32 %v1002, %v1114
    %1116 = vmatmul.f32.gmra.mxu0 %v556
    %v1117 = vpop.f32.mrf.mxu0
    %v1118 = vadd.f32 %v1005, %v1117
    %1119 = vmatmul.f32.gmra.mxu0 %v558
    %v1120 = vpop.f32.mrf.mxu0
    %v1121 = vadd.f32 %v1008, %v1120
    %1122 = vmatmul.f32.gmra.mxu0 %v560
    %v1123 = vpop.f32.mrf.mxu0
    %v1124 = vadd.f32 %v1011, %v1123
    %1125 = vmatmul.f32.gmra.mxu0 %v562
    %v1126 = vpop.f32.mrf.mxu0
    %v1127 = vadd.f32 %v1014, %v1126
    %1128 = vmatmul.f32.gmra.mxu0 %v564
    %v1129 = vpop.f32.mrf.mxu0
    %v1130 = vadd.f32 %v1017, %v1129
    %1131 = vmatmul.f32.gmra.mxu0 %v566
    %v1132 = vpop.f32.mrf.mxu0
    %v1133 = vadd.f32 %v1020, %v1132
    %1134 = vmatmul.f32.gmra.mxu0 %v568
    %v1135 = vpop.f32.mrf.mxu0
    %v1136 = vadd.f32 %v1023, %v1135
    %1137 = vmatmul.f32.gmra.mxu0 %v570
    %v1138 = vpop.f32.mrf.mxu0
    %v1139 = vadd.f32 %v1026, %v1138
    %1140 = vmatmul.f32.gmra.mxu0 %v572
    %v1141 = vpop.f32.mrf.mxu0
    %v1142 = vadd.f32 %v1029, %v1141
    %1143 = vmatmul.f32.gmra.mxu0 %v574
    %v1144 = vpop.f32.mrf.mxu0
    %v1145 = vadd.f32 %v1032, %v1144
    %1146 = vmatmul.f32.gmra.mxu0 %v576
    %v1147 = vpop.f32.mrf.mxu0
    %v1148 = vadd.f32 %v1035, %v1147
    %1149 = vmatmul.f32.gmra.mxu0 %v578
    %v1150 = vpop.f32.mrf.mxu0
    %v1151 = vadd.f32 %v1038, %v1150
    %1152 = vmatmul.f32.gmra.mxu0 %v580
    %v1153 = vpop.f32.mrf.mxu0
    %v1154 = vadd.f32 %v1041, %v1153
    %1155 = vmatmul.f32.gmra.mxu0 %v582
    %v1156 = vpop.f32.mrf.mxu0
    %v1157 = vadd.f32 %v1044, %v1156
    %1158 = vmatmul.f32.gmra.mxu0 %v584
    %v1159 = vpop.f32.mrf.mxu0
    %v1160 = vadd.f32 %v1047, %v1159
    %1161 = vmatmul.f32.gmra.mxu0 %v586
    %v1162 = vpop.f32.mrf.mxu0
    %v1163 = vadd.f32 %v1050, %v1162
    %1164 = vmatmul.f32.gmra.mxu0 %v588
    %v1165 = vpop.f32.mrf.mxu0
    %v1166 = vadd.f32 %v1053, %v1165
    %1167 = vmatmul.f32.gmra.mxu0 %v590
    %v1168 = vpop.f32.mrf.mxu0
    %v1169 = vadd.f32 %v1056, %v1168
    %1170 = vmatmul.f32.gmra.mxu0 %v592
    %v1171 = vpop.f32.mrf.mxu0
    %v1172 = vadd.f32 %v1059, %v1171
    %1173 = vmatmul.f32.gmra.mxu0 %v594
    %v1174 = vpop.f32.mrf.mxu0
    %v1175 = vadd.f32 %v1062, %v1174
    %1176 = vmatmul.f32.gmra.mxu0 %v596
    %v1177 = vpop.f32.mrf.mxu0
    %v1178 = vadd.f32 %v1065, %v1177
    %1179 = vmatmul.f32.gmra.mxu0 %v598
    %v1180 = vpop.f32.mrf.mxu0
    %v1181 = vadd.f32 %v1068, %v1180
    %1182 = vmatmul.f32.gmra.mxu0 %v600
    %v1183 = vpop.f32.mrf.mxu0
    %v1184 = vadd.f32 %v1071, %v1183
    %1185 = vmatmul.f32.gmra.mxu0 %v602
    %v1186 = vpop.f32.mrf.mxu0
    %v1187 = vadd.f32 %v1074, %v1186
    %1188 = vmatmul.f32.gmra.mxu0 %v604
    %v1189 = vpop.f32.mrf.mxu0
    %v1190 = vadd.f32 %v1077, %v1189
    %1191 = vmatmul.f32.gmra.mxu0 %v606
    %v1192 = vpop.f32.mrf.mxu0
    %v1193 = vadd.f32 %v1080, %v1192
    %1194 = vmatmul.f32.gmra.mxu0 %v608
    %v1195 = vpop.f32.mrf.mxu0
    %v1196 = vadd.f32 %v1083, %v1195
    %1197 = vmatmul.f32.gmra.mxu0 %v610
    %v1198 = vpop.f32.mrf.mxu0
    %v1199 = vadd.f32 %v1086, %v1198
    %1200 = vdwg.mxu0
    %1201 = vmatpush.msra.mxu0 %v673
    %1202 = vmatpush.msra.mxu0 %v669
    %1203 = vmatpush.msra.mxu0 %v665
    %1204 = vmatpush.msra.mxu0 %v661
    %1205 = vmatpush.msra.mxu0 %v657
    %1206 = vmatpush.msra.mxu0 %v653
    %1207 = vmatpush.msra.mxu0 %v649
    %1208 = vmatpush.msra.mxu0 %v645
    %1209 = vmatpush.msra.mxu0 %v641
    %1210 = vmatpush.msra.mxu0 %v637
    %1211 = vmatpush.msra.mxu0 %v633
    %1212 = vmatpush.msra.mxu0 %v629
    %1213 = vmatpush.msra.mxu0 %v625
    %1214 = vmatpush.msra.mxu0 %v621
    %1215 = vmatpush.msra.mxu0 %v617
    %1216 = vmatpush.msra.mxu0 %v613
    %1217 = vmatmul.f32.gmra.mxu0 %v547
    %v1218 = vpop.f32.mrf.mxu0
    %v1219 = vadd.f32 %v743, %v1218
    %1220 = vmatmul.f32.gmra.mxu0 %v549
    %v1221 = vpop.f32.mrf.mxu0
    %v1222 = vadd.f32 %v743, %v1221
    %1223 = vmatmul.f32.gmra.mxu0 %v551
    %v1224 = vpop.f32.mrf.mxu0
    %v1225 = vadd.f32 %v743, %v1224
    %1226 = vmatmul.f32.gmra.mxu0 %v553
    %v1227 = vpop.f32.mrf.mxu0
    %v1228 = vadd.f32 %v743, %v1227
    %1229 = vmatmul.f32.gmra.mxu0 %v555
    %v1230 = vpop.f32.mrf.mxu0
    %v1231 = vadd.f32 %v743, %v1230
    %1232 = vmatmul.f32.gmra.mxu0 %v557
    %v1233 = vpop.f32.mrf.mxu0
    %v1234 = vadd.f32 %v743, %v1233
    %1235 = vmatmul.f32.gmra.mxu0 %v559
    %v1236 = vpop.f32.mrf.mxu0
    %v1237 = vadd.f32 %v743, %v1236
    %1238 = vmatmul.f32.gmra.mxu0 %v561
    %v1239 = vpop.f32.mrf.mxu0
    %v1240 = vadd.f32 %v743, %v1239
    %1241 = vmatmul.f32.gmra.mxu0 %v563
    %v1242 = vpop.f32.mrf.mxu0
    %v1243 = vadd.f32 %v743, %v1242
    %1244 = vmatmul.f32.gmra.mxu0 %v565
    %v1245 = vpop.f32.mrf.mxu0
    %v1246 = vadd.f32 %v743, %v1245
    %1247 = vmatmul.f32.gmra.mxu0 %v567
    %v1248 = vpop.f32.mrf.mxu0
    %v1249 = vadd.f32 %v743, %v1248
    %1250 = vmatmul.f32.gmra.mxu0 %v569
    %v1251 = vpop.f32.mrf.mxu0
    %v1252 = vadd.f32 %v743, %v1251
    %1253 = vmatmul.f32.gmra.mxu0 %v571
    %v1254 = vpop.f32.mrf.mxu0
    %v1255 = vadd.f32 %v743, %v1254
    %1256 = vmatmul.f32.gmra.mxu0 %v573
    %v1257 = vpop.f32.mrf.mxu0
    %v1258 = vadd.f32 %v743, %v1257
    %1259 = vmatmul.f32.gmra.mxu0 %v575
    %v1260 = vpop.f32.mrf.mxu0
    %v1261 = vadd.f32 %v743, %v1260
    %1262 = vmatmul.f32.gmra.mxu0 %v577
    %v1263 = vpop.f32.mrf.mxu0
    %v1264 = vadd.f32 %v743, %v1263
    %1265 = vmatmul.f32.gmra.mxu0 %v579
    %v1266 = vpop.f32.mrf.mxu0
    %v1267 = vadd.f32 %v743, %v1266
    %1268 = vmatmul.f32.gmra.mxu0 %v581
    %v1269 = vpop.f32.mrf.mxu0
    %v1270 = vadd.f32 %v743, %v1269
    %1271 = vmatmul.f32.gmra.mxu0 %v583
    %v1272 = vpop.f32.mrf.mxu0
    %v1273 = vadd.f32 %v743, %v1272
    %1274 = vmatmul.f32.gmra.mxu0 %v585
    %v1275 = vpop.f32.mrf.mxu0
    %v1276 = vadd.f32 %v743, %v1275
    %1277 = vmatmul.f32.gmra.mxu0 %v587
    %v1278 = vpop.f32.mrf.mxu0
    %v1279 = vadd.f32 %v743, %v1278
    %1280 = vmatmul.f32.gmra.mxu0 %v589
    %v1281 = vpop.f32.mrf.mxu0
    %v1282 = vadd.f32 %v743, %v1281
    %1283 = vmatmul.f32.gmra.mxu0 %v591
    %v1284 = vpop.f32.mrf.mxu0
    %v1285 = vadd.f32 %v743, %v1284
    %1286 = vmatmul.f32.gmra.mxu0 %v593
    %v1287 = vpop.f32.mrf.mxu0
    %v1288 = vadd.f32 %v743, %v1287
    %1289 = vmatmul.f32.gmra.mxu0 %v595
    %v1290 = vpop.f32.mrf.mxu0
    %v1291 = vadd.f32 %v743, %v1290
    %1292 = vmatmul.f32.gmra.mxu0 %v597
    %v1293 = vpop.f32.mrf.mxu0
    %v1294 = vadd.f32 %v743, %v1293
    %1295 = vmatmul.f32.gmra.mxu0 %v599
    %v1296 = vpop.f32.mrf.mxu0
    %v1297 = vadd.f32 %v743, %v1296
    %1298 = vmatmul.f32.gmra.mxu0 %v601
    %v1299 = vpop.f32.mrf.mxu0
    %v1300 = vadd.f32 %v743, %v1299
    %1301 = vmatmul.f32.gmra.mxu0 %v603
    %v1302 = vpop.f32.mrf.mxu0
    %v1303 = vadd.f32 %v743, %v1302
    %1304 = vmatmul.f32.gmra.mxu0 %v605
    %v1305 = vpop.f32.mrf.mxu0
    %v1306 = vadd.f32 %v743, %v1305
    %1307 = vmatmul.f32.gmra.mxu0 %v607
    %v1308 = vpop.f32.mrf.mxu0
    %v1309 = vadd.f32 %v743, %v1308
    %1310 = vmatmul.f32.gmra.mxu0 %v609
    %v1311 = vpop.f32.mrf.mxu0
    %v1312 = vadd.f32 %v743, %v1311
    %1313 = vdwg.mxu0
    %1314 = vmatpush.msra.mxu0 %v737
    %1315 = vmatpush.msra.mxu0 %v733
    %1316 = vmatpush.msra.mxu0 %v729
    %1317 = vmatpush.msra.mxu0 %v725
    %1318 = vmatpush.msra.mxu0 %v721
    %1319 = vmatpush.msra.mxu0 %v717
    %1320 = vmatpush.msra.mxu0 %v713
    %1321 = vmatpush.msra.mxu0 %v709
    %1322 = vmatpush.msra.mxu0 %v705
    %1323 = vmatpush.msra.mxu0 %v701
    %1324 = vmatpush.msra.mxu0 %v697
    %1325 = vmatpush.msra.mxu0 %v693
    %1326 = vmatpush.msra.mxu0 %v689
    %1327 = vmatpush.msra.mxu0 %v685
    %1328 = vmatpush.msra.mxu0 %v681
    %1329 = vmatpush.msra.mxu0 %v677
    %1330 = vmatmul.f32.gmra.mxu0 %v548
    %v1331 = vpop.f32.mrf.mxu0
    %v1332 = vadd.f32 %v1219, %v1331
    %1333 = vmatmul.f32.gmra.mxu0 %v550
    %v1334 = vpop.f32.mrf.mxu0
    %v1335 = vadd.f32 %v1222, %v1334
    %1336 = vmatmul.f32.gmra.mxu0 %v552
    %v1337 = vpop.f32.mrf.mxu0
    %v1338 = vadd.f32 %v1225, %v1337
    %1339 = vmatmul.f32.gmra.mxu0 %v554
    %v1340 = vpop.f32.mrf.mxu0
    %v1341 = vadd.f32 %v1228, %v1340
    %1342 = vmatmul.f32.gmra.mxu0 %v556
    %v1343 = vpop.f32.mrf.mxu0
    %v1344 = vadd.f32 %v1231, %v1343
    %1345 = vmatmul.f32.gmra.mxu0 %v558
    %v1346 = vpop.f32.mrf.mxu0
    %v1347 = vadd.f32 %v1234, %v1346
    %1348 = vmatmul.f32.gmra.mxu0 %v560
    %v1349 = vpop.f32.mrf.mxu0
    %v1350 = vadd.f32 %v1237, %v1349
    %1351 = vmatmul.f32.gmra.mxu0 %v562
    %v1352 = vpop.f32.mrf.mxu0
    %v1353 = vadd.f32 %v1240, %v1352
    %1354 = vmatmul.f32.gmra.mxu0 %v564
    %v1355 = vpop.f32.mrf.mxu0
    %v1356 = vadd.f32 %v1243, %v1355
    %1357 = vmatmul.f32.gmra.mxu0 %v566
    %v1358 = vpop.f32.mrf.mxu0
    %v1359 = vadd.f32 %v1246, %v1358
    %1360 = vmatmul.f32.gmra.mxu0 %v568
    %v1361 = vpop.f32.mrf.mxu0
    %v1362 = vadd.f32 %v1249, %v1361
    %1363 = vmatmul.f32.gmra.mxu0 %v570
    %v1364 = vpop.f32.mrf.mxu0
    %v1365 = vadd.f32 %v1252, %v1364
    %1366 = vmatmul.f32.gmra.mxu0 %v572
    %v1367 = vpop.f32.mrf.mxu0
    %v1368 = vadd.f32 %v1255, %v1367
    %1369 = vmatmul.f32.gmra.mxu0 %v574
    %v1370 = vpop.f32.mrf.mxu0
    %v1371 = vadd.f32 %v1258, %v1370
    %1372 = vmatmul.f32.gmra.mxu0 %v576
    %v1373 = vpop.f32.mrf.mxu0
    %v1374 = vadd.f32 %v1261, %v1373
    %1375 = vmatmul.f32.gmra.mxu0 %v578
    %v1376 = vpop.f32.mrf.mxu0
    %v1377 = vadd.f32 %v1264, %v1376
    %1378 = vmatmul.f32.gmra.mxu0 %v580
    %v1379 = vpop.f32.mrf.mxu0
    %v1380 = vadd.f32 %v1267, %v1379
    %1381 = vmatmul.f32.gmra.mxu0 %v582
    %v1382 = vpop.f32.mrf.mxu0
    %v1383 = vadd.f32 %v1270, %v1382
    %1384 = vmatmul.f32.gmra.mxu0 %v584
    %v1385 = vpop.f32.mrf.mxu0
    %v1386 = vadd.f32 %v1273, %v1385
    %1387 = vmatmul.f32.gmra.mxu0 %v586
    %v1388 = vpop.f32.mrf.mxu0
    %v1389 = vadd.f32 %v1276, %v1388
    %1390 = vmatmul.f32.gmra.mxu0 %v588
    %v1391 = vpop.f32.mrf.mxu0
    %v1392 = vadd.f32 %v1279, %v1391
    %1393 = vmatmul.f32.gmra.mxu0 %v590
    %v1394 = vpop.f32.mrf.mxu0
    %v1395 = vadd.f32 %v1282, %v1394
    %1396 = vmatmul.f32.gmra.mxu0 %v592
    %v1397 = vpop.f32.mrf.mxu0
    %v1398 = vadd.f32 %v1285, %v1397
    %1399 = vmatmul.f32.gmra.mxu0 %v594
    %v1400 = vpop.f32.mrf.mxu0
    %v1401 = vadd.f32 %v1288, %v1400
    %1402 = vmatmul.f32.gmra.mxu0 %v596
    %v1403 = vpop.f32.mrf.mxu0
    %v1404 = vadd.f32 %v1291, %v1403
    %1405 = vmatmul.f32.gmra.mxu0 %v598
    %v1406 = vpop.f32.mrf.mxu0
    %v1407 = vadd.f32 %v1294, %v1406
    %1408 = vmatmul.f32.gmra.mxu0 %v600
    %v1409 = vpop.f32.mrf.mxu0
    %v1410 = vadd.f32 %v1297, %v1409
    %1411 = vmatmul.f32.gmra.mxu0 %v602
    %v1412 = vpop.f32.mrf.mxu0
    %v1413 = vadd.f32 %v1300, %v1412
    %1414 = vmatmul.f32.gmra.mxu0 %v604
    %v1415 = vpop.f32.mrf.mxu0
    %v1416 = vadd.f32 %v1303, %v1415
    %1417 = vmatmul.f32.gmra.mxu0 %v606
    %v1418 = vpop.f32.mrf.mxu0
    %v1419 = vadd.f32 %v1306, %v1418
    %1420 = vmatmul.f32.gmra.mxu0 %v608
    %v1421 = vpop.f32.mrf.mxu0
    %v1422 = vadd.f32 %v1309, %v1421
    %1423 = vmatmul.f32.gmra.mxu0 %v610
    %v1424 = vpop.f32.mrf.mxu0
    %v1425 = vadd.f32 %v1312, %v1424
    %1426 = vdwg.mxu0
    %1427 = vmatpush.msra.mxu0 %v674
    %1428 = vmatpush.msra.mxu0 %v670
    %1429 = vmatpush.msra.mxu0 %v666
    %1430 = vmatpush.msra.mxu0 %v662
    %1431 = vmatpush.msra.mxu0 %v658
    %1432 = vmatpush.msra.mxu0 %v654
    %1433 = vmatpush.msra.mxu0 %v650
    %1434 = vmatpush.msra.mxu0 %v646
    %1435 = vmatpush.msra.mxu0 %v642
    %1436 = vmatpush.msra.mxu0 %v638
    %1437 = vmatpush.msra.mxu0 %v634
    %1438 = vmatpush.msra.mxu0 %v630
    %1439 = vmatpush.msra.mxu0 %v626
    %1440 = vmatpush.msra.mxu0 %v622
    %1441 = vmatpush.msra.mxu0 %v618
    %1442 = vmatpush.msra.mxu0 %v614
    %1443 = vmatmul.f32.gmra.mxu0 %v547
    %v1444 = vpop.f32.mrf.mxu0
    %v1445 = vadd.f32 %v744, %v1444
    %1446 = vmatmul.f32.gmra.mxu0 %v549
    %v1447 = vpop.f32.mrf.mxu0
    %v1448 = vadd.f32 %v744, %v1447
    %1449 = vmatmul.f32.gmra.mxu0 %v551
    %v1450 = vpop.f32.mrf.mxu0
    %v1451 = vadd.f32 %v744, %v1450
    %1452 = vmatmul.f32.gmra.mxu0 %v553
    %v1453 = vpop.f32.mrf.mxu0
    %v1454 = vadd.f32 %v744, %v1453
    %1455 = vmatmul.f32.gmra.mxu0 %v555
    %v1456 = vpop.f32.mrf.mxu0
    %v1457 = vadd.f32 %v744, %v1456
    %1458 = vmatmul.f32.gmra.mxu0 %v557
    %v1459 = vpop.f32.mrf.mxu0
    %v1460 = vadd.f32 %v744, %v1459
    %1461 = vmatmul.f32.gmra.mxu0 %v559
    %v1462 = vpop.f32.mrf.mxu0
    %v1463 = vadd.f32 %v744, %v1462
    %1464 = vmatmul.f32.gmra.mxu0 %v561
    %v1465 = vpop.f32.mrf.mxu0
    %v1466 = vadd.f32 %v744, %v1465
    %1467 = vmatmul.f32.gmra.mxu0 %v563
    %v1468 = vpop.f32.mrf.mxu0
    %v1469 = vadd.f32 %v744, %v1468
    %1470 = vmatmul.f32.gmra.mxu0 %v565
    %v1471 = vpop.f32.mrf.mxu0
    %v1472 = vadd.f32 %v744, %v1471
    %1473 = vmatmul.f32.gmra.mxu0 %v567
    %v1474 = vpop.f32.mrf.mxu0
    %v1475 = vadd.f32 %v744, %v1474
    %1476 = vmatmul.f32.gmra.mxu0 %v569
    %v1477 = vpop.f32.mrf.mxu0
    %v1478 = vadd.f32 %v744, %v1477
    %1479 = vmatmul.f32.gmra.mxu0 %v571
    %v1480 = vpop.f32.mrf.mxu0
    %v1481 = vadd.f32 %v744, %v1480
    %1482 = vmatmul.f32.gmra.mxu0 %v573
    %v1483 = vpop.f32.mrf.mxu0
    %v1484 = vadd.f32 %v744, %v1483
    %1485 = vmatmul.f32.gmra.mxu0 %v575
    %v1486 = vpop.f32.mrf.mxu0
    %v1487 = vadd.f32 %v744, %v1486
    %1488 = vmatmul.f32.gmra.mxu0 %v577
    %v1489 = vpop.f32.mrf.mxu0
    %v1490 = vadd.f32 %v744, %v1489
    %1491 = vmatmul.f32.gmra.mxu0 %v579
    %v1492 = vpop.f32.mrf.mxu0
    %v1493 = vadd.f32 %v744, %v1492
    %1494 = vmatmul.f32.gmra.mxu0 %v581
    %v1495 = vpop.f32.mrf.mxu0
    %v1496 = vadd.f32 %v744, %v1495
    %1497 = vmatmul.f32.gmra.mxu0 %v583
    %v1498 = vpop.f32.mrf.mxu0
    %v1499 = vadd.f32 %v744, %v1498
    %1500 = vmatmul.f32.gmra.mxu0 %v585
    %v1501 = vpop.f32.mrf.mxu0
    %v1502 = vadd.f32 %v744, %v1501
    %1503 = vmatmul.f32.gmra.mxu0 %v587
    %v1504 = vpop.f32.mrf.mxu0
    %v1505 = vadd.f32 %v744, %v1504
    %1506 = vmatmul.f32.gmra.mxu0 %v589
    %v1507 = vpop.f32.mrf.mxu0
    %v1508 = vadd.f32 %v744, %v1507
    %1509 = vmatmul.f32.gmra.mxu0 %v591
    %v1510 = vpop.f32.mrf.mxu0
    %v1511 = vadd.f32 %v744, %v1510
    %1512 = vmatmul.f32.gmra.mxu0 %v593
    %v1513 = vpop.f32.mrf.mxu0
    %v1514 = vadd.f32 %v744, %v1513
    %1515 = vmatmul.f32.gmra.mxu0 %v595
    %v1516 = vpop.f32.mrf.mxu0
    %v1517 = vadd.f32 %v744, %v1516
    %1518 = vmatmul.f32.gmra.mxu0 %v597
    %v1519 = vpop.f32.mrf.mxu0
    %v1520 = vadd.f32 %v744, %v1519
    %1521 = vmatmul.f32.gmra.mxu0 %v599
    %v1522 = vpop.f32.mrf.mxu0
    %v1523 = vadd.f32 %v744, %v1522
    %1524 = vmatmul.f32.gmra.mxu0 %v601
    %v1525 = vpop.f32.mrf.mxu0
    %v1526 = vadd.f32 %v744, %v1525
    %1527 = vmatmul.f32.gmra.mxu0 %v603
    %v1528 = vpop.f32.mrf.mxu0
    %v1529 = vadd.f32 %v744, %v1528
    %1530 = vmatmul.f32.gmra.mxu0 %v605
    %v1531 = vpop.f32.mrf.mxu0
    %v1532 = vadd.f32 %v744, %v1531
    %1533 = vmatmul.f32.gmra.mxu0 %v607
    %v1534 = vpop.f32.mrf.mxu0
    %v1535 = vadd.f32 %v744, %v1534
    %1536 = vmatmul.f32.gmra.mxu0 %v609
    %v1537 = vpop.f32.mrf.mxu0
    %v1538 = vadd.f32 %v744, %v1537
    %1539 = vdwg.mxu0
    %1540 = vmatpush.msra.mxu0 %v738
    %1541 = vmatpush.msra.mxu0 %v734
    %1542 = vmatpush.msra.mxu0 %v730
    %1543 = vmatpush.msra.mxu0 %v726
    %1544 = vmatpush.msra.mxu0 %v722
    %1545 = vmatpush.msra.mxu0 %v718
    %1546 = vmatpush.msra.mxu0 %v714
    %1547 = vmatpush.msra.mxu0 %v710
    %1548 = vmatpush.msra.mxu0 %v706
    %1549 = vmatpush.msra.mxu0 %v702
    %1550 = vmatpush.msra.mxu0 %v698
    %1551 = vmatpush.msra.mxu0 %v694
    %1552 = vmatpush.msra.mxu0 %v690
    %1553 = vmatpush.msra.mxu0 %v686
    %1554 = vmatpush.msra.mxu0 %v682
    %1555 = vmatpush.msra.mxu0 %v678
    %1556 = vmatmul.f32.gmra.mxu0 %v548
    %v1557 = vpop.f32.mrf.mxu0
    %v1558 = vadd.f32 %v1445, %v1557
    %1559 = vmatmul.f32.gmra.mxu0 %v550
    %v1560 = vpop.f32.mrf.mxu0
    %v1561 = vadd.f32 %v1448, %v1560
    %1562 = vmatmul.f32.gmra.mxu0 %v552
    %v1563 = vpop.f32.mrf.mxu0
    %v1564 = vadd.f32 %v1451, %v1563
    %1565 = vmatmul.f32.gmra.mxu0 %v554
    %v1566 = vpop.f32.mrf.mxu0
    %v1567 = vadd.f32 %v1454, %v1566
    %1568 = vmatmul.f32.gmra.mxu0 %v556
    %v1569 = vpop.f32.mrf.mxu0
    %v1570 = vadd.f32 %v1457, %v1569
    %1571 = vmatmul.f32.gmra.mxu0 %v558
    %v1572 = vpop.f32.mrf.mxu0
    %v1573 = vadd.f32 %v1460, %v1572
    %1574 = vmatmul.f32.gmra.mxu0 %v560
    %v1575 = vpop.f32.mrf.mxu0
    %v1576 = vadd.f32 %v1463, %v1575
    %1577 = vmatmul.f32.gmra.mxu0 %v562
    %v1578 = vpop.f32.mrf.mxu0
    %v1579 = vadd.f32 %v1466, %v1578
    %1580 = vmatmul.f32.gmra.mxu0 %v564
    %v1581 = vpop.f32.mrf.mxu0
    %v1582 = vadd.f32 %v1469, %v1581
    %1583 = vmatmul.f32.gmra.mxu0 %v566
    %v1584 = vpop.f32.mrf.mxu0
    %v1585 = vadd.f32 %v1472, %v1584
    %1586 = vmatmul.f32.gmra.mxu0 %v568
    %v1587 = vpop.f32.mrf.mxu0
    %v1588 = vadd.f32 %v1475, %v1587
    %1589 = vmatmul.f32.gmra.mxu0 %v570
    %v1590 = vpop.f32.mrf.mxu0
    %v1591 = vadd.f32 %v1478, %v1590
    %1592 = vmatmul.f32.gmra.mxu0 %v572
    %v1593 = vpop.f32.mrf.mxu0
    %v1594 = vadd.f32 %v1481, %v1593
    %1595 = vmatmul.f32.gmra.mxu0 %v574
    %v1596 = vpop.f32.mrf.mxu0
    %v1597 = vadd.f32 %v1484, %v1596
    %1598 = vmatmul.f32.gmra.mxu0 %v576
    %v1599 = vpop.f32.mrf.mxu0
    %v1600 = vadd.f32 %v1487, %v1599
    %1601 = vmatmul.f32.gmra.mxu0 %v578
    %v1602 = vpop.f32.mrf.mxu0
    %v1603 = vadd.f32 %v1490, %v1602
    %1604 = vmatmul.f32.gmra.mxu0 %v580
    %v1605 = vpop.f32.mrf.mxu0
    %v1606 = vadd.f32 %v1493, %v1605
    %1607 = vmatmul.f32.gmra.mxu0 %v582
    %v1608 = vpop.f32.mrf.mxu0
    %v1609 = vadd.f32 %v1496, %v1608
    %1610 = vmatmul.f32.gmra.mxu0 %v584
    %v1611 = vpop.f32.mrf.mxu0
    %v1612 = vadd.f32 %v1499, %v1611
    %1613 = vmatmul.f32.gmra.mxu0 %v586
    %v1614 = vpop.f32.mrf.mxu0
    %v1615 = vadd.f32 %v1502, %v1614
    %1616 = vmatmul.f32.gmra.mxu0 %v588
    %v1617 = vpop.f32.mrf.mxu0
    %v1618 = vadd.f32 %v1505, %v1617
    %1619 = vmatmul.f32.gmra.mxu0 %v590
    %v1620 = vpop.f32.mrf.mxu0
    %v1621 = vadd.f32 %v1508, %v1620
    %1622 = vmatmul.f32.gmra.mxu0 %v592
    %v1623 = vpop.f32.mrf.mxu0
    %v1624 = vadd.f32 %v1511, %v1623
    %1625 = vmatmul.f32.gmra.mxu0 %v594
    %v1626 = vpop.f32.mrf.mxu0
    %v1627 = vadd.f32 %v1514, %v1626
    %1628 = vmatmul.f32.gmra.mxu0 %v596
    %v1629 = vpop.f32.mrf.mxu0
    %v1630 = vadd.f32 %v1517, %v1629
    %1631 = vmatmul.f32.gmra.mxu0 %v598
    %v1632 = vpop.f32.mrf.mxu0
    %v1633 = vadd.f32 %v1520, %v1632
    %1634 = vmatmul.f32.gmra.mxu0 %v600
    %v1635 = vpop.f32.mrf.mxu0
    %v1636 = vadd.f32 %v1523, %v1635
    %1637 = vmatmul.f32.gmra.mxu0 %v602
    %v1638 = vpop.f32.mrf.mxu0
    %v1639 = vadd.f32 %v1526, %v1638
    %1640 = vmatmul.f32.gmra.mxu0 %v604
    %v1641 = vpop.f32.mrf.mxu0
    %v1642 = vadd.f32 %v1529, %v1641
    %1643 = vmatmul.f32.gmra.mxu0 %v606
    %v1644 = vpop.f32.mrf.mxu0
    %v1645 = vadd.f32 %v1532, %v1644
    %1646 = vmatmul.f32.gmra.mxu0 %v608
    %v1647 = vpop.f32.mrf.mxu0
    %v1648 = vadd.f32 %v1535, %v1647
    %1649 = vmatmul.f32.gmra.mxu0 %v610
    %v1650 = vpop.f32.mrf.mxu0
    %v1651 = vadd.f32 %v1538, %v1650
    %1652 = vdwg.mxu0
    %v1653 = vmax.f32 %v880, 0.0
    %v1654 = vmax.f32 %v1106, 0.0
    %v1655 = vmax.f32 %v1332, 0.0
    %v1656 = vmax.f32 %v1558, 0.0
    %v1657 = vmax.f32 %v883, 0.0
    %v1658 = vmax.f32 %v1109, 0.0
    %v1659 = vmax.f32 %v1335, 0.0
    %v1660 = vmax.f32 %v1561, 0.0
    %v1661 = vmax.f32 %v886, 0.0
    %v1662 = vmax.f32 %v1112, 0.0
    %v1663 = vmax.f32 %v1338, 0.0
    %v1664 = vmax.f32 %v1564, 0.0
    %v1665 = vmax.f32 %v889, 0.0
    %v1666 = vmax.f32 %v1115, 0.0
    %v1667 = vmax.f32 %v1341, 0.0
    %v1668 = vmax.f32 %v1567, 0.0
    %v1669 = vmax.f32 %v892, 0.0
    %v1670 = vmax.f32 %v1118, 0.0
    %v1671 = vmax.f32 %v1344, 0.0
    %v1672 = vmax.f32 %v1570, 0.0
    %v1673 = vmax.f32 %v895, 0.0
    %v1674 = vmax.f32 %v1121, 0.0
    %v1675 = vmax.f32 %v1347, 0.0
    %v1676 = vmax.f32 %v1573, 0.0
    %v1677 = vmax.f32 %v898, 0.0
    %v1678 = vmax.f32 %v1124, 0.0
    %v1679 = vmax.f32 %v1350, 0.0
    %v1680 = vmax.f32 %v1576, 0.0
    %v1681 = vmax.f32 %v901, 0.0
    %v1682 = vmax.f32 %v1127, 0.0
    %v1683 = vmax.f32 %v1353, 0.0
    %v1684 = vmax.f32 %v1579, 0.0
    %v1685 = vmax.f32 %v904, 0.0
    %v1686 = vmax.f32 %v1130, 0.0
    %v1687 = vmax.f32 %v1356, 0.0
    %v1688 = vmax.f32 %v1582, 0.0
    %v1689 = vmax.f32 %v907, 0.0
    %v1690 = vmax.f32 %v1133, 0.0
    %v1691 = vmax.f32 %v1359, 0.0
    %v1692 = vmax.f32 %v1585, 0.0
    %v1693 = vmax.f32 %v910, 0.0
    %v1694 = vmax.f32 %v1136, 0.0
    %v1695 = vmax.f32 %v1362, 0.0
    %v1696 = vmax.f32 %v1588, 0.0
    %v1697 = vmax.f32 %v913, 0.0
    %v1698 = vmax.f32 %v1139, 0.0
    %v1699 = vmax.f32 %v1365, 0.0
    %v1700 = vmax.f32 %v1591, 0.0
    %v1701 = vmax.f32 %v916, 0.0
    %v1702 = vmax.f32 %v1142, 0.0
    %v1703 = vmax.f32 %v1368, 0.0
    %v1704 = vmax.f32 %v1594, 0.0
    %v1705 = vmax.f32 %v919, 0.0
    %v1706 = vmax.f32 %v1145, 0.0
    %v1707 = vmax.f32 %v1371, 0.0
    %v1708 = vmax.f32 %v1597, 0.0
    %v1709 = vmax.f32 %v922, 0.0
    %v1710 = vmax.f32 %v1148, 0.0
    %v1711 = vmax.f32 %v1374, 0.0
    %v1712 = vmax.f32 %v1600, 0.0
    %v1713 = vmax.f32 %v925, 0.0
    %v1714 = vmax.f32 %v1151, 0.0
    %v1715 = vmax.f32 %v1377, 0.0
    %v1716 = vmax.f32 %v1603, 0.0
    %v1717 = vmax.f32 %v928, 0.0
    %v1718 = vmax.f32 %v1154, 0.0
    %v1719 = vmax.f32 %v1380, 0.0
    %v1720 = vmax.f32 %v1606, 0.0
    %v1721 = vmax.f32 %v931, 0.0
    %v1722 = vmax.f32 %v1157, 0.0
    %v1723 = vmax.f32 %v1383, 0.0
    %v1724 = vmax.f32 %v1609, 0.0
    %v1725 = vmax.f32 %v934, 0.0
    %v1726 = vmax.f32 %v1160, 0.0
    %v1727 = vmax.f32 %v1386, 0.0
    %v1728 = vmax.f32 %v1612, 0.0
    %v1729 = vmax.f32 %v937, 0.0
    %v1730 = vmax.f32 %v1163, 0.0
    %v1731 = vmax.f32 %v1389, 0.0
    %v1732 = vmax.f32 %v1615, 0.0
    %v1733 = vmax.f32 %v940, 0.0
    %v1734 = vmax.f32 %v1166, 0.0
    %v1735 = vmax.f32 %v1392, 0.0
    %v1736 = vmax.f32 %v1618, 0.0
    %v1737 = vmax.f32 %v943, 0.0
    %v1738 = vmax.f32 %v1169, 0.0
    %v1739 = vmax.f32 %v1395, 0.0
    %v1740 = vmax.f32 %v1621, 0.0
    %v1741 = vmax.f32 %v946, 0.0
    %v1742 = vmax.f32 %v1172, 0.0
    %v1743 = vmax.f32 %v1398, 0.0
    %v1744 = vmax.f32 %v1624, 0.0
    %v1745 = vmax.f32 %v949, 0.0
    %v1746 = vmax.f32 %v1175, 0.0
    %v1747 = vmax.f32 %v1401, 0.0
    %v1748 = vmax.f32 %v1627, 0.0
    %v1749 = vmax.f32 %v952, 0.0
    %v1750 = vmax.f32 %v1178, 0.0
    %v1751 = vmax.f32 %v1404, 0.0
    %v1752 = vmax.f32 %v1630, 0.0
    %v1753 = vmax.f32 %v955, 0.0
    %v1754 = vmax.f32 %v1181, 0.0
    %v1755 = vmax.f32 %v1407, 0.0
    %v1756 = vmax.f32 %v1633, 0.0
    %v1757 = vmax.f32 %v958, 0.0
    %v1758 = vmax.f32 %v1184, 0.0
    %v1759 = vmax.f32 %v1410, 0.0
    %v1760 = vmax.f32 %v1636, 0.0
    %v1761 = vmax.f32 %v961, 0.0
    %v1762 = vmax.f32 %v1187, 0.0
    %v1763 = vmax.f32 %v1413, 0.0
    %v1764 = vmax.f32 %v1639, 0.0
    %v1765 = vmax.f32 %v964, 0.0
    %v1766 = vmax.f32 %v1190, 0.0
    %v1767 = vmax.f32 %v1416, 0.0
    %v1768 = vmax.f32 %v1642, 0.0
    %v1769 = vmax.f32 %v967, 0.0
    %v1770 = vmax.f32 %v1193, 0.0
    %v1771 = vmax.f32 %v1419, 0.0
    %v1772 = vmax.f32 %v1645, 0.0
    %v1773 = vmax.f32 %v970, 0.0
    %v1774 = vmax.f32 %v1196, 0.0
    %v1775 = vmax.f32 %v1422, 0.0
    %v1776 = vmax.f32 %v1648, 0.0
    %v1777 = vmax.f32 %v973, 0.0
    %v1778 = vmax.f32 %v1199, 0.0
    %v1779 = vmax.f32 %v1425, 0.0
    %v1780 = vmax.f32 %v1651, 0.0
    %v1781 = vld [vmem:[#allocation5] sm:$0xff]
    %v1782 = vld [vmem:[#allocation5 + $0x8] sm:$0xff]
    %v1783 = vld [vmem:[#allocation5 + $0x10] sm:$0xff]
    %v1784 = vld [vmem:[#allocation5 + $0x18] sm:$0xff]
    %v1785 = vld [vmem:[#allocation5 + $0x20] sm:$0xff]
    %v1786 = vld [vmem:[#allocation5 + $0x28] sm:$0xff]
    %v1787 = vld [vmem:[#allocation5 + $0x30] sm:$0xff]
    %v1788 = vld [vmem:[#allocation5 + $0x38] sm:$0xff]
    %v1789 = vld [vmem:[#allocation5 + $0x40] sm:$0xff]
    %v1790 = vld [vmem:[#allocation5 + $0x48] sm:$0xff]
    %v1791 = vld [vmem:[#allocation5 + $0x50] sm:$0xff]
    %v1792 = vld [vmem:[#allocation5 + $0x58] sm:$0xff]
    %v1793 = vld [vmem:[#allocation5 + $0x60] sm:$0xff]
    %v1794 = vld [vmem:[#allocation5 + $0x68] sm:$0xff]
    %v1795 = vld [vmem:[#allocation5 + $0x70] sm:$0xff]
    %v1796 = vld [vmem:[#allocation5 + $0x78] sm:$0xff]
    %v1797 = vld [vmem:[#allocation5 + $0x80] sm:$0xff]
    %v1798 = vld [vmem:[#allocation5 + $0x88] sm:$0xff]
    %v1799 = vld [vmem:[#allocation5 + $0x90] sm:$0xff]
    %v1800 = vld [vmem:[#allocation5 + $0x98] sm:$0xff]
    %v1801 = vld [vmem:[#allocation5 + $0xa0] sm:$0xff]
    %v1802 = vld [vmem:[#allocation5 + $0xa8] sm:$0xff]
    %v1803 = vld [vmem:[#allocation5 + $0xb0] sm:$0xff]
    %v1804 = vld [vmem:[#allocation5 + $0xb8] sm:$0xff]
    %v1805 = vld [vmem:[#allocation5 + $0xc0] sm:$0xff]
    %v1806 = vld [vmem:[#allocation5 + $0xc8] sm:$0xff]
    %v1807 = vld [vmem:[#allocation5 + $0xd0] sm:$0xff]
    %v1808 = vld [vmem:[#allocation5 + $0xd8] sm:$0xff]
    %v1809 = vld [vmem:[#allocation5 + $0xe0] sm:$0xff]
    %v1810 = vld [vmem:[#allocation5 + $0xe8] sm:$0xff]
    %v1811 = vld [vmem:[#allocation5 + $0xf0] sm:$0xff]
    %v1812 = vld [vmem:[#allocation5 + $0xf8] sm:$0xff]
    %v1813 = vld [vmem:[#allocation5 + $0x100] sm:$0xff]
    %v1814 = vld [vmem:[#allocation5 + $0x108] sm:$0xff]
    %v1815 = vld [vmem:[#allocation5 + $0x110] sm:$0xff]
    %v1816 = vld [vmem:[#allocation5 + $0x118] sm:$0xff]
    %v1817 = vld [vmem:[#allocation5 + $0x120] sm:$0xff]
    %v1818 = vld [vmem:[#allocation5 + $0x128] sm:$0xff]
    %v1819 = vld [vmem:[#allocation5 + $0x130] sm:$0xff]
    %v1820 = vld [vmem:[#allocation5 + $0x138] sm:$0xff]
    %v1821 = vld [vmem:[#allocation5 + $0x140] sm:$0xff]
    %v1822 = vld [vmem:[#allocation5 + $0x148] sm:$0xff]
    %v1823 = vld [vmem:[#allocation5 + $0x150] sm:$0xff]
    %v1824 = vld [vmem:[#allocation5 + $0x158] sm:$0xff]
    %v1825 = vld [vmem:[#allocation5 + $0x160] sm:$0xff]
    %v1826 = vld [vmem:[#allocation5 + $0x168] sm:$0xff]
    %v1827 = vld [vmem:[#allocation5 + $0x170] sm:$0xff]
    %v1828 = vld [vmem:[#allocation5 + $0x178] sm:$0xff]
    %v1829 = vld [vmem:[#allocation5 + $0x180] sm:$0xff]
    %v1830 = vld [vmem:[#allocation5 + $0x188] sm:$0xff]
    %v1831 = vld [vmem:[#allocation5 + $0x190] sm:$0xff]
    %v1832 = vld [vmem:[#allocation5 + $0x198] sm:$0xff]
    %v1833 = vld [vmem:[#allocation5 + $0x1a0] sm:$0xff]
    %v1834 = vld [vmem:[#allocation5 + $0x1a8] sm:$0xff]
    %v1835 = vld [vmem:[#allocation5 + $0x1b0] sm:$0xff]
    %v1836 = vld [vmem:[#allocation5 + $0x1b8] sm:$0xff]
    %v1837 = vld [vmem:[#allocation5 + $0x1c0] sm:$0xff]
    %v1838 = vld [vmem:[#allocation5 + $0x1c8] sm:$0xff]
    %v1839 = vld [vmem:[#allocation5 + $0x1d0] sm:$0xff]
    %v1840 = vld [vmem:[#allocation5 + $0x1d8] sm:$0xff]
    %v1841 = vld [vmem:[#allocation5 + $0x1e0] sm:$0xff]
    %v1842 = vld [vmem:[#allocation5 + $0x1e8] sm:$0xff]
    %v1843 = vld [vmem:[#allocation5 + $0x1f0] sm:$0xff]
    %v1844 = vld [vmem:[#allocation5 + $0x1f8] sm:$0xff]
    %v1845 = vld [vmem:[#allocation5 + $0x200] sm:$0xff]
    %v1846 = vld [vmem:[#allocation5 + $0x208] sm:$0xff]
    %v1847 = vld [vmem:[#allocation5 + $0x210] sm:$0xff]
    %v1848 = vld [vmem:[#allocation5 + $0x218] sm:$0xff]
    %v1849 = vld [vmem:[#allocation5 + $0x220] sm:$0xff]
    %v1850 = vld [vmem:[#allocation5 + $0x228] sm:$0xff]
    %v1851 = vld [vmem:[#allocation5 + $0x230] sm:$0xff]
    %v1852 = vld [vmem:[#allocation5 + $0x238] sm:$0xff]
    %v1853 = vld [vmem:[#allocation5 + $0x240] sm:$0xff]
    %v1854 = vld [vmem:[#allocation5 + $0x248] sm:$0xff]
    %v1855 = vld [vmem:[#allocation5 + $0x250] sm:$0xff]
    %v1856 = vld [vmem:[#allocation5 + $0x258] sm:$0xff]
    %v1857 = vld [vmem:[#allocation5 + $0x260] sm:$0xff]
    %v1858 = vld [vmem:[#allocation5 + $0x268] sm:$0xff]
    %v1859 = vld [vmem:[#allocation5 + $0x270] sm:$0xff]
    %v1860 = vld [vmem:[#allocation5 + $0x278] sm:$0xff]
    %v1861 = vld [vmem:[#allocation5 + $0x280] sm:$0xff]
    %v1862 = vld [vmem:[#allocation5 + $0x288] sm:$0xff]
    %v1863 = vld [vmem:[#allocation5 + $0x290] sm:$0xff]
    %v1864 = vld [vmem:[#allocation5 + $0x298] sm:$0xff]
    %v1865 = vld [vmem:[#allocation5 + $0x2a0] sm:$0xff]
    %v1866 = vld [vmem:[#allocation5 + $0x2a8] sm:$0xff]
    %v1867 = vld [vmem:[#allocation5 + $0x2b0] sm:$0xff]
    %v1868 = vld [vmem:[#allocation5 + $0x2b8] sm:$0xff]
    %v1869 = vld [vmem:[#allocation5 + $0x2c0] sm:$0xff]
    %v1870 = vld [vmem:[#allocation5 + $0x2c8] sm:$0xff]
    %v1871 = vld [vmem:[#allocation5 + $0x2d0] sm:$0xff]
    %v1872 = vld [vmem:[#allocation5 + $0x2d8] sm:$0xff]
    %v1873 = vld [vmem:[#allocation5 + $0x2e0] sm:$0xff]
    %v1874 = vld [vmem:[#allocation5 + $0x2e8] sm:$0xff]
    %v1875 = vld [vmem:[#allocation5 + $0x2f0] sm:$0xff]
    %v1876 = vld [vmem:[#allocation5 + $0x2f8] sm:$0xff]
    %v1877 = vld [vmem:[#allocation5 + $0x300] sm:$0xff]
    %v1878 = vld [vmem:[#allocation5 + $0x308] sm:$0xff]
    %v1879 = vld [vmem:[#allocation5 + $0x310] sm:$0xff]
    %v1880 = vld [vmem:[#allocation5 + $0x318] sm:$0xff]
    %v1881 = vld [vmem:[#allocation5 + $0x320] sm:$0xff]
    %v1882 = vld [vmem:[#allocation5 + $0x328] sm:$0xff]
    %v1883 = vld [vmem:[#allocation5 + $0x330] sm:$0xff]
    %v1884 = vld [vmem:[#allocation5 + $0x338] sm:$0xff]
    %v1885 = vld [vmem:[#allocation5 + $0x340] sm:$0xff]
    %v1886 = vld [vmem:[#allocation5 + $0x348] sm:$0xff]
    %v1887 = vld [vmem:[#allocation5 + $0x350] sm:$0xff]
    %v1888 = vld [vmem:[#allocation5 + $0x358] sm:$0xff]
    %v1889 = vld [vmem:[#allocation5 + $0x360] sm:$0xff]
    %v1890 = vld [vmem:[#allocation5 + $0x368] sm:$0xff]
    %v1891 = vld [vmem:[#allocation5 + $0x370] sm:$0xff]
    %v1892 = vld [vmem:[#allocation5 + $0x378] sm:$0xff]
    %v1893 = vld [vmem:[#allocation5 + $0x380] sm:$0xff]
    %v1894 = vld [vmem:[#allocation5 + $0x388] sm:$0xff]
    %v1895 = vld [vmem:[#allocation5 + $0x390] sm:$0xff]
    %v1896 = vld [vmem:[#allocation5 + $0x398] sm:$0xff]
    %v1897 = vld [vmem:[#allocation5 + $0x3a0] sm:$0xff]
    %v1898 = vld [vmem:[#allocation5 + $0x3a8] sm:$0xff]
    %v1899 = vld [vmem:[#allocation5 + $0x3b0] sm:$0xff]
    %v1900 = vld [vmem:[#allocation5 + $0x3b8] sm:$0xff]
    %v1901 = vld [vmem:[#allocation5 + $0x3c0] sm:$0xff]
    %v1902 = vld [vmem:[#allocation5 + $0x3c8] sm:$0xff]
    %v1903 = vld [vmem:[#allocation5 + $0x3d0] sm:$0xff]
    %v1904 = vld [vmem:[#allocation5 + $0x3d8] sm:$0xff]
    %v1905 = vld [vmem:[#allocation5 + $0x3e0] sm:$0xff]
    %v1906 = vld [vmem:[#allocation5 + $0x3e8] sm:$0xff]
    %v1907 = vld [vmem:[#allocation5 + $0x3f0] sm:$0xff]
    %v1908 = vld [vmem:[#allocation5 + $0x3f8] sm:$0xff]
    %v1909 = vld [vmem:[#allocation5 + $0x400] sm:$0xff]
    %v1910 = vld [vmem:[#allocation5 + $0x408] sm:$0xff]
    %v1911 = vld [vmem:[#allocation5 + $0x410] sm:$0xff]
    %v1912 = vld [vmem:[#allocation5 + $0x418] sm:$0xff]
    %v1913 = vld [vmem:[#allocation5 + $0x420] sm:$0xff]
    %v1914 = vld [vmem:[#allocation5 + $0x428] sm:$0xff]
    %v1915 = vld [vmem:[#allocation5 + $0x430] sm:$0xff]
    %v1916 = vld [vmem:[#allocation5 + $0x438] sm:$0xff]
    %v1917 = vld [vmem:[#allocation5 + $0x440] sm:$0xff]
    %v1918 = vld [vmem:[#allocation5 + $0x448] sm:$0xff]
    %v1919 = vld [vmem:[#allocation5 + $0x450] sm:$0xff]
    %v1920 = vld [vmem:[#allocation5 + $0x458] sm:$0xff]
    %v1921 = vld [vmem:[#allocation5 + $0x460] sm:$0xff]
    %v1922 = vld [vmem:[#allocation5 + $0x468] sm:$0xff]
    %v1923 = vld [vmem:[#allocation5 + $0x470] sm:$0xff]
    %v1924 = vld [vmem:[#allocation5 + $0x478] sm:$0xff]
    %v1925 = vld [vmem:[#allocation5 + $0x480] sm:$0xff]
    %v1926 = vld [vmem:[#allocation5 + $0x488] sm:$0xff]
    %v1927 = vld [vmem:[#allocation5 + $0x490] sm:$0xff]
    %v1928 = vld [vmem:[#allocation5 + $0x498] sm:$0xff]
    %v1929 = vld [vmem:[#allocation5 + $0x4a0] sm:$0xff]
    %v1930 = vld [vmem:[#allocation5 + $0x4a8] sm:$0xff]
    %v1931 = vld [vmem:[#allocation5 + $0x4b0] sm:$0xff]
    %v1932 = vld [vmem:[#allocation5 + $0x4b8] sm:$0xff]
    %v1933 = vld [vmem:[#allocation5 + $0x4c0] sm:$0xff]
    %v1934 = vld [vmem:[#allocation5 + $0x4c8] sm:$0xff]
    %v1935 = vld [vmem:[#allocation5 + $0x4d0] sm:$0xff]
    %v1936 = vld [vmem:[#allocation5 + $0x4d8] sm:$0xff]
    %v1937 = vld [vmem:[#allocation5 + $0x4e0] sm:$0xff]
    %v1938 = vld [vmem:[#allocation5 + $0x4e8] sm:$0xff]
    %v1939 = vld [vmem:[#allocation5 + $0x4f0] sm:$0xff]
    %v1940 = vld [vmem:[#allocation5 + $0x4f8] sm:$0xff]
    %v1941 = vld [vmem:[#allocation5 + $0x500] sm:$0xff]
    %v1942 = vld [vmem:[#allocation5 + $0x508] sm:$0xff]
    %v1943 = vld [vmem:[#allocation5 + $0x510] sm:$0xff]
    %v1944 = vld [vmem:[#allocation5 + $0x518] sm:$0xff]
    %v1945 = vld [vmem:[#allocation5 + $0x520] sm:$0xff]
    %v1946 = vld [vmem:[#allocation5 + $0x528] sm:$0xff]
    %v1947 = vld [vmem:[#allocation5 + $0x530] sm:$0xff]
    %v1948 = vld [vmem:[#allocation5 + $0x538] sm:$0xff]
    %v1949 = vld [vmem:[#allocation5 + $0x540] sm:$0xff]
    %v1950 = vld [vmem:[#allocation5 + $0x548] sm:$0xff]
    %v1951 = vld [vmem:[#allocation5 + $0x550] sm:$0xff]
    %v1952 = vld [vmem:[#allocation5 + $0x558] sm:$0xff]
    %v1953 = vld [vmem:[#allocation5 + $0x560] sm:$0xff]
    %v1954 = vld [vmem:[#allocation5 + $0x568] sm:$0xff]
    %v1955 = vld [vmem:[#allocation5 + $0x570] sm:$0xff]
    %v1956 = vld [vmem:[#allocation5 + $0x578] sm:$0xff]
    %v1957 = vld [vmem:[#allocation5 + $0x580] sm:$0xff]
    %v1958 = vld [vmem:[#allocation5 + $0x588] sm:$0xff]
    %v1959 = vld [vmem:[#allocation5 + $0x590] sm:$0xff]
    %v1960 = vld [vmem:[#allocation5 + $0x598] sm:$0xff]
    %v1961 = vld [vmem:[#allocation5 + $0x5a0] sm:$0xff]
    %v1962 = vld [vmem:[#allocation5 + $0x5a8] sm:$0xff]
    %v1963 = vld [vmem:[#allocation5 + $0x5b0] sm:$0xff]
    %v1964 = vld [vmem:[#allocation5 + $0x5b8] sm:$0xff]
    %v1965 = vld [vmem:[#allocation5 + $0x5c0] sm:$0xff]
    %v1966 = vld [vmem:[#allocation5 + $0x5c8] sm:$0xff]
    %v1967 = vld [vmem:[#allocation5 + $0x5d0] sm:$0xff]
    %v1968 = vld [vmem:[#allocation5 + $0x5d8] sm:$0xff]
    %v1969 = vld [vmem:[#allocation5 + $0x5e0] sm:$0xff]
    %v1970 = vld [vmem:[#allocation5 + $0x5e8] sm:$0xff]
    %v1971 = vld [vmem:[#allocation5 + $0x5f0] sm:$0xff]
    %v1972 = vld [vmem:[#allocation5 + $0x5f8] sm:$0xff]
    %v1973 = vld [vmem:[#allocation5 + $0x600] sm:$0xff]
    %v1974 = vld [vmem:[#allocation5 + $0x608] sm:$0xff]
    %v1975 = vld [vmem:[#allocation5 + $0x610] sm:$0xff]
    %v1976 = vld [vmem:[#allocation5 + $0x618] sm:$0xff]
    %v1977 = vld [vmem:[#allocation5 + $0x620] sm:$0xff]
    %v1978 = vld [vmem:[#allocation5 + $0x628] sm:$0xff]
    %v1979 = vld [vmem:[#allocation5 + $0x630] sm:$0xff]
    %v1980 = vld [vmem:[#allocation5 + $0x638] sm:$0xff]
    %v1981 = vld [vmem:[#allocation5 + $0x640] sm:$0xff]
    %v1982 = vld [vmem:[#allocation5 + $0x648] sm:$0xff]
    %v1983 = vld [vmem:[#allocation5 + $0x650] sm:$0xff]
    %v1984 = vld [vmem:[#allocation5 + $0x658] sm:$0xff]
    %v1985 = vld [vmem:[#allocation5 + $0x660] sm:$0xff]
    %v1986 = vld [vmem:[#allocation5 + $0x668] sm:$0xff]
    %v1987 = vld [vmem:[#allocation5 + $0x670] sm:$0xff]
    %v1988 = vld [vmem:[#allocation5 + $0x678] sm:$0xff]
    %v1989 = vld [vmem:[#allocation5 + $0x680] sm:$0xff]
    %v1990 = vld [vmem:[#allocation5 + $0x688] sm:$0xff]
    %v1991 = vld [vmem:[#allocation5 + $0x690] sm:$0xff]
    %v1992 = vld [vmem:[#allocation5 + $0x698] sm:$0xff]
    %v1993 = vld [vmem:[#allocation5 + $0x6a0] sm:$0xff]
    %v1994 = vld [vmem:[#allocation5 + $0x6a8] sm:$0xff]
    %v1995 = vld [vmem:[#allocation5 + $0x6b0] sm:$0xff]
    %v1996 = vld [vmem:[#allocation5 + $0x6b8] sm:$0xff]
    %v1997 = vld [vmem:[#allocation5 + $0x6c0] sm:$0xff]
    %v1998 = vld [vmem:[#allocation5 + $0x6c8] sm:$0xff]
    %v1999 = vld [vmem:[#allocation5 + $0x6d0] sm:$0xff]
    %v2000 = vld [vmem:[#allocation5 + $0x6d8] sm:$0xff]
    %v2001 = vld [vmem:[#allocation5 + $0x6e0] sm:$0xff]
    %v2002 = vld [vmem:[#allocation5 + $0x6e8] sm:$0xff]
    %v2003 = vld [vmem:[#allocation5 + $0x6f0] sm:$0xff]
    %v2004 = vld [vmem:[#allocation5 + $0x6f8] sm:$0xff]
    %v2005 = vld [vmem:[#allocation5 + $0x700] sm:$0xff]
    %v2006 = vld [vmem:[#allocation5 + $0x708] sm:$0xff]
    %v2007 = vld [vmem:[#allocation5 + $0x710] sm:$0xff]
    %v2008 = vld [vmem:[#allocation5 + $0x718] sm:$0xff]
    %v2009 = vld [vmem:[#allocation5 + $0x720] sm:$0xff]
    %v2010 = vld [vmem:[#allocation5 + $0x728] sm:$0xff]
    %v2011 = vld [vmem:[#allocation5 + $0x730] sm:$0xff]
    %v2012 = vld [vmem:[#allocation5 + $0x738] sm:$0xff]
    %v2013 = vld [vmem:[#allocation5 + $0x740] sm:$0xff]
    %v2014 = vld [vmem:[#allocation5 + $0x748] sm:$0xff]
    %v2015 = vld [vmem:[#allocation5 + $0x750] sm:$0xff]
    %v2016 = vld [vmem:[#allocation5 + $0x758] sm:$0xff]
    %v2017 = vld [vmem:[#allocation5 + $0x760] sm:$0xff]
    %v2018 = vld [vmem:[#allocation5 + $0x768] sm:$0xff]
    %v2019 = vld [vmem:[#allocation5 + $0x770] sm:$0xff]
    %v2020 = vld [vmem:[#allocation5 + $0x778] sm:$0xff]
    %v2021 = vld [vmem:[#allocation5 + $0x780] sm:$0xff]
    %v2022 = vld [vmem:[#allocation5 + $0x788] sm:$0xff]
    %v2023 = vld [vmem:[#allocation5 + $0x790] sm:$0xff]
    %v2024 = vld [vmem:[#allocation5 + $0x798] sm:$0xff]
    %v2025 = vld [vmem:[#allocation5 + $0x7a0] sm:$0xff]
    %v2026 = vld [vmem:[#allocation5 + $0x7a8] sm:$0xff]
    %v2027 = vld [vmem:[#allocation5 + $0x7b0] sm:$0xff]
    %v2028 = vld [vmem:[#allocation5 + $0x7b8] sm:$0xff]
    %v2029 = vld [vmem:[#allocation5 + $0x7c0] sm:$0xff]
    %v2030 = vld [vmem:[#allocation5 + $0x7c8] sm:$0xff]
    %v2031 = vld [vmem:[#allocation5 + $0x7d0] sm:$0xff]
    %v2032 = vld [vmem:[#allocation5 + $0x7d8] sm:$0xff]
    %v2033 = vld [vmem:[#allocation5 + $0x7e0] sm:$0xff]
    %v2034 = vld [vmem:[#allocation5 + $0x7e8] sm:$0xff]
    %v2035 = vld [vmem:[#allocation5 + $0x7f0] sm:$0xff]
    %v2036 = vld [vmem:[#allocation5 + $0x7f8] sm:$0xff]
    %v2037 = vld [vmem:[%s8] sm:$0xf]
    %v2039 = vperm.slane %v2037, 0
    %v2040 = vperm.slane %v2037, 1
    %v2041 = vperm.slane %v2037, 2
    %v2042 = vperm.slane %v2037, 3
    %2047 = vmatpush.msra.mxu0 %v1841
    %2048 = vmatpush.msra.mxu0 %v1837
    %2049 = vmatpush.msra.mxu0 %v1833
    %2050 = vmatpush.msra.mxu0 %v1829
    %2051 = vmatpush.msra.mxu0 %v1825
    %2052 = vmatpush.msra.mxu0 %v1821
    %2053 = vmatpush.msra.mxu0 %v1817
    %2054 = vmatpush.msra.mxu0 %v1813
    %2055 = vmatpush.msra.mxu0 %v1809
    %2056 = vmatpush.msra.mxu0 %v1805
    %2057 = vmatpush.msra.mxu0 %v1801
    %2058 = vmatpush.msra.mxu0 %v1797
    %2059 = vmatpush.msra.mxu0 %v1793
    %2060 = vmatpush.msra.mxu0 %v1789
    %2061 = vmatpush.msra.mxu0 %v1785
    %2062 = vmatpush.msra.mxu0 %v1781
    %2063 = vmatmul.f32.gmra.mxu0 %v1653
    %v2064 = vpop.f32.mrf.mxu0
    %v2065 = vadd.f32 %v2039, %v2064
    %2066 = vmatmul.f32.gmra.mxu0 %v1657
    %v2067 = vpop.f32.mrf.mxu0
    %v2068 = vadd.f32 %v2039, %v2067
    %2069 = vmatmul.f32.gmra.mxu0 %v1661
    %v2070 = vpop.f32.mrf.mxu0
    %v2071 = vadd.f32 %v2039, %v2070
    %2072 = vmatmul.f32.gmra.mxu0 %v1665
    %v2073 = vpop.f32.mrf.mxu0
    %v2074 = vadd.f32 %v2039, %v2073
    %2075 = vmatmul.f32.gmra.mxu0 %v1669
    %v2076 = vpop.f32.mrf.mxu0
    %v2077 = vadd.f32 %v2039, %v2076
    %2078 = vmatmul.f32.gmra.mxu0 %v1673
    %v2079 = vpop.f32.mrf.mxu0
    %v2080 = vadd.f32 %v2039, %v2079
    %2081 = vmatmul.f32.gmra.mxu0 %v1677
    %v2082 = vpop.f32.mrf.mxu0
    %v2083 = vadd.f32 %v2039, %v2082
    %2084 = vmatmul.f32.gmra.mxu0 %v1681
    %v2085 = vpop.f32.mrf.mxu0
    %v2086 = vadd.f32 %v2039, %v2085
    %2087 = vmatmul.f32.gmra.mxu0 %v1685
    %v2088 = vpop.f32.mrf.mxu0
    %v2089 = vadd.f32 %v2039, %v2088
    %2090 = vmatmul.f32.gmra.mxu0 %v1689
    %v2091 = vpop.f32.mrf.mxu0
    %v2092 = vadd.f32 %v2039, %v2091
    %2093 = vmatmul.f32.gmra.mxu0 %v1693
    %v2094 = vpop.f32.mrf.mxu0
    %v2095 = vadd.f32 %v2039, %v2094
    %2096 = vmatmul.f32.gmra.mxu0 %v1697
    %v2097 = vpop.f32.mrf.mxu0
    %v2098 = vadd.f32 %v2039, %v2097
    %2099 = vmatmul.f32.gmra.mxu0 %v1701
    %v2100 = vpop.f32.mrf.mxu0
    %v2101 = vadd.f32 %v2039, %v2100
    %2102 = vmatmul.f32.gmra.mxu0 %v1705
    %v2103 = vpop.f32.mrf.mxu0
    %v2104 = vadd.f32 %v2039, %v2103
    %2105 = vmatmul.f32.gmra.mxu0 %v1709
    %v2106 = vpop.f32.mrf.mxu0
    %v2107 = vadd.f32 %v2039, %v2106
    %2108 = vmatmul.f32.gmra.mxu0 %v1713
    %v2109 = vpop.f32.mrf.mxu0
    %v2110 = vadd.f32 %v2039, %v2109
    %2111 = vmatmul.f32.gmra.mxu0 %v1717
    %v2112 = vpop.f32.mrf.mxu0
    %v2113 = vadd.f32 %v2039, %v2112
    %2114 = vmatmul.f32.gmra.mxu0 %v1721
    %v2115 = vpop.f32.mrf.mxu0
    %v2116 = vadd.f32 %v2039, %v2115
    %2117 = vmatmul.f32.gmra.mxu0 %v1725
    %v2118 = vpop.f32.mrf.mxu0
    %v2119 = vadd.f32 %v2039, %v2118
    %2120 = vmatmul.f32.gmra.mxu0 %v1729
    %v2121 = vpop.f32.mrf.mxu0
    %v2122 = vadd.f32 %v2039, %v2121
    %2123 = vmatmul.f32.gmra.mxu0 %v1733
    %v2124 = vpop.f32.mrf.mxu0
    %v2125 = vadd.f32 %v2039, %v2124
    %2126 = vmatmul.f32.gmra.mxu0 %v1737
    %v2127 = vpop.f32.mrf.mxu0
    %v2128 = vadd.f32 %v2039, %v2127
    %2129 = vmatmul.f32.gmra.mxu0 %v1741
    %v2130 = vpop.f32.mrf.mxu0
    %v2131 = vadd.f32 %v2039, %v2130
    %2132 = vmatmul.f32.gmra.mxu0 %v1745
    %v2133 = vpop.f32.mrf.mxu0
    %v2134 = vadd.f32 %v2039, %v2133
    %2135 = vmatmul.f32.gmra.mxu0 %v1749
    %v2136 = vpop.f32.mrf.mxu0
    %v2137 = vadd.f32 %v2039, %v2136
    %2138 = vmatmul.f32.gmra.mxu0 %v1753
    %v2139 = vpop.f32.mrf.mxu0
    %v2140 = vadd.f32 %v2039, %v2139
    %2141 = vmatmul.f32.gmra.mxu0 %v1757
    %v2142 = vpop.f32.mrf.mxu0
    %v2143 = vadd.f32 %v2039, %v2142
    %2144 = vmatmul.f32.gmra.mxu0 %v1761
    %v2145 = vpop.f32.mrf.mxu0
    %v2146 = vadd.f32 %v2039, %v2145
    %2147 = vmatmul.f32.gmra.mxu0 %v1765
    %v2148 = vpop.f32.mrf.mxu0
    %v2149 = vadd.f32 %v2039, %v2148
    %2150 = vmatmul.f32.gmra.mxu0 %v1769
    %v2151 = vpop.f32.mrf.mxu0
    %v2152 = vadd.f32 %v2039, %v2151
    %2153 = vmatmul.f32.gmra.mxu0 %v1773
    %v2154 = vpop.f32.mrf.mxu0
    %v2155 = vadd.f32 %v2039, %v2154
    %2156 = vmatmul.f32.gmra.mxu0 %v1777
    %v2157 = vpop.f32.mrf.mxu0
    %v2158 = vadd.f32 %v2039, %v2157
    %2159 = vdwg.mxu0
    %2160 = vmatpush.msra.mxu0 %v1905
    %2161 = vmatpush.msra.mxu0 %v1901
    %2162 = vmatpush.msra.mxu0 %v1897
    %2163 = vmatpush.msra.mxu0 %v1893
    %2164 = vmatpush.msra.mxu0 %v1889
    %2165 = vmatpush.msra.mxu0 %v1885
    %2166 = vmatpush.msra.mxu0 %v1881
    %2167 = vmatpush.msra.mxu0 %v1877
    %2168 = vmatpush.msra.mxu0 %v1873
    %2169 = vmatpush.msra.mxu0 %v1869
    %2170 = vmatpush.msra.mxu0 %v1865
    %2171 = vmatpush.msra.mxu0 %v1861
    %2172 = vmatpush.msra.mxu0 %v1857
    %2173 = vmatpush.msra.mxu0 %v1853
    %2174 = vmatpush.msra.mxu0 %v1849
    %2175 = vmatpush.msra.mxu0 %v1845
    %2176 = vmatmul.f32.gmra.mxu0 %v1654
    %v2177 = vpop.f32.mrf.mxu0
    %v2178 = vadd.f32 %v2065, %v2177
    %2179 = vmatmul.f32.gmra.mxu0 %v1658
    %v2180 = vpop.f32.mrf.mxu0
    %v2181 = vadd.f32 %v2068, %v2180
    %2182 = vmatmul.f32.gmra.mxu0 %v1662
    %v2183 = vpop.f32.mrf.mxu0
    %v2184 = vadd.f32 %v2071, %v2183
    %2185 = vmatmul.f32.gmra.mxu0 %v1666
    %v2186 = vpop.f32.mrf.mxu0
    %v2187 = vadd.f32 %v2074, %v2186
    %2188 = vmatmul.f32.gmra.mxu0 %v1670
    %v2189 = vpop.f32.mrf.mxu0
    %v2190 = vadd.f32 %v2077, %v2189
    %2191 = vmatmul.f32.gmra.mxu0 %v1674
    %v2192 = vpop.f32.mrf.mxu0
    %v2193 = vadd.f32 %v2080, %v2192
    %2194 = vmatmul.f32.gmra.mxu0 %v1678
    %v2195 = vpop.f32.mrf.mxu0
    %v2196 = vadd.f32 %v2083, %v2195
    %2197 = vmatmul.f32.gmra.mxu0 %v1682
    %v2198 = vpop.f32.mrf.mxu0
    %v2199 = vadd.f32 %v2086, %v2198
    %2200 = vmatmul.f32.gmra.mxu0 %v1686
    %v2201 = vpop.f32.mrf.mxu0
    %v2202 = vadd.f32 %v2089, %v2201
    %2203 = vmatmul.f32.gmra.mxu0 %v1690
    %v2204 = vpop.f32.mrf.mxu0
    %v2205 = vadd.f32 %v2092, %v2204
    %2206 = vmatmul.f32.gmra.mxu0 %v1694
    %v2207 = vpop.f32.mrf.mxu0
    %v2208 = vadd.f32 %v2095, %v2207
    %2209 = vmatmul.f32.gmra.mxu0 %v1698
    %v2210 = vpop.f32.mrf.mxu0
    %v2211 = vadd.f32 %v2098, %v2210
    %2212 = vmatmul.f32.gmra.mxu0 %v1702
    %v2213 = vpop.f32.mrf.mxu0
    %v2214 = vadd.f32 %v2101, %v2213
    %2215 = vmatmul.f32.gmra.mxu0 %v1706
    %v2216 = vpop.f32.mrf.mxu0
    %v2217 = vadd.f32 %v2104, %v2216
    %2218 = vmatmul.f32.gmra.mxu0 %v1710
    %v2219 = vpop.f32.mrf.mxu0
    %v2220 = vadd.f32 %v2107, %v2219
    %2221 = vmatmul.f32.gmra.mxu0 %v1714
    %v2222 = vpop.f32.mrf.mxu0
    %v2223 = vadd.f32 %v2110, %v2222
    %2224 = vmatmul.f32.gmra.mxu0 %v1718
    %v2225 = vpop.f32.mrf.mxu0
    %v2226 = vadd.f32 %v2113, %v2225
    %2227 = vmatmul.f32.gmra.mxu0 %v1722
    %v2228 = vpop.f32.mrf.mxu0
    %v2229 = vadd.f32 %v2116, %v2228
    %2230 = vmatmul.f32.gmra.mxu0 %v1726
    %v2231 = vpop.f32.mrf.mxu0
    %v2232 = vadd.f32 %v2119, %v2231
    %2233 = vmatmul.f32.gmra.mxu0 %v1730
    %v2234 = vpop.f32.mrf.mxu0
    %v2235 = vadd.f32 %v2122, %v2234
    %2236 = vmatmul.f32.gmra.mxu0 %v1734
    %v2237 = vpop.f32.mrf.mxu0
    %v2238 = vadd.f32 %v2125, %v2237
    %2239 = vmatmul.f32.gmra.mxu0 %v1738
    %v2240 = vpop.f32.mrf.mxu0
    %v2241 = vadd.f32 %v2128, %v2240
    %2242 = vmatmul.f32.gmra.mxu0 %v1742
    %v2243 = vpop.f32.mrf.mxu0
    %v2244 = vadd.f32 %v2131, %v2243
    %2245 = vmatmul.f32.gmra.mxu0 %v1746
    %v2246 = vpop.f32.mrf.mxu0
    %v2247 = vadd.f32 %v2134, %v2246
    %2248 = vmatmul.f32.gmra.mxu0 %v1750
    %v2249 = vpop.f32.mrf.mxu0
    %v2250 = vadd.f32 %v2137, %v2249
    %2251 = vmatmul.f32.gmra.mxu0 %v1754
    %v2252 = vpop.f32.mrf.mxu0
    %v2253 = vadd.f32 %v2140, %v2252
    %2254 = vmatmul.f32.gmra.mxu0 %v1758
    %v2255 = vpop.f32.mrf.mxu0
    %v2256 = vadd.f32 %v2143, %v2255
    %2257 = vmatmul.f32.gmra.mxu0 %v1762
    %v2258 = vpop.f32.mrf.mxu0
    %v2259 = vadd.f32 %v2146, %v2258
    %2260 = vmatmul.f32.gmra.mxu0 %v1766
    %v2261 = vpop.f32.mrf.mxu0
    %v2262 = vadd.f32 %v2149, %v2261
    %2263 = vmatmul.f32.gmra.mxu0 %v1770
    %v2264 = vpop.f32.mrf.mxu0
    %v2265 = vadd.f32 %v2152, %v2264
    %2266 = vmatmul.f32.gmra.mxu0 %v1774
    %v2267 = vpop.f32.mrf.mxu0
    %v2268 = vadd.f32 %v2155, %v2267
    %2269 = vmatmul.f32.gmra.mxu0 %v1778
    %v2270 = vpop.f32.mrf.mxu0
    %v2271 = vadd.f32 %v2158, %v2270
    %2272 = vdwg.mxu0
    %2273 = vmatpush.msra.mxu0 %v1969
    %2274 = vmatpush.msra.mxu0 %v1965
    %2275 = vmatpush.msra.mxu0 %v1961
    %2276 = vmatpush.msra.mxu0 %v1957
    %2277 = vmatpush.msra.mxu0 %v1953
    %2278 = vmatpush.msra.mxu0 %v1949
    %2279 = vmatpush.msra.mxu0 %v1945
    %2280 = vmatpush.msra.mxu0 %v1941
    %2281 = vmatpush.msra.mxu0 %v1937
    %2282 = vmatpush.msra.mxu0 %v1933
    %2283 = vmatpush.msra.mxu0 %v1929
    %2284 = vmatpush.msra.mxu0 %v1925
    %2285 = vmatpush.msra.mxu0 %v1921
    %2286 = vmatpush.msra.mxu0 %v1917
    %2287 = vmatpush.msra.mxu0 %v1913
    %2288 = vmatpush.msra.mxu0 %v1909
    %2289 = vmatmul.f32.gmra.mxu0 %v1655
    %v2290 = vpop.f32.mrf.mxu0
    %v2291 = vadd.f32 %v2178, %v2290
    %2292 = vmatmul.f32.gmra.mxu0 %v1659
    %v2293 = vpop.f32.mrf.mxu0
    %v2294 = vadd.f32 %v2181, %v2293
    %2295 = vmatmul.f32.gmra.mxu0 %v1663
    %v2296 = vpop.f32.mrf.mxu0
    %v2297 = vadd.f32 %v2184, %v2296
    %2298 = vmatmul.f32.gmra.mxu0 %v1667
    %v2299 = vpop.f32.mrf.mxu0
    %v2300 = vadd.f32 %v2187, %v2299
    %2301 = vmatmul.f32.gmra.mxu0 %v1671
    %v2302 = vpop.f32.mrf.mxu0
    %v2303 = vadd.f32 %v2190, %v2302
    %2304 = vmatmul.f32.gmra.mxu0 %v1675
    %v2305 = vpop.f32.mrf.mxu0
    %v2306 = vadd.f32 %v2193, %v2305
    %2307 = vmatmul.f32.gmra.mxu0 %v1679
    %v2308 = vpop.f32.mrf.mxu0
    %v2309 = vadd.f32 %v2196, %v2308
    %2310 = vmatmul.f32.gmra.mxu0 %v1683
    %v2311 = vpop.f32.mrf.mxu0
    %v2312 = vadd.f32 %v2199, %v2311
    %2313 = vmatmul.f32.gmra.mxu0 %v1687
    %v2314 = vpop.f32.mrf.mxu0
    %v2315 = vadd.f32 %v2202, %v2314
    %2316 = vmatmul.f32.gmra.mxu0 %v1691
    %v2317 = vpop.f32.mrf.mxu0
    %v2318 = vadd.f32 %v2205, %v2317
    %2319 = vmatmul.f32.gmra.mxu0 %v1695
    %v2320 = vpop.f32.mrf.mxu0
    %v2321 = vadd.f32 %v2208, %v2320
    %2322 = vmatmul.f32.gmra.mxu0 %v1699
    %v2323 = vpop.f32.mrf.mxu0
    %v2324 = vadd.f32 %v2211, %v2323
    %2325 = vmatmul.f32.gmra.mxu0 %v1703
    %v2326 = vpop.f32.mrf.mxu0
    %v2327 = vadd.f32 %v2214, %v2326
    %2328 = vmatmul.f32.gmra.mxu0 %v1707
    %v2329 = vpop.f32.mrf.mxu0
    %v2330 = vadd.f32 %v2217, %v2329
    %2331 = vmatmul.f32.gmra.mxu0 %v1711
    %v2332 = vpop.f32.mrf.mxu0
    %v2333 = vadd.f32 %v2220, %v2332
    %2334 = vmatmul.f32.gmra.mxu0 %v1715
    %v2335 = vpop.f32.mrf.mxu0
    %v2336 = vadd.f32 %v2223, %v2335
    %2337 = vmatmul.f32.gmra.mxu0 %v1719
    %v2338 = vpop.f32.mrf.mxu0
    %v2339 = vadd.f32 %v2226, %v2338
    %2340 = vmatmul.f32.gmra.mxu0 %v1723
    %v2341 = vpop.f32.mrf.mxu0
    %v2342 = vadd.f32 %v2229, %v2341
    %2343 = vmatmul.f32.gmra.mxu0 %v1727
    %v2344 = vpop.f32.mrf.mxu0
    %v2345 = vadd.f32 %v2232, %v2344
    %2346 = vmatmul.f32.gmra.mxu0 %v1731
    %v2347 = vpop.f32.mrf.mxu0
    %v2348 = vadd.f32 %v2235, %v2347
    %2349 = vmatmul.f32.gmra.mxu0 %v1735
    %v2350 = vpop.f32.mrf.mxu0
    %v2351 = vadd.f32 %v2238, %v2350
    %2352 = vmatmul.f32.gmra.mxu0 %v1739
    %v2353 = vpop.f32.mrf.mxu0
    %v2354 = vadd.f32 %v2241, %v2353
    %2355 = vmatmul.f32.gmra.mxu0 %v1743
    %v2356 = vpop.f32.mrf.mxu0
    %v2357 = vadd.f32 %v2244, %v2356
    %2358 = vmatmul.f32.gmra.mxu0 %v1747
    %v2359 = vpop.f32.mrf.mxu0
    %v2360 = vadd.f32 %v2247, %v2359
    %2361 = vmatmul.f32.gmra.mxu0 %v1751
    %v2362 = vpop.f32.mrf.mxu0
    %v2363 = vadd.f32 %v2250, %v2362
    %2364 = vmatmul.f32.gmra.mxu0 %v1755
    %v2365 = vpop.f32.mrf.mxu0
    %v2366 = vadd.f32 %v2253, %v2365
    %2367 = vmatmul.f32.gmra.mxu0 %v1759
    %v2368 = vpop.f32.mrf.mxu0
    %v2369 = vadd.f32 %v2256, %v2368
    %2370 = vmatmul.f32.gmra.mxu0 %v1763
    %v2371 = vpop.f32.mrf.mxu0
    %v2372 = vadd.f32 %v2259, %v2371
    %2373 = vmatmul.f32.gmra.mxu0 %v1767
    %v2374 = vpop.f32.mrf.mxu0
    %v2375 = vadd.f32 %v2262, %v2374
    %2376 = vmatmul.f32.gmra.mxu0 %v1771
    %v2377 = vpop.f32.mrf.mxu0
    %v2378 = vadd.f32 %v2265, %v2377
    %2379 = vmatmul.f32.gmra.mxu0 %v1775
    %v2380 = vpop.f32.mrf.mxu0
    %v2381 = vadd.f32 %v2268, %v2380
    %2382 = vmatmul.f32.gmra.mxu0 %v1779
    %v2383 = vpop.f32.mrf.mxu0
    %v2384 = vadd.f32 %v2271, %v2383
    %2385 = vdwg.mxu0
    %2386 = vmatpush.msra.mxu0 %v2033
    %2387 = vmatpush.msra.mxu0 %v2029
    %2388 = vmatpush.msra.mxu0 %v2025
    %2389 = vmatpush.msra.mxu0 %v2021
    %2390 = vmatpush.msra.mxu0 %v2017
    %2391 = vmatpush.msra.mxu0 %v2013
    %2392 = vmatpush.msra.mxu0 %v2009
    %2393 = vmatpush.msra.mxu0 %v2005
    %2394 = vmatpush.msra.mxu0 %v2001
    %2395 = vmatpush.msra.mxu0 %v1997
    %2396 = vmatpush.msra.mxu0 %v1993
    %2397 = vmatpush.msra.mxu0 %v1989
    %2398 = vmatpush.msra.mxu0 %v1985
    %2399 = vmatpush.msra.mxu0 %v1981
    %2400 = vmatpush.msra.mxu0 %v1977
    %2401 = vmatpush.msra.mxu0 %v1973
    %2402 = vmatmul.f32.gmra.mxu0 %v1656
    %v2403 = vpop.f32.mrf.mxu0
    %v2404 = vadd.f32 %v2291, %v2403
    %2405 = vmatmul.f32.gmra.mxu0 %v1660
    %v2406 = vpop.f32.mrf.mxu0
    %v2407 = vadd.f32 %v2294, %v2406
    %2408 = vmatmul.f32.gmra.mxu0 %v1664
    %v2409 = vpop.f32.mrf.mxu0
    %v2410 = vadd.f32 %v2297, %v2409
    %2411 = vmatmul.f32.gmra.mxu0 %v1668
    %v2412 = vpop.f32.mrf.mxu0
    %v2413 = vadd.f32 %v2300, %v2412
    %2414 = vmatmul.f32.gmra.mxu0 %v1672
    %v2415 = vpop.f32.mrf.mxu0
    %v2416 = vadd.f32 %v2303, %v2415
    %2417 = vmatmul.f32.gmra.mxu0 %v1676
    %v2418 = vpop.f32.mrf.mxu0
    %v2419 = vadd.f32 %v2306, %v2418
    %2420 = vmatmul.f32.gmra.mxu0 %v1680
    %v2421 = vpop.f32.mrf.mxu0
    %v2422 = vadd.f32 %v2309, %v2421
    %2423 = vmatmul.f32.gmra.mxu0 %v1684
    %v2424 = vpop.f32.mrf.mxu0
    %v2425 = vadd.f32 %v2312, %v2424
    %2426 = vmatmul.f32.gmra.mxu0 %v1688
    %v2427 = vpop.f32.mrf.mxu0
    %v2428 = vadd.f32 %v2315, %v2427
    %2429 = vmatmul.f32.gmra.mxu0 %v1692
    %v2430 = vpop.f32.mrf.mxu0
    %v2431 = vadd.f32 %v2318, %v2430
    %2432 = vmatmul.f32.gmra.mxu0 %v1696
    %v2433 = vpop.f32.mrf.mxu0
    %v2434 = vadd.f32 %v2321, %v2433
    %2435 = vmatmul.f32.gmra.mxu0 %v1700
    %v2436 = vpop.f32.mrf.mxu0
    %v2437 = vadd.f32 %v2324, %v2436
    %2438 = vmatmul.f32.gmra.mxu0 %v1704
    %v2439 = vpop.f32.mrf.mxu0
    %v2440 = vadd.f32 %v2327, %v2439
    %2441 = vmatmul.f32.gmra.mxu0 %v1708
    %v2442 = vpop.f32.mrf.mxu0
    %v2443 = vadd.f32 %v2330, %v2442
    %2444 = vmatmul.f32.gmra.mxu0 %v1712
    %v2445 = vpop.f32.mrf.mxu0
    %v2446 = vadd.f32 %v2333, %v2445
    %2447 = vmatmul.f32.gmra.mxu0 %v1716
    %v2448 = vpop.f32.mrf.mxu0
    %v2449 = vadd.f32 %v2336, %v2448
    %2450 = vmatmul.f32.gmra.mxu0 %v1720
    %v2451 = vpop.f32.mrf.mxu0
    %v2452 = vadd.f32 %v2339, %v2451
    %2453 = vmatmul.f32.gmra.mxu0 %v1724
    %v2454 = vpop.f32.mrf.mxu0
    %v2455 = vadd.f32 %v2342, %v2454
    %2456 = vmatmul.f32.gmra.mxu0 %v1728
    %v2457 = vpop.f32.mrf.mxu0
    %v2458 = vadd.f32 %v2345, %v2457
    %2459 = vmatmul.f32.gmra.mxu0 %v1732
    %v2460 = vpop.f32.mrf.mxu0
    %v2461 = vadd.f32 %v2348, %v2460
    %2462 = vmatmul.f32.gmra.mxu0 %v1736
    %v2463 = vpop.f32.mrf.mxu0
    %v2464 = vadd.f32 %v2351, %v2463
    %2465 = vmatmul.f32.gmra.mxu0 %v1740
    %v2466 = vpop.f32.mrf.mxu0
    %v2467 = vadd.f32 %v2354, %v2466
    %2468 = vmatmul.f32.gmra.mxu0 %v1744
    %v2469 = vpop.f32.mrf.mxu0
    %v2470 = vadd.f32 %v2357, %v2469
    %2471 = vmatmul.f32.gmra.mxu0 %v1748
    %v2472 = vpop.f32.mrf.mxu0
    %v2473 = vadd.f32 %v2360, %v2472
    %2474 = vmatmul.f32.gmra.mxu0 %v1752
    %v2475 = vpop.f32.mrf.mxu0
    %v2476 = vadd.f32 %v2363, %v2475
    %2477 = vmatmul.f32.gmra.mxu0 %v1756
    %v2478 = vpop.f32.mrf.mxu0
    %v2479 = vadd.f32 %v2366, %v2478
    %2480 = vmatmul.f32.gmra.mxu0 %v1760
    %v2481 = vpop.f32.mrf.mxu0
    %v2482 = vadd.f32 %v2369, %v2481
    %2483 = vmatmul.f32.gmra.mxu0 %v1764
    %v2484 = vpop.f32.mrf.mxu0
    %v2485 = vadd.f32 %v2372, %v2484
    %2486 = vmatmul.f32.gmra.mxu0 %v1768
    %v2487 = vpop.f32.mrf.mxu0
    %v2488 = vadd.f32 %v2375, %v2487
    %2489 = vmatmul.f32.gmra.mxu0 %v1772
    %v2490 = vpop.f32.mrf.mxu0
    %v2491 = vadd.f32 %v2378, %v2490
    %2492 = vmatmul.f32.gmra.mxu0 %v1776
    %v2493 = vpop.f32.mrf.mxu0
    %v2494 = vadd.f32 %v2381, %v2493
    %2495 = vmatmul.f32.gmra.mxu0 %v1780
    %v2496 = vpop.f32.mrf.mxu0
    %v2497 = vadd.f32 %v2384, %v2496
    %2498 = vdwg.mxu0
    %2499 = vmatpush.msra.mxu0 %v1842
    %2500 = vmatpush.msra.mxu0 %v1838
    %2501 = vmatpush.msra.mxu0 %v1834
    %2502 = vmatpush.msra.mxu0 %v1830
    %2503 = vmatpush.msra.mxu0 %v1826
    %2504 = vmatpush.msra.mxu0 %v1822
    %2505 = vmatpush.msra.mxu0 %v1818
    %2506 = vmatpush.msra.mxu0 %v1814
    %2507 = vmatpush.msra.mxu0 %v1810
    %2508 = vmatpush.msra.mxu0 %v1806
    %2509 = vmatpush.msra.mxu0 %v1802
    %2510 = vmatpush.msra.mxu0 %v1798
    %2511 = vmatpush.msra.mxu0 %v1794
    %2512 = vmatpush.msra.mxu0 %v1790
    %2513 = vmatpush.msra.mxu0 %v1786
    %2514 = vmatpush.msra.mxu0 %v1782
    %2515 = vmatmul.f32.gmra.mxu0 %v1653
    %v2516 = vpop.f32.mrf.mxu0
    %v2517 = vadd.f32 %v2040, %v2516
    %2518 = vmatmul.f32.gmra.mxu0 %v1657
    %v2519 = vpop.f32.mrf.mxu0
    %v2520 = vadd.f32 %v2040, %v2519
    %2521 = vmatmul.f32.gmra.mxu0 %v1661
    %v2522 = vpop.f32.mrf.mxu0
    %v2523 = vadd.f32 %v2040, %v2522
    %2524 = vmatmul.f32.gmra.mxu0 %v1665
    %v2525 = vpop.f32.mrf.mxu0
    %v2526 = vadd.f32 %v2040, %v2525
    %2527 = vmatmul.f32.gmra.mxu0 %v1669
    %v2528 = vpop.f32.mrf.mxu0
    %v2529 = vadd.f32 %v2040, %v2528
    %2530 = vmatmul.f32.gmra.mxu0 %v1673
    %v2531 = vpop.f32.mrf.mxu0
    %v2532 = vadd.f32 %v2040, %v2531
    %2533 = vmatmul.f32.gmra.mxu0 %v1677
    %v2534 = vpop.f32.mrf.mxu0
    %v2535 = vadd.f32 %v2040, %v2534
    %2536 = vmatmul.f32.gmra.mxu0 %v1681
    %v2537 = vpop.f32.mrf.mxu0
    %v2538 = vadd.f32 %v2040, %v2537
    %2539 = vmatmul.f32.gmra.mxu0 %v1685
    %v2540 = vpop.f32.mrf.mxu0
    %v2541 = vadd.f32 %v2040, %v2540
    %2542 = vmatmul.f32.gmra.mxu0 %v1689
    %v2543 = vpop.f32.mrf.mxu0
    %v2544 = vadd.f32 %v2040, %v2543
    %2545 = vmatmul.f32.gmra.mxu0 %v1693
    %v2546 = vpop.f32.mrf.mxu0
    %v2547 = vadd.f32 %v2040, %v2546
    %2548 = vmatmul.f32.gmra.mxu0 %v1697
    %v2549 = vpop.f32.mrf.mxu0
    %v2550 = vadd.f32 %v2040, %v2549
    %2551 = vmatmul.f32.gmra.mxu0 %v1701
    %v2552 = vpop.f32.mrf.mxu0
    %v2553 = vadd.f32 %v2040, %v2552
    %2554 = vmatmul.f32.gmra.mxu0 %v1705
    %v2555 = vpop.f32.mrf.mxu0
    %v2556 = vadd.f32 %v2040, %v2555
    %2557 = vmatmul.f32.gmra.mxu0 %v1709
    %v2558 = vpop.f32.mrf.mxu0
    %v2559 = vadd.f32 %v2040, %v2558
    %2560 = vmatmul.f32.gmra.mxu0 %v1713
    %v2561 = vpop.f32.mrf.mxu0
    %v2562 = vadd.f32 %v2040, %v2561
    %2563 = vmatmul.f32.gmra.mxu0 %v1717
    %v2564 = vpop.f32.mrf.mxu0
    %v2565 = vadd.f32 %v2040, %v2564
    %2566 = vmatmul.f32.gmra.mxu0 %v1721
    %v2567 = vpop.f32.mrf.mxu0
    %v2568 = vadd.f32 %v2040, %v2567
    %2569 = vmatmul.f32.gmra.mxu0 %v1725
    %v2570 = vpop.f32.mrf.mxu0
    %v2571 = vadd.f32 %v2040, %v2570
    %2572 = vmatmul.f32.gmra.mxu0 %v1729
    %v2573 = vpop.f32.mrf.mxu0
    %v2574 = vadd.f32 %v2040, %v2573
    %2575 = vmatmul.f32.gmra.mxu0 %v1733
    %v2576 = vpop.f32.mrf.mxu0
    %v2577 = vadd.f32 %v2040, %v2576
    %2578 = vmatmul.f32.gmra.mxu0 %v1737
    %v2579 = vpop.f32.mrf.mxu0
    %v2580 = vadd.f32 %v2040, %v2579
    %2581 = vmatmul.f32.gmra.mxu0 %v1741
    %v2582 = vpop.f32.mrf.mxu0
    %v2583 = vadd.f32 %v2040, %v2582
    %2584 = vmatmul.f32.gmra.mxu0 %v1745
    %v2585 = vpop.f32.mrf.mxu0
    %v2586 = vadd.f32 %v2040, %v2585
    %2587 = vmatmul.f32.gmra.mxu0 %v1749
    %v2588 = vpop.f32.mrf.mxu0
    %v2589 = vadd.f32 %v2040, %v2588
    %2590 = vmatmul.f32.gmra.mxu0 %v1753
    %v2591 = vpop.f32.mrf.mxu0
    %v2592 = vadd.f32 %v2040, %v2591
    %2593 = vmatmul.f32.gmra.mxu0 %v1757
    %v2594 = vpop.f32.mrf.mxu0
    %v2595 = vadd.f32 %v2040, %v2594
    %2596 = vmatmul.f32.gmra.mxu0 %v1761
    %v2597 = vpop.f32.mrf.mxu0
    %v2598 = vadd.f32 %v2040, %v2597
    %2599 = vmatmul.f32.gmra.mxu0 %v1765
    %v2600 = vpop.f32.mrf.mxu0
    %v2601 = vadd.f32 %v2040, %v2600
    %2602 = vmatmul.f32.gmra.mxu0 %v1769
    %v2603 = vpop.f32.mrf.mxu0
    %v2604 = vadd.f32 %v2040, %v2603
    %2605 = vmatmul.f32.gmra.mxu0 %v1773
    %v2606 = vpop.f32.mrf.mxu0
    %v2607 = vadd.f32 %v2040, %v2606
    %2608 = vmatmul.f32.gmra.mxu0 %v1777
    %v2609 = vpop.f32.mrf.mxu0
    %v2610 = vadd.f32 %v2040, %v2609
    %2611 = vdwg.mxu0
    %2612 = vmatpush.msra.mxu0 %v1906
    %2613 = vmatpush.msra.mxu0 %v1902
    %2614 = vmatpush.msra.mxu0 %v1898
    %2615 = vmatpush.msra.mxu0 %v1894
    %2616 = vmatpush.msra.mxu0 %v1890
    %2617 = vmatpush.msra.mxu0 %v1886
    %2618 = vmatpush.msra.mxu0 %v1882
    %2619 = vmatpush.msra.mxu0 %v1878
    %2620 = vmatpush.msra.mxu0 %v1874
    %2621 = vmatpush.msra.mxu0 %v1870
    %2622 = vmatpush.msra.mxu0 %v1866
    %2623 = vmatpush.msra.mxu0 %v1862
    %2624 = vmatpush.msra.mxu0 %v1858
    %2625 = vmatpush.msra.mxu0 %v1854
    %2626 = vmatpush.msra.mxu0 %v1850
    %2627 = vmatpush.msra.mxu0 %v1846
    %2628 = vmatmul.f32.gmra.mxu0 %v1654
    %v2629 = vpop.f32.mrf.mxu0
    %v2630 = vadd.f32 %v2517, %v2629
    %2631 = vmatmul.f32.gmra.mxu0 %v1658
    %v2632 = vpop.f32.mrf.mxu0
    %v2633 = vadd.f32 %v2520, %v2632
    %2634 = vmatmul.f32.gmra.mxu0 %v1662
    %v2635 = vpop.f32.mrf.mxu0
    %v2636 = vadd.f32 %v2523, %v2635
    %2637 = vmatmul.f32.gmra.mxu0 %v1666
    %v2638 = vpop.f32.mrf.mxu0
    %v2639 = vadd.f32 %v2526, %v2638
    %2640 = vmatmul.f32.gmra.mxu0 %v1670
    %v2641 = vpop.f32.mrf.mxu0
    %v2642 = vadd.f32 %v2529, %v2641
    %2643 = vmatmul.f32.gmra.mxu0 %v1674
    %v2644 = vpop.f32.mrf.mxu0
    %v2645 = vadd.f32 %v2532, %v2644
    %2646 = vmatmul.f32.gmra.mxu0 %v1678
    %v2647 = vpop.f32.mrf.mxu0
    %v2648 = vadd.f32 %v2535, %v2647
    %2649 = vmatmul.f32.gmra.mxu0 %v1682
    %v2650 = vpop.f32.mrf.mxu0
    %v2651 = vadd.f32 %v2538, %v2650
    %2652 = vmatmul.f32.gmra.mxu0 %v1686
    %v2653 = vpop.f32.mrf.mxu0
    %v2654 = vadd.f32 %v2541, %v2653
    %2655 = vmatmul.f32.gmra.mxu0 %v1690
    %v2656 = vpop.f32.mrf.mxu0
    %v2657 = vadd.f32 %v2544, %v2656
    %2658 = vmatmul.f32.gmra.mxu0 %v1694
    %v2659 = vpop.f32.mrf.mxu0
    %v2660 = vadd.f32 %v2547, %v2659
    %2661 = vmatmul.f32.gmra.mxu0 %v1698
    %v2662 = vpop.f32.mrf.mxu0
    %v2663 = vadd.f32 %v2550, %v2662
    %2664 = vmatmul.f32.gmra.mxu0 %v1702
    %v2665 = vpop.f32.mrf.mxu0
    %v2666 = vadd.f32 %v2553, %v2665
    %2667 = vmatmul.f32.gmra.mxu0 %v1706
    %v2668 = vpop.f32.mrf.mxu0
    %v2669 = vadd.f32 %v2556, %v2668
    %2670 = vmatmul.f32.gmra.mxu0 %v1710
    %v2671 = vpop.f32.mrf.mxu0
    %v2672 = vadd.f32 %v2559, %v2671
    %2673 = vmatmul.f32.gmra.mxu0 %v1714
    %v2674 = vpop.f32.mrf.mxu0
    %v2675 = vadd.f32 %v2562, %v2674
    %2676 = vmatmul.f32.gmra.mxu0 %v1718
    %v2677 = vpop.f32.mrf.mxu0
    %v2678 = vadd.f32 %v2565, %v2677
    %2679 = vmatmul.f32.gmra.mxu0 %v1722
    %v2680 = vpop.f32.mrf.mxu0
    %v2681 = vadd.f32 %v2568, %v2680
    %2682 = vmatmul.f32.gmra.mxu0 %v1726
    %v2683 = vpop.f32.mrf.mxu0
    %v2684 = vadd.f32 %v2571, %v2683
    %2685 = vmatmul.f32.gmra.mxu0 %v1730
    %v2686 = vpop.f32.mrf.mxu0
    %v2687 = vadd.f32 %v2574, %v2686
    %2688 = vmatmul.f32.gmra.mxu0 %v1734
    %v2689 = vpop.f32.mrf.mxu0
    %v2690 = vadd.f32 %v2577, %v2689
    %2691 = vmatmul.f32.gmra.mxu0 %v1738
    %v2692 = vpop.f32.mrf.mxu0
    %v2693 = vadd.f32 %v2580, %v2692
    %2694 = vmatmul.f32.gmra.mxu0 %v1742
    %v2695 = vpop.f32.mrf.mxu0
    %v2696 = vadd.f32 %v2583, %v2695
    %2697 = vmatmul.f32.gmra.mxu0 %v1746
    %v2698 = vpop.f32.mrf.mxu0
    %v2699 = vadd.f32 %v2586, %v2698
    %2700 = vmatmul.f32.gmra.mxu0 %v1750
    %v2701 = vpop.f32.mrf.mxu0
    %v2702 = vadd.f32 %v2589, %v2701
    %2703 = vmatmul.f32.gmra.mxu0 %v1754
    %v2704 = vpop.f32.mrf.mxu0
    %v2705 = vadd.f32 %v2592, %v2704
    %2706 = vmatmul.f32.gmra.mxu0 %v1758
    %v2707 = vpop.f32.mrf.mxu0
    %v2708 = vadd.f32 %v2595, %v2707
    %2709 = vmatmul.f32.gmra.mxu0 %v1762
    %v2710 = vpop.f32.mrf.mxu0
    %v2711 = vadd.f32 %v2598, %v2710
    %2712 = vmatmul.f32.gmra.mxu0 %v1766
    %v2713 = vpop.f32.mrf.mxu0
    %v2714 = vadd.f32 %v2601, %v2713
    %2715 = vmatmul.f32.gmra.mxu0 %v1770
    %v2716 = vpop.f32.mrf.mxu0
    %v2717 = vadd.f32 %v2604, %v2716
    %2718 = vmatmul.f32.gmra.mxu0 %v1774
    %v2719 = vpop.f32.mrf.mxu0
    %v2720 = vadd.f32 %v2607, %v2719
    %2721 = vmatmul.f32.gmra.mxu0 %v1778
    %v2722 = vpop.f32.mrf.mxu0
    %v2723 = vadd.f32 %v2610, %v2722
    %2724 = vdwg.mxu0
    %2725 = vmatpush.msra.mxu0 %v1970
    %2726 = vmatpush.msra.mxu0 %v1966
    %2727 = vmatpush.msra.mxu0 %v1962
    %2728 = vmatpush.msra.mxu0 %v1958
    %2729 = vmatpush.msra.mxu0 %v1954
    %2730 = vmatpush.msra.mxu0 %v1950
    %2731 = vmatpush.msra.mxu0 %v1946
    %2732 = vmatpush.msra.mxu0 %v1942
    %2733 = vmatpush.msra.mxu0 %v1938
    %2734 = vmatpush.msra.mxu0 %v1934
    %2735 = vmatpush.msra.mxu0 %v1930
    %2736 = vmatpush.msra.mxu0 %v1926
    %2737 = vmatpush.msra.mxu0 %v1922
    %2738 = vmatpush.msra.mxu0 %v1918
    %2739 = vmatpush.msra.mxu0 %v1914
    %2740 = vmatpush.msra.mxu0 %v1910
    %2741 = vmatmul.f32.gmra.mxu0 %v1655
    %v2742 = vpop.f32.mrf.mxu0
    %v2743 = vadd.f32 %v2630, %v2742
    %2744 = vmatmul.f32.gmra.mxu0 %v1659
    %v2745 = vpop.f32.mrf.mxu0
    %v2746 = vadd.f32 %v2633, %v2745
    %2747 = vmatmul.f32.gmra.mxu0 %v1663
    %v2748 = vpop.f32.mrf.mxu0
    %v2749 = vadd.f32 %v2636, %v2748
    %2750 = vmatmul.f32.gmra.mxu0 %v1667
    %v2751 = vpop.f32.mrf.mxu0
    %v2752 = vadd.f32 %v2639, %v2751
    %2753 = vmatmul.f32.gmra.mxu0 %v1671
    %v2754 = vpop.f32.mrf.mxu0
    %v2755 = vadd.f32 %v2642, %v2754
    %2756 = vmatmul.f32.gmra.mxu0 %v1675
    %v2757 = vpop.f32.mrf.mxu0
    %v2758 = vadd.f32 %v2645, %v2757
    %2759 = vmatmul.f32.gmra.mxu0 %v1679
    %v2760 = vpop.f32.mrf.mxu0
    %v2761 = vadd.f32 %v2648, %v2760
    %2762 = vmatmul.f32.gmra.mxu0 %v1683
    %v2763 = vpop.f32.mrf.mxu0
    %v2764 = vadd.f32 %v2651, %v2763
    %2765 = vmatmul.f32.gmra.mxu0 %v1687
    %v2766 = vpop.f32.mrf.mxu0
    %v2767 = vadd.f32 %v2654, %v2766
    %2768 = vmatmul.f32.gmra.mxu0 %v1691
    %v2769 = vpop.f32.mrf.mxu0
    %v2770 = vadd.f32 %v2657, %v2769
    %2771 = vmatmul.f32.gmra.mxu0 %v1695
    %v2772 = vpop.f32.mrf.mxu0
    %v2773 = vadd.f32 %v2660, %v2772
    %2774 = vmatmul.f32.gmra.mxu0 %v1699
    %v2775 = vpop.f32.mrf.mxu0
    %v2776 = vadd.f32 %v2663, %v2775
    %2777 = vmatmul.f32.gmra.mxu0 %v1703
    %v2778 = vpop.f32.mrf.mxu0
    %v2779 = vadd.f32 %v2666, %v2778
    %2780 = vmatmul.f32.gmra.mxu0 %v1707
    %v2781 = vpop.f32.mrf.mxu0
    %v2782 = vadd.f32 %v2669, %v2781
    %2783 = vmatmul.f32.gmra.mxu0 %v1711
    %v2784 = vpop.f32.mrf.mxu0
    %v2785 = vadd.f32 %v2672, %v2784
    %2786 = vmatmul.f32.gmra.mxu0 %v1715
    %v2787 = vpop.f32.mrf.mxu0
    %v2788 = vadd.f32 %v2675, %v2787
    %2789 = vmatmul.f32.gmra.mxu0 %v1719
    %v2790 = vpop.f32.mrf.mxu0
    %v2791 = vadd.f32 %v2678, %v2790
    %2792 = vmatmul.f32.gmra.mxu0 %v1723
    %v2793 = vpop.f32.mrf.mxu0
    %v2794 = vadd.f32 %v2681, %v2793
    %2795 = vmatmul.f32.gmra.mxu0 %v1727
    %v2796 = vpop.f32.mrf.mxu0
    %v2797 = vadd.f32 %v2684, %v2796
    %2798 = vmatmul.f32.gmra.mxu0 %v1731
    %v2799 = vpop.f32.mrf.mxu0
    %v2800 = vadd.f32 %v2687, %v2799
    %2801 = vmatmul.f32.gmra.mxu0 %v1735
    %v2802 = vpop.f32.mrf.mxu0
    %v2803 = vadd.f32 %v2690, %v2802
    %2804 = vmatmul.f32.gmra.mxu0 %v1739
    %v2805 = vpop.f32.mrf.mxu0
    %v2806 = vadd.f32 %v2693, %v2805
    %2807 = vmatmul.f32.gmra.mxu0 %v1743
    %v2808 = vpop.f32.mrf.mxu0
    %v2809 = vadd.f32 %v2696, %v2808
    %2810 = vmatmul.f32.gmra.mxu0 %v1747
    %v2811 = vpop.f32.mrf.mxu0
    %v2812 = vadd.f32 %v2699, %v2811
    %2813 = vmatmul.f32.gmra.mxu0 %v1751
    %v2814 = vpop.f32.mrf.mxu0
    %v2815 = vadd.f32 %v2702, %v2814
    %2816 = vmatmul.f32.gmra.mxu0 %v1755
    %v2817 = vpop.f32.mrf.mxu0
    %v2818 = vadd.f32 %v2705, %v2817
    %2819 = vmatmul.f32.gmra.mxu0 %v1759
    %v2820 = vpop.f32.mrf.mxu0
    %v2821 = vadd.f32 %v2708, %v2820
    %2822 = vmatmul.f32.gmra.mxu0 %v1763
    %v2823 = vpop.f32.mrf.mxu0
    %v2824 = vadd.f32 %v2711, %v2823
    %2825 = vmatmul.f32.gmra.mxu0 %v1767
    %v2826 = vpop.f32.mrf.mxu0
    %v2827 = vadd.f32 %v2714, %v2826
    %2828 = vmatmul.f32.gmra.mxu0 %v1771
    %v2829 = vpop.f32.mrf.mxu0
    %v2830 = vadd.f32 %v2717, %v2829
    %2831 = vmatmul.f32.gmra.mxu0 %v1775
    %v2832 = vpop.f32.mrf.mxu0
    %v2833 = vadd.f32 %v2720, %v2832
    %2834 = vmatmul.f32.gmra.mxu0 %v1779
    %v2835 = vpop.f32.mrf.mxu0
    %v2836 = vadd.f32 %v2723, %v2835
    %2837 = vdwg.mxu0
    %2838 = vmatpush.msra.mxu0 %v2034
    %2839 = vmatpush.msra.mxu0 %v2030
    %2840 = vmatpush.msra.mxu0 %v2026
    %2841 = vmatpush.msra.mxu0 %v2022
    %2842 = vmatpush.msra.mxu0 %v2018
    %2843 = vmatpush.msra.mxu0 %v2014
    %2844 = vmatpush.msra.mxu0 %v2010
    %2845 = vmatpush.msra.mxu0 %v2006
    %2846 = vmatpush.msra.mxu0 %v2002
    %2847 = vmatpush.msra.mxu0 %v1998
    %2848 = vmatpush.msra.mxu0 %v1994
    %2849 = vmatpush.msra.mxu0 %v1990
    %2850 = vmatpush.msra.mxu0 %v1986
    %2851 = vmatpush.msra.mxu0 %v1982
    %2852 = vmatpush.msra.mxu0 %v1978
    %2853 = vmatpush.msra.mxu0 %v1974
    %2854 = vmatmul.f32.gmra.mxu0 %v1656
    %v2855 = vpop.f32.mrf.mxu0
    %v2856 = vadd.f32 %v2743, %v2855
    %2857 = vmatmul.f32.gmra.mxu0 %v1660
    %v2858 = vpop.f32.mrf.mxu0
    %v2859 = vadd.f32 %v2746, %v2858
    %2860 = vmatmul.f32.gmra.mxu0 %v1664
    %v2861 = vpop.f32.mrf.mxu0
    %v2862 = vadd.f32 %v2749, %v2861
    %2863 = vmatmul.f32.gmra.mxu0 %v1668
    %v2864 = vpop.f32.mrf.mxu0
    %v2865 = vadd.f32 %v2752, %v2864
    %2866 = vmatmul.f32.gmra.mxu0 %v1672
    %v2867 = vpop.f32.mrf.mxu0
    %v2868 = vadd.f32 %v2755, %v2867
    %2869 = vmatmul.f32.gmra.mxu0 %v1676
    %v2870 = vpop.f32.mrf.mxu0
    %v2871 = vadd.f32 %v2758, %v2870
    %2872 = vmatmul.f32.gmra.mxu0 %v1680
    %v2873 = vpop.f32.mrf.mxu0
    %v2874 = vadd.f32 %v2761, %v2873
    %2875 = vmatmul.f32.gmra.mxu0 %v1684
    %v2876 = vpop.f32.mrf.mxu0
    %v2877 = vadd.f32 %v2764, %v2876
    %2878 = vmatmul.f32.gmra.mxu0 %v1688
    %v2879 = vpop.f32.mrf.mxu0
    %v2880 = vadd.f32 %v2767, %v2879
    %2881 = vmatmul.f32.gmra.mxu0 %v1692
    %v2882 = vpop.f32.mrf.mxu0
    %v2883 = vadd.f32 %v2770, %v2882
    %2884 = vmatmul.f32.gmra.mxu0 %v1696
    %v2885 = vpop.f32.mrf.mxu0
    %v2886 = vadd.f32 %v2773, %v2885
    %2887 = vmatmul.f32.gmra.mxu0 %v1700
    %v2888 = vpop.f32.mrf.mxu0
    %v2889 = vadd.f32 %v2776, %v2888
    %2890 = vmatmul.f32.gmra.mxu0 %v1704
    %v2891 = vpop.f32.mrf.mxu0
    %v2892 = vadd.f32 %v2779, %v2891
    %2893 = vmatmul.f32.gmra.mxu0 %v1708
    %v2894 = vpop.f32.mrf.mxu0
    %v2895 = vadd.f32 %v2782, %v2894
    %2896 = vmatmul.f32.gmra.mxu0 %v1712
    %v2897 = vpop.f32.mrf.mxu0
    %v2898 = vadd.f32 %v2785, %v2897
    %2899 = vmatmul.f32.gmra.mxu0 %v1716
    %v2900 = vpop.f32.mrf.mxu0
    %v2901 = vadd.f32 %v2788, %v2900
    %2902 = vmatmul.f32.gmra.mxu0 %v1720
    %v2903 = vpop.f32.mrf.mxu0
    %v2904 = vadd.f32 %v2791, %v2903
    %2905 = vmatmul.f32.gmra.mxu0 %v1724
    %v2906 = vpop.f32.mrf.mxu0
    %v2907 = vadd.f32 %v2794, %v2906
    %2908 = vmatmul.f32.gmra.mxu0 %v1728
    %v2909 = vpop.f32.mrf.mxu0
    %v2910 = vadd.f32 %v2797, %v2909
    %2911 = vmatmul.f32.gmra.mxu0 %v1732
    %v2912 = vpop.f32.mrf.mxu0
    %v2913 = vadd.f32 %v2800, %v2912
    %2914 = vmatmul.f32.gmra.mxu0 %v1736
    %v2915 = vpop.f32.mrf.mxu0
    %v2916 = vadd.f32 %v2803, %v2915
    %2917 = vmatmul.f32.gmra.mxu0 %v1740
    %v2918 = vpop.f32.mrf.mxu0
    %v2919 = vadd.f32 %v2806, %v2918
    %2920 = vmatmul.f32.gmra.mxu0 %v1744
    %v2921 = vpop.f32.mrf.mxu0
    %v2922 = vadd.f32 %v2809, %v2921
    %2923 = vmatmul.f32.gmra.mxu0 %v1748
    %v2924 = vpop.f32.mrf.mxu0
    %v2925 = vadd.f32 %v2812, %v2924
    %2926 = vmatmul.f32.gmra.mxu0 %v1752
    %v2927 = vpop.f32.mrf.mxu0
    %v2928 = vadd.f32 %v2815, %v2927
    %2929 = vmatmul.f32.gmra.mxu0 %v1756
    %v2930 = vpop.f32.mrf.mxu0
    %v2931 = vadd.f32 %v2818, %v2930
    %2932 = vmatmul.f32.gmra.mxu0 %v1760
    %v2933 = vpop.f32.mrf.mxu0
    %v2934 = vadd.f32 %v2821, %v2933
    %2935 = vmatmul.f32.gmra.mxu0 %v1764
    %v2936 = vpop.f32.mrf.mxu0
    %v2937 = vadd.f32 %v2824, %v2936
    %2938 = vmatmul.f32.gmra.mxu0 %v1768
    %v2939 = vpop.f32.mrf.mxu0
    %v2940 = vadd.f32 %v2827, %v2939
    %2941 = vmatmul.f32.gmra.mxu0 %v1772
    %v2942 = vpop.f32.mrf.mxu0
    %v2943 = vadd.f32 %v2830, %v2942
    %2944 = vmatmul.f32.gmra.mxu0 %v1776
    %v2945 = vpop.f32.mrf.mxu0
    %v2946 = vadd.f32 %v2833, %v2945
    %2947 = vmatmul.f32.gmra.mxu0 %v1780
    %v2948 = vpop.f32.mrf.mxu0
    %v2949 = vadd.f32 %v2836, %v2948
    %2950 = vdwg.mxu0
    %2951 = vmatpush.msra.mxu0 %v1843
    %2952 = vmatpush.msra.mxu0 %v1839
    %2953 = vmatpush.msra.mxu0 %v1835
    %2954 = vmatpush.msra.mxu0 %v1831
    %2955 = vmatpush.msra.mxu0 %v1827
    %2956 = vmatpush.msra.mxu0 %v1823
    %2957 = vmatpush.msra.mxu0 %v1819
    %2958 = vmatpush.msra.mxu0 %v1815
    %2959 = vmatpush.msra.mxu0 %v1811
    %2960 = vmatpush.msra.mxu0 %v1807
    %2961 = vmatpush.msra.mxu0 %v1803
    %2962 = vmatpush.msra.mxu0 %v1799
    %2963 = vmatpush.msra.mxu0 %v1795
    %2964 = vmatpush.msra.mxu0 %v1791
    %2965 = vmatpush.msra.mxu0 %v1787
    %2966 = vmatpush.msra.mxu0 %v1783
    %2967 = vmatmul.f32.gmra.mxu0 %v1653
    %v2968 = vpop.f32.mrf.mxu0
    %v2969 = vadd.f32 %v2041, %v2968
    %2970 = vmatmul.f32.gmra.mxu0 %v1657
    %v2971 = vpop.f32.mrf.mxu0
    %v2972 = vadd.f32 %v2041, %v2971
    %2973 = vmatmul.f32.gmra.mxu0 %v1661
    %v2974 = vpop.f32.mrf.mxu0
    %v2975 = vadd.f32 %v2041, %v2974
    %2976 = vmatmul.f32.gmra.mxu0 %v1665
    %v2977 = vpop.f32.mrf.mxu0
    %v2978 = vadd.f32 %v2041, %v2977
    %2979 = vmatmul.f32.gmra.mxu0 %v1669
    %v2980 = vpop.f32.mrf.mxu0
    %v2981 = vadd.f32 %v2041, %v2980
    %2982 = vmatmul.f32.gmra.mxu0 %v1673
    %v2983 = vpop.f32.mrf.mxu0
    %v2984 = vadd.f32 %v2041, %v2983
    %2985 = vmatmul.f32.gmra.mxu0 %v1677
    %v2986 = vpop.f32.mrf.mxu0
    %v2987 = vadd.f32 %v2041, %v2986
    %2988 = vmatmul.f32.gmra.mxu0 %v1681
    %v2989 = vpop.f32.mrf.mxu0
    %v2990 = vadd.f32 %v2041, %v2989
    %2991 = vmatmul.f32.gmra.mxu0 %v1685
    %v2992 = vpop.f32.mrf.mxu0
    %v2993 = vadd.f32 %v2041, %v2992
    %2994 = vmatmul.f32.gmra.mxu0 %v1689
    %v2995 = vpop.f32.mrf.mxu0
    %v2996 = vadd.f32 %v2041, %v2995
    %2997 = vmatmul.f32.gmra.mxu0 %v1693
    %v2998 = vpop.f32.mrf.mxu0
    %v2999 = vadd.f32 %v2041, %v2998
    %3000 = vmatmul.f32.gmra.mxu0 %v1697
    %v3001 = vpop.f32.mrf.mxu0
    %v3002 = vadd.f32 %v2041, %v3001
    %3003 = vmatmul.f32.gmra.mxu0 %v1701
    %v3004 = vpop.f32.mrf.mxu0
    %v3005 = vadd.f32 %v2041, %v3004
    %3006 = vmatmul.f32.gmra.mxu0 %v1705
    %v3007 = vpop.f32.mrf.mxu0
    %v3008 = vadd.f32 %v2041, %v3007
    %3009 = vmatmul.f32.gmra.mxu0 %v1709
    %v3010 = vpop.f32.mrf.mxu0
    %v3011 = vadd.f32 %v2041, %v3010
    %3012 = vmatmul.f32.gmra.mxu0 %v1713
    %v3013 = vpop.f32.mrf.mxu0
    %v3014 = vadd.f32 %v2041, %v3013
    %3015 = vmatmul.f32.gmra.mxu0 %v1717
    %v3016 = vpop.f32.mrf.mxu0
    %v3017 = vadd.f32 %v2041, %v3016
    %3018 = vmatmul.f32.gmra.mxu0 %v1721
    %v3019 = vpop.f32.mrf.mxu0
    %v3020 = vadd.f32 %v2041, %v3019
    %3021 = vmatmul.f32.gmra.mxu0 %v1725
    %v3022 = vpop.f32.mrf.mxu0
    %v3023 = vadd.f32 %v2041, %v3022
    %3024 = vmatmul.f32.gmra.mxu0 %v1729
    %v3025 = vpop.f32.mrf.mxu0
    %v3026 = vadd.f32 %v2041, %v3025
    %3027 = vmatmul.f32.gmra.mxu0 %v1733
    %v3028 = vpop.f32.mrf.mxu0
    %v3029 = vadd.f32 %v2041, %v3028
    %3030 = vmatmul.f32.gmra.mxu0 %v1737
    %v3031 = vpop.f32.mrf.mxu0
    %v3032 = vadd.f32 %v2041, %v3031
    %3033 = vmatmul.f32.gmra.mxu0 %v1741
    %v3034 = vpop.f32.mrf.mxu0
    %v3035 = vadd.f32 %v2041, %v3034
    %3036 = vmatmul.f32.gmra.mxu0 %v1745
    %v3037 = vpop.f32.mrf.mxu0
    %v3038 = vadd.f32 %v2041, %v3037
    %3039 = vmatmul.f32.gmra.mxu0 %v1749
    %v3040 = vpop.f32.mrf.mxu0
    %v3041 = vadd.f32 %v2041, %v3040
    %3042 = vmatmul.f32.gmra.mxu0 %v1753
    %v3043 = vpop.f32.mrf.mxu0
    %v3044 = vadd.f32 %v2041, %v3043
    %3045 = vmatmul.f32.gmra.mxu0 %v1757
    %v3046 = vpop.f32.mrf.mxu0
    %v3047 = vadd.f32 %v2041, %v3046
    %3048 = vmatmul.f32.gmra.mxu0 %v1761
    %v3049 = vpop.f32.mrf.mxu0
    %v3050 = vadd.f32 %v2041, %v3049
    %3051 = vmatmul.f32.gmra.mxu0 %v1765
    %v3052 = vpop.f32.mrf.mxu0
    %v3053 = vadd.f32 %v2041, %v3052
    %3054 = vmatmul.f32.gmra.mxu0 %v1769
    %v3055 = vpop.f32.mrf.mxu0
    %v3056 = vadd.f32 %v2041, %v3055
    %3057 = vmatmul.f32.gmra.mxu0 %v1773
    %v3058 = vpop.f32.mrf.mxu0
    %v3059 = vadd.f32 %v2041, %v3058
    %3060 = vmatmul.f32.gmra.mxu0 %v1777
    %v3061 = vpop.f32.mrf.mxu0
    %v3062 = vadd.f32 %v2041, %v3061
    %3063 = vdwg.mxu0
    %3064 = vmatpush.msra.mxu0 %v1907
    %3065 = vmatpush.msra.mxu0 %v1903
    %3066 = vmatpush.msra.mxu0 %v1899
    %3067 = vmatpush.msra.mxu0 %v1895
    %3068 = vmatpush.msra.mxu0 %v1891
    %3069 = vmatpush.msra.mxu0 %v1887
    %3070 = vmatpush.msra.mxu0 %v1883
    %3071 = vmatpush.msra.mxu0 %v1879
    %3072 = vmatpush.msra.mxu0 %v1875
    %3073 = vmatpush.msra.mxu0 %v1871
    %3074 = vmatpush.msra.mxu0 %v1867
    %3075 = vmatpush.msra.mxu0 %v1863
    %3076 = vmatpush.msra.mxu0 %v1859
    %3077 = vmatpush.msra.mxu0 %v1855
    %3078 = vmatpush.msra.mxu0 %v1851
    %3079 = vmatpush.msra.mxu0 %v1847
    %3080 = vmatmul.f32.gmra.mxu0 %v1654
    %v3081 = vpop.f32.mrf.mxu0
    %v3082 = vadd.f32 %v2969, %v3081
    %3083 = vmatmul.f32.gmra.mxu0 %v1658
    %v3084 = vpop.f32.mrf.mxu0
    %v3085 = vadd.f32 %v2972, %v3084
    %3086 = vmatmul.f32.gmra.mxu0 %v1662
    %v3087 = vpop.f32.mrf.mxu0
    %v3088 = vadd.f32 %v2975, %v3087
    %3089 = vmatmul.f32.gmra.mxu0 %v1666
    %v3090 = vpop.f32.mrf.mxu0
    %v3091 = vadd.f32 %v2978, %v3090
    %3092 = vmatmul.f32.gmra.mxu0 %v1670
    %v3093 = vpop.f32.mrf.mxu0
    %v3094 = vadd.f32 %v2981, %v3093
    %3095 = vmatmul.f32.gmra.mxu0 %v1674
    %v3096 = vpop.f32.mrf.mxu0
    %v3097 = vadd.f32 %v2984, %v3096
    %3098 = vmatmul.f32.gmra.mxu0 %v1678
    %v3099 = vpop.f32.mrf.mxu0
    %v3100 = vadd.f32 %v2987, %v3099
    %3101 = vmatmul.f32.gmra.mxu0 %v1682
    %v3102 = vpop.f32.mrf.mxu0
    %v3103 = vadd.f32 %v2990, %v3102
    %3104 = vmatmul.f32.gmra.mxu0 %v1686
    %v3105 = vpop.f32.mrf.mxu0
    %v3106 = vadd.f32 %v2993, %v3105
    %3107 = vmatmul.f32.gmra.mxu0 %v1690
    %v3108 = vpop.f32.mrf.mxu0
    %v3109 = vadd.f32 %v2996, %v3108
    %3110 = vmatmul.f32.gmra.mxu0 %v1694
    %v3111 = vpop.f32.mrf.mxu0
    %v3112 = vadd.f32 %v2999, %v3111
    %3113 = vmatmul.f32.gmra.mxu0 %v1698
    %v3114 = vpop.f32.mrf.mxu0
    %v3115 = vadd.f32 %v3002, %v3114
    %3116 = vmatmul.f32.gmra.mxu0 %v1702
    %v3117 = vpop.f32.mrf.mxu0
    %v3118 = vadd.f32 %v3005, %v3117
    %3119 = vmatmul.f32.gmra.mxu0 %v1706
    %v3120 = vpop.f32.mrf.mxu0
    %v3121 = vadd.f32 %v3008, %v3120
    %3122 = vmatmul.f32.gmra.mxu0 %v1710
    %v3123 = vpop.f32.mrf.mxu0
    %v3124 = vadd.f32 %v3011, %v3123
    %3125 = vmatmul.f32.gmra.mxu0 %v1714
    %v3126 = vpop.f32.mrf.mxu0
    %v3127 = vadd.f32 %v3014, %v3126
    %3128 = vmatmul.f32.gmra.mxu0 %v1718
    %v3129 = vpop.f32.mrf.mxu0
    %v3130 = vadd.f32 %v3017, %v3129
    %3131 = vmatmul.f32.gmra.mxu0 %v1722
    %v3132 = vpop.f32.mrf.mxu0
    %v3133 = vadd.f32 %v3020, %v3132
    %3134 = vmatmul.f32.gmra.mxu0 %v1726
    %v3135 = vpop.f32.mrf.mxu0
    %v3136 = vadd.f32 %v3023, %v3135
    %3137 = vmatmul.f32.gmra.mxu0 %v1730
    %v3138 = vpop.f32.mrf.mxu0
    %v3139 = vadd.f32 %v3026, %v3138
    %3140 = vmatmul.f32.gmra.mxu0 %v1734
    %v3141 = vpop.f32.mrf.mxu0
    %v3142 = vadd.f32 %v3029, %v3141
    %3143 = vmatmul.f32.gmra.mxu0 %v1738
    %v3144 = vpop.f32.mrf.mxu0
    %v3145 = vadd.f32 %v3032, %v3144
    %3146 = vmatmul.f32.gmra.mxu0 %v1742
    %v3147 = vpop.f32.mrf.mxu0
    %v3148 = vadd.f32 %v3035, %v3147
    %3149 = vmatmul.f32.gmra.mxu0 %v1746
    %v3150 = vpop.f32.mrf.mxu0
    %v3151 = vadd.f32 %v3038, %v3150
    %3152 = vmatmul.f32.gmra.mxu0 %v1750
    %v3153 = vpop.f32.mrf.mxu0
    %v3154 = vadd.f32 %v3041, %v3153
    %3155 = vmatmul.f32.gmra.mxu0 %v1754
    %v3156 = vpop.f32.mrf.mxu0
    %v3157 = vadd.f32 %v3044, %v3156
    %3158 = vmatmul.f32.gmra.mxu0 %v1758
    %v3159 = vpop.f32.mrf.mxu0
    %v3160 = vadd.f32 %v3047, %v3159
    %3161 = vmatmul.f32.gmra.mxu0 %v1762
    %v3162 = vpop.f32.mrf.mxu0
    %v3163 = vadd.f32 %v3050, %v3162
    %3164 = vmatmul.f32.gmra.mxu0 %v1766
    %v3165 = vpop.f32.mrf.mxu0
    %v3166 = vadd.f32 %v3053, %v3165
    %3167 = vmatmul.f32.gmra.mxu0 %v1770
    %v3168 = vpop.f32.mrf.mxu0
    %v3169 = vadd.f32 %v3056, %v3168
    %3170 = vmatmul.f32.gmra.mxu0 %v1774
    %v3171 = vpop.f32.mrf.mxu0
    %v3172 = vadd.f32 %v3059, %v3171
    %3173 = vmatmul.f32.gmra.mxu0 %v1778
    %v3174 = vpop.f32.mrf.mxu0
    %v3175 = vadd.f32 %v3062, %v3174
    %3176 = vdwg.mxu0
    %3177 = vmatpush.msra.mxu0 %v1971
    %3178 = vmatpush.msra.mxu0 %v1967
    %3179 = vmatpush.msra.mxu0 %v1963
    %3180 = vmatpush.msra.mxu0 %v1959
    %3181 = vmatpush.msra.mxu0 %v1955
    %3182 = vmatpush.msra.mxu0 %v1951
    %3183 = vmatpush.msra.mxu0 %v1947
    %3184 = vmatpush.msra.mxu0 %v1943
    %3185 = vmatpush.msra.mxu0 %v1939
    %3186 = vmatpush.msra.mxu0 %v1935
    %3187 = vmatpush.msra.mxu0 %v1931
    %3188 = vmatpush.msra.mxu0 %v1927
    %3189 = vmatpush.msra.mxu0 %v1923
    %3190 = vmatpush.msra.mxu0 %v1919
    %3191 = vmatpush.msra.mxu0 %v1915
    %3192 = vmatpush.msra.mxu0 %v1911
    %3193 = vmatmul.f32.gmra.mxu0 %v1655
    %v3194 = vpop.f32.mrf.mxu0
    %v3195 = vadd.f32 %v3082, %v3194
    %3196 = vmatmul.f32.gmra.mxu0 %v1659
    %v3197 = vpop.f32.mrf.mxu0
    %v3198 = vadd.f32 %v3085, %v3197
    %3199 = vmatmul.f32.gmra.mxu0 %v1663
    %v3200 = vpop.f32.mrf.mxu0
    %v3201 = vadd.f32 %v3088, %v3200
    %3202 = vmatmul.f32.gmra.mxu0 %v1667
    %v3203 = vpop.f32.mrf.mxu0
    %v3204 = vadd.f32 %v3091, %v3203
    %3205 = vmatmul.f32.gmra.mxu0 %v1671
    %v3206 = vpop.f32.mrf.mxu0
    %v3207 = vadd.f32 %v3094, %v3206
    %3208 = vmatmul.f32.gmra.mxu0 %v1675
    %v3209 = vpop.f32.mrf.mxu0
    %v3210 = vadd.f32 %v3097, %v3209
    %3211 = vmatmul.f32.gmra.mxu0 %v1679
    %v3212 = vpop.f32.mrf.mxu0
    %v3213 = vadd.f32 %v3100, %v3212
    %3214 = vmatmul.f32.gmra.mxu0 %v1683
    %v3215 = vpop.f32.mrf.mxu0
    %v3216 = vadd.f32 %v3103, %v3215
    %3217 = vmatmul.f32.gmra.mxu0 %v1687
    %v3218 = vpop.f32.mrf.mxu0
    %v3219 = vadd.f32 %v3106, %v3218
    %3220 = vmatmul.f32.gmra.mxu0 %v1691
    %v3221 = vpop.f32.mrf.mxu0
    %v3222 = vadd.f32 %v3109, %v3221
    %3223 = vmatmul.f32.gmra.mxu0 %v1695
    %v3224 = vpop.f32.mrf.mxu0
    %v3225 = vadd.f32 %v3112, %v3224
    %3226 = vmatmul.f32.gmra.mxu0 %v1699
    %v3227 = vpop.f32.mrf.mxu0
    %v3228 = vadd.f32 %v3115, %v3227
    %3229 = vmatmul.f32.gmra.mxu0 %v1703
    %v3230 = vpop.f32.mrf.mxu0
    %v3231 = vadd.f32 %v3118, %v3230
    %3232 = vmatmul.f32.gmra.mxu0 %v1707
    %v3233 = vpop.f32.mrf.mxu0
    %v3234 = vadd.f32 %v3121, %v3233
    %3235 = vmatmul.f32.gmra.mxu0 %v1711
    %v3236 = vpop.f32.mrf.mxu0
    %v3237 = vadd.f32 %v3124, %v3236
    %3238 = vmatmul.f32.gmra.mxu0 %v1715
    %v3239 = vpop.f32.mrf.mxu0
    %v3240 = vadd.f32 %v3127, %v3239
    %3241 = vmatmul.f32.gmra.mxu0 %v1719
    %v3242 = vpop.f32.mrf.mxu0
    %v3243 = vadd.f32 %v3130, %v3242
    %3244 = vmatmul.f32.gmra.mxu0 %v1723
    %v3245 = vpop.f32.mrf.mxu0
    %v3246 = vadd.f32 %v3133, %v3245
    %3247 = vmatmul.f32.gmra.mxu0 %v1727
    %v3248 = vpop.f32.mrf.mxu0
    %v3249 = vadd.f32 %v3136, %v3248
    %3250 = vmatmul.f32.gmra.mxu0 %v1731
    %v3251 = vpop.f32.mrf.mxu0
    %v3252 = vadd.f32 %v3139, %v3251
    %3253 = vmatmul.f32.gmra.mxu0 %v1735
    %v3254 = vpop.f32.mrf.mxu0
    %v3255 = vadd.f32 %v3142, %v3254
    %3256 = vmatmul.f32.gmra.mxu0 %v1739
    %v3257 = vpop.f32.mrf.mxu0
    %v3258 = vadd.f32 %v3145, %v3257
    %3259 = vmatmul.f32.gmra.mxu0 %v1743
    %v3260 = vpop.f32.mrf.mxu0
    %v3261 = vadd.f32 %v3148, %v3260
    %3262 = vmatmul.f32.gmra.mxu0 %v1747
    %v3263 = vpop.f32.mrf.mxu0
    %v3264 = vadd.f32 %v3151, %v3263
    %3265 = vmatmul.f32.gmra.mxu0 %v1751
    %v3266 = vpop.f32.mrf.mxu0
    %v3267 = vadd.f32 %v3154, %v3266
    %3268 = vmatmul.f32.gmra.mxu0 %v1755
    %v3269 = vpop.f32.mrf.mxu0
    %v3270 = vadd.f32 %v3157, %v3269
    %3271 = vmatmul.f32.gmra.mxu0 %v1759
    %v3272 = vpop.f32.mrf.mxu0
    %v3273 = vadd.f32 %v3160, %v3272
    %3274 = vmatmul.f32.gmra.mxu0 %v1763
    %v3275 = vpop.f32.mrf.mxu0
    %v3276 = vadd.f32 %v3163, %v3275
    %3277 = vmatmul.f32.gmra.mxu0 %v1767
    %v3278 = vpop.f32.mrf.mxu0
    %v3279 = vadd.f32 %v3166, %v3278
    %3280 = vmatmul.f32.gmra.mxu0 %v1771
    %v3281 = vpop.f32.mrf.mxu0
    %v3282 = vadd.f32 %v3169, %v3281
    %3283 = vmatmul.f32.gmra.mxu0 %v1775
    %v3284 = vpop.f32.mrf.mxu0
    %v3285 = vadd.f32 %v3172, %v3284
    %3286 = vmatmul.f32.gmra.mxu0 %v1779
    %v3287 = vpop.f32.mrf.mxu0
    %v3288 = vadd.f32 %v3175, %v3287
    %3289 = vdwg.mxu0
    %3290 = vmatpush.msra.mxu0 %v2035
    %3291 = vmatpush.msra.mxu0 %v2031
    %3292 = vmatpush.msra.mxu0 %v2027
    %3293 = vmatpush.msra.mxu0 %v2023
    %3294 = vmatpush.msra.mxu0 %v2019
    %3295 = vmatpush.msra.mxu0 %v2015
    %3296 = vmatpush.msra.mxu0 %v2011
    %3297 = vmatpush.msra.mxu0 %v2007
    %3298 = vmatpush.msra.mxu0 %v2003
    %3299 = vmatpush.msra.mxu0 %v1999
    %3300 = vmatpush.msra.mxu0 %v1995
    %3301 = vmatpush.msra.mxu0 %v1991
    %3302 = vmatpush.msra.mxu0 %v1987
    %3303 = vmatpush.msra.mxu0 %v1983
    %3304 = vmatpush.msra.mxu0 %v1979
    %3305 = vmatpush.msra.mxu0 %v1975
    %3306 = vmatmul.f32.gmra.mxu0 %v1656
    %v3307 = vpop.f32.mrf.mxu0
    %v3308 = vadd.f32 %v3195, %v3307
    %3309 = vmatmul.f32.gmra.mxu0 %v1660
    %v3310 = vpop.f32.mrf.mxu0
    %v3311 = vadd.f32 %v3198, %v3310
    %3312 = vmatmul.f32.gmra.mxu0 %v1664
    %v3313 = vpop.f32.mrf.mxu0
    %v3314 = vadd.f32 %v3201, %v3313
    %3315 = vmatmul.f32.gmra.mxu0 %v1668
    %v3316 = vpop.f32.mrf.mxu0
    %v3317 = vadd.f32 %v3204, %v3316
    %3318 = vmatmul.f32.gmra.mxu0 %v1672
    %v3319 = vpop.f32.mrf.mxu0
    %v3320 = vadd.f32 %v3207, %v3319
    %3321 = vmatmul.f32.gmra.mxu0 %v1676
    %v3322 = vpop.f32.mrf.mxu0
    %v3323 = vadd.f32 %v3210, %v3322
    %3324 = vmatmul.f32.gmra.mxu0 %v1680
    %v3325 = vpop.f32.mrf.mxu0
    %v3326 = vadd.f32 %v3213, %v3325
    %3327 = vmatmul.f32.gmra.mxu0 %v1684
    %v3328 = vpop.f32.mrf.mxu0
    %v3329 = vadd.f32 %v3216, %v3328
    %3330 = vmatmul.f32.gmra.mxu0 %v1688
    %v3331 = vpop.f32.mrf.mxu0
    %v3332 = vadd.f32 %v3219, %v3331
    %3333 = vmatmul.f32.gmra.mxu0 %v1692
    %v3334 = vpop.f32.mrf.mxu0
    %v3335 = vadd.f32 %v3222, %v3334
    %3336 = vmatmul.f32.gmra.mxu0 %v1696
    %v3337 = vpop.f32.mrf.mxu0
    %v3338 = vadd.f32 %v3225, %v3337
    %3339 = vmatmul.f32.gmra.mxu0 %v1700
    %v3340 = vpop.f32.mrf.mxu0
    %v3341 = vadd.f32 %v3228, %v3340
    %3342 = vmatmul.f32.gmra.mxu0 %v1704
    %v3343 = vpop.f32.mrf.mxu0
    %v3344 = vadd.f32 %v3231, %v3343
    %3345 = vmatmul.f32.gmra.mxu0 %v1708
    %v3346 = vpop.f32.mrf.mxu0
    %v3347 = vadd.f32 %v3234, %v3346
    %3348 = vmatmul.f32.gmra.mxu0 %v1712
    %v3349 = vpop.f32.mrf.mxu0
    %v3350 = vadd.f32 %v3237, %v3349
    %3351 = vmatmul.f32.gmra.mxu0 %v1716
    %v3352 = vpop.f32.mrf.mxu0
    %v3353 = vadd.f32 %v3240, %v3352
    %3354 = vmatmul.f32.gmra.mxu0 %v1720
    %v3355 = vpop.f32.mrf.mxu0
    %v3356 = vadd.f32 %v3243, %v3355
    %3357 = vmatmul.f32.gmra.mxu0 %v1724
    %v3358 = vpop.f32.mrf.mxu0
    %v3359 = vadd.f32 %v3246, %v3358
    %3360 = vmatmul.f32.gmra.mxu0 %v1728
    %v3361 = vpop.f32.mrf.mxu0
    %v3362 = vadd.f32 %v3249, %v3361
    %3363 = vmatmul.f32.gmra.mxu0 %v1732
    %v3364 = vpop.f32.mrf.mxu0
    %v3365 = vadd.f32 %v3252, %v3364
    %3366 = vmatmul.f32.gmra.mxu0 %v1736
    %v3367 = vpop.f32.mrf.mxu0
    %v3368 = vadd.f32 %v3255, %v3367
    %3369 = vmatmul.f32.gmra.mxu0 %v1740
    %v3370 = vpop.f32.mrf.mxu0
    %v3371 = vadd.f32 %v3258, %v3370
    %3372 = vmatmul.f32.gmra.mxu0 %v1744
    %v3373 = vpop.f32.mrf.mxu0
    %v3374 = vadd.f32 %v3261, %v3373
    %3375 = vmatmul.f32.gmra.mxu0 %v1748
    %v3376 = vpop.f32.mrf.mxu0
    %v3377 = vadd.f32 %v3264, %v3376
    %3378 = vmatmul.f32.gmra.mxu0 %v1752
    %v3379 = vpop.f32.mrf.mxu0
    %v3380 = vadd.f32 %v3267, %v3379
    %3381 = vmatmul.f32.gmra.mxu0 %v1756
    %v3382 = vpop.f32.mrf.mxu0
    %v3383 = vadd.f32 %v3270, %v3382
    %3384 = vmatmul.f32.gmra.mxu0 %v1760
    %v3385 = vpop.f32.mrf.mxu0
    %v3386 = vadd.f32 %v3273, %v3385
    %3387 = vmatmul.f32.gmra.mxu0 %v1764
    %v3388 = vpop.f32.mrf.mxu0
    %v3389 = vadd.f32 %v3276, %v3388
    %3390 = vmatmul.f32.gmra.mxu0 %v1768
    %v3391 = vpop.f32.mrf.mxu0
    %v3392 = vadd.f32 %v3279, %v3391
    %3393 = vmatmul.f32.gmra.mxu0 %v1772
    %v3394 = vpop.f32.mrf.mxu0
    %v3395 = vadd.f32 %v3282, %v3394
    %3396 = vmatmul.f32.gmra.mxu0 %v1776
    %v3397 = vpop.f32.mrf.mxu0
    %v3398 = vadd.f32 %v3285, %v3397
    %3399 = vmatmul.f32.gmra.mxu0 %v1780
    %v3400 = vpop.f32.mrf.mxu0
    %v3401 = vadd.f32 %v3288, %v3400
    %3402 = vdwg.mxu0
    %3403 = vmatpush.msra.mxu0 %v1844
    %3404 = vmatpush.msra.mxu0 %v1840
    %3405 = vmatpush.msra.mxu0 %v1836
    %3406 = vmatpush.msra.mxu0 %v1832
    %3407 = vmatpush.msra.mxu0 %v1828
    %3408 = vmatpush.msra.mxu0 %v1824
    %3409 = vmatpush.msra.mxu0 %v1820
    %3410 = vmatpush.msra.mxu0 %v1816
    %3411 = vmatpush.msra.mxu0 %v1812
    %3412 = vmatpush.msra.mxu0 %v1808
    %3413 = vmatpush.msra.mxu0 %v1804
    %3414 = vmatpush.msra.mxu0 %v1800
    %3415 = vmatpush.msra.mxu0 %v1796
    %3416 = vmatpush.msra.mxu0 %v1792
    %3417 = vmatpush.msra.mxu0 %v1788
    %3418 = vmatpush.msra.mxu0 %v1784
    %3419 = vmatmul.f32.gmra.mxu0 %v1653
    %v3420 = vpop.f32.mrf.mxu0
    %v3421 = vadd.f32 %v2042, %v3420
    %3422 = vmatmul.f32.gmra.mxu0 %v1657
    %v3423 = vpop.f32.mrf.mxu0
    %v3424 = vadd.f32 %v2042, %v3423
    %3425 = vmatmul.f32.gmra.mxu0 %v1661
    %v3426 = vpop.f32.mrf.mxu0
    %v3427 = vadd.f32 %v2042, %v3426
    %3428 = vmatmul.f32.gmra.mxu0 %v1665
    %v3429 = vpop.f32.mrf.mxu0
    %v3430 = vadd.f32 %v2042, %v3429
    %3431 = vmatmul.f32.gmra.mxu0 %v1669
    %v3432 = vpop.f32.mrf.mxu0
    %v3433 = vadd.f32 %v2042, %v3432
    %3434 = vmatmul.f32.gmra.mxu0 %v1673
    %v3435 = vpop.f32.mrf.mxu0
    %v3436 = vadd.f32 %v2042, %v3435
    %3437 = vmatmul.f32.gmra.mxu0 %v1677
    %v3438 = vpop.f32.mrf.mxu0
    %v3439 = vadd.f32 %v2042, %v3438
    %3440 = vmatmul.f32.gmra.mxu0 %v1681
    %v3441 = vpop.f32.mrf.mxu0
    %v3442 = vadd.f32 %v2042, %v3441
    %3443 = vmatmul.f32.gmra.mxu0 %v1685
    %v3444 = vpop.f32.mrf.mxu0
    %v3445 = vadd.f32 %v2042, %v3444
    %3446 = vmatmul.f32.gmra.mxu0 %v1689
    %v3447 = vpop.f32.mrf.mxu0
    %v3448 = vadd.f32 %v2042, %v3447
    %3449 = vmatmul.f32.gmra.mxu0 %v1693
    %v3450 = vpop.f32.mrf.mxu0
    %v3451 = vadd.f32 %v2042, %v3450
    %3452 = vmatmul.f32.gmra.mxu0 %v1697
    %v3453 = vpop.f32.mrf.mxu0
    %v3454 = vadd.f32 %v2042, %v3453
    %3455 = vmatmul.f32.gmra.mxu0 %v1701
    %v3456 = vpop.f32.mrf.mxu0
    %v3457 = vadd.f32 %v2042, %v3456
    %3458 = vmatmul.f32.gmra.mxu0 %v1705
    %v3459 = vpop.f32.mrf.mxu0
    %v3460 = vadd.f32 %v2042, %v3459
    %3461 = vmatmul.f32.gmra.mxu0 %v1709
    %v3462 = vpop.f32.mrf.mxu0
    %v3463 = vadd.f32 %v2042, %v3462
    %3464 = vmatmul.f32.gmra.mxu0 %v1713
    %v3465 = vpop.f32.mrf.mxu0
    %v3466 = vadd.f32 %v2042, %v3465
    %3467 = vmatmul.f32.gmra.mxu0 %v1717
    %v3468 = vpop.f32.mrf.mxu0
    %v3469 = vadd.f32 %v2042, %v3468
    %3470 = vmatmul.f32.gmra.mxu0 %v1721
    %v3471 = vpop.f32.mrf.mxu0
    %v3472 = vadd.f32 %v2042, %v3471
    %3473 = vmatmul.f32.gmra.mxu0 %v1725
    %v3474 = vpop.f32.mrf.mxu0
    %v3475 = vadd.f32 %v2042, %v3474
    %3476 = vmatmul.f32.gmra.mxu0 %v1729
    %v3477 = vpop.f32.mrf.mxu0
    %v3478 = vadd.f32 %v2042, %v3477
    %3479 = vmatmul.f32.gmra.mxu0 %v1733
    %v3480 = vpop.f32.mrf.mxu0
    %v3481 = vadd.f32 %v2042, %v3480
    %3482 = vmatmul.f32.gmra.mxu0 %v1737
    %v3483 = vpop.f32.mrf.mxu0
    %v3484 = vadd.f32 %v2042, %v3483
    %3485 = vmatmul.f32.gmra.mxu0 %v1741
    %v3486 = vpop.f32.mrf.mxu0
    %v3487 = vadd.f32 %v2042, %v3486
    %3488 = vmatmul.f32.gmra.mxu0 %v1745
    %v3489 = vpop.f32.mrf.mxu0
    %v3490 = vadd.f32 %v2042, %v3489
    %3491 = vmatmul.f32.gmra.mxu0 %v1749
    %v3492 = vpop.f32.mrf.mxu0
    %v3493 = vadd.f32 %v2042, %v3492
    %3494 = vmatmul.f32.gmra.mxu0 %v1753
    %v3495 = vpop.f32.mrf.mxu0
    %v3496 = vadd.f32 %v2042, %v3495
    %3497 = vmatmul.f32.gmra.mxu0 %v1757
    %v3498 = vpop.f32.mrf.mxu0
    %v3499 = vadd.f32 %v2042, %v3498
    %3500 = vmatmul.f32.gmra.mxu0 %v1761
    %v3501 = vpop.f32.mrf.mxu0
    %v3502 = vadd.f32 %v2042, %v3501
    %3503 = vmatmul.f32.gmra.mxu0 %v1765
    %v3504 = vpop.f32.mrf.mxu0
    %v3505 = vadd.f32 %v2042, %v3504
    %3506 = vmatmul.f32.gmra.mxu0 %v1769
    %v3507 = vpop.f32.mrf.mxu0
    %v3508 = vadd.f32 %v2042, %v3507
    %3509 = vmatmul.f32.gmra.mxu0 %v1773
    %v3510 = vpop.f32.mrf.mxu0
    %v3511 = vadd.f32 %v2042, %v3510
    %3512 = vmatmul.f32.gmra.mxu0 %v1777
    %v3513 = vpop.f32.mrf.mxu0
    %v3514 = vadd.f32 %v2042, %v3513
    %3515 = vdwg.mxu0
    %3516 = vmatpush.msra.mxu0 %v1908
    %3517 = vmatpush.msra.mxu0 %v1904
    %3518 = vmatpush.msra.mxu0 %v1900
    %3519 = vmatpush.msra.mxu0 %v1896
    %3520 = vmatpush.msra.mxu0 %v1892
    %3521 = vmatpush.msra.mxu0 %v1888
    %3522 = vmatpush.msra.mxu0 %v1884
    %3523 = vmatpush.msra.mxu0 %v1880
    %3524 = vmatpush.msra.mxu0 %v1876
    %3525 = vmatpush.msra.mxu0 %v1872
    %3526 = vmatpush.msra.mxu0 %v1868
    %3527 = vmatpush.msra.mxu0 %v1864
    %3528 = vmatpush.msra.mxu0 %v1860
    %3529 = vmatpush.msra.mxu0 %v1856
    %3530 = vmatpush.msra.mxu0 %v1852
    %3531 = vmatpush.msra.mxu0 %v1848
    %3532 = vmatmul.f32.gmra.mxu0 %v1654
    %v3533 = vpop.f32.mrf.mxu0
    %v3534 = vadd.f32 %v3421, %v3533
    %3535 = vmatmul.f32.gmra.mxu0 %v1658
    %v3536 = vpop.f32.mrf.mxu0
    %v3537 = vadd.f32 %v3424, %v3536
    %3538 = vmatmul.f32.gmra.mxu0 %v1662
    %v3539 = vpop.f32.mrf.mxu0
    %v3540 = vadd.f32 %v3427, %v3539
    %3541 = vmatmul.f32.gmra.mxu0 %v1666
    %v3542 = vpop.f32.mrf.mxu0
    %v3543 = vadd.f32 %v3430, %v3542
    %3544 = vmatmul.f32.gmra.mxu0 %v1670
    %v3545 = vpop.f32.mrf.mxu0
    %v3546 = vadd.f32 %v3433, %v3545
    %3547 = vmatmul.f32.gmra.mxu0 %v1674
    %v3548 = vpop.f32.mrf.mxu0
    %v3549 = vadd.f32 %v3436, %v3548
    %3550 = vmatmul.f32.gmra.mxu0 %v1678
    %v3551 = vpop.f32.mrf.mxu0
    %v3552 = vadd.f32 %v3439, %v3551
    %3553 = vmatmul.f32.gmra.mxu0 %v1682
    %v3554 = vpop.f32.mrf.mxu0
    %v3555 = vadd.f32 %v3442, %v3554
    %3556 = vmatmul.f32.gmra.mxu0 %v1686
    %v3557 = vpop.f32.mrf.mxu0
    %v3558 = vadd.f32 %v3445, %v3557
    %3559 = vmatmul.f32.gmra.mxu0 %v1690
    %v3560 = vpop.f32.mrf.mxu0
    %v3561 = vadd.f32 %v3448, %v3560
    %3562 = vmatmul.f32.gmra.mxu0 %v1694
    %v3563 = vpop.f32.mrf.mxu0
    %v3564 = vadd.f32 %v3451, %v3563
    %3565 = vmatmul.f32.gmra.mxu0 %v1698
    %v3566 = vpop.f32.mrf.mxu0
    %v3567 = vadd.f32 %v3454, %v3566
    %3568 = vmatmul.f32.gmra.mxu0 %v1702
    %v3569 = vpop.f32.mrf.mxu0
    %v3570 = vadd.f32 %v3457, %v3569
    %3571 = vmatmul.f32.gmra.mxu0 %v1706
    %v3572 = vpop.f32.mrf.mxu0
    %v3573 = vadd.f32 %v3460, %v3572
    %3574 = vmatmul.f32.gmra.mxu0 %v1710
    %v3575 = vpop.f32.mrf.mxu0
    %v3576 = vadd.f32 %v3463, %v3575
    %3577 = vmatmul.f32.gmra.mxu0 %v1714
    %v3578 = vpop.f32.mrf.mxu0
    %v3579 = vadd.f32 %v3466, %v3578
    %3580 = vmatmul.f32.gmra.mxu0 %v1718
    %v3581 = vpop.f32.mrf.mxu0
    %v3582 = vadd.f32 %v3469, %v3581
    %3583 = vmatmul.f32.gmra.mxu0 %v1722
    %v3584 = vpop.f32.mrf.mxu0
    %v3585 = vadd.f32 %v3472, %v3584
    %3586 = vmatmul.f32.gmra.mxu0 %v1726
    %v3587 = vpop.f32.mrf.mxu0
    %v3588 = vadd.f32 %v3475, %v3587
    %3589 = vmatmul.f32.gmra.mxu0 %v1730
    %v3590 = vpop.f32.mrf.mxu0
    %v3591 = vadd.f32 %v3478, %v3590
    %3592 = vmatmul.f32.gmra.mxu0 %v1734
    %v3593 = vpop.f32.mrf.mxu0
    %v3594 = vadd.f32 %v3481, %v3593
    %3595 = vmatmul.f32.gmra.mxu0 %v1738
    %v3596 = vpop.f32.mrf.mxu0
    %v3597 = vadd.f32 %v3484, %v3596
    %3598 = vmatmul.f32.gmra.mxu0 %v1742
    %v3599 = vpop.f32.mrf.mxu0
    %v3600 = vadd.f32 %v3487, %v3599
    %3601 = vmatmul.f32.gmra.mxu0 %v1746
    %v3602 = vpop.f32.mrf.mxu0
    %v3603 = vadd.f32 %v3490, %v3602
    %3604 = vmatmul.f32.gmra.mxu0 %v1750
    %v3605 = vpop.f32.mrf.mxu0
    %v3606 = vadd.f32 %v3493, %v3605
    %3607 = vmatmul.f32.gmra.mxu0 %v1754
    %v3608 = vpop.f32.mrf.mxu0
    %v3609 = vadd.f32 %v3496, %v3608
    %3610 = vmatmul.f32.gmra.mxu0 %v1758
    %v3611 = vpop.f32.mrf.mxu0
    %v3612 = vadd.f32 %v3499, %v3611
    %3613 = vmatmul.f32.gmra.mxu0 %v1762
    %v3614 = vpop.f32.mrf.mxu0
    %v3615 = vadd.f32 %v3502, %v3614
    %3616 = vmatmul.f32.gmra.mxu0 %v1766
    %v3617 = vpop.f32.mrf.mxu0
    %v3618 = vadd.f32 %v3505, %v3617
    %3619 = vmatmul.f32.gmra.mxu0 %v1770
    %v3620 = vpop.f32.mrf.mxu0
    %v3621 = vadd.f32 %v3508, %v3620
    %3622 = vmatmul.f32.gmra.mxu0 %v1774
    %v3623 = vpop.f32.mrf.mxu0
    %v3624 = vadd.f32 %v3511, %v3623
    %3625 = vmatmul.f32.gmra.mxu0 %v1778
    %v3626 = vpop.f32.mrf.mxu0
    %v3627 = vadd.f32 %v3514, %v3626
    %3628 = vdwg.mxu0
    %3629 = vmatpush.msra.mxu0 %v1972
    %3630 = vmatpush.msra.mxu0 %v1968
    %3631 = vmatpush.msra.mxu0 %v1964
    %3632 = vmatpush.msra.mxu0 %v1960
    %3633 = vmatpush.msra.mxu0 %v1956
    %3634 = vmatpush.msra.mxu0 %v1952
    %3635 = vmatpush.msra.mxu0 %v1948
    %3636 = vmatpush.msra.mxu0 %v1944
    %3637 = vmatpush.msra.mxu0 %v1940
    %3638 = vmatpush.msra.mxu0 %v1936
    %3639 = vmatpush.msra.mxu0 %v1932
    %3640 = vmatpush.msra.mxu0 %v1928
    %3641 = vmatpush.msra.mxu0 %v1924
    %3642 = vmatpush.msra.mxu0 %v1920
    %3643 = vmatpush.msra.mxu0 %v1916
    %3644 = vmatpush.msra.mxu0 %v1912
    %3645 = vmatmul.f32.gmra.mxu0 %v1655
    %v3646 = vpop.f32.mrf.mxu0
    %v3647 = vadd.f32 %v3534, %v3646
    %3648 = vmatmul.f32.gmra.mxu0 %v1659
    %v3649 = vpop.f32.mrf.mxu0
    %v3650 = vadd.f32 %v3537, %v3649
    %3651 = vmatmul.f32.gmra.mxu0 %v1663
    %v3652 = vpop.f32.mrf.mxu0
    %v3653 = vadd.f32 %v3540, %v3652
    %3654 = vmatmul.f32.gmra.mxu0 %v1667
    %v3655 = vpop.f32.mrf.mxu0
    %v3656 = vadd.f32 %v3543, %v3655
    %3657 = vmatmul.f32.gmra.mxu0 %v1671
    %v3658 = vpop.f32.mrf.mxu0
    %v3659 = vadd.f32 %v3546, %v3658
    %3660 = vmatmul.f32.gmra.mxu0 %v1675
    %v3661 = vpop.f32.mrf.mxu0
    %v3662 = vadd.f32 %v3549, %v3661
    %3663 = vmatmul.f32.gmra.mxu0 %v1679
    %v3664 = vpop.f32.mrf.mxu0
    %v3665 = vadd.f32 %v3552, %v3664
    %3666 = vmatmul.f32.gmra.mxu0 %v1683
    %v3667 = vpop.f32.mrf.mxu0
    %v3668 = vadd.f32 %v3555, %v3667
    %3669 = vmatmul.f32.gmra.mxu0 %v1687
    %v3670 = vpop.f32.mrf.mxu0
    %v3671 = vadd.f32 %v3558, %v3670
    %3672 = vmatmul.f32.gmra.mxu0 %v1691
    %v3673 = vpop.f32.mrf.mxu0
    %v3674 = vadd.f32 %v3561, %v3673
    %3675 = vmatmul.f32.gmra.mxu0 %v1695
    %v3676 = vpop.f32.mrf.mxu0
    %v3677 = vadd.f32 %v3564, %v3676
    %3678 = vmatmul.f32.gmra.mxu0 %v1699
    %v3679 = vpop.f32.mrf.mxu0
    %v3680 = vadd.f32 %v3567, %v3679
    %3681 = vmatmul.f32.gmra.mxu0 %v1703
    %v3682 = vpop.f32.mrf.mxu0
    %v3683 = vadd.f32 %v3570, %v3682
    %3684 = vmatmul.f32.gmra.mxu0 %v1707
    %v3685 = vpop.f32.mrf.mxu0
    %v3686 = vadd.f32 %v3573, %v3685
    %3687 = vmatmul.f32.gmra.mxu0 %v1711
    %v3688 = vpop.f32.mrf.mxu0
    %v3689 = vadd.f32 %v3576, %v3688
    %3690 = vmatmul.f32.gmra.mxu0 %v1715
    %v3691 = vpop.f32.mrf.mxu0
    %v3692 = vadd.f32 %v3579, %v3691
    %3693 = vmatmul.f32.gmra.mxu0 %v1719
    %v3694 = vpop.f32.mrf.mxu0
    %v3695 = vadd.f32 %v3582, %v3694
    %3696 = vmatmul.f32.gmra.mxu0 %v1723
    %v3697 = vpop.f32.mrf.mxu0
    %v3698 = vadd.f32 %v3585, %v3697
    %3699 = vmatmul.f32.gmra.mxu0 %v1727
    %v3700 = vpop.f32.mrf.mxu0
    %v3701 = vadd.f32 %v3588, %v3700
    %3702 = vmatmul.f32.gmra.mxu0 %v1731
    %v3703 = vpop.f32.mrf.mxu0
    %v3704 = vadd.f32 %v3591, %v3703
    %3705 = vmatmul.f32.gmra.mxu0 %v1735
    %v3706 = vpop.f32.mrf.mxu0
    %v3707 = vadd.f32 %v3594, %v3706
    %3708 = vmatmul.f32.gmra.mxu0 %v1739
    %v3709 = vpop.f32.mrf.mxu0
    %v3710 = vadd.f32 %v3597, %v3709
    %3711 = vmatmul.f32.gmra.mxu0 %v1743
    %v3712 = vpop.f32.mrf.mxu0
    %v3713 = vadd.f32 %v3600, %v3712
    %3714 = vmatmul.f32.gmra.mxu0 %v1747
    %v3715 = vpop.f32.mrf.mxu0
    %v3716 = vadd.f32 %v3603, %v3715
    %3717 = vmatmul.f32.gmra.mxu0 %v1751
    %v3718 = vpop.f32.mrf.mxu0
    %v3719 = vadd.f32 %v3606, %v3718
    %3720 = vmatmul.f32.gmra.mxu0 %v1755
    %v3721 = vpop.f32.mrf.mxu0
    %v3722 = vadd.f32 %v3609, %v3721
    %3723 = vmatmul.f32.gmra.mxu0 %v1759
    %v3724 = vpop.f32.mrf.mxu0
    %v3725 = vadd.f32 %v3612, %v3724
    %3726 = vmatmul.f32.gmra.mxu0 %v1763
    %v3727 = vpop.f32.mrf.mxu0
    %v3728 = vadd.f32 %v3615, %v3727
    %3729 = vmatmul.f32.gmra.mxu0 %v1767
    %v3730 = vpop.f32.mrf.mxu0
    %v3731 = vadd.f32 %v3618, %v3730
    %3732 = vmatmul.f32.gmra.mxu0 %v1771
    %v3733 = vpop.f32.mrf.mxu0
    %v3734 = vadd.f32 %v3621, %v3733
    %3735 = vmatmul.f32.gmra.mxu0 %v1775
    %v3736 = vpop.f32.mrf.mxu0
    %v3737 = vadd.f32 %v3624, %v3736
    %3738 = vmatmul.f32.gmra.mxu0 %v1779
    %v3739 = vpop.f32.mrf.mxu0
    %v3740 = vadd.f32 %v3627, %v3739
    %3741 = vdwg.mxu0
    %3742 = vmatpush.msra.mxu0 %v2036
    %3743 = vmatpush.msra.mxu0 %v2032
    %3744 = vmatpush.msra.mxu0 %v2028
    %3745 = vmatpush.msra.mxu0 %v2024
    %3746 = vmatpush.msra.mxu0 %v2020
    %3747 = vmatpush.msra.mxu0 %v2016
    %3748 = vmatpush.msra.mxu0 %v2012
    %3749 = vmatpush.msra.mxu0 %v2008
    %3750 = vmatpush.msra.mxu0 %v2004
    %3751 = vmatpush.msra.mxu0 %v2000
    %3752 = vmatpush.msra.mxu0 %v1996
    %3753 = vmatpush.msra.mxu0 %v1992
    %3754 = vmatpush.msra.mxu0 %v1988
    %3755 = vmatpush.msra.mxu0 %v1984
    %3756 = vmatpush.msra.mxu0 %v1980
    %3757 = vmatpush.msra.mxu0 %v1976
    %3758 = vmatmul.f32.gmra.mxu0 %v1656
    %v3759 = vpop.f32.mrf.mxu0
    %v3760 = vadd.f32 %v3647, %v3759
    %3761 = vmatmul.f32.gmra.mxu0 %v1660
    %v3762 = vpop.f32.mrf.mxu0
    %v3763 = vadd.f32 %v3650, %v3762
    %3764 = vmatmul.f32.gmra.mxu0 %v1664
    %v3765 = vpop.f32.mrf.mxu0
    %v3766 = vadd.f32 %v3653, %v3765
    %3767 = vmatmul.f32.gmra.mxu0 %v1668
    %v3768 = vpop.f32.mrf.mxu0
    %v3769 = vadd.f32 %v3656, %v3768
    %3770 = vmatmul.f32.gmra.mxu0 %v1672
    %v3771 = vpop.f32.mrf.mxu0
    %v3772 = vadd.f32 %v3659, %v3771
    %3773 = vmatmul.f32.gmra.mxu0 %v1676
    %v3774 = vpop.f32.mrf.mxu0
    %v3775 = vadd.f32 %v3662, %v3774
    %3776 = vmatmul.f32.gmra.mxu0 %v1680
    %v3777 = vpop.f32.mrf.mxu0
    %v3778 = vadd.f32 %v3665, %v3777
    %3779 = vmatmul.f32.gmra.mxu0 %v1684
    %v3780 = vpop.f32.mrf.mxu0
    %v3781 = vadd.f32 %v3668, %v3780
    %3782 = vmatmul.f32.gmra.mxu0 %v1688
    %v3783 = vpop.f32.mrf.mxu0
    %v3784 = vadd.f32 %v3671, %v3783
    %3785 = vmatmul.f32.gmra.mxu0 %v1692
    %v3786 = vpop.f32.mrf.mxu0
    %v3787 = vadd.f32 %v3674, %v3786
    %3788 = vmatmul.f32.gmra.mxu0 %v1696
    %v3789 = vpop.f32.mrf.mxu0
    %v3790 = vadd.f32 %v3677, %v3789
    %3791 = vmatmul.f32.gmra.mxu0 %v1700
    %v3792 = vpop.f32.mrf.mxu0
    %v3793 = vadd.f32 %v3680, %v3792
    %3794 = vmatmul.f32.gmra.mxu0 %v1704
    %v3795 = vpop.f32.mrf.mxu0
    %v3796 = vadd.f32 %v3683, %v3795
    %3797 = vmatmul.f32.gmra.mxu0 %v1708
    %v3798 = vpop.f32.mrf.mxu0
    %v3799 = vadd.f32 %v3686, %v3798
    %3800 = vmatmul.f32.gmra.mxu0 %v1712
    %v3801 = vpop.f32.mrf.mxu0
    %v3802 = vadd.f32 %v3689, %v3801
    %3803 = vmatmul.f32.gmra.mxu0 %v1716
    %v3804 = vpop.f32.mrf.mxu0
    %v3805 = vadd.f32 %v3692, %v3804
    %3806 = vmatmul.f32.gmra.mxu0 %v1720
    %v3807 = vpop.f32.mrf.mxu0
    %v3808 = vadd.f32 %v3695, %v3807
    %3809 = vmatmul.f32.gmra.mxu0 %v1724
    %v3810 = vpop.f32.mrf.mxu0
    %v3811 = vadd.f32 %v3698, %v3810
    %3812 = vmatmul.f32.gmra.mxu0 %v1728
    %v3813 = vpop.f32.mrf.mxu0
    %v3814 = vadd.f32 %v3701, %v3813
    %3815 = vmatmul.f32.gmra.mxu0 %v1732
    %v3816 = vpop.f32.mrf.mxu0
    %v3817 = vadd.f32 %v3704, %v3816
    %3818 = vmatmul.f32.gmra.mxu0 %v1736
    %v3819 = vpop.f32.mrf.mxu0
    %v3820 = vadd.f32 %v3707, %v3819
    %3821 = vmatmul.f32.gmra.mxu0 %v1740
    %v3822 = vpop.f32.mrf.mxu0
    %v3823 = vadd.f32 %v3710, %v3822
    %3824 = vmatmul.f32.gmra.mxu0 %v1744
    %v3825 = vpop.f32.mrf.mxu0
    %v3826 = vadd.f32 %v3713, %v3825
    %3827 = vmatmul.f32.gmra.mxu0 %v1748
    %v3828 = vpop.f32.mrf.mxu0
    %v3829 = vadd.f32 %v3716, %v3828
    %3830 = vmatmul.f32.gmra.mxu0 %v1752
    %v3831 = vpop.f32.mrf.mxu0
    %v3832 = vadd.f32 %v3719, %v3831
    %3833 = vmatmul.f32.gmra.mxu0 %v1756
    %v3834 = vpop.f32.mrf.mxu0
    %v3835 = vadd.f32 %v3722, %v3834
    %3836 = vmatmul.f32.gmra.mxu0 %v1760
    %v3837 = vpop.f32.mrf.mxu0
    %v3838 = vadd.f32 %v3725, %v3837
    %3839 = vmatmul.f32.gmra.mxu0 %v1764
    %v3840 = vpop.f32.mrf.mxu0
    %v3841 = vadd.f32 %v3728, %v3840
    %3842 = vmatmul.f32.gmra.mxu0 %v1768
    %v3843 = vpop.f32.mrf.mxu0
    %v3844 = vadd.f32 %v3731, %v3843
    %3845 = vmatmul.f32.gmra.mxu0 %v1772
    %v3846 = vpop.f32.mrf.mxu0
    %v3847 = vadd.f32 %v3734, %v3846
    %3848 = vmatmul.f32.gmra.mxu0 %v1776
    %v3849 = vpop.f32.mrf.mxu0
    %v3850 = vadd.f32 %v3737, %v3849
    %3851 = vmatmul.f32.gmra.mxu0 %v1780
    %v3852 = vpop.f32.mrf.mxu0
    %v3853 = vadd.f32 %v3740, %v3852
    %3854 = vdwg.mxu0
    %v3855 = vmax.f32 %v2404, 0.0
    %v3856 = vmax.f32 %v2856, 0.0
    %v3857 = vmax.f32 %v3308, 0.0
    %v3858 = vmax.f32 %v3760, 0.0
    %v3859 = vmax.f32 %v2407, 0.0
    %v3860 = vmax.f32 %v2859, 0.0
    %v3861 = vmax.f32 %v3311, 0.0
    %v3862 = vmax.f32 %v3763, 0.0
    %v3863 = vmax.f32 %v2410, 0.0
    %v3864 = vmax.f32 %v2862, 0.0
    %v3865 = vmax.f32 %v3314, 0.0
    %v3866 = vmax.f32 %v3766, 0.0
    %v3867 = vmax.f32 %v2413, 0.0
    %v3868 = vmax.f32 %v2865, 0.0
    %v3869 = vmax.f32 %v3317, 0.0
    %v3870 = vmax.f32 %v3769, 0.0
    %v3871 = vmax.f32 %v2416, 0.0
    %v3872 = vmax.f32 %v2868, 0.0
    %v3873 = vmax.f32 %v3320, 0.0
    %v3874 = vmax.f32 %v3772, 0.0
    %v3875 = vmax.f32 %v2419, 0.0
    %v3876 = vmax.f32 %v2871, 0.0
    %v3877 = vmax.f32 %v3323, 0.0
    %v3878 = vmax.f32 %v3775, 0.0
    %v3879 = vmax.f32 %v2422, 0.0
    %v3880 = vmax.f32 %v2874, 0.0
    %v3881 = vmax.f32 %v3326, 0.0
    %v3882 = vmax.f32 %v3778, 0.0
    %v3883 = vmax.f32 %v2425, 0.0
    %v3884 = vmax.f32 %v2877, 0.0
    %v3885 = vmax.f32 %v3329, 0.0
    %v3886 = vmax.f32 %v3781, 0.0
    %v3887 = vmax.f32 %v2428, 0.0
    %v3888 = vmax.f32 %v2880, 0.0
    %v3889 = vmax.f32 %v3332, 0.0
    %v3890 = vmax.f32 %v3784, 0.0
    %v3891 = vmax.f32 %v2431, 0.0
    %v3892 = vmax.f32 %v2883, 0.0
    %v3893 = vmax.f32 %v3335, 0.0
    %v3894 = vmax.f32 %v3787, 0.0
    %v3895 = vmax.f32 %v2434, 0.0
    %v3896 = vmax.f32 %v2886, 0.0
    %v3897 = vmax.f32 %v3338, 0.0
    %v3898 = vmax.f32 %v3790, 0.0
    %v3899 = vmax.f32 %v2437, 0.0
    %v3900 = vmax.f32 %v2889, 0.0
    %v3901 = vmax.f32 %v3341, 0.0
    %v3902 = vmax.f32 %v3793, 0.0
    %v3903 = vmax.f32 %v2440, 0.0
    %v3904 = vmax.f32 %v2892, 0.0
    %v3905 = vmax.f32 %v3344, 0.0
    %v3906 = vmax.f32 %v3796, 0.0
    %v3907 = vmax.f32 %v2443, 0.0
    %v3908 = vmax.f32 %v2895, 0.0
    %v3909 = vmax.f32 %v3347, 0.0
    %v3910 = vmax.f32 %v3799, 0.0
    %v3911 = vmax.f32 %v2446, 0.0
    %v3912 = vmax.f32 %v2898, 0.0
    %v3913 = vmax.f32 %v3350, 0.0
    %v3914 = vmax.f32 %v3802, 0.0
    %v3915 = vmax.f32 %v2449, 0.0
    %v3916 = vmax.f32 %v2901, 0.0
    %v3917 = vmax.f32 %v3353, 0.0
    %v3918 = vmax.f32 %v3805, 0.0
    %v3919 = vmax.f32 %v2452, 0.0
    %v3920 = vmax.f32 %v2904, 0.0
    %v3921 = vmax.f32 %v3356, 0.0
    %v3922 = vmax.f32 %v3808, 0.0
    %v3923 = vmax.f32 %v2455, 0.0
    %v3924 = vmax.f32 %v2907, 0.0
    %v3925 = vmax.f32 %v3359, 0.0
    %v3926 = vmax.f32 %v3811, 0.0
    %v3927 = vmax.f32 %v2458, 0.0
    %v3928 = vmax.f32 %v2910, 0.0
    %v3929 = vmax.f32 %v3362, 0.0
    %v3930 = vmax.f32 %v3814, 0.0
    %v3931 = vmax.f32 %v2461, 0.0
    %v3932 = vmax.f32 %v2913, 0.0
    %v3933 = vmax.f32 %v3365, 0.0
    %v3934 = vmax.f32 %v3817, 0.0
    %v3935 = vmax.f32 %v2464, 0.0
    %v3936 = vmax.f32 %v2916, 0.0
    %v3937 = vmax.f32 %v3368, 0.0
    %v3938 = vmax.f32 %v3820, 0.0
    %v3939 = vmax.f32 %v2467, 0.0
    %v3940 = vmax.f32 %v2919, 0.0
    %v3941 = vmax.f32 %v3371, 0.0
    %v3942 = vmax.f32 %v3823, 0.0
    %v3943 = vmax.f32 %v2470, 0.0
    %v3944 = vmax.f32 %v2922, 0.0
    %v3945 = vmax.f32 %v3374, 0.0
    %v3946 = vmax.f32 %v3826, 0.0
    %v3947 = vmax.f32 %v2473, 0.0
    %v3948 = vmax.f32 %v2925, 0.0
    %v3949 = vmax.f32 %v3377, 0.0
    %v3950 = vmax.f32 %v3829, 0.0
    %v3951 = vmax.f32 %v2476, 0.0
    %v3952 = vmax.f32 %v2928, 0.0
    %v3953 = vmax.f32 %v3380, 0.0
    %v3954 = vmax.f32 %v3832, 0.0
    %v3955 = vmax.f32 %v2479, 0.0
    %v3956 = vmax.f32 %v2931, 0.0
    %v3957 = vmax.f32 %v3383, 0.0
    %v3958 = vmax.f32 %v3835, 0.0
    %v3959 = vmax.f32 %v2482, 0.0
    %v3960 = vmax.f32 %v2934, 0.0
    %v3961 = vmax.f32 %v3386, 0.0
    %v3962 = vmax.f32 %v3838, 0.0
    %v3963 = vmax.f32 %v2485, 0.0
    %v3964 = vmax.f32 %v2937, 0.0
    %v3965 = vmax.f32 %v3389, 0.0
    %v3966 = vmax.f32 %v3841, 0.0
    %v3967 = vmax.f32 %v2488, 0.0
    %v3968 = vmax.f32 %v2940, 0.0
    %v3969 = vmax.f32 %v3392, 0.0
    %v3970 = vmax.f32 %v3844, 0.0
    %v3971 = vmax.f32 %v2491, 0.0
    %v3972 = vmax.f32 %v2943, 0.0
    %v3973 = vmax.f32 %v3395, 0.0
    %v3974 = vmax.f32 %v3847, 0.0
    %v3975 = vmax.f32 %v2494, 0.0
    %v3976 = vmax.f32 %v2946, 0.0
    %v3977 = vmax.f32 %v3398, 0.0
    %v3978 = vmax.f32 %v3850, 0.0
    %v3979 = vmax.f32 %v2497, 0.0
    %v3980 = vmax.f32 %v2949, 0.0
    %v3981 = vmax.f32 %v3401, 0.0
    %v3982 = vmax.f32 %v3853, 0.0
    %v3983 = vld [vmem:[#allocation7] sm:$0xff]
    %v3984 = vld [vmem:[#allocation7 + $0x8] sm:$0xff]
    %v3985 = vld [vmem:[#allocation7 + $0x10] sm:$0xff]
    %v3986 = vld [vmem:[#allocation7 + $0x18] sm:$0xff]
    %v3987 = vld [vmem:[#allocation7 + $0x20] sm:$0xff]
    %v3988 = vld [vmem:[#allocation7 + $0x28] sm:$0xff]
    %v3989 = vld [vmem:[#allocation7 + $0x30] sm:$0xff]
    %v3990 = vld [vmem:[#allocation7 + $0x38] sm:$0xff]
    %v3991 = vld [vmem:[#allocation7 + $0x40] sm:$0xff]
    %v3992 = vld [vmem:[#allocation7 + $0x48] sm:$0xff]
    %v3993 = vld [vmem:[#allocation7 + $0x50] sm:$0xff]
    %v3994 = vld [vmem:[#allocation7 + $0x58] sm:$0xff]
    %v3995 = vld [vmem:[#allocation7 + $0x60] sm:$0xff]
    %v3996 = vld [vmem:[#allocation7 + $0x68] sm:$0xff]
    %v3997 = vld [vmem:[#allocation7 + $0x70] sm:$0xff]
    %v3998 = vld [vmem:[#allocation7 + $0x78] sm:$0xff]
    %v3999 = vld [vmem:[#allocation7 + $0x80] sm:$0xff]
    %v4000 = vld [vmem:[#allocation7 + $0x88] sm:$0xff]
    %v4001 = vld [vmem:[#allocation7 + $0x90] sm:$0xff]
    %v4002 = vld [vmem:[#allocation7 + $0x98] sm:$0xff]
    %v4003 = vld [vmem:[#allocation7 + $0xa0] sm:$0xff]
    %v4004 = vld [vmem:[#allocation7 + $0xa8] sm:$0xff]
    %v4005 = vld [vmem:[#allocation7 + $0xb0] sm:$0xff]
    %v4006 = vld [vmem:[#allocation7 + $0xb8] sm:$0xff]
    %v4007 = vld [vmem:[#allocation7 + $0xc0] sm:$0xff]
    %v4008 = vld [vmem:[#allocation7 + $0xc8] sm:$0xff]
    %v4009 = vld [vmem:[#allocation7 + $0xd0] sm:$0xff]
    %v4010 = vld [vmem:[#allocation7 + $0xd8] sm:$0xff]
    %v4011 = vld [vmem:[#allocation7 + $0xe0] sm:$0xff]
    %v4012 = vld [vmem:[#allocation7 + $0xe8] sm:$0xff]
    %v4013 = vld [vmem:[#allocation7 + $0xf0] sm:$0xff]
    %v4014 = vld [vmem:[#allocation7 + $0xf8] sm:$0xff]
    %v4015 = vld [vmem:[#allocation7 + $0x100] sm:$0xff]
    %v4016 = vld [vmem:[#allocation7 + $0x108] sm:$0xff]
    %v4017 = vld [vmem:[#allocation7 + $0x110] sm:$0xff]
    %v4018 = vld [vmem:[#allocation7 + $0x118] sm:$0xff]
    %v4019 = vld [vmem:[#allocation7 + $0x120] sm:$0xff]
    %v4020 = vld [vmem:[#allocation7 + $0x128] sm:$0xff]
    %v4021 = vld [vmem:[#allocation7 + $0x130] sm:$0xff]
    %v4022 = vld [vmem:[#allocation7 + $0x138] sm:$0xff]
    %v4023 = vld [vmem:[#allocation7 + $0x140] sm:$0xff]
    %v4024 = vld [vmem:[#allocation7 + $0x148] sm:$0xff]
    %v4025 = vld [vmem:[#allocation7 + $0x150] sm:$0xff]
    %v4026 = vld [vmem:[#allocation7 + $0x158] sm:$0xff]
    %v4027 = vld [vmem:[#allocation7 + $0x160] sm:$0xff]
    %v4028 = vld [vmem:[#allocation7 + $0x168] sm:$0xff]
    %v4029 = vld [vmem:[#allocation7 + $0x170] sm:$0xff]
    %v4030 = vld [vmem:[#allocation7 + $0x178] sm:$0xff]
    %v4031 = vld [vmem:[#allocation7 + $0x180] sm:$0xff]
    %v4032 = vld [vmem:[#allocation7 + $0x188] sm:$0xff]
    %v4033 = vld [vmem:[#allocation7 + $0x190] sm:$0xff]
    %v4034 = vld [vmem:[#allocation7 + $0x198] sm:$0xff]
    %v4035 = vld [vmem:[#allocation7 + $0x1a0] sm:$0xff]
    %v4036 = vld [vmem:[#allocation7 + $0x1a8] sm:$0xff]
    %v4037 = vld [vmem:[#allocation7 + $0x1b0] sm:$0xff]
    %v4038 = vld [vmem:[#allocation7 + $0x1b8] sm:$0xff]
    %v4039 = vld [vmem:[#allocation7 + $0x1c0] sm:$0xff]
    %v4040 = vld [vmem:[#allocation7 + $0x1c8] sm:$0xff]
    %v4041 = vld [vmem:[#allocation7 + $0x1d0] sm:$0xff]
    %v4042 = vld [vmem:[#allocation7 + $0x1d8] sm:$0xff]
    %v4043 = vld [vmem:[#allocation7 + $0x1e0] sm:$0xff]
    %v4044 = vld [vmem:[#allocation7 + $0x1e8] sm:$0xff]
    %v4045 = vld [vmem:[#allocation7 + $0x1f0] sm:$0xff]
    %v4046 = vld [vmem:[#allocation7 + $0x1f8] sm:$0xff]
    %v4047 = vld [vmem:[#allocation7 + $0x200] sm:$0xff]
    %v4048 = vld [vmem:[#allocation7 + $0x208] sm:$0xff]
    %v4049 = vld [vmem:[#allocation7 + $0x210] sm:$0xff]
    %v4050 = vld [vmem:[#allocation7 + $0x218] sm:$0xff]
    %v4051 = vld [vmem:[#allocation7 + $0x220] sm:$0xff]
    %v4052 = vld [vmem:[#allocation7 + $0x228] sm:$0xff]
    %v4053 = vld [vmem:[#allocation7 + $0x230] sm:$0xff]
    %v4054 = vld [vmem:[#allocation7 + $0x238] sm:$0xff]
    %v4055 = vld [vmem:[#allocation7 + $0x240] sm:$0xff]
    %v4056 = vld [vmem:[#allocation7 + $0x248] sm:$0xff]
    %v4057 = vld [vmem:[#allocation7 + $0x250] sm:$0xff]
    %v4058 = vld [vmem:[#allocation7 + $0x258] sm:$0xff]
    %v4059 = vld [vmem:[#allocation7 + $0x260] sm:$0xff]
    %v4060 = vld [vmem:[#allocation7 + $0x268] sm:$0xff]
    %v4061 = vld [vmem:[#allocation7 + $0x270] sm:$0xff]
    %v4062 = vld [vmem:[#allocation7 + $0x278] sm:$0xff]
    %v4063 = vld [vmem:[#allocation7 + $0x280] sm:$0xff]
    %v4064 = vld [vmem:[#allocation7 + $0x288] sm:$0xff]
    %v4065 = vld [vmem:[#allocation7 + $0x290] sm:$0xff]
    %v4066 = vld [vmem:[#allocation7 + $0x298] sm:$0xff]
    %v4067 = vld [vmem:[#allocation7 + $0x2a0] sm:$0xff]
    %v4068 = vld [vmem:[#allocation7 + $0x2a8] sm:$0xff]
    %v4069 = vld [vmem:[#allocation7 + $0x2b0] sm:$0xff]
    %v4070 = vld [vmem:[#allocation7 + $0x2b8] sm:$0xff]
    %v4071 = vld [vmem:[#allocation7 + $0x2c0] sm:$0xff]
    %v4072 = vld [vmem:[#allocation7 + $0x2c8] sm:$0xff]
    %v4073 = vld [vmem:[#allocation7 + $0x2d0] sm:$0xff]
    %v4074 = vld [vmem:[#allocation7 + $0x2d8] sm:$0xff]
    %v4075 = vld [vmem:[#allocation7 + $0x2e0] sm:$0xff]
    %v4076 = vld [vmem:[#allocation7 + $0x2e8] sm:$0xff]
    %v4077 = vld [vmem:[#allocation7 + $0x2f0] sm:$0xff]
    %v4078 = vld [vmem:[#allocation7 + $0x2f8] sm:$0xff]
    %v4079 = vld [vmem:[#allocation7 + $0x300] sm:$0xff]
    %v4080 = vld [vmem:[#allocation7 + $0x308] sm:$0xff]
    %v4081 = vld [vmem:[#allocation7 + $0x310] sm:$0xff]
    %v4082 = vld [vmem:[#allocation7 + $0x318] sm:$0xff]
    %v4083 = vld [vmem:[#allocation7 + $0x320] sm:$0xff]
    %v4084 = vld [vmem:[#allocation7 + $0x328] sm:$0xff]
    %v4085 = vld [vmem:[#allocation7 + $0x330] sm:$0xff]
    %v4086 = vld [vmem:[#allocation7 + $0x338] sm:$0xff]
    %v4087 = vld [vmem:[#allocation7 + $0x340] sm:$0xff]
    %v4088 = vld [vmem:[#allocation7 + $0x348] sm:$0xff]
    %v4089 = vld [vmem:[#allocation7 + $0x350] sm:$0xff]
    %v4090 = vld [vmem:[#allocation7 + $0x358] sm:$0xff]
    %v4091 = vld [vmem:[#allocation7 + $0x360] sm:$0xff]
    %v4092 = vld [vmem:[#allocation7 + $0x368] sm:$0xff]
    %v4093 = vld [vmem:[#allocation7 + $0x370] sm:$0xff]
    %v4094 = vld [vmem:[#allocation7 + $0x378] sm:$0xff]
    %v4095 = vld [vmem:[#allocation7 + $0x380] sm:$0xff]
    %v4096 = vld [vmem:[#allocation7 + $0x388] sm:$0xff]
    %v4097 = vld [vmem:[#allocation7 + $0x390] sm:$0xff]
    %v4098 = vld [vmem:[#allocation7 + $0x398] sm:$0xff]
    %v4099 = vld [vmem:[#allocation7 + $0x3a0] sm:$0xff]
    %v4100 = vld [vmem:[#allocation7 + $0x3a8] sm:$0xff]
    %v4101 = vld [vmem:[#allocation7 + $0x3b0] sm:$0xff]
    %v4102 = vld [vmem:[#allocation7 + $0x3b8] sm:$0xff]
    %v4103 = vld [vmem:[#allocation7 + $0x3c0] sm:$0xff]
    %v4104 = vld [vmem:[#allocation7 + $0x3c8] sm:$0xff]
    %v4105 = vld [vmem:[#allocation7 + $0x3d0] sm:$0xff]
    %v4106 = vld [vmem:[#allocation7 + $0x3d8] sm:$0xff]
    %v4107 = vld [vmem:[#allocation7 + $0x3e0] sm:$0xff]
    %v4108 = vld [vmem:[#allocation7 + $0x3e8] sm:$0xff]
    %v4109 = vld [vmem:[#allocation7 + $0x3f0] sm:$0xff]
    %v4110 = vld [vmem:[#allocation7 + $0x3f8] sm:$0xff]
    %v4111 = vld [vmem:[#allocation7 + $0x400] sm:$0xff]
    %v4112 = vld [vmem:[#allocation7 + $0x408] sm:$0xff]
    %v4113 = vld [vmem:[#allocation7 + $0x410] sm:$0xff]
    %v4114 = vld [vmem:[#allocation7 + $0x418] sm:$0xff]
    %v4115 = vld [vmem:[#allocation7 + $0x420] sm:$0xff]
    %v4116 = vld [vmem:[#allocation7 + $0x428] sm:$0xff]
    %v4117 = vld [vmem:[#allocation7 + $0x430] sm:$0xff]
    %v4118 = vld [vmem:[#allocation7 + $0x438] sm:$0xff]
    %v4119 = vld [vmem:[#allocation7 + $0x440] sm:$0xff]
    %v4120 = vld [vmem:[#allocation7 + $0x448] sm:$0xff]
    %v4121 = vld [vmem:[#allocation7 + $0x450] sm:$0xff]
    %v4122 = vld [vmem:[#allocation7 + $0x458] sm:$0xff]
    %v4123 = vld [vmem:[#allocation7 + $0x460] sm:$0xff]
    %v4124 = vld [vmem:[#allocation7 + $0x468] sm:$0xff]
    %v4125 = vld [vmem:[#allocation7 + $0x470] sm:$0xff]
    %v4126 = vld [vmem:[#allocation7 + $0x478] sm:$0xff]
    %v4127 = vld [vmem:[#allocation7 + $0x480] sm:$0xff]
    %v4128 = vld [vmem:[#allocation7 + $0x488] sm:$0xff]
    %v4129 = vld [vmem:[#allocation7 + $0x490] sm:$0xff]
    %v4130 = vld [vmem:[#allocation7 + $0x498] sm:$0xff]
    %v4131 = vld [vmem:[#allocation7 + $0x4a0] sm:$0xff]
    %v4132 = vld [vmem:[#allocation7 + $0x4a8] sm:$0xff]
    %v4133 = vld [vmem:[#allocation7 + $0x4b0] sm:$0xff]
    %v4134 = vld [vmem:[#allocation7 + $0x4b8] sm:$0xff]
    %v4135 = vld [vmem:[#allocation7 + $0x4c0] sm:$0xff]
    %v4136 = vld [vmem:[#allocation7 + $0x4c8] sm:$0xff]
    %v4137 = vld [vmem:[#allocation7 + $0x4d0] sm:$0xff]
    %v4138 = vld [vmem:[#allocation7 + $0x4d8] sm:$0xff]
    %v4139 = vld [vmem:[#allocation7 + $0x4e0] sm:$0xff]
    %v4140 = vld [vmem:[#allocation7 + $0x4e8] sm:$0xff]
    %v4141 = vld [vmem:[#allocation7 + $0x4f0] sm:$0xff]
    %v4142 = vld [vmem:[#allocation7 + $0x4f8] sm:$0xff]
    %v4143 = vld [vmem:[#allocation7 + $0x500] sm:$0xff]
    %v4144 = vld [vmem:[#allocation7 + $0x508] sm:$0xff]
    %v4145 = vld [vmem:[#allocation7 + $0x510] sm:$0xff]
    %v4146 = vld [vmem:[#allocation7 + $0x518] sm:$0xff]
    %v4147 = vld [vmem:[#allocation7 + $0x520] sm:$0xff]
    %v4148 = vld [vmem:[#allocation7 + $0x528] sm:$0xff]
    %v4149 = vld [vmem:[#allocation7 + $0x530] sm:$0xff]
    %v4150 = vld [vmem:[#allocation7 + $0x538] sm:$0xff]
    %v4151 = vld [vmem:[#allocation7 + $0x540] sm:$0xff]
    %v4152 = vld [vmem:[#allocation7 + $0x548] sm:$0xff]
    %v4153 = vld [vmem:[#allocation7 + $0x550] sm:$0xff]
    %v4154 = vld [vmem:[#allocation7 + $0x558] sm:$0xff]
    %v4155 = vld [vmem:[#allocation7 + $0x560] sm:$0xff]
    %v4156 = vld [vmem:[#allocation7 + $0x568] sm:$0xff]
    %v4157 = vld [vmem:[#allocation7 + $0x570] sm:$0xff]
    %v4158 = vld [vmem:[#allocation7 + $0x578] sm:$0xff]
    %v4159 = vld [vmem:[#allocation7 + $0x580] sm:$0xff]
    %v4160 = vld [vmem:[#allocation7 + $0x588] sm:$0xff]
    %v4161 = vld [vmem:[#allocation7 + $0x590] sm:$0xff]
    %v4162 = vld [vmem:[#allocation7 + $0x598] sm:$0xff]
    %v4163 = vld [vmem:[#allocation7 + $0x5a0] sm:$0xff]
    %v4164 = vld [vmem:[#allocation7 + $0x5a8] sm:$0xff]
    %v4165 = vld [vmem:[#allocation7 + $0x5b0] sm:$0xff]
    %v4166 = vld [vmem:[#allocation7 + $0x5b8] sm:$0xff]
    %v4167 = vld [vmem:[#allocation7 + $0x5c0] sm:$0xff]
    %v4168 = vld [vmem:[#allocation7 + $0x5c8] sm:$0xff]
    %v4169 = vld [vmem:[#allocation7 + $0x5d0] sm:$0xff]
    %v4170 = vld [vmem:[#allocation7 + $0x5d8] sm:$0xff]
    %v4171 = vld [vmem:[#allocation7 + $0x5e0] sm:$0xff]
    %v4172 = vld [vmem:[#allocation7 + $0x5e8] sm:$0xff]
    %v4173 = vld [vmem:[#allocation7 + $0x5f0] sm:$0xff]
    %v4174 = vld [vmem:[#allocation7 + $0x5f8] sm:$0xff]
    %v4175 = vld [vmem:[#allocation7 + $0x600] sm:$0xff]
    %v4176 = vld [vmem:[#allocation7 + $0x608] sm:$0xff]
    %v4177 = vld [vmem:[#allocation7 + $0x610] sm:$0xff]
    %v4178 = vld [vmem:[#allocation7 + $0x618] sm:$0xff]
    %v4179 = vld [vmem:[#allocation7 + $0x620] sm:$0xff]
    %v4180 = vld [vmem:[#allocation7 + $0x628] sm:$0xff]
    %v4181 = vld [vmem:[#allocation7 + $0x630] sm:$0xff]
    %v4182 = vld [vmem:[#allocation7 + $0x638] sm:$0xff]
    %v4183 = vld [vmem:[#allocation7 + $0x640] sm:$0xff]
    %v4184 = vld [vmem:[#allocation7 + $0x648] sm:$0xff]
    %v4185 = vld [vmem:[#allocation7 + $0x650] sm:$0xff]
    %v4186 = vld [vmem:[#allocation7 + $0x658] sm:$0xff]
    %v4187 = vld [vmem:[#allocation7 + $0x660] sm:$0xff]
    %v4188 = vld [vmem:[#allocation7 + $0x668] sm:$0xff]
    %v4189 = vld [vmem:[#allocation7 + $0x670] sm:$0xff]
    %v4190 = vld [vmem:[#allocation7 + $0x678] sm:$0xff]
    %v4191 = vld [vmem:[#allocation7 + $0x680] sm:$0xff]
    %v4192 = vld [vmem:[#allocation7 + $0x688] sm:$0xff]
    %v4193 = vld [vmem:[#allocation7 + $0x690] sm:$0xff]
    %v4194 = vld [vmem:[#allocation7 + $0x698] sm:$0xff]
    %v4195 = vld [vmem:[#allocation7 + $0x6a0] sm:$0xff]
    %v4196 = vld [vmem:[#allocation7 + $0x6a8] sm:$0xff]
    %v4197 = vld [vmem:[#allocation7 + $0x6b0] sm:$0xff]
    %v4198 = vld [vmem:[#allocation7 + $0x6b8] sm:$0xff]
    %v4199 = vld [vmem:[#allocation7 + $0x6c0] sm:$0xff]
    %v4200 = vld [vmem:[#allocation7 + $0x6c8] sm:$0xff]
    %v4201 = vld [vmem:[#allocation7 + $0x6d0] sm:$0xff]
    %v4202 = vld [vmem:[#allocation7 + $0x6d8] sm:$0xff]
    %v4203 = vld [vmem:[#allocation7 + $0x6e0] sm:$0xff]
    %v4204 = vld [vmem:[#allocation7 + $0x6e8] sm:$0xff]
    %v4205 = vld [vmem:[#allocation7 + $0x6f0] sm:$0xff]
    %v4206 = vld [vmem:[#allocation7 + $0x6f8] sm:$0xff]
    %v4207 = vld [vmem:[#allocation7 + $0x700] sm:$0xff]
    %v4208 = vld [vmem:[#allocation7 + $0x708] sm:$0xff]
    %v4209 = vld [vmem:[#allocation7 + $0x710] sm:$0xff]
    %v4210 = vld [vmem:[#allocation7 + $0x718] sm:$0xff]
    %v4211 = vld [vmem:[#allocation7 + $0x720] sm:$0xff]
    %v4212 = vld [vmem:[#allocation7 + $0x728] sm:$0xff]
    %v4213 = vld [vmem:[#allocation7 + $0x730] sm:$0xff]
    %v4214 = vld [vmem:[#allocation7 + $0x738] sm:$0xff]
    %v4215 = vld [vmem:[#allocation7 + $0x740] sm:$0xff]
    %v4216 = vld [vmem:[#allocation7 + $0x748] sm:$0xff]
    %v4217 = vld [vmem:[#allocation7 + $0x750] sm:$0xff]
    %v4218 = vld [vmem:[#allocation7 + $0x758] sm:$0xff]
    %v4219 = vld [vmem:[#allocation7 + $0x760] sm:$0xff]
    %v4220 = vld [vmem:[#allocation7 + $0x768] sm:$0xff]
    %v4221 = vld [vmem:[#allocation7 + $0x770] sm:$0xff]
    %v4222 = vld [vmem:[#allocation7 + $0x778] sm:$0xff]
    %v4223 = vld [vmem:[#allocation7 + $0x780] sm:$0xff]
    %v4224 = vld [vmem:[#allocation7 + $0x788] sm:$0xff]
    %v4225 = vld [vmem:[#allocation7 + $0x790] sm:$0xff]
    %v4226 = vld [vmem:[#allocation7 + $0x798] sm:$0xff]
    %v4227 = vld [vmem:[#allocation7 + $0x7a0] sm:$0xff]
    %v4228 = vld [vmem:[#allocation7 + $0x7a8] sm:$0xff]
    %v4229 = vld [vmem:[#allocation7 + $0x7b0] sm:$0xff]
    %v4230 = vld [vmem:[#allocation7 + $0x7b8] sm:$0xff]
    %v4231 = vld [vmem:[#allocation7 + $0x7c0] sm:$0xff]
    %v4232 = vld [vmem:[#allocation7 + $0x7c8] sm:$0xff]
    %v4233 = vld [vmem:[#allocation7 + $0x7d0] sm:$0xff]
    %v4234 = vld [vmem:[#allocation7 + $0x7d8] sm:$0xff]
    %v4235 = vld [vmem:[#allocation7 + $0x7e0] sm:$0xff]
    %v4236 = vld [vmem:[#allocation7 + $0x7e8] sm:$0xff]
    %v4237 = vld [vmem:[#allocation7 + $0x7f0] sm:$0xff]
    %v4238 = vld [vmem:[#allocation7 + $0x7f8] sm:$0xff]
    %v4239 = vld [vmem:[%s10] sm:$0xf]
    %v4241 = vperm.slane %v4239, 0
    %v4242 = vperm.slane %v4239, 1
    %v4243 = vperm.slane %v4239, 2
    %v4244 = vperm.slane %v4239, 3
    %4249 = vmatpush.msra.mxu0 %v4043
    %4250 = vmatpush.msra.mxu0 %v4039
    %4251 = vmatpush.msra.mxu0 %v4035
    %4252 = vmatpush.msra.mxu0 %v4031
    %4253 = vmatpush.msra.mxu0 %v4027
    %4254 = vmatpush.msra.mxu0 %v4023
    %4255 = vmatpush.msra.mxu0 %v4019
    %4256 = vmatpush.msra.mxu0 %v4015
    %4257 = vmatpush.msra.mxu0 %v4011
    %4258 = vmatpush.msra.mxu0 %v4007
    %4259 = vmatpush.msra.mxu0 %v4003
    %4260 = vmatpush.msra.mxu0 %v3999
    %4261 = vmatpush.msra.mxu0 %v3995
    %4262 = vmatpush.msra.mxu0 %v3991
    %4263 = vmatpush.msra.mxu0 %v3987
    %4264 = vmatpush.msra.mxu0 %v3983
    %4265 = vmatmul.f32.gmra.mxu0 %v3855
    %v4266 = vpop.f32.mrf.mxu0
    %v4267 = vadd.f32 %v4241, %v4266
    %4268 = vmatmul.f32.gmra.mxu0 %v3859
    %v4269 = vpop.f32.mrf.mxu0
    %v4270 = vadd.f32 %v4241, %v4269
    %4271 = vmatmul.f32.gmra.mxu0 %v3863
    %v4272 = vpop.f32.mrf.mxu0
    %v4273 = vadd.f32 %v4241, %v4272
    %4274 = vmatmul.f32.gmra.mxu0 %v3867
    %v4275 = vpop.f32.mrf.mxu0
    %v4276 = vadd.f32 %v4241, %v4275
    %4277 = vmatmul.f32.gmra.mxu0 %v3871
    %v4278 = vpop.f32.mrf.mxu0
    %v4279 = vadd.f32 %v4241, %v4278
    %4280 = vmatmul.f32.gmra.mxu0 %v3875
    %v4281 = vpop.f32.mrf.mxu0
    %v4282 = vadd.f32 %v4241, %v4281
    %4283 = vmatmul.f32.gmra.mxu0 %v3879
    %v4284 = vpop.f32.mrf.mxu0
    %v4285 = vadd.f32 %v4241, %v4284
    %4286 = vmatmul.f32.gmra.mxu0 %v3883
    %v4287 = vpop.f32.mrf.mxu0
    %v4288 = vadd.f32 %v4241, %v4287
    %4289 = vmatmul.f32.gmra.mxu0 %v3887
    %v4290 = vpop.f32.mrf.mxu0
    %v4291 = vadd.f32 %v4241, %v4290
    %4292 = vmatmul.f32.gmra.mxu0 %v3891
    %v4293 = vpop.f32.mrf.mxu0
    %v4294 = vadd.f32 %v4241, %v4293
    %4295 = vmatmul.f32.gmra.mxu0 %v3895
    %v4296 = vpop.f32.mrf.mxu0
    %v4297 = vadd.f32 %v4241, %v4296
    %4298 = vmatmul.f32.gmra.mxu0 %v3899
    %v4299 = vpop.f32.mrf.mxu0
    %v4300 = vadd.f32 %v4241, %v4299
    %4301 = vmatmul.f32.gmra.mxu0 %v3903
    %v4302 = vpop.f32.mrf.mxu0
    %v4303 = vadd.f32 %v4241, %v4302
    %4304 = vmatmul.f32.gmra.mxu0 %v3907
    %v4305 = vpop.f32.mrf.mxu0
    %v4306 = vadd.f32 %v4241, %v4305
    %4307 = vmatmul.f32.gmra.mxu0 %v3911
    %v4308 = vpop.f32.mrf.mxu0
    %v4309 = vadd.f32 %v4241, %v4308
    %4310 = vmatmul.f32.gmra.mxu0 %v3915
    %v4311 = vpop.f32.mrf.mxu0
    %v4312 = vadd.f32 %v4241, %v4311
    %4313 = vmatmul.f32.gmra.mxu0 %v3919
    %v4314 = vpop.f32.mrf.mxu0
    %v4315 = vadd.f32 %v4241, %v4314
    %4316 = vmatmul.f32.gmra.mxu0 %v3923
    %v4317 = vpop.f32.mrf.mxu0
    %v4318 = vadd.f32 %v4241, %v4317
    %4319 = vmatmul.f32.gmra.mxu0 %v3927
    %v4320 = vpop.f32.mrf.mxu0
    %v4321 = vadd.f32 %v4241, %v4320
    %4322 = vmatmul.f32.gmra.mxu0 %v3931
    %v4323 = vpop.f32.mrf.mxu0
    %v4324 = vadd.f32 %v4241, %v4323
    %4325 = vmatmul.f32.gmra.mxu0 %v3935
    %v4326 = vpop.f32.mrf.mxu0
    %v4327 = vadd.f32 %v4241, %v4326
    %4328 = vmatmul.f32.gmra.mxu0 %v3939
    %v4329 = vpop.f32.mrf.mxu0
    %v4330 = vadd.f32 %v4241, %v4329
    %4331 = vmatmul.f32.gmra.mxu0 %v3943
    %v4332 = vpop.f32.mrf.mxu0
    %v4333 = vadd.f32 %v4241, %v4332
    %4334 = vmatmul.f32.gmra.mxu0 %v3947
    %v4335 = vpop.f32.mrf.mxu0
    %v4336 = vadd.f32 %v4241, %v4335
    %4337 = vmatmul.f32.gmra.mxu0 %v3951
    %v4338 = vpop.f32.mrf.mxu0
    %v4339 = vadd.f32 %v4241, %v4338
    %4340 = vmatmul.f32.gmra.mxu0 %v3955
    %v4341 = vpop.f32.mrf.mxu0
    %v4342 = vadd.f32 %v4241, %v4341
    %4343 = vmatmul.f32.gmra.mxu0 %v3959
    %v4344 = vpop.f32.mrf.mxu0
    %v4345 = vadd.f32 %v4241, %v4344
    %4346 = vmatmul.f32.gmra.mxu0 %v3963
    %v4347 = vpop.f32.mrf.mxu0
    %v4348 = vadd.f32 %v4241, %v4347
    %4349 = vmatmul.f32.gmra.mxu0 %v3967
    %v4350 = vpop.f32.mrf.mxu0
    %v4351 = vadd.f32 %v4241, %v4350
    %4352 = vmatmul.f32.gmra.mxu0 %v3971
    %v4353 = vpop.f32.mrf.mxu0
    %v4354 = vadd.f32 %v4241, %v4353
    %4355 = vmatmul.f32.gmra.mxu0 %v3975
    %v4356 = vpop.f32.mrf.mxu0
    %v4357 = vadd.f32 %v4241, %v4356
    %4358 = vmatmul.f32.gmra.mxu0 %v3979
    %v4359 = vpop.f32.mrf.mxu0
    %v4360 = vadd.f32 %v4241, %v4359
    %4361 = vdwg.mxu0
    %4362 = vmatpush.msra.mxu0 %v4107
    %4363 = vmatpush.msra.mxu0 %v4103
    %4364 = vmatpush.msra.mxu0 %v4099
    %4365 = vmatpush.msra.mxu0 %v4095
    %4366 = vmatpush.msra.mxu0 %v4091
    %4367 = vmatpush.msra.mxu0 %v4087
    %4368 = vmatpush.msra.mxu0 %v4083
    %4369 = vmatpush.msra.mxu0 %v4079
    %4370 = vmatpush.msra.mxu0 %v4075
    %4371 = vmatpush.msra.mxu0 %v4071
    %4372 = vmatpush.msra.mxu0 %v4067
    %4373 = vmatpush.msra.mxu0 %v4063
    %4374 = vmatpush.msra.mxu0 %v4059
    %4375 = vmatpush.msra.mxu0 %v4055
    %4376 = vmatpush.msra.mxu0 %v4051
    %4377 = vmatpush.msra.mxu0 %v4047
    %4378 = vmatmul.f32.gmra.mxu0 %v3856
    %v4379 = vpop.f32.mrf.mxu0
    %v4380 = vadd.f32 %v4267, %v4379
    %4381 = vmatmul.f32.gmra.mxu0 %v3860
    %v4382 = vpop.f32.mrf.mxu0
    %v4383 = vadd.f32 %v4270, %v4382
    %4384 = vmatmul.f32.gmra.mxu0 %v3864
    %v4385 = vpop.f32.mrf.mxu0
    %v4386 = vadd.f32 %v4273, %v4385
    %4387 = vmatmul.f32.gmra.mxu0 %v3868
    %v4388 = vpop.f32.mrf.mxu0
    %v4389 = vadd.f32 %v4276, %v4388
    %4390 = vmatmul.f32.gmra.mxu0 %v3872
    %v4391 = vpop.f32.mrf.mxu0
    %v4392 = vadd.f32 %v4279, %v4391
    %4393 = vmatmul.f32.gmra.mxu0 %v3876
    %v4394 = vpop.f32.mrf.mxu0
    %v4395 = vadd.f32 %v4282, %v4394
    %4396 = vmatmul.f32.gmra.mxu0 %v3880
    %v4397 = vpop.f32.mrf.mxu0
    %v4398 = vadd.f32 %v4285, %v4397
    %4399 = vmatmul.f32.gmra.mxu0 %v3884
    %v4400 = vpop.f32.mrf.mxu0
    %v4401 = vadd.f32 %v4288, %v4400
    %4402 = vmatmul.f32.gmra.mxu0 %v3888
    %v4403 = vpop.f32.mrf.mxu0
    %v4404 = vadd.f32 %v4291, %v4403
    %4405 = vmatmul.f32.gmra.mxu0 %v3892
    %v4406 = vpop.f32.mrf.mxu0
    %v4407 = vadd.f32 %v4294, %v4406
    %4408 = vmatmul.f32.gmra.mxu0 %v3896
    %v4409 = vpop.f32.mrf.mxu0
    %v4410 = vadd.f32 %v4297, %v4409
    %4411 = vmatmul.f32.gmra.mxu0 %v3900
    %v4412 = vpop.f32.mrf.mxu0
    %v4413 = vadd.f32 %v4300, %v4412
    %4414 = vmatmul.f32.gmra.mxu0 %v3904
    %v4415 = vpop.f32.mrf.mxu0
    %v4416 = vadd.f32 %v4303, %v4415
    %4417 = vmatmul.f32.gmra.mxu0 %v3908
    %v4418 = vpop.f32.mrf.mxu0
    %v4419 = vadd.f32 %v4306, %v4418
    %4420 = vmatmul.f32.gmra.mxu0 %v3912
    %v4421 = vpop.f32.mrf.mxu0
    %v4422 = vadd.f32 %v4309, %v4421
    %4423 = vmatmul.f32.gmra.mxu0 %v3916
    %v4424 = vpop.f32.mrf.mxu0
    %v4425 = vadd.f32 %v4312, %v4424
    %4426 = vmatmul.f32.gmra.mxu0 %v3920
    %v4427 = vpop.f32.mrf.mxu0
    %v4428 = vadd.f32 %v4315, %v4427
    %4429 = vmatmul.f32.gmra.mxu0 %v3924
    %v4430 = vpop.f32.mrf.mxu0
    %v4431 = vadd.f32 %v4318, %v4430
    %4432 = vmatmul.f32.gmra.mxu0 %v3928
    %v4433 = vpop.f32.mrf.mxu0
    %v4434 = vadd.f32 %v4321, %v4433
    %4435 = vmatmul.f32.gmra.mxu0 %v3932
    %v4436 = vpop.f32.mrf.mxu0
    %v4437 = vadd.f32 %v4324, %v4436
    %4438 = vmatmul.f32.gmra.mxu0 %v3936
    %v4439 = vpop.f32.mrf.mxu0
    %v4440 = vadd.f32 %v4327, %v4439
    %4441 = vmatmul.f32.gmra.mxu0 %v3940
    %v4442 = vpop.f32.mrf.mxu0
    %v4443 = vadd.f32 %v4330, %v4442
    %4444 = vmatmul.f32.gmra.mxu0 %v3944
    %v4445 = vpop.f32.mrf.mxu0
    %v4446 = vadd.f32 %v4333, %v4445
    %4447 = vmatmul.f32.gmra.mxu0 %v3948
    %v4448 = vpop.f32.mrf.mxu0
    %v4449 = vadd.f32 %v4336, %v4448
    %4450 = vmatmul.f32.gmra.mxu0 %v3952
    %v4451 = vpop.f32.mrf.mxu0
    %v4452 = vadd.f32 %v4339, %v4451
    %4453 = vmatmul.f32.gmra.mxu0 %v3956
    %v4454 = vpop.f32.mrf.mxu0
    %v4455 = vadd.f32 %v4342, %v4454
    %4456 = vmatmul.f32.gmra.mxu0 %v3960
    %v4457 = vpop.f32.mrf.mxu0
    %v4458 = vadd.f32 %v4345, %v4457
    %4459 = vmatmul.f32.gmra.mxu0 %v3964
    %v4460 = vpop.f32.mrf.mxu0
    %v4461 = vadd.f32 %v4348, %v4460
    %4462 = vmatmul.f32.gmra.mxu0 %v3968
    %v4463 = vpop.f32.mrf.mxu0
    %v4464 = vadd.f32 %v4351, %v4463
    %4465 = vmatmul.f32.gmra.mxu0 %v3972
    %v4466 = vpop.f32.mrf.mxu0
    %v4467 = vadd.f32 %v4354, %v4466
    %4468 = vmatmul.f32.gmra.mxu0 %v3976
    %v4469 = vpop.f32.mrf.mxu0
    %v4470 = vadd.f32 %v4357, %v4469
    %4471 = vmatmul.f32.gmra.mxu0 %v3980
    %v4472 = vpop.f32.mrf.mxu0
    %v4473 = vadd.f32 %v4360, %v4472
    %4474 = vdwg.mxu0
    %4475 = vmatpush.msra.mxu0 %v4171
    %4476 = vmatpush.msra.mxu0 %v4167
    %4477 = vmatpush.msra.mxu0 %v4163
    %4478 = vmatpush.msra.mxu0 %v4159
    %4479 = vmatpush.msra.mxu0 %v4155
    %4480 = vmatpush.msra.mxu0 %v4151
    %4481 = vmatpush.msra.mxu0 %v4147
    %4482 = vmatpush.msra.mxu0 %v4143
    %4483 = vmatpush.msra.mxu0 %v4139
    %4484 = vmatpush.msra.mxu0 %v4135
    %4485 = vmatpush.msra.mxu0 %v4131
    %4486 = vmatpush.msra.mxu0 %v4127
    %4487 = vmatpush.msra.mxu0 %v4123
    %4488 = vmatpush.msra.mxu0 %v4119
    %4489 = vmatpush.msra.mxu0 %v4115
    %4490 = vmatpush.msra.mxu0 %v4111
    %4491 = vmatmul.f32.gmra.mxu0 %v3857
    %v4492 = vpop.f32.mrf.mxu0
    %v4493 = vadd.f32 %v4380, %v4492
    %4494 = vmatmul.f32.gmra.mxu0 %v3861
    %v4495 = vpop.f32.mrf.mxu0
    %v4496 = vadd.f32 %v4383, %v4495
    %4497 = vmatmul.f32.gmra.mxu0 %v3865
    %v4498 = vpop.f32.mrf.mxu0
    %v4499 = vadd.f32 %v4386, %v4498
    %4500 = vmatmul.f32.gmra.mxu0 %v3869
    %v4501 = vpop.f32.mrf.mxu0
    %v4502 = vadd.f32 %v4389, %v4501
    %4503 = vmatmul.f32.gmra.mxu0 %v3873
    %v4504 = vpop.f32.mrf.mxu0
    %v4505 = vadd.f32 %v4392, %v4504
    %4506 = vmatmul.f32.gmra.mxu0 %v3877
    %v4507 = vpop.f32.mrf.mxu0
    %v4508 = vadd.f32 %v4395, %v4507
    %4509 = vmatmul.f32.gmra.mxu0 %v3881
    %v4510 = vpop.f32.mrf.mxu0
    %v4511 = vadd.f32 %v4398, %v4510
    %4512 = vmatmul.f32.gmra.mxu0 %v3885
    %v4513 = vpop.f32.mrf.mxu0
    %v4514 = vadd.f32 %v4401, %v4513
    %4515 = vmatmul.f32.gmra.mxu0 %v3889
    %v4516 = vpop.f32.mrf.mxu0
    %v4517 = vadd.f32 %v4404, %v4516
    %4518 = vmatmul.f32.gmra.mxu0 %v3893
    %v4519 = vpop.f32.mrf.mxu0
    %v4520 = vadd.f32 %v4407, %v4519
    %4521 = vmatmul.f32.gmra.mxu0 %v3897
    %v4522 = vpop.f32.mrf.mxu0
    %v4523 = vadd.f32 %v4410, %v4522
    %4524 = vmatmul.f32.gmra.mxu0 %v3901
    %v4525 = vpop.f32.mrf.mxu0
    %v4526 = vadd.f32 %v4413, %v4525
    %4527 = vmatmul.f32.gmra.mxu0 %v3905
    %v4528 = vpop.f32.mrf.mxu0
    %v4529 = vadd.f32 %v4416, %v4528
    %4530 = vmatmul.f32.gmra.mxu0 %v3909
    %v4531 = vpop.f32.mrf.mxu0
    %v4532 = vadd.f32 %v4419, %v4531
    %4533 = vmatmul.f32.gmra.mxu0 %v3913
    %v4534 = vpop.f32.mrf.mxu0
    %v4535 = vadd.f32 %v4422, %v4534
    %4536 = vmatmul.f32.gmra.mxu0 %v3917
    %v4537 = vpop.f32.mrf.mxu0
    %v4538 = vadd.f32 %v4425, %v4537
    %4539 = vmatmul.f32.gmra.mxu0 %v3921
    %v4540 = vpop.f32.mrf.mxu0
    %v4541 = vadd.f32 %v4428, %v4540
    %4542 = vmatmul.f32.gmra.mxu0 %v3925
    %v4543 = vpop.f32.mrf.mxu0
    %v4544 = vadd.f32 %v4431, %v4543
    %4545 = vmatmul.f32.gmra.mxu0 %v3929
    %v4546 = vpop.f32.mrf.mxu0
    %v4547 = vadd.f32 %v4434, %v4546
    %4548 = vmatmul.f32.gmra.mxu0 %v3933
    %v4549 = vpop.f32.mrf.mxu0
    %v4550 = vadd.f32 %v4437, %v4549
    %4551 = vmatmul.f32.gmra.mxu0 %v3937
    %v4552 = vpop.f32.mrf.mxu0
    %v4553 = vadd.f32 %v4440, %v4552
    %4554 = vmatmul.f32.gmra.mxu0 %v3941
    %v4555 = vpop.f32.mrf.mxu0
    %v4556 = vadd.f32 %v4443, %v4555
    %4557 = vmatmul.f32.gmra.mxu0 %v3945
    %v4558 = vpop.f32.mrf.mxu0
    %v4559 = vadd.f32 %v4446, %v4558
    %4560 = vmatmul.f32.gmra.mxu0 %v3949
    %v4561 = vpop.f32.mrf.mxu0
    %v4562 = vadd.f32 %v4449, %v4561
    %4563 = vmatmul.f32.gmra.mxu0 %v3953
    %v4564 = vpop.f32.mrf.mxu0
    %v4565 = vadd.f32 %v4452, %v4564
    %4566 = vmatmul.f32.gmra.mxu0 %v3957
    %v4567 = vpop.f32.mrf.mxu0
    %v4568 = vadd.f32 %v4455, %v4567
    %4569 = vmatmul.f32.gmra.mxu0 %v3961
    %v4570 = vpop.f32.mrf.mxu0
    %v4571 = vadd.f32 %v4458, %v4570
    %4572 = vmatmul.f32.gmra.mxu0 %v3965
    %v4573 = vpop.f32.mrf.mxu0
    %v4574 = vadd.f32 %v4461, %v4573
    %4575 = vmatmul.f32.gmra.mxu0 %v3969
    %v4576 = vpop.f32.mrf.mxu0
    %v4577 = vadd.f32 %v4464, %v4576
    %4578 = vmatmul.f32.gmra.mxu0 %v3973
    %v4579 = vpop.f32.mrf.mxu0
    %v4580 = vadd.f32 %v4467, %v4579
    %4581 = vmatmul.f32.gmra.mxu0 %v3977
    %v4582 = vpop.f32.mrf.mxu0
    %v4583 = vadd.f32 %v4470, %v4582
    %4584 = vmatmul.f32.gmra.mxu0 %v3981
    %v4585 = vpop.f32.mrf.mxu0
    %v4586 = vadd.f32 %v4473, %v4585
    %4587 = vdwg.mxu0
    %4588 = vmatpush.msra.mxu0 %v4235
    %4589 = vmatpush.msra.mxu0 %v4231
    %4590 = vmatpush.msra.mxu0 %v4227
    %4591 = vmatpush.msra.mxu0 %v4223
    %4592 = vmatpush.msra.mxu0 %v4219
    %4593 = vmatpush.msra.mxu0 %v4215
    %4594 = vmatpush.msra.mxu0 %v4211
    %4595 = vmatpush.msra.mxu0 %v4207
    %4596 = vmatpush.msra.mxu0 %v4203
    %4597 = vmatpush.msra.mxu0 %v4199
    %4598 = vmatpush.msra.mxu0 %v4195
    %4599 = vmatpush.msra.mxu0 %v4191
    %4600 = vmatpush.msra.mxu0 %v4187
    %4601 = vmatpush.msra.mxu0 %v4183
    %4602 = vmatpush.msra.mxu0 %v4179
    %4603 = vmatpush.msra.mxu0 %v4175
    %4604 = vmatmul.f32.gmra.mxu0 %v3858
    %v4605 = vpop.f32.mrf.mxu0
    %v4606 = vadd.f32 %v4493, %v4605
    %4607 = vmatmul.f32.gmra.mxu0 %v3862
    %v4608 = vpop.f32.mrf.mxu0
    %v4609 = vadd.f32 %v4496, %v4608
    %4610 = vmatmul.f32.gmra.mxu0 %v3866
    %v4611 = vpop.f32.mrf.mxu0
    %v4612 = vadd.f32 %v4499, %v4611
    %4613 = vmatmul.f32.gmra.mxu0 %v3870
    %v4614 = vpop.f32.mrf.mxu0
    %v4615 = vadd.f32 %v4502, %v4614
    %4616 = vmatmul.f32.gmra.mxu0 %v3874
    %v4617 = vpop.f32.mrf.mxu0
    %v4618 = vadd.f32 %v4505, %v4617
    %4619 = vmatmul.f32.gmra.mxu0 %v3878
    %v4620 = vpop.f32.mrf.mxu0
    %v4621 = vadd.f32 %v4508, %v4620
    %4622 = vmatmul.f32.gmra.mxu0 %v3882
    %v4623 = vpop.f32.mrf.mxu0
    %v4624 = vadd.f32 %v4511, %v4623
    %4625 = vmatmul.f32.gmra.mxu0 %v3886
    %v4626 = vpop.f32.mrf.mxu0
    %v4627 = vadd.f32 %v4514, %v4626
    %4628 = vmatmul.f32.gmra.mxu0 %v3890
    %v4629 = vpop.f32.mrf.mxu0
    %v4630 = vadd.f32 %v4517, %v4629
    %4631 = vmatmul.f32.gmra.mxu0 %v3894
    %v4632 = vpop.f32.mrf.mxu0
    %v4633 = vadd.f32 %v4520, %v4632
    %4634 = vmatmul.f32.gmra.mxu0 %v3898
    %v4635 = vpop.f32.mrf.mxu0
    %v4636 = vadd.f32 %v4523, %v4635
    %4637 = vmatmul.f32.gmra.mxu0 %v3902
    %v4638 = vpop.f32.mrf.mxu0
    %v4639 = vadd.f32 %v4526, %v4638
    %4640 = vmatmul.f32.gmra.mxu0 %v3906
    %v4641 = vpop.f32.mrf.mxu0
    %v4642 = vadd.f32 %v4529, %v4641
    %4643 = vmatmul.f32.gmra.mxu0 %v3910
    %v4644 = vpop.f32.mrf.mxu0
    %v4645 = vadd.f32 %v4532, %v4644
    %4646 = vmatmul.f32.gmra.mxu0 %v3914
    %v4647 = vpop.f32.mrf.mxu0
    %v4648 = vadd.f32 %v4535, %v4647
    %4649 = vmatmul.f32.gmra.mxu0 %v3918
    %v4650 = vpop.f32.mrf.mxu0
    %v4651 = vadd.f32 %v4538, %v4650
    %4652 = vmatmul.f32.gmra.mxu0 %v3922
    %v4653 = vpop.f32.mrf.mxu0
    %v4654 = vadd.f32 %v4541, %v4653
    %4655 = vmatmul.f32.gmra.mxu0 %v3926
    %v4656 = vpop.f32.mrf.mxu0
    %v4657 = vadd.f32 %v4544, %v4656
    %4658 = vmatmul.f32.gmra.mxu0 %v3930
    %v4659 = vpop.f32.mrf.mxu0
    %v4660 = vadd.f32 %v4547, %v4659
    %4661 = vmatmul.f32.gmra.mxu0 %v3934
    %v4662 = vpop.f32.mrf.mxu0
    %v4663 = vadd.f32 %v4550, %v4662
    %4664 = vmatmul.f32.gmra.mxu0 %v3938
    %v4665 = vpop.f32.mrf.mxu0
    %v4666 = vadd.f32 %v4553, %v4665
    %4667 = vmatmul.f32.gmra.mxu0 %v3942
    %v4668 = vpop.f32.mrf.mxu0
    %v4669 = vadd.f32 %v4556, %v4668
    %4670 = vmatmul.f32.gmra.mxu0 %v3946
    %v4671 = vpop.f32.mrf.mxu0
    %v4672 = vadd.f32 %v4559, %v4671
    %4673 = vmatmul.f32.gmra.mxu0 %v3950
    %v4674 = vpop.f32.mrf.mxu0
    %v4675 = vadd.f32 %v4562, %v4674
    %4676 = vmatmul.f32.gmra.mxu0 %v3954
    %v4677 = vpop.f32.mrf.mxu0
    %v4678 = vadd.f32 %v4565, %v4677
    %4679 = vmatmul.f32.gmra.mxu0 %v3958
    %v4680 = vpop.f32.mrf.mxu0
    %v4681 = vadd.f32 %v4568, %v4680
    %4682 = vmatmul.f32.gmra.mxu0 %v3962
    %v4683 = vpop.f32.mrf.mxu0
    %v4684 = vadd.f32 %v4571, %v4683
    %4685 = vmatmul.f32.gmra.mxu0 %v3966
    %v4686 = vpop.f32.mrf.mxu0
    %v4687 = vadd.f32 %v4574, %v4686
    %4688 = vmatmul.f32.gmra.mxu0 %v3970
    %v4689 = vpop.f32.mrf.mxu0
    %v4690 = vadd.f32 %v4577, %v4689
    %4691 = vmatmul.f32.gmra.mxu0 %v3974
    %v4692 = vpop.f32.mrf.mxu0
    %v4693 = vadd.f32 %v4580, %v4692
    %4694 = vmatmul.f32.gmra.mxu0 %v3978
    %v4695 = vpop.f32.mrf.mxu0
    %v4696 = vadd.f32 %v4583, %v4695
    %4697 = vmatmul.f32.gmra.mxu0 %v3982
    %v4698 = vpop.f32.mrf.mxu0
    %v4699 = vadd.f32 %v4586, %v4698
    %4700 = vdwg.mxu0
    %4701 = vmatpush.msra.mxu0 %v4044
    %4702 = vmatpush.msra.mxu0 %v4040
    %4703 = vmatpush.msra.mxu0 %v4036
    %4704 = vmatpush.msra.mxu0 %v4032
    %4705 = vmatpush.msra.mxu0 %v4028
    %4706 = vmatpush.msra.mxu0 %v4024
    %4707 = vmatpush.msra.mxu0 %v4020
    %4708 = vmatpush.msra.mxu0 %v4016
    %4709 = vmatpush.msra.mxu0 %v4012
    %4710 = vmatpush.msra.mxu0 %v4008
    %4711 = vmatpush.msra.mxu0 %v4004
    %4712 = vmatpush.msra.mxu0 %v4000
    %4713 = vmatpush.msra.mxu0 %v3996
    %4714 = vmatpush.msra.mxu0 %v3992
    %4715 = vmatpush.msra.mxu0 %v3988
    %4716 = vmatpush.msra.mxu0 %v3984
    %4717 = vmatmul.f32.gmra.mxu0 %v3855
    %v4718 = vpop.f32.mrf.mxu0
    %v4719 = vadd.f32 %v4242, %v4718
    %4720 = vmatmul.f32.gmra.mxu0 %v3859
    %v4721 = vpop.f32.mrf.mxu0
    %v4722 = vadd.f32 %v4242, %v4721
    %4723 = vmatmul.f32.gmra.mxu0 %v3863
    %v4724 = vpop.f32.mrf.mxu0
    %v4725 = vadd.f32 %v4242, %v4724
    %4726 = vmatmul.f32.gmra.mxu0 %v3867
    %v4727 = vpop.f32.mrf.mxu0
    %v4728 = vadd.f32 %v4242, %v4727
    %4729 = vmatmul.f32.gmra.mxu0 %v3871
    %v4730 = vpop.f32.mrf.mxu0
    %v4731 = vadd.f32 %v4242, %v4730
    %4732 = vmatmul.f32.gmra.mxu0 %v3875
    %v4733 = vpop.f32.mrf.mxu0
    %v4734 = vadd.f32 %v4242, %v4733
    %4735 = vmatmul.f32.gmra.mxu0 %v3879
    %v4736 = vpop.f32.mrf.mxu0
    %v4737 = vadd.f32 %v4242, %v4736
    %4738 = vmatmul.f32.gmra.mxu0 %v3883
    %v4739 = vpop.f32.mrf.mxu0
    %v4740 = vadd.f32 %v4242, %v4739
    %4741 = vmatmul.f32.gmra.mxu0 %v3887
    %v4742 = vpop.f32.mrf.mxu0
    %v4743 = vadd.f32 %v4242, %v4742
    %4744 = vmatmul.f32.gmra.mxu0 %v3891
    %v4745 = vpop.f32.mrf.mxu0
    %v4746 = vadd.f32 %v4242, %v4745
    %4747 = vmatmul.f32.gmra.mxu0 %v3895
    %v4748 = vpop.f32.mrf.mxu0
    %v4749 = vadd.f32 %v4242, %v4748
    %4750 = vmatmul.f32.gmra.mxu0 %v3899
    %v4751 = vpop.f32.mrf.mxu0
    %v4752 = vadd.f32 %v4242, %v4751
    %4753 = vmatmul.f32.gmra.mxu0 %v3903
    %v4754 = vpop.f32.mrf.mxu0
    %v4755 = vadd.f32 %v4242, %v4754
    %4756 = vmatmul.f32.gmra.mxu0 %v3907
    %v4757 = vpop.f32.mrf.mxu0
    %v4758 = vadd.f32 %v4242, %v4757
    %4759 = vmatmul.f32.gmra.mxu0 %v3911
    %v4760 = vpop.f32.mrf.mxu0
    %v4761 = vadd.f32 %v4242, %v4760
    %4762 = vmatmul.f32.gmra.mxu0 %v3915
    %v4763 = vpop.f32.mrf.mxu0
    %v4764 = vadd.f32 %v4242, %v4763
    %4765 = vmatmul.f32.gmra.mxu0 %v3919
    %v4766 = vpop.f32.mrf.mxu0
    %v4767 = vadd.f32 %v4242, %v4766
    %4768 = vmatmul.f32.gmra.mxu0 %v3923
    %v4769 = vpop.f32.mrf.mxu0
    %v4770 = vadd.f32 %v4242, %v4769
    %4771 = vmatmul.f32.gmra.mxu0 %v3927
    %v4772 = vpop.f32.mrf.mxu0
    %v4773 = vadd.f32 %v4242, %v4772
    %4774 = vmatmul.f32.gmra.mxu0 %v3931
    %v4775 = vpop.f32.mrf.mxu0
    %v4776 = vadd.f32 %v4242, %v4775
    %4777 = vmatmul.f32.gmra.mxu0 %v3935
    %v4778 = vpop.f32.mrf.mxu0
    %v4779 = vadd.f32 %v4242, %v4778
    %4780 = vmatmul.f32.gmra.mxu0 %v3939
    %v4781 = vpop.f32.mrf.mxu0
    %v4782 = vadd.f32 %v4242, %v4781
    %4783 = vmatmul.f32.gmra.mxu0 %v3943
    %v4784 = vpop.f32.mrf.mxu0
    %v4785 = vadd.f32 %v4242, %v4784
    %4786 = vmatmul.f32.gmra.mxu0 %v3947
    %v4787 = vpop.f32.mrf.mxu0
    %v4788 = vadd.f32 %v4242, %v4787
    %4789 = vmatmul.f32.gmra.mxu0 %v3951
    %v4790 = vpop.f32.mrf.mxu0
    %v4791 = vadd.f32 %v4242, %v4790
    %4792 = vmatmul.f32.gmra.mxu0 %v3955
    %v4793 = vpop.f32.mrf.mxu0
    %v4794 = vadd.f32 %v4242, %v4793
    %4795 = vmatmul.f32.gmra.mxu0 %v3959
    %v4796 = vpop.f32.mrf.mxu0
    %v4797 = vadd.f32 %v4242, %v4796
    %4798 = vmatmul.f32.gmra.mxu0 %v3963
    %v4799 = vpop.f32.mrf.mxu0
    %v4800 = vadd.f32 %v4242, %v4799
    %4801 = vmatmul.f32.gmra.mxu0 %v3967
    %v4802 = vpop.f32.mrf.mxu0
    %v4803 = vadd.f32 %v4242, %v4802
    %4804 = vmatmul.f32.gmra.mxu0 %v3971
    %v4805 = vpop.f32.mrf.mxu0
    %v4806 = vadd.f32 %v4242, %v4805
    %4807 = vmatmul.f32.gmra.mxu0 %v3975
    %v4808 = vpop.f32.mrf.mxu0
    %v4809 = vadd.f32 %v4242, %v4808
    %4810 = vmatmul.f32.gmra.mxu0 %v3979
    %v4811 = vpop.f32.mrf.mxu0
    %v4812 = vadd.f32 %v4242, %v4811
    %4813 = vdwg.mxu0
    %4814 = vmatpush.msra.mxu0 %v4108
    %4815 = vmatpush.msra.mxu0 %v4104
    %4816 = vmatpush.msra.mxu0 %v4100
    %4817 = vmatpush.msra.mxu0 %v4096
    %4818 = vmatpush.msra.mxu0 %v4092
    %4819 = vmatpush.msra.mxu0 %v4088
    %4820 = vmatpush.msra.mxu0 %v4084
    %4821 = vmatpush.msra.mxu0 %v4080
    %4822 = vmatpush.msra.mxu0 %v4076
    %4823 = vmatpush.msra.mxu0 %v4072
    %4824 = vmatpush.msra.mxu0 %v4068
    %4825 = vmatpush.msra.mxu0 %v4064
    %4826 = vmatpush.msra.mxu0 %v4060
    %4827 = vmatpush.msra.mxu0 %v4056
    %4828 = vmatpush.msra.mxu0 %v4052
    %4829 = vmatpush.msra.mxu0 %v4048
    %4830 = vmatmul.f32.gmra.mxu0 %v3856
    %v4831 = vpop.f32.mrf.mxu0
    %v4832 = vadd.f32 %v4719, %v4831
    %4833 = vmatmul.f32.gmra.mxu0 %v3860
    %v4834 = vpop.f32.mrf.mxu0
    %v4835 = vadd.f32 %v4722, %v4834
    %4836 = vmatmul.f32.gmra.mxu0 %v3864
    %v4837 = vpop.f32.mrf.mxu0
    %v4838 = vadd.f32 %v4725, %v4837
    %4839 = vmatmul.f32.gmra.mxu0 %v3868
    %v4840 = vpop.f32.mrf.mxu0
    %v4841 = vadd.f32 %v4728, %v4840
    %4842 = vmatmul.f32.gmra.mxu0 %v3872
    %v4843 = vpop.f32.mrf.mxu0
    %v4844 = vadd.f32 %v4731, %v4843
    %4845 = vmatmul.f32.gmra.mxu0 %v3876
    %v4846 = vpop.f32.mrf.mxu0
    %v4847 = vadd.f32 %v4734, %v4846
    %4848 = vmatmul.f32.gmra.mxu0 %v3880
    %v4849 = vpop.f32.mrf.mxu0
    %v4850 = vadd.f32 %v4737, %v4849
    %4851 = vmatmul.f32.gmra.mxu0 %v3884
    %v4852 = vpop.f32.mrf.mxu0
    %v4853 = vadd.f32 %v4740, %v4852
    %4854 = vmatmul.f32.gmra.mxu0 %v3888
    %v4855 = vpop.f32.mrf.mxu0
    %v4856 = vadd.f32 %v4743, %v4855
    %4857 = vmatmul.f32.gmra.mxu0 %v3892
    %v4858 = vpop.f32.mrf.mxu0
    %v4859 = vadd.f32 %v4746, %v4858
    %4860 = vmatmul.f32.gmra.mxu0 %v3896
    %v4861 = vpop.f32.mrf.mxu0
    %v4862 = vadd.f32 %v4749, %v4861
    %4863 = vmatmul.f32.gmra.mxu0 %v3900
    %v4864 = vpop.f32.mrf.mxu0
    %v4865 = vadd.f32 %v4752, %v4864
    %4866 = vmatmul.f32.gmra.mxu0 %v3904
    %v4867 = vpop.f32.mrf.mxu0
    %v4868 = vadd.f32 %v4755, %v4867
    %4869 = vmatmul.f32.gmra.mxu0 %v3908
    %v4870 = vpop.f32.mrf.mxu0
    %v4871 = vadd.f32 %v4758, %v4870
    %4872 = vmatmul.f32.gmra.mxu0 %v3912
    %v4873 = vpop.f32.mrf.mxu0
    %v4874 = vadd.f32 %v4761, %v4873
    %4875 = vmatmul.f32.gmra.mxu0 %v3916
    %v4876 = vpop.f32.mrf.mxu0
    %v4877 = vadd.f32 %v4764, %v4876
    %4878 = vmatmul.f32.gmra.mxu0 %v3920
    %v4879 = vpop.f32.mrf.mxu0
    %v4880 = vadd.f32 %v4767, %v4879
    %4881 = vmatmul.f32.gmra.mxu0 %v3924
    %v4882 = vpop.f32.mrf.mxu0
    %v4883 = vadd.f32 %v4770, %v4882
    %4884 = vmatmul.f32.gmra.mxu0 %v3928
    %v4885 = vpop.f32.mrf.mxu0
    %v4886 = vadd.f32 %v4773, %v4885
    %4887 = vmatmul.f32.gmra.mxu0 %v3932
    %v4888 = vpop.f32.mrf.mxu0
    %v4889 = vadd.f32 %v4776, %v4888
    %4890 = vmatmul.f32.gmra.mxu0 %v3936
    %v4891 = vpop.f32.mrf.mxu0
    %v4892 = vadd.f32 %v4779, %v4891
    %4893 = vmatmul.f32.gmra.mxu0 %v3940
    %v4894 = vpop.f32.mrf.mxu0
    %v4895 = vadd.f32 %v4782, %v4894
    %4896 = vmatmul.f32.gmra.mxu0 %v3944
    %v4897 = vpop.f32.mrf.mxu0
    %v4898 = vadd.f32 %v4785, %v4897
    %4899 = vmatmul.f32.gmra.mxu0 %v3948
    %v4900 = vpop.f32.mrf.mxu0
    %v4901 = vadd.f32 %v4788, %v4900
    %4902 = vmatmul.f32.gmra.mxu0 %v3952
    %v4903 = vpop.f32.mrf.mxu0
    %v4904 = vadd.f32 %v4791, %v4903
    %4905 = vmatmul.f32.gmra.mxu0 %v3956
    %v4906 = vpop.f32.mrf.mxu0
    %v4907 = vadd.f32 %v4794, %v4906
    %4908 = vmatmul.f32.gmra.mxu0 %v3960
    %v4909 = vpop.f32.mrf.mxu0
    %v4910 = vadd.f32 %v4797, %v4909
    %4911 = vmatmul.f32.gmra.mxu0 %v3964
    %v4912 = vpop.f32.mrf.mxu0
    %v4913 = vadd.f32 %v4800, %v4912
    %4914 = vmatmul.f32.gmra.mxu0 %v3968
    %v4915 = vpop.f32.mrf.mxu0
    %v4916 = vadd.f32 %v4803, %v4915
    %4917 = vmatmul.f32.gmra.mxu0 %v3972
    %v4918 = vpop.f32.mrf.mxu0
    %v4919 = vadd.f32 %v4806, %v4918
    %4920 = vmatmul.f32.gmra.mxu0 %v3976
    %v4921 = vpop.f32.mrf.mxu0
    %v4922 = vadd.f32 %v4809, %v4921
    %4923 = vmatmul.f32.gmra.mxu0 %v3980
    %v4924 = vpop.f32.mrf.mxu0
    %v4925 = vadd.f32 %v4812, %v4924
    %4926 = vdwg.mxu0
    %4927 = vmatpush.msra.mxu0 %v4172
    %4928 = vmatpush.msra.mxu0 %v4168
    %4929 = vmatpush.msra.mxu0 %v4164
    %4930 = vmatpush.msra.mxu0 %v4160
    %4931 = vmatpush.msra.mxu0 %v4156
    %4932 = vmatpush.msra.mxu0 %v4152
    %4933 = vmatpush.msra.mxu0 %v4148
    %4934 = vmatpush.msra.mxu0 %v4144
    %4935 = vmatpush.msra.mxu0 %v4140
    %4936 = vmatpush.msra.mxu0 %v4136
    %4937 = vmatpush.msra.mxu0 %v4132
    %4938 = vmatpush.msra.mxu0 %v4128
    %4939 = vmatpush.msra.mxu0 %v4124
    %4940 = vmatpush.msra.mxu0 %v4120
    %4941 = vmatpush.msra.mxu0 %v4116
    %4942 = vmatpush.msra.mxu0 %v4112
    %4943 = vmatmul.f32.gmra.mxu0 %v3857
    %v4944 = vpop.f32.mrf.mxu0
    %v4945 = vadd.f32 %v4832, %v4944
    %4946 = vmatmul.f32.gmra.mxu0 %v3861
    %v4947 = vpop.f32.mrf.mxu0
    %v4948 = vadd.f32 %v4835, %v4947
    %4949 = vmatmul.f32.gmra.mxu0 %v3865
    %v4950 = vpop.f32.mrf.mxu0
    %v4951 = vadd.f32 %v4838, %v4950
    %4952 = vmatmul.f32.gmra.mxu0 %v3869
    %v4953 = vpop.f32.mrf.mxu0
    %v4954 = vadd.f32 %v4841, %v4953
    %4955 = vmatmul.f32.gmra.mxu0 %v3873
    %v4956 = vpop.f32.mrf.mxu0
    %v4957 = vadd.f32 %v4844, %v4956
    %4958 = vmatmul.f32.gmra.mxu0 %v3877
    %v4959 = vpop.f32.mrf.mxu0
    %v4960 = vadd.f32 %v4847, %v4959
    %4961 = vmatmul.f32.gmra.mxu0 %v3881
    %v4962 = vpop.f32.mrf.mxu0
    %v4963 = vadd.f32 %v4850, %v4962
    %4964 = vmatmul.f32.gmra.mxu0 %v3885
    %v4965 = vpop.f32.mrf.mxu0
    %v4966 = vadd.f32 %v4853, %v4965
    %4967 = vmatmul.f32.gmra.mxu0 %v3889
    %v4968 = vpop.f32.mrf.mxu0
    %v4969 = vadd.f32 %v4856, %v4968
    %4970 = vmatmul.f32.gmra.mxu0 %v3893
    %v4971 = vpop.f32.mrf.mxu0
    %v4972 = vadd.f32 %v4859, %v4971
    %4973 = vmatmul.f32.gmra.mxu0 %v3897
    %v4974 = vpop.f32.mrf.mxu0
    %v4975 = vadd.f32 %v4862, %v4974
    %4976 = vmatmul.f32.gmra.mxu0 %v3901
    %v4977 = vpop.f32.mrf.mxu0
    %v4978 = vadd.f32 %v4865, %v4977
    %4979 = vmatmul.f32.gmra.mxu0 %v3905
    %v4980 = vpop.f32.mrf.mxu0
    %v4981 = vadd.f32 %v4868, %v4980
    %4982 = vmatmul.f32.gmra.mxu0 %v3909
    %v4983 = vpop.f32.mrf.mxu0
    %v4984 = vadd.f32 %v4871, %v4983
    %4985 = vmatmul.f32.gmra.mxu0 %v3913
    %v4986 = vpop.f32.mrf.mxu0
    %v4987 = vadd.f32 %v4874, %v4986
    %4988 = vmatmul.f32.gmra.mxu0 %v3917
    %v4989 = vpop.f32.mrf.mxu0
    %v4990 = vadd.f32 %v4877, %v4989
    %4991 = vmatmul.f32.gmra.mxu0 %v3921
    %v4992 = vpop.f32.mrf.mxu0
    %v4993 = vadd.f32 %v4880, %v4992
    %4994 = vmatmul.f32.gmra.mxu0 %v3925
    %v4995 = vpop.f32.mrf.mxu0
    %v4996 = vadd.f32 %v4883, %v4995
    %4997 = vmatmul.f32.gmra.mxu0 %v3929
    %v4998 = vpop.f32.mrf.mxu0
    %v4999 = vadd.f32 %v4886, %v4998
    %5000 = vmatmul.f32.gmra.mxu0 %v3933
    %v5001 = vpop.f32.mrf.mxu0
    %v5002 = vadd.f32 %v4889, %v5001
    %5003 = vmatmul.f32.gmra.mxu0 %v3937
    %v5004 = vpop.f32.mrf.mxu0
    %v5005 = vadd.f32 %v4892, %v5004
    %5006 = vmatmul.f32.gmra.mxu0 %v3941
    %v5007 = vpop.f32.mrf.mxu0
    %v5008 = vadd.f32 %v4895, %v5007
    %5009 = vmatmul.f32.gmra.mxu0 %v3945
    %v5010 = vpop.f32.mrf.mxu0
    %v5011 = vadd.f32 %v4898, %v5010
    %5012 = vmatmul.f32.gmra.mxu0 %v3949
    %v5013 = vpop.f32.mrf.mxu0
    %v5014 = vadd.f32 %v4901, %v5013
    %5015 = vmatmul.f32.gmra.mxu0 %v3953
    %v5016 = vpop.f32.mrf.mxu0
    %v5017 = vadd.f32 %v4904, %v5016
    %5018 = vmatmul.f32.gmra.mxu0 %v3957
    %v5019 = vpop.f32.mrf.mxu0
    %v5020 = vadd.f32 %v4907, %v5019
    %5021 = vmatmul.f32.gmra.mxu0 %v3961
    %v5022 = vpop.f32.mrf.mxu0
    %v5023 = vadd.f32 %v4910, %v5022
    %5024 = vmatmul.f32.gmra.mxu0 %v3965
    %v5025 = vpop.f32.mrf.mxu0
    %v5026 = vadd.f32 %v4913, %v5025
    %5027 = vmatmul.f32.gmra.mxu0 %v3969
    %v5028 = vpop.f32.mrf.mxu0
    %v5029 = vadd.f32 %v4916, %v5028
    %5030 = vmatmul.f32.gmra.mxu0 %v3973
    %v5031 = vpop.f32.mrf.mxu0
    %v5032 = vadd.f32 %v4919, %v5031
    %5033 = vmatmul.f32.gmra.mxu0 %v3977
    %v5034 = vpop.f32.mrf.mxu0
    %v5035 = vadd.f32 %v4922, %v5034
    %5036 = vmatmul.f32.gmra.mxu0 %v3981
    %v5037 = vpop.f32.mrf.mxu0
    %v5038 = vadd.f32 %v4925, %v5037
    %5039 = vdwg.mxu0
    %5040 = vmatpush.msra.mxu0 %v4236
    %5041 = vmatpush.msra.mxu0 %v4232
    %5042 = vmatpush.msra.mxu0 %v4228
    %5043 = vmatpush.msra.mxu0 %v4224
    %5044 = vmatpush.msra.mxu0 %v4220
    %5045 = vmatpush.msra.mxu0 %v4216
    %5046 = vmatpush.msra.mxu0 %v4212
    %5047 = vmatpush.msra.mxu0 %v4208
    %5048 = vmatpush.msra.mxu0 %v4204
    %5049 = vmatpush.msra.mxu0 %v4200
    %5050 = vmatpush.msra.mxu0 %v4196
    %5051 = vmatpush.msra.mxu0 %v4192
    %5052 = vmatpush.msra.mxu0 %v4188
    %5053 = vmatpush.msra.mxu0 %v4184
    %5054 = vmatpush.msra.mxu0 %v4180
    %5055 = vmatpush.msra.mxu0 %v4176
    %5056 = vmatmul.f32.gmra.mxu0 %v3858
    %v5057 = vpop.f32.mrf.mxu0
    %v5058 = vadd.f32 %v4945, %v5057
    %5059 = vmatmul.f32.gmra.mxu0 %v3862
    %v5060 = vpop.f32.mrf.mxu0
    %v5061 = vadd.f32 %v4948, %v5060
    %5062 = vmatmul.f32.gmra.mxu0 %v3866
    %v5063 = vpop.f32.mrf.mxu0
    %v5064 = vadd.f32 %v4951, %v5063
    %5065 = vmatmul.f32.gmra.mxu0 %v3870
    %v5066 = vpop.f32.mrf.mxu0
    %v5067 = vadd.f32 %v4954, %v5066
    %5068 = vmatmul.f32.gmra.mxu0 %v3874
    %v5069 = vpop.f32.mrf.mxu0
    %v5070 = vadd.f32 %v4957, %v5069
    %5071 = vmatmul.f32.gmra.mxu0 %v3878
    %v5072 = vpop.f32.mrf.mxu0
    %v5073 = vadd.f32 %v4960, %v5072
    %5074 = vmatmul.f32.gmra.mxu0 %v3882
    %v5075 = vpop.f32.mrf.mxu0
    %v5076 = vadd.f32 %v4963, %v5075
    %5077 = vmatmul.f32.gmra.mxu0 %v3886
    %v5078 = vpop.f32.mrf.mxu0
    %v5079 = vadd.f32 %v4966, %v5078
    %5080 = vmatmul.f32.gmra.mxu0 %v3890
    %v5081 = vpop.f32.mrf.mxu0
    %v5082 = vadd.f32 %v4969, %v5081
    %5083 = vmatmul.f32.gmra.mxu0 %v3894
    %v5084 = vpop.f32.mrf.mxu0
    %v5085 = vadd.f32 %v4972, %v5084
    %5086 = vmatmul.f32.gmra.mxu0 %v3898
    %v5087 = vpop.f32.mrf.mxu0
    %v5088 = vadd.f32 %v4975, %v5087
    %5089 = vmatmul.f32.gmra.mxu0 %v3902
    %v5090 = vpop.f32.mrf.mxu0
    %v5091 = vadd.f32 %v4978, %v5090
    %5092 = vmatmul.f32.gmra.mxu0 %v3906
    %v5093 = vpop.f32.mrf.mxu0
    %v5094 = vadd.f32 %v4981, %v5093
    %5095 = vmatmul.f32.gmra.mxu0 %v3910
    %v5096 = vpop.f32.mrf.mxu0
    %v5097 = vadd.f32 %v4984, %v5096
    %5098 = vmatmul.f32.gmra.mxu0 %v3914
    %v5099 = vpop.f32.mrf.mxu0
    %v5100 = vadd.f32 %v4987, %v5099
    %5101 = vmatmul.f32.gmra.mxu0 %v3918
    %v5102 = vpop.f32.mrf.mxu0
    %v5103 = vadd.f32 %v4990, %v5102
    %5104 = vmatmul.f32.gmra.mxu0 %v3922
    %v5105 = vpop.f32.mrf.mxu0
    %v5106 = vadd.f32 %v4993, %v5105
    %5107 = vmatmul.f32.gmra.mxu0 %v3926
    %v5108 = vpop.f32.mrf.mxu0
    %v5109 = vadd.f32 %v4996, %v5108
    %5110 = vmatmul.f32.gmra.mxu0 %v3930
    %v5111 = vpop.f32.mrf.mxu0
    %v5112 = vadd.f32 %v4999, %v5111
    %5113 = vmatmul.f32.gmra.mxu0 %v3934
    %v5114 = vpop.f32.mrf.mxu0
    %v5115 = vadd.f32 %v5002, %v5114
    %5116 = vmatmul.f32.gmra.mxu0 %v3938
    %v5117 = vpop.f32.mrf.mxu0
    %v5118 = vadd.f32 %v5005, %v5117
    %5119 = vmatmul.f32.gmra.mxu0 %v3942
    %v5120 = vpop.f32.mrf.mxu0
    %v5121 = vadd.f32 %v5008, %v5120
    %5122 = vmatmul.f32.gmra.mxu0 %v3946
    %v5123 = vpop.f32.mrf.mxu0
    %v5124 = vadd.f32 %v5011, %v5123
    %5125 = vmatmul.f32.gmra.mxu0 %v3950
    %v5126 = vpop.f32.mrf.mxu0
    %v5127 = vadd.f32 %v5014, %v5126
    %5128 = vmatmul.f32.gmra.mxu0 %v3954
    %v5129 = vpop.f32.mrf.mxu0
    %v5130 = vadd.f32 %v5017, %v5129
    %5131 = vmatmul.f32.gmra.mxu0 %v3958
    %v5132 = vpop.f32.mrf.mxu0
    %v5133 = vadd.f32 %v5020, %v5132
    %5134 = vmatmul.f32.gmra.mxu0 %v3962
    %v5135 = vpop.f32.mrf.mxu0
    %v5136 = vadd.f32 %v5023, %v5135
    %5137 = vmatmul.f32.gmra.mxu0 %v3966
    %v5138 = vpop.f32.mrf.mxu0
    %v5139 = vadd.f32 %v5026, %v5138
    %5140 = vmatmul.f32.gmra.mxu0 %v3970
    %v5141 = vpop.f32.mrf.mxu0
    %v5142 = vadd.f32 %v5029, %v5141
    %5143 = vmatmul.f32.gmra.mxu0 %v3974
    %v5144 = vpop.f32.mrf.mxu0
    %v5145 = vadd.f32 %v5032, %v5144
    %5146 = vmatmul.f32.gmra.mxu0 %v3978
    %v5147 = vpop.f32.mrf.mxu0
    %v5148 = vadd.f32 %v5035, %v5147
    %5149 = vmatmul.f32.gmra.mxu0 %v3982
    %v5150 = vpop.f32.mrf.mxu0
    %v5151 = vadd.f32 %v5038, %v5150
    %5152 = vdwg.mxu0
    %5153 = vmatpush.msra.mxu0 %v4045
    %5154 = vmatpush.msra.mxu0 %v4041
    %5155 = vmatpush.msra.mxu0 %v4037
    %5156 = vmatpush.msra.mxu0 %v4033
    %5157 = vmatpush.msra.mxu0 %v4029
    %5158 = vmatpush.msra.mxu0 %v4025
    %5159 = vmatpush.msra.mxu0 %v4021
    %5160 = vmatpush.msra.mxu0 %v4017
    %5161 = vmatpush.msra.mxu0 %v4013
    %5162 = vmatpush.msra.mxu0 %v4009
    %5163 = vmatpush.msra.mxu0 %v4005
    %5164 = vmatpush.msra.mxu0 %v4001
    %5165 = vmatpush.msra.mxu0 %v3997
    %5166 = vmatpush.msra.mxu0 %v3993
    %5167 = vmatpush.msra.mxu0 %v3989
    %5168 = vmatpush.msra.mxu0 %v3985
    %5169 = vmatmul.f32.gmra.mxu0 %v3855
    %v5170 = vpop.f32.mrf.mxu0
    %v5171 = vadd.f32 %v4243, %v5170
    %5172 = vmatmul.f32.gmra.mxu0 %v3859
    %v5173 = vpop.f32.mrf.mxu0
    %v5174 = vadd.f32 %v4243, %v5173
    %5175 = vmatmul.f32.gmra.mxu0 %v3863
    %v5176 = vpop.f32.mrf.mxu0
    %v5177 = vadd.f32 %v4243, %v5176
    %5178 = vmatmul.f32.gmra.mxu0 %v3867
    %v5179 = vpop.f32.mrf.mxu0
    %v5180 = vadd.f32 %v4243, %v5179
    %5181 = vmatmul.f32.gmra.mxu0 %v3871
    %v5182 = vpop.f32.mrf.mxu0
    %v5183 = vadd.f32 %v4243, %v5182
    %5184 = vmatmul.f32.gmra.mxu0 %v3875
    %v5185 = vpop.f32.mrf.mxu0
    %v5186 = vadd.f32 %v4243, %v5185
    %5187 = vmatmul.f32.gmra.mxu0 %v3879
    %v5188 = vpop.f32.mrf.mxu0
    %v5189 = vadd.f32 %v4243, %v5188
    %5190 = vmatmul.f32.gmra.mxu0 %v3883
    %v5191 = vpop.f32.mrf.mxu0
    %v5192 = vadd.f32 %v4243, %v5191
    %5193 = vmatmul.f32.gmra.mxu0 %v3887
    %v5194 = vpop.f32.mrf.mxu0
    %v5195 = vadd.f32 %v4243, %v5194
    %5196 = vmatmul.f32.gmra.mxu0 %v3891
    %v5197 = vpop.f32.mrf.mxu0
    %v5198 = vadd.f32 %v4243, %v5197
    %5199 = vmatmul.f32.gmra.mxu0 %v3895
    %v5200 = vpop.f32.mrf.mxu0
    %v5201 = vadd.f32 %v4243, %v5200
    %5202 = vmatmul.f32.gmra.mxu0 %v3899
    %v5203 = vpop.f32.mrf.mxu0
    %v5204 = vadd.f32 %v4243, %v5203
    %5205 = vmatmul.f32.gmra.mxu0 %v3903
    %v5206 = vpop.f32.mrf.mxu0
    %v5207 = vadd.f32 %v4243, %v5206
    %5208 = vmatmul.f32.gmra.mxu0 %v3907
    %v5209 = vpop.f32.mrf.mxu0
    %v5210 = vadd.f32 %v4243, %v5209
    %5211 = vmatmul.f32.gmra.mxu0 %v3911
    %v5212 = vpop.f32.mrf.mxu0
    %v5213 = vadd.f32 %v4243, %v5212
    %5214 = vmatmul.f32.gmra.mxu0 %v3915
    %v5215 = vpop.f32.mrf.mxu0
    %v5216 = vadd.f32 %v4243, %v5215
    %5217 = vmatmul.f32.gmra.mxu0 %v3919
    %v5218 = vpop.f32.mrf.mxu0
    %v5219 = vadd.f32 %v4243, %v5218
    %5220 = vmatmul.f32.gmra.mxu0 %v3923
    %v5221 = vpop.f32.mrf.mxu0
    %v5222 = vadd.f32 %v4243, %v5221
    %5223 = vmatmul.f32.gmra.mxu0 %v3927
    %v5224 = vpop.f32.mrf.mxu0
    %v5225 = vadd.f32 %v4243, %v5224
    %5226 = vmatmul.f32.gmra.mxu0 %v3931
    %v5227 = vpop.f32.mrf.mxu0
    %v5228 = vadd.f32 %v4243, %v5227
    %5229 = vmatmul.f32.gmra.mxu0 %v3935
    %v5230 = vpop.f32.mrf.mxu0
    %v5231 = vadd.f32 %v4243, %v5230
    %5232 = vmatmul.f32.gmra.mxu0 %v3939
    %v5233 = vpop.f32.mrf.mxu0
    %v5234 = vadd.f32 %v4243, %v5233
    %5235 = vmatmul.f32.gmra.mxu0 %v3943
    %v5236 = vpop.f32.mrf.mxu0
    %v5237 = vadd.f32 %v4243, %v5236
    %5238 = vmatmul.f32.gmra.mxu0 %v3947
    %v5239 = vpop.f32.mrf.mxu0
    %v5240 = vadd.f32 %v4243, %v5239
    %5241 = vmatmul.f32.gmra.mxu0 %v3951
    %v5242 = vpop.f32.mrf.mxu0
    %v5243 = vadd.f32 %v4243, %v5242
    %5244 = vmatmul.f32.gmra.mxu0 %v3955
    %v5245 = vpop.f32.mrf.mxu0
    %v5246 = vadd.f32 %v4243, %v5245
    %5247 = vmatmul.f32.gmra.mxu0 %v3959
    %v5248 = vpop.f32.mrf.mxu0
    %v5249 = vadd.f32 %v4243, %v5248
    %5250 = vmatmul.f32.gmra.mxu0 %v3963
    %v5251 = vpop.f32.mrf.mxu0
    %v5252 = vadd.f32 %v4243, %v5251
    %5253 = vmatmul.f32.gmra.mxu0 %v3967
    %v5254 = vpop.f32.mrf.mxu0
    %v5255 = vadd.f32 %v4243, %v5254
    %5256 = vmatmul.f32.gmra.mxu0 %v3971
    %v5257 = vpop.f32.mrf.mxu0
    %v5258 = vadd.f32 %v4243, %v5257
    %5259 = vmatmul.f32.gmra.mxu0 %v3975
    %v5260 = vpop.f32.mrf.mxu0
    %v5261 = vadd.f32 %v4243, %v5260
    %5262 = vmatmul.f32.gmra.mxu0 %v3979
    %v5263 = vpop.f32.mrf.mxu0
    %v5264 = vadd.f32 %v4243, %v5263
    %5265 = vdwg.mxu0
    %5266 = vmatpush.msra.mxu0 %v4109
    %5267 = vmatpush.msra.mxu0 %v4105
    %5268 = vmatpush.msra.mxu0 %v4101
    %5269 = vmatpush.msra.mxu0 %v4097
    %5270 = vmatpush.msra.mxu0 %v4093
    %5271 = vmatpush.msra.mxu0 %v4089
    %5272 = vmatpush.msra.mxu0 %v4085
    %5273 = vmatpush.msra.mxu0 %v4081
    %5274 = vmatpush.msra.mxu0 %v4077
    %5275 = vmatpush.msra.mxu0 %v4073
    %5276 = vmatpush.msra.mxu0 %v4069
    %5277 = vmatpush.msra.mxu0 %v4065
    %5278 = vmatpush.msra.mxu0 %v4061
    %5279 = vmatpush.msra.mxu0 %v4057
    %5280 = vmatpush.msra.mxu0 %v4053
    %5281 = vmatpush.msra.mxu0 %v4049
    %5282 = vmatmul.f32.gmra.mxu0 %v3856
    %v5283 = vpop.f32.mrf.mxu0
    %v5284 = vadd.f32 %v5171, %v5283
    %5285 = vmatmul.f32.gmra.mxu0 %v3860
    %v5286 = vpop.f32.mrf.mxu0
    %v5287 = vadd.f32 %v5174, %v5286
    %5288 = vmatmul.f32.gmra.mxu0 %v3864
    %v5289 = vpop.f32.mrf.mxu0
    %v5290 = vadd.f32 %v5177, %v5289
    %5291 = vmatmul.f32.gmra.mxu0 %v3868
    %v5292 = vpop.f32.mrf.mxu0
    %v5293 = vadd.f32 %v5180, %v5292
    %5294 = vmatmul.f32.gmra.mxu0 %v3872
    %v5295 = vpop.f32.mrf.mxu0
    %v5296 = vadd.f32 %v5183, %v5295
    %5297 = vmatmul.f32.gmra.mxu0 %v3876
    %v5298 = vpop.f32.mrf.mxu0
    %v5299 = vadd.f32 %v5186, %v5298
    %5300 = vmatmul.f32.gmra.mxu0 %v3880
    %v5301 = vpop.f32.mrf.mxu0
    %v5302 = vadd.f32 %v5189, %v5301
    %5303 = vmatmul.f32.gmra.mxu0 %v3884
    %v5304 = vpop.f32.mrf.mxu0
    %v5305 = vadd.f32 %v5192, %v5304
    %5306 = vmatmul.f32.gmra.mxu0 %v3888
    %v5307 = vpop.f32.mrf.mxu0
    %v5308 = vadd.f32 %v5195, %v5307
    %5309 = vmatmul.f32.gmra.mxu0 %v3892
    %v5310 = vpop.f32.mrf.mxu0
    %v5311 = vadd.f32 %v5198, %v5310
    %5312 = vmatmul.f32.gmra.mxu0 %v3896
    %v5313 = vpop.f32.mrf.mxu0
    %v5314 = vadd.f32 %v5201, %v5313
    %5315 = vmatmul.f32.gmra.mxu0 %v3900
    %v5316 = vpop.f32.mrf.mxu0
    %v5317 = vadd.f32 %v5204, %v5316
    %5318 = vmatmul.f32.gmra.mxu0 %v3904
    %v5319 = vpop.f32.mrf.mxu0
    %v5320 = vadd.f32 %v5207, %v5319
    %5321 = vmatmul.f32.gmra.mxu0 %v3908
    %v5322 = vpop.f32.mrf.mxu0
    %v5323 = vadd.f32 %v5210, %v5322
    %5324 = vmatmul.f32.gmra.mxu0 %v3912
    %v5325 = vpop.f32.mrf.mxu0
    %v5326 = vadd.f32 %v5213, %v5325
    %5327 = vmatmul.f32.gmra.mxu0 %v3916
    %v5328 = vpop.f32.mrf.mxu0
    %v5329 = vadd.f32 %v5216, %v5328
    %5330 = vmatmul.f32.gmra.mxu0 %v3920
    %v5331 = vpop.f32.mrf.mxu0
    %v5332 = vadd.f32 %v5219, %v5331
    %5333 = vmatmul.f32.gmra.mxu0 %v3924
    %v5334 = vpop.f32.mrf.mxu0
    %v5335 = vadd.f32 %v5222, %v5334
    %5336 = vmatmul.f32.gmra.mxu0 %v3928
    %v5337 = vpop.f32.mrf.mxu0
    %v5338 = vadd.f32 %v5225, %v5337
    %5339 = vmatmul.f32.gmra.mxu0 %v3932
    %v5340 = vpop.f32.mrf.mxu0
    %v5341 = vadd.f32 %v5228, %v5340
    %5342 = vmatmul.f32.gmra.mxu0 %v3936
    %v5343 = vpop.f32.mrf.mxu0
    %v5344 = vadd.f32 %v5231, %v5343
    %5345 = vmatmul.f32.gmra.mxu0 %v3940
    %v5346 = vpop.f32.mrf.mxu0
    %v5347 = vadd.f32 %v5234, %v5346
    %5348 = vmatmul.f32.gmra.mxu0 %v3944
    %v5349 = vpop.f32.mrf.mxu0
    %v5350 = vadd.f32 %v5237, %v5349
    %5351 = vmatmul.f32.gmra.mxu0 %v3948
    %v5352 = vpop.f32.mrf.mxu0
    %v5353 = vadd.f32 %v5240, %v5352
    %5354 = vmatmul.f32.gmra.mxu0 %v3952
    %v5355 = vpop.f32.mrf.mxu0
    %v5356 = vadd.f32 %v5243, %v5355
    %5357 = vmatmul.f32.gmra.mxu0 %v3956
    %v5358 = vpop.f32.mrf.mxu0
    %v5359 = vadd.f32 %v5246, %v5358
    %5360 = vmatmul.f32.gmra.mxu0 %v3960
    %v5361 = vpop.f32.mrf.mxu0
    %v5362 = vadd.f32 %v5249, %v5361
    %5363 = vmatmul.f32.gmra.mxu0 %v3964
    %v5364 = vpop.f32.mrf.mxu0
    %v5365 = vadd.f32 %v5252, %v5364
    %5366 = vmatmul.f32.gmra.mxu0 %v3968
    %v5367 = vpop.f32.mrf.mxu0
    %v5368 = vadd.f32 %v5255, %v5367
    %5369 = vmatmul.f32.gmra.mxu0 %v3972
    %v5370 = vpop.f32.mrf.mxu0
    %v5371 = vadd.f32 %v5258, %v5370
    %5372 = vmatmul.f32.gmra.mxu0 %v3976
    %v5373 = vpop.f32.mrf.mxu0
    %v5374 = vadd.f32 %v5261, %v5373
    %5375 = vmatmul.f32.gmra.mxu0 %v3980
    %v5376 = vpop.f32.mrf.mxu0
    %v5377 = vadd.f32 %v5264, %v5376
    %5378 = vdwg.mxu0
    %5379 = vmatpush.msra.mxu0 %v4173
    %5380 = vmatpush.msra.mxu0 %v4169
    %5381 = vmatpush.msra.mxu0 %v4165
    %5382 = vmatpush.msra.mxu0 %v4161
    %5383 = vmatpush.msra.mxu0 %v4157
    %5384 = vmatpush.msra.mxu0 %v4153
    %5385 = vmatpush.msra.mxu0 %v4149
    %5386 = vmatpush.msra.mxu0 %v4145
    %5387 = vmatpush.msra.mxu0 %v4141
    %5388 = vmatpush.msra.mxu0 %v4137
    %5389 = vmatpush.msra.mxu0 %v4133
    %5390 = vmatpush.msra.mxu0 %v4129
    %5391 = vmatpush.msra.mxu0 %v4125
    %5392 = vmatpush.msra.mxu0 %v4121
    %5393 = vmatpush.msra.mxu0 %v4117
    %5394 = vmatpush.msra.mxu0 %v4113
    %5395 = vmatmul.f32.gmra.mxu0 %v3857
    %v5396 = vpop.f32.mrf.mxu0
    %v5397 = vadd.f32 %v5284, %v5396
    %5398 = vmatmul.f32.gmra.mxu0 %v3861
    %v5399 = vpop.f32.mrf.mxu0
    %v5400 = vadd.f32 %v5287, %v5399
    %5401 = vmatmul.f32.gmra.mxu0 %v3865
    %v5402 = vpop.f32.mrf.mxu0
    %v5403 = vadd.f32 %v5290, %v5402
    %5404 = vmatmul.f32.gmra.mxu0 %v3869
    %v5405 = vpop.f32.mrf.mxu0
    %v5406 = vadd.f32 %v5293, %v5405
    %5407 = vmatmul.f32.gmra.mxu0 %v3873
    %v5408 = vpop.f32.mrf.mxu0
    %v5409 = vadd.f32 %v5296, %v5408
    %5410 = vmatmul.f32.gmra.mxu0 %v3877
    %v5411 = vpop.f32.mrf.mxu0
    %v5412 = vadd.f32 %v5299, %v5411
    %5413 = vmatmul.f32.gmra.mxu0 %v3881
    %v5414 = vpop.f32.mrf.mxu0
    %v5415 = vadd.f32 %v5302, %v5414
    %5416 = vmatmul.f32.gmra.mxu0 %v3885
    %v5417 = vpop.f32.mrf.mxu0
    %v5418 = vadd.f32 %v5305, %v5417
    %5419 = vmatmul.f32.gmra.mxu0 %v3889
    %v5420 = vpop.f32.mrf.mxu0
    %v5421 = vadd.f32 %v5308, %v5420
    %5422 = vmatmul.f32.gmra.mxu0 %v3893
    %v5423 = vpop.f32.mrf.mxu0
    %v5424 = vadd.f32 %v5311, %v5423
    %5425 = vmatmul.f32.gmra.mxu0 %v3897
    %v5426 = vpop.f32.mrf.mxu0
    %v5427 = vadd.f32 %v5314, %v5426
    %5428 = vmatmul.f32.gmra.mxu0 %v3901
    %v5429 = vpop.f32.mrf.mxu0
    %v5430 = vadd.f32 %v5317, %v5429
    %5431 = vmatmul.f32.gmra.mxu0 %v3905
    %v5432 = vpop.f32.mrf.mxu0
    %v5433 = vadd.f32 %v5320, %v5432
    %5434 = vmatmul.f32.gmra.mxu0 %v3909
    %v5435 = vpop.f32.mrf.mxu0
    %v5436 = vadd.f32 %v5323, %v5435
    %5437 = vmatmul.f32.gmra.mxu0 %v3913
    %v5438 = vpop.f32.mrf.mxu0
    %v5439 = vadd.f32 %v5326, %v5438
    %5440 = vmatmul.f32.gmra.mxu0 %v3917
    %v5441 = vpop.f32.mrf.mxu0
    %v5442 = vadd.f32 %v5329, %v5441
    %5443 = vmatmul.f32.gmra.mxu0 %v3921
    %v5444 = vpop.f32.mrf.mxu0
    %v5445 = vadd.f32 %v5332, %v5444
    %5446 = vmatmul.f32.gmra.mxu0 %v3925
    %v5447 = vpop.f32.mrf.mxu0
    %v5448 = vadd.f32 %v5335, %v5447
    %5449 = vmatmul.f32.gmra.mxu0 %v3929
    %v5450 = vpop.f32.mrf.mxu0
    %v5451 = vadd.f32 %v5338, %v5450
    %5452 = vmatmul.f32.gmra.mxu0 %v3933
    %v5453 = vpop.f32.mrf.mxu0
    %v5454 = vadd.f32 %v5341, %v5453
    %5455 = vmatmul.f32.gmra.mxu0 %v3937
    %v5456 = vpop.f32.mrf.mxu0
    %v5457 = vadd.f32 %v5344, %v5456
    %5458 = vmatmul.f32.gmra.mxu0 %v3941
    %v5459 = vpop.f32.mrf.mxu0
    %v5460 = vadd.f32 %v5347, %v5459
    %5461 = vmatmul.f32.gmra.mxu0 %v3945
    %v5462 = vpop.f32.mrf.mxu0
    %v5463 = vadd.f32 %v5350, %v5462
    %5464 = vmatmul.f32.gmra.mxu0 %v3949
    %v5465 = vpop.f32.mrf.mxu0
    %v5466 = vadd.f32 %v5353, %v5465
    %5467 = vmatmul.f32.gmra.mxu0 %v3953
    %v5468 = vpop.f32.mrf.mxu0
    %v5469 = vadd.f32 %v5356, %v5468
    %5470 = vmatmul.f32.gmra.mxu0 %v3957
    %v5471 = vpop.f32.mrf.mxu0
    %v5472 = vadd.f32 %v5359, %v5471
    %5473 = vmatmul.f32.gmra.mxu0 %v3961
    %v5474 = vpop.f32.mrf.mxu0
    %v5475 = vadd.f32 %v5362, %v5474
    %5476 = vmatmul.f32.gmra.mxu0 %v3965
    %v5477 = vpop.f32.mrf.mxu0
    %v5478 = vadd.f32 %v5365, %v5477
    %5479 = vmatmul.f32.gmra.mxu0 %v3969
    %v5480 = vpop.f32.mrf.mxu0
    %v5481 = vadd.f32 %v5368, %v5480
    %5482 = vmatmul.f32.gmra.mxu0 %v3973
    %v5483 = vpop.f32.mrf.mxu0
    %v5484 = vadd.f32 %v5371, %v5483
    %5485 = vmatmul.f32.gmra.mxu0 %v3977
    %v5486 = vpop.f32.mrf.mxu0
    %v5487 = vadd.f32 %v5374, %v5486
    %5488 = vmatmul.f32.gmra.mxu0 %v3981
    %v5489 = vpop.f32.mrf.mxu0
    %v5490 = vadd.f32 %v5377, %v5489
    %5491 = vdwg.mxu0
    %5492 = vmatpush.msra.mxu0 %v4237
    %5493 = vmatpush.msra.mxu0 %v4233
    %5494 = vmatpush.msra.mxu0 %v4229
    %5495 = vmatpush.msra.mxu0 %v4225
    %5496 = vmatpush.msra.mxu0 %v4221
    %5497 = vmatpush.msra.mxu0 %v4217
    %5498 = vmatpush.msra.mxu0 %v4213
    %5499 = vmatpush.msra.mxu0 %v4209
    %5500 = vmatpush.msra.mxu0 %v4205
    %5501 = vmatpush.msra.mxu0 %v4201
    %5502 = vmatpush.msra.mxu0 %v4197
    %5503 = vmatpush.msra.mxu0 %v4193
    %5504 = vmatpush.msra.mxu0 %v4189
    %5505 = vmatpush.msra.mxu0 %v4185
    %5506 = vmatpush.msra.mxu0 %v4181
    %5507 = vmatpush.msra.mxu0 %v4177
    %5508 = vmatmul.f32.gmra.mxu0 %v3858
    %v5509 = vpop.f32.mrf.mxu0
    %v5510 = vadd.f32 %v5397, %v5509
    %5511 = vmatmul.f32.gmra.mxu0 %v3862
    %v5512 = vpop.f32.mrf.mxu0
    %v5513 = vadd.f32 %v5400, %v5512
    %5514 = vmatmul.f32.gmra.mxu0 %v3866
    %v5515 = vpop.f32.mrf.mxu0
    %v5516 = vadd.f32 %v5403, %v5515
    %5517 = vmatmul.f32.gmra.mxu0 %v3870
    %v5518 = vpop.f32.mrf.mxu0
    %v5519 = vadd.f32 %v5406, %v5518
    %5520 = vmatmul.f32.gmra.mxu0 %v3874
    %v5521 = vpop.f32.mrf.mxu0
    %v5522 = vadd.f32 %v5409, %v5521
    %5523 = vmatmul.f32.gmra.mxu0 %v3878
    %v5524 = vpop.f32.mrf.mxu0
    %v5525 = vadd.f32 %v5412, %v5524
    %5526 = vmatmul.f32.gmra.mxu0 %v3882
    %v5527 = vpop.f32.mrf.mxu0
    %v5528 = vadd.f32 %v5415, %v5527
    %5529 = vmatmul.f32.gmra.mxu0 %v3886
    %v5530 = vpop.f32.mrf.mxu0
    %v5531 = vadd.f32 %v5418, %v5530
    %5532 = vmatmul.f32.gmra.mxu0 %v3890
    %v5533 = vpop.f32.mrf.mxu0
    %v5534 = vadd.f32 %v5421, %v5533
    %5535 = vmatmul.f32.gmra.mxu0 %v3894
    %v5536 = vpop.f32.mrf.mxu0
    %v5537 = vadd.f32 %v5424, %v5536
    %5538 = vmatmul.f32.gmra.mxu0 %v3898
    %v5539 = vpop.f32.mrf.mxu0
    %v5540 = vadd.f32 %v5427, %v5539
    %5541 = vmatmul.f32.gmra.mxu0 %v3902
    %v5542 = vpop.f32.mrf.mxu0
    %v5543 = vadd.f32 %v5430, %v5542
    %5544 = vmatmul.f32.gmra.mxu0 %v3906
    %v5545 = vpop.f32.mrf.mxu0
    %v5546 = vadd.f32 %v5433, %v5545
    %5547 = vmatmul.f32.gmra.mxu0 %v3910
    %v5548 = vpop.f32.mrf.mxu0
    %v5549 = vadd.f32 %v5436, %v5548
    %5550 = vmatmul.f32.gmra.mxu0 %v3914
    %v5551 = vpop.f32.mrf.mxu0
    %v5552 = vadd.f32 %v5439, %v5551
    %5553 = vmatmul.f32.gmra.mxu0 %v3918
    %v5554 = vpop.f32.mrf.mxu0
    %v5555 = vadd.f32 %v5442, %v5554
    %5556 = vmatmul.f32.gmra.mxu0 %v3922
    %v5557 = vpop.f32.mrf.mxu0
    %v5558 = vadd.f32 %v5445, %v5557
    %5559 = vmatmul.f32.gmra.mxu0 %v3926
    %v5560 = vpop.f32.mrf.mxu0
    %v5561 = vadd.f32 %v5448, %v5560
    %5562 = vmatmul.f32.gmra.mxu0 %v3930
    %v5563 = vpop.f32.mrf.mxu0
    %v5564 = vadd.f32 %v5451, %v5563
    %5565 = vmatmul.f32.gmra.mxu0 %v3934
    %v5566 = vpop.f32.mrf.mxu0
    %v5567 = vadd.f32 %v5454, %v5566
    %5568 = vmatmul.f32.gmra.mxu0 %v3938
    %v5569 = vpop.f32.mrf.mxu0
    %v5570 = vadd.f32 %v5457, %v5569
    %5571 = vmatmul.f32.gmra.mxu0 %v3942
    %v5572 = vpop.f32.mrf.mxu0
    %v5573 = vadd.f32 %v5460, %v5572
    %5574 = vmatmul.f32.gmra.mxu0 %v3946
    %v5575 = vpop.f32.mrf.mxu0
    %v5576 = vadd.f32 %v5463, %v5575
    %5577 = vmatmul.f32.gmra.mxu0 %v3950
    %v5578 = vpop.f32.mrf.mxu0
    %v5579 = vadd.f32 %v5466, %v5578
    %5580 = vmatmul.f32.gmra.mxu0 %v3954
    %v5581 = vpop.f32.mrf.mxu0
    %v5582 = vadd.f32 %v5469, %v5581
    %5583 = vmatmul.f32.gmra.mxu0 %v3958
    %v5584 = vpop.f32.mrf.mxu0
    %v5585 = vadd.f32 %v5472, %v5584
    %5586 = vmatmul.f32.gmra.mxu0 %v3962
    %v5587 = vpop.f32.mrf.mxu0
    %v5588 = vadd.f32 %v5475, %v5587
    %5589 = vmatmul.f32.gmra.mxu0 %v3966
    %v5590 = vpop.f32.mrf.mxu0
    %v5591 = vadd.f32 %v5478, %v5590
    %5592 = vmatmul.f32.gmra.mxu0 %v3970
    %v5593 = vpop.f32.mrf.mxu0
    %v5594 = vadd.f32 %v5481, %v5593
    %5595 = vmatmul.f32.gmra.mxu0 %v3974
    %v5596 = vpop.f32.mrf.mxu0
    %v5597 = vadd.f32 %v5484, %v5596
    %5598 = vmatmul.f32.gmra.mxu0 %v3978
    %v5599 = vpop.f32.mrf.mxu0
    %v5600 = vadd.f32 %v5487, %v5599
    %5601 = vmatmul.f32.gmra.mxu0 %v3982
    %v5602 = vpop.f32.mrf.mxu0
    %v5603 = vadd.f32 %v5490, %v5602
    %5604 = vdwg.mxu0
    %5605 = vmatpush.msra.mxu0 %v4046
    %5606 = vmatpush.msra.mxu0 %v4042
    %5607 = vmatpush.msra.mxu0 %v4038
    %5608 = vmatpush.msra.mxu0 %v4034
    %5609 = vmatpush.msra.mxu0 %v4030
    %5610 = vmatpush.msra.mxu0 %v4026
    %5611 = vmatpush.msra.mxu0 %v4022
    %5612 = vmatpush.msra.mxu0 %v4018
    %5613 = vmatpush.msra.mxu0 %v4014
    %5614 = vmatpush.msra.mxu0 %v4010
    %5615 = vmatpush.msra.mxu0 %v4006
    %5616 = vmatpush.msra.mxu0 %v4002
    %5617 = vmatpush.msra.mxu0 %v3998
    %5618 = vmatpush.msra.mxu0 %v3994
    %5619 = vmatpush.msra.mxu0 %v3990
    %5620 = vmatpush.msra.mxu0 %v3986
    %5621 = vmatmul.f32.gmra.mxu0 %v3855
    %v5622 = vpop.f32.mrf.mxu0
    %v5623 = vadd.f32 %v4244, %v5622
    %5624 = vmatmul.f32.gmra.mxu0 %v3859
    %v5625 = vpop.f32.mrf.mxu0
    %v5626 = vadd.f32 %v4244, %v5625
    %5627 = vmatmul.f32.gmra.mxu0 %v3863
    %v5628 = vpop.f32.mrf.mxu0
    %v5629 = vadd.f32 %v4244, %v5628
    %5630 = vmatmul.f32.gmra.mxu0 %v3867
    %v5631 = vpop.f32.mrf.mxu0
    %v5632 = vadd.f32 %v4244, %v5631
    %5633 = vmatmul.f32.gmra.mxu0 %v3871
    %v5634 = vpop.f32.mrf.mxu0
    %v5635 = vadd.f32 %v4244, %v5634
    %5636 = vmatmul.f32.gmra.mxu0 %v3875
    %v5637 = vpop.f32.mrf.mxu0
    %v5638 = vadd.f32 %v4244, %v5637
    %5639 = vmatmul.f32.gmra.mxu0 %v3879
    %v5640 = vpop.f32.mrf.mxu0
    %v5641 = vadd.f32 %v4244, %v5640
    %5642 = vmatmul.f32.gmra.mxu0 %v3883
    %v5643 = vpop.f32.mrf.mxu0
    %v5644 = vadd.f32 %v4244, %v5643
    %5645 = vmatmul.f32.gmra.mxu0 %v3887
    %v5646 = vpop.f32.mrf.mxu0
    %v5647 = vadd.f32 %v4244, %v5646
    %5648 = vmatmul.f32.gmra.mxu0 %v3891
    %v5649 = vpop.f32.mrf.mxu0
    %v5650 = vadd.f32 %v4244, %v5649
    %5651 = vmatmul.f32.gmra.mxu0 %v3895
    %v5652 = vpop.f32.mrf.mxu0
    %v5653 = vadd.f32 %v4244, %v5652
    %5654 = vmatmul.f32.gmra.mxu0 %v3899
    %v5655 = vpop.f32.mrf.mxu0
    %v5656 = vadd.f32 %v4244, %v5655
    %5657 = vmatmul.f32.gmra.mxu0 %v3903
    %v5658 = vpop.f32.mrf.mxu0
    %v5659 = vadd.f32 %v4244, %v5658
    %5660 = vmatmul.f32.gmra.mxu0 %v3907
    %v5661 = vpop.f32.mrf.mxu0
    %v5662 = vadd.f32 %v4244, %v5661
    %5663 = vmatmul.f32.gmra.mxu0 %v3911
    %v5664 = vpop.f32.mrf.mxu0
    %v5665 = vadd.f32 %v4244, %v5664
    %5666 = vmatmul.f32.gmra.mxu0 %v3915
    %v5667 = vpop.f32.mrf.mxu0
    %v5668 = vadd.f32 %v4244, %v5667
    %5669 = vmatmul.f32.gmra.mxu0 %v3919
    %v5670 = vpop.f32.mrf.mxu0
    %v5671 = vadd.f32 %v4244, %v5670
    %5672 = vmatmul.f32.gmra.mxu0 %v3923
    %v5673 = vpop.f32.mrf.mxu0
    %v5674 = vadd.f32 %v4244, %v5673
    %5675 = vmatmul.f32.gmra.mxu0 %v3927
    %v5676 = vpop.f32.mrf.mxu0
    %v5677 = vadd.f32 %v4244, %v5676
    %5678 = vmatmul.f32.gmra.mxu0 %v3931
    %v5679 = vpop.f32.mrf.mxu0
    %v5680 = vadd.f32 %v4244, %v5679
    %5681 = vmatmul.f32.gmra.mxu0 %v3935
    %v5682 = vpop.f32.mrf.mxu0
    %v5683 = vadd.f32 %v4244, %v5682
    %5684 = vmatmul.f32.gmra.mxu0 %v3939
    %v5685 = vpop.f32.mrf.mxu0
    %v5686 = vadd.f32 %v4244, %v5685
    %5687 = vmatmul.f32.gmra.mxu0 %v3943
    %v5688 = vpop.f32.mrf.mxu0
    %v5689 = vadd.f32 %v4244, %v5688
    %5690 = vmatmul.f32.gmra.mxu0 %v3947
    %v5691 = vpop.f32.mrf.mxu0
    %v5692 = vadd.f32 %v4244, %v5691
    %5693 = vmatmul.f32.gmra.mxu0 %v3951
    %v5694 = vpop.f32.mrf.mxu0
    %v5695 = vadd.f32 %v4244, %v5694
    %5696 = vmatmul.f32.gmra.mxu0 %v3955
    %v5697 = vpop.f32.mrf.mxu0
    %v5698 = vadd.f32 %v4244, %v5697
    %5699 = vmatmul.f32.gmra.mxu0 %v3959
    %v5700 = vpop.f32.mrf.mxu0
    %v5701 = vadd.f32 %v4244, %v5700
    %5702 = vmatmul.f32.gmra.mxu0 %v3963
    %v5703 = vpop.f32.mrf.mxu0
    %v5704 = vadd.f32 %v4244, %v5703
    %5705 = vmatmul.f32.gmra.mxu0 %v3967
    %v5706 = vpop.f32.mrf.mxu0
    %v5707 = vadd.f32 %v4244, %v5706
    %5708 = vmatmul.f32.gmra.mxu0 %v3971
    %v5709 = vpop.f32.mrf.mxu0
    %v5710 = vadd.f32 %v4244, %v5709
    %5711 = vmatmul.f32.gmra.mxu0 %v3975
    %v5712 = vpop.f32.mrf.mxu0
    %v5713 = vadd.f32 %v4244, %v5712
    %5714 = vmatmul.f32.gmra.mxu0 %v3979
    %v5715 = vpop.f32.mrf.mxu0
    %v5716 = vadd.f32 %v4244, %v5715
    %5717 = vdwg.mxu0
    %5718 = vmatpush.msra.mxu0 %v4110
    %5719 = vmatpush.msra.mxu0 %v4106
    %5720 = vmatpush.msra.mxu0 %v4102
    %5721 = vmatpush.msra.mxu0 %v4098
    %5722 = vmatpush.msra.mxu0 %v4094
    %5723 = vmatpush.msra.mxu0 %v4090
    %5724 = vmatpush.msra.mxu0 %v4086
    %5725 = vmatpush.msra.mxu0 %v4082
    %5726 = vmatpush.msra.mxu0 %v4078
    %5727 = vmatpush.msra.mxu0 %v4074
    %5728 = vmatpush.msra.mxu0 %v4070
    %5729 = vmatpush.msra.mxu0 %v4066
    %5730 = vmatpush.msra.mxu0 %v4062
    %5731 = vmatpush.msra.mxu0 %v4058
    %5732 = vmatpush.msra.mxu0 %v4054
    %5733 = vmatpush.msra.mxu0 %v4050
    %5734 = vmatmul.f32.gmra.mxu0 %v3856
    %v5735 = vpop.f32.mrf.mxu0
    %v5736 = vadd.f32 %v5623, %v5735
    %5737 = vmatmul.f32.gmra.mxu0 %v3860
    %v5738 = vpop.f32.mrf.mxu0
    %v5739 = vadd.f32 %v5626, %v5738
    %5740 = vmatmul.f32.gmra.mxu0 %v3864
    %v5741 = vpop.f32.mrf.mxu0
    %v5742 = vadd.f32 %v5629, %v5741
    %5743 = vmatmul.f32.gmra.mxu0 %v3868
    %v5744 = vpop.f32.mrf.mxu0
    %v5745 = vadd.f32 %v5632, %v5744
    %5746 = vmatmul.f32.gmra.mxu0 %v3872
    %v5747 = vpop.f32.mrf.mxu0
    %v5748 = vadd.f32 %v5635, %v5747
    %5749 = vmatmul.f32.gmra.mxu0 %v3876
    %v5750 = vpop.f32.mrf.mxu0
    %v5751 = vadd.f32 %v5638, %v5750
    %5752 = vmatmul.f32.gmra.mxu0 %v3880
    %v5753 = vpop.f32.mrf.mxu0
    %v5754 = vadd.f32 %v5641, %v5753
    %5755 = vmatmul.f32.gmra.mxu0 %v3884
    %v5756 = vpop.f32.mrf.mxu0
    %v5757 = vadd.f32 %v5644, %v5756
    %5758 = vmatmul.f32.gmra.mxu0 %v3888
    %v5759 = vpop.f32.mrf.mxu0
    %v5760 = vadd.f32 %v5647, %v5759
    %5761 = vmatmul.f32.gmra.mxu0 %v3892
    %v5762 = vpop.f32.mrf.mxu0
    %v5763 = vadd.f32 %v5650, %v5762
    %5764 = vmatmul.f32.gmra.mxu0 %v3896
    %v5765 = vpop.f32.mrf.mxu0
    %v5766 = vadd.f32 %v5653, %v5765
    %5767 = vmatmul.f32.gmra.mxu0 %v3900
    %v5768 = vpop.f32.mrf.mxu0
    %v5769 = vadd.f32 %v5656, %v5768
    %5770 = vmatmul.f32.gmra.mxu0 %v3904
    %v5771 = vpop.f32.mrf.mxu0
    %v5772 = vadd.f32 %v5659, %v5771
    %5773 = vmatmul.f32.gmra.mxu0 %v3908
    %v5774 = vpop.f32.mrf.mxu0
    %v5775 = vadd.f32 %v5662, %v5774
    %5776 = vmatmul.f32.gmra.mxu0 %v3912
    %v5777 = vpop.f32.mrf.mxu0
    %v5778 = vadd.f32 %v5665, %v5777
    %5779 = vmatmul.f32.gmra.mxu0 %v3916
    %v5780 = vpop.f32.mrf.mxu0
    %v5781 = vadd.f32 %v5668, %v5780
    %5782 = vmatmul.f32.gmra.mxu0 %v3920
    %v5783 = vpop.f32.mrf.mxu0
    %v5784 = vadd.f32 %v5671, %v5783
    %5785 = vmatmul.f32.gmra.mxu0 %v3924
    %v5786 = vpop.f32.mrf.mxu0
    %v5787 = vadd.f32 %v5674, %v5786
    %5788 = vmatmul.f32.gmra.mxu0 %v3928
    %v5789 = vpop.f32.mrf.mxu0
    %v5790 = vadd.f32 %v5677, %v5789
    %5791 = vmatmul.f32.gmra.mxu0 %v3932
    %v5792 = vpop.f32.mrf.mxu0
    %v5793 = vadd.f32 %v5680, %v5792
    %5794 = vmatmul.f32.gmra.mxu0 %v3936
    %v5795 = vpop.f32.mrf.mxu0
    %v5796 = vadd.f32 %v5683, %v5795
    %5797 = vmatmul.f32.gmra.mxu0 %v3940
    %v5798 = vpop.f32.mrf.mxu0
    %v5799 = vadd.f32 %v5686, %v5798
    %5800 = vmatmul.f32.gmra.mxu0 %v3944
    %v5801 = vpop.f32.mrf.mxu0
    %v5802 = vadd.f32 %v5689, %v5801
    %5803 = vmatmul.f32.gmra.mxu0 %v3948
    %v5804 = vpop.f32.mrf.mxu0
    %v5805 = vadd.f32 %v5692, %v5804
    %5806 = vmatmul.f32.gmra.mxu0 %v3952
    %v5807 = vpop.f32.mrf.mxu0
    %v5808 = vadd.f32 %v5695, %v5807
    %5809 = vmatmul.f32.gmra.mxu0 %v3956
    %v5810 = vpop.f32.mrf.mxu0
    %v5811 = vadd.f32 %v5698, %v5810
    %5812 = vmatmul.f32.gmra.mxu0 %v3960
    %v5813 = vpop.f32.mrf.mxu0
    %v5814 = vadd.f32 %v5701, %v5813
    %5815 = vmatmul.f32.gmra.mxu0 %v3964
    %v5816 = vpop.f32.mrf.mxu0
    %v5817 = vadd.f32 %v5704, %v5816
    %5818 = vmatmul.f32.gmra.mxu0 %v3968
    %v5819 = vpop.f32.mrf.mxu0
    %v5820 = vadd.f32 %v5707, %v5819
    %5821 = vmatmul.f32.gmra.mxu0 %v3972
    %v5822 = vpop.f32.mrf.mxu0
    %v5823 = vadd.f32 %v5710, %v5822
    %5824 = vmatmul.f32.gmra.mxu0 %v3976
    %v5825 = vpop.f32.mrf.mxu0
    %v5826 = vadd.f32 %v5713, %v5825
    %5827 = vmatmul.f32.gmra.mxu0 %v3980
    %v5828 = vpop.f32.mrf.mxu0
    %v5829 = vadd.f32 %v5716, %v5828
    %5830 = vdwg.mxu0
    %5831 = vmatpush.msra.mxu0 %v4174
    %5832 = vmatpush.msra.mxu0 %v4170
    %5833 = vmatpush.msra.mxu0 %v4166
    %5834 = vmatpush.msra.mxu0 %v4162
    %5835 = vmatpush.msra.mxu0 %v4158
    %5836 = vmatpush.msra.mxu0 %v4154
    %5837 = vmatpush.msra.mxu0 %v4150
    %5838 = vmatpush.msra.mxu0 %v4146
    %5839 = vmatpush.msra.mxu0 %v4142
    %5840 = vmatpush.msra.mxu0 %v4138
    %5841 = vmatpush.msra.mxu0 %v4134
    %5842 = vmatpush.msra.mxu0 %v4130
    %5843 = vmatpush.msra.mxu0 %v4126
    %5844 = vmatpush.msra.mxu0 %v4122
    %5845 = vmatpush.msra.mxu0 %v4118
    %5846 = vmatpush.msra.mxu0 %v4114
    %5847 = vmatmul.f32.gmra.mxu0 %v3857
    %v5848 = vpop.f32.mrf.mxu0
    %v5849 = vadd.f32 %v5736, %v5848
    %5850 = vmatmul.f32.gmra.mxu0 %v3861
    %v5851 = vpop.f32.mrf.mxu0
    %v5852 = vadd.f32 %v5739, %v5851
    %5853 = vmatmul.f32.gmra.mxu0 %v3865
    %v5854 = vpop.f32.mrf.mxu0
    %v5855 = vadd.f32 %v5742, %v5854
    %5856 = vmatmul.f32.gmra.mxu0 %v3869
    %v5857 = vpop.f32.mrf.mxu0
    %v5858 = vadd.f32 %v5745, %v5857
    %5859 = vmatmul.f32.gmra.mxu0 %v3873
    %v5860 = vpop.f32.mrf.mxu0
    %v5861 = vadd.f32 %v5748, %v5860
    %5862 = vmatmul.f32.gmra.mxu0 %v3877
    %v5863 = vpop.f32.mrf.mxu0
    %v5864 = vadd.f32 %v5751, %v5863
    %5865 = vmatmul.f32.gmra.mxu0 %v3881
    %v5866 = vpop.f32.mrf.mxu0
    %v5867 = vadd.f32 %v5754, %v5866
    %5868 = vmatmul.f32.gmra.mxu0 %v3885
    %v5869 = vpop.f32.mrf.mxu0
    %v5870 = vadd.f32 %v5757, %v5869
    %5871 = vmatmul.f32.gmra.mxu0 %v3889
    %v5872 = vpop.f32.mrf.mxu0
    %v5873 = vadd.f32 %v5760, %v5872
    %5874 = vmatmul.f32.gmra.mxu0 %v3893
    %v5875 = vpop.f32.mrf.mxu0
    %v5876 = vadd.f32 %v5763, %v5875
    %5877 = vmatmul.f32.gmra.mxu0 %v3897
    %v5878 = vpop.f32.mrf.mxu0
    %v5879 = vadd.f32 %v5766, %v5878
    %5880 = vmatmul.f32.gmra.mxu0 %v3901
    %v5881 = vpop.f32.mrf.mxu0
    %v5882 = vadd.f32 %v5769, %v5881
    %5883 = vmatmul.f32.gmra.mxu0 %v3905
    %v5884 = vpop.f32.mrf.mxu0
    %v5885 = vadd.f32 %v5772, %v5884
    %5886 = vmatmul.f32.gmra.mxu0 %v3909
    %v5887 = vpop.f32.mrf.mxu0
    %v5888 = vadd.f32 %v5775, %v5887
    %5889 = vmatmul.f32.gmra.mxu0 %v3913
    %v5890 = vpop.f32.mrf.mxu0
    %v5891 = vadd.f32 %v5778, %v5890
    %5892 = vmatmul.f32.gmra.mxu0 %v3917
    %v5893 = vpop.f32.mrf.mxu0
    %v5894 = vadd.f32 %v5781, %v5893
    %5895 = vmatmul.f32.gmra.mxu0 %v3921
    %v5896 = vpop.f32.mrf.mxu0
    %v5897 = vadd.f32 %v5784, %v5896
    %5898 = vmatmul.f32.gmra.mxu0 %v3925
    %v5899 = vpop.f32.mrf.mxu0
    %v5900 = vadd.f32 %v5787, %v5899
    %5901 = vmatmul.f32.gmra.mxu0 %v3929
    %v5902 = vpop.f32.mrf.mxu0
    %v5903 = vadd.f32 %v5790, %v5902
    %5904 = vmatmul.f32.gmra.mxu0 %v3933
    %v5905 = vpop.f32.mrf.mxu0
    %v5906 = vadd.f32 %v5793, %v5905
    %5907 = vmatmul.f32.gmra.mxu0 %v3937
    %v5908 = vpop.f32.mrf.mxu0
    %v5909 = vadd.f32 %v5796, %v5908
    %5910 = vmatmul.f32.gmra.mxu0 %v3941
    %v5911 = vpop.f32.mrf.mxu0
    %v5912 = vadd.f32 %v5799, %v5911
    %5913 = vmatmul.f32.gmra.mxu0 %v3945
    %v5914 = vpop.f32.mrf.mxu0
    %v5915 = vadd.f32 %v5802, %v5914
    %5916 = vmatmul.f32.gmra.mxu0 %v3949
    %v5917 = vpop.f32.mrf.mxu0
    %v5918 = vadd.f32 %v5805, %v5917
    %5919 = vmatmul.f32.gmra.mxu0 %v3953
    %v5920 = vpop.f32.mrf.mxu0
    %v5921 = vadd.f32 %v5808, %v5920
    %5922 = vmatmul.f32.gmra.mxu0 %v3957
    %v5923 = vpop.f32.mrf.mxu0
    %v5924 = vadd.f32 %v5811, %v5923
    %5925 = vmatmul.f32.gmra.mxu0 %v3961
    %v5926 = vpop.f32.mrf.mxu0
    %v5927 = vadd.f32 %v5814, %v5926
    %5928 = vmatmul.f32.gmra.mxu0 %v3965
    %v5929 = vpop.f32.mrf.mxu0
    %v5930 = vadd.f32 %v5817, %v5929
    %5931 = vmatmul.f32.gmra.mxu0 %v3969
    %v5932 = vpop.f32.mrf.mxu0
    %v5933 = vadd.f32 %v5820, %v5932
    %5934 = vmatmul.f32.gmra.mxu0 %v3973
    %v5935 = vpop.f32.mrf.mxu0
    %v5936 = vadd.f32 %v5823, %v5935
    %5937 = vmatmul.f32.gmra.mxu0 %v3977
    %v5938 = vpop.f32.mrf.mxu0
    %v5939 = vadd.f32 %v5826, %v5938
    %5940 = vmatmul.f32.gmra.mxu0 %v3981
    %v5941 = vpop.f32.mrf.mxu0
    %v5942 = vadd.f32 %v5829, %v5941
    %5943 = vdwg.mxu0
    %5944 = vmatpush.msra.mxu0 %v4238
    %5945 = vmatpush.msra.mxu0 %v4234
    %5946 = vmatpush.msra.mxu0 %v4230
    %5947 = vmatpush.msra.mxu0 %v4226
    %5948 = vmatpush.msra.mxu0 %v4222
    %5949 = vmatpush.msra.mxu0 %v4218
    %5950 = vmatpush.msra.mxu0 %v4214
    %5951 = vmatpush.msra.mxu0 %v4210
    %5952 = vmatpush.msra.mxu0 %v4206
    %5953 = vmatpush.msra.mxu0 %v4202
    %5954 = vmatpush.msra.mxu0 %v4198
    %5955 = vmatpush.msra.mxu0 %v4194
    %5956 = vmatpush.msra.mxu0 %v4190
    %5957 = vmatpush.msra.mxu0 %v4186
    %5958 = vmatpush.msra.mxu0 %v4182
    %5959 = vmatpush.msra.mxu0 %v4178
    %5960 = vmatmul.f32.gmra.mxu0 %v3858
    %v5961 = vpop.f32.mrf.mxu0
    %v5962 = vadd.f32 %v5849, %v5961
    %5963 = vmatmul.f32.gmra.mxu0 %v3862
    %v5964 = vpop.f32.mrf.mxu0
    %v5965 = vadd.f32 %v5852, %v5964
    %5966 = vmatmul.f32.gmra.mxu0 %v3866
    %v5967 = vpop.f32.mrf.mxu0
    %v5968 = vadd.f32 %v5855, %v5967
    %5969 = vmatmul.f32.gmra.mxu0 %v3870
    %v5970 = vpop.f32.mrf.mxu0
    %v5971 = vadd.f32 %v5858, %v5970
    %5972 = vmatmul.f32.gmra.mxu0 %v3874
    %v5973 = vpop.f32.mrf.mxu0
    %v5974 = vadd.f32 %v5861, %v5973
    %5975 = vmatmul.f32.gmra.mxu0 %v3878
    %v5976 = vpop.f32.mrf.mxu0
    %v5977 = vadd.f32 %v5864, %v5976
    %5978 = vmatmul.f32.gmra.mxu0 %v3882
    %v5979 = vpop.f32.mrf.mxu0
    %v5980 = vadd.f32 %v5867, %v5979
    %5981 = vmatmul.f32.gmra.mxu0 %v3886
    %v5982 = vpop.f32.mrf.mxu0
    %v5983 = vadd.f32 %v5870, %v5982
    %5984 = vmatmul.f32.gmra.mxu0 %v3890
    %v5985 = vpop.f32.mrf.mxu0
    %v5986 = vadd.f32 %v5873, %v5985
    %5987 = vmatmul.f32.gmra.mxu0 %v3894
    %v5988 = vpop.f32.mrf.mxu0
    %v5989 = vadd.f32 %v5876, %v5988
    %5990 = vmatmul.f32.gmra.mxu0 %v3898
    %v5991 = vpop.f32.mrf.mxu0
    %v5992 = vadd.f32 %v5879, %v5991
    %5993 = vmatmul.f32.gmra.mxu0 %v3902
    %v5994 = vpop.f32.mrf.mxu0
    %v5995 = vadd.f32 %v5882, %v5994
    %5996 = vmatmul.f32.gmra.mxu0 %v3906
    %v5997 = vpop.f32.mrf.mxu0
    %v5998 = vadd.f32 %v5885, %v5997
    %5999 = vmatmul.f32.gmra.mxu0 %v3910
    %v6000 = vpop.f32.mrf.mxu0
    %v6001 = vadd.f32 %v5888, %v6000
    %6002 = vmatmul.f32.gmra.mxu0 %v3914
    %v6003 = vpop.f32.mrf.mxu0
    %v6004 = vadd.f32 %v5891, %v6003
    %6005 = vmatmul.f32.gmra.mxu0 %v3918
    %v6006 = vpop.f32.mrf.mxu0
    %v6007 = vadd.f32 %v5894, %v6006
    %6008 = vmatmul.f32.gmra.mxu0 %v3922
    %v6009 = vpop.f32.mrf.mxu0
    %v6010 = vadd.f32 %v5897, %v6009
    %6011 = vmatmul.f32.gmra.mxu0 %v3926
    %v6012 = vpop.f32.mrf.mxu0
    %v6013 = vadd.f32 %v5900, %v6012
    %6014 = vmatmul.f32.gmra.mxu0 %v3930
    %v6015 = vpop.f32.mrf.mxu0
    %v6016 = vadd.f32 %v5903, %v6015
    %6017 = vmatmul.f32.gmra.mxu0 %v3934
    %v6018 = vpop.f32.mrf.mxu0
    %v6019 = vadd.f32 %v5906, %v6018
    %6020 = vmatmul.f32.gmra.mxu0 %v3938
    %v6021 = vpop.f32.mrf.mxu0
    %v6022 = vadd.f32 %v5909, %v6021
    %6023 = vmatmul.f32.gmra.mxu0 %v3942
    %v6024 = vpop.f32.mrf.mxu0
    %v6025 = vadd.f32 %v5912, %v6024
    %6026 = vmatmul.f32.gmra.mxu0 %v3946
    %v6027 = vpop.f32.mrf.mxu0
    %v6028 = vadd.f32 %v5915, %v6027
    %6029 = vmatmul.f32.gmra.mxu0 %v3950
    %v6030 = vpop.f32.mrf.mxu0
    %v6031 = vadd.f32 %v5918, %v6030
    %6032 = vmatmul.f32.gmra.mxu0 %v3954
    %v6033 = vpop.f32.mrf.mxu0
    %v6034 = vadd.f32 %v5921, %v6033
    %6035 = vmatmul.f32.gmra.mxu0 %v3958
    %v6036 = vpop.f32.mrf.mxu0
    %v6037 = vadd.f32 %v5924, %v6036
    %6038 = vmatmul.f32.gmra.mxu0 %v3962
    %v6039 = vpop.f32.mrf.mxu0
    %v6040 = vadd.f32 %v5927, %v6039
    %6041 = vmatmul.f32.gmra.mxu0 %v3966
    %v6042 = vpop.f32.mrf.mxu0
    %v6043 = vadd.f32 %v5930, %v6042
    %6044 = vmatmul.f32.gmra.mxu0 %v3970
    %v6045 = vpop.f32.mrf.mxu0
    %v6046 = vadd.f32 %v5933, %v6045
    %6047 = vmatmul.f32.gmra.mxu0 %v3974
    %v6048 = vpop.f32.mrf.mxu0
    %v6049 = vadd.f32 %v5936, %v6048
    %6050 = vmatmul.f32.gmra.mxu0 %v3978
    %v6051 = vpop.f32.mrf.mxu0
    %v6052 = vadd.f32 %v5939, %v6051
    %6053 = vmatmul.f32.gmra.mxu0 %v3982
    %v6054 = vpop.f32.mrf.mxu0
    %v6055 = vadd.f32 %v5942, %v6054
    %6056 = vdwg.mxu0
    %v6057 = vmul.f32 %v4606, 0.5
    %v6058 = vmul.f32 %v5058, 0.5
    %v6059 = vmul.f32 %v5510, 0.5
    %v6060 = vmul.f32 %v5962, 0.5
    %v6061 = vmul.f32 %v4609, 0.5
    %v6062 = vmul.f32 %v5061, 0.5
    %v6063 = vmul.f32 %v5513, 0.5
    %v6064 = vmul.f32 %v5965, 0.5
    %v6065 = vmul.f32 %v4612, 0.5
    %v6066 = vmul.f32 %v5064, 0.5
    %v6067 = vmul.f32 %v5516, 0.5
    %v6068 = vmul.f32 %v5968, 0.5
    %v6069 = vmul.f32 %v4615, 0.5
    %v6070 = vmul.f32 %v5067, 0.5
    %v6071 = vmul.f32 %v5519, 0.5
    %v6072 = vmul.f32 %v5971, 0.5
    %v6073 = vmul.f32 %v4618, 0.5
    %v6074 = vmul.f32 %v5070, 0.5
    %v6075 = vmul.f32 %v5522, 0.5
    %v6076 = vmul.f32 %v5974, 0.5
    %v6077 = vmul.f32 %v4621, 0.5
    %v6078 = vmul.f32 %v5073, 0.5
    %v6079 = vmul.f32 %v5525, 0.5
    %v6080 = vmul.f32 %v5977, 0.5
    %v6081 = vmul.f32 %v4624, 0.5
    %v6082 = vmul.f32 %v5076, 0.5
    %v6083 = vmul.f32 %v5528, 0.5
    %v6084 = vmul.f32 %v5980, 0.5
    %v6085 = vmul.f32 %v4627, 0.5
    %v6086 = vmul.f32 %v5079, 0.5
    %v6087 = vmul.f32 %v5531, 0.5
    %v6088 = vmul.f32 %v5983, 0.5
    %v6089 = vmul.f32 %v4630, 0.5
    %v6090 = vmul.f32 %v5082, 0.5
    %v6091 = vmul.f32 %v5534, 0.5
    %v6092 = vmul.f32 %v5986, 0.5
    %v6093 = vmul.f32 %v4633, 0.5
    %v6094 = vmul.f32 %v5085, 0.5
    %v6095 = vmul.f32 %v5537, 0.5
    %v6096 = vmul.f32 %v5989, 0.5
    %v6097 = vmul.f32 %v4636, 0.5
    %v6098 = vmul.f32 %v5088, 0.5
    %v6099 = vmul.f32 %v5540, 0.5
    %v6100 = vmul.f32 %v5992, 0.5
    %v6101 = vmul.f32 %v4639, 0.5
    %v6102 = vmul.f32 %v5091, 0.5
    %v6103 = vmul.f32 %v5543, 0.5
    %v6104 = vmul.f32 %v5995, 0.5
    %v6105 = vmul.f32 %v4642, 0.5
    %v6106 = vmul.f32 %v5094, 0.5
    %v6107 = vmul.f32 %v5546, 0.5
    %v6108 = vmul.f32 %v5998, 0.5
    %v6109 = vmul.f32 %v4645, 0.5
    %v6110 = vmul.f32 %v5097, 0.5
    %v6111 = vmul.f32 %v5549, 0.5
    %v6112 = vmul.f32 %v6001, 0.5
    %v6113 = vmul.f32 %v4648, 0.5
    %v6114 = vmul.f32 %v5100, 0.5
    %v6115 = vmul.f32 %v5552, 0.5
    %v6116 = vmul.f32 %v6004, 0.5
    %v6117 = vmul.f32 %v4651, 0.5
    %v6118 = vmul.f32 %v5103, 0.5
    %v6119 = vmul.f32 %v5555, 0.5
    %v6120 = vmul.f32 %v6007, 0.5
    %v6121 = vmul.f32 %v4654, 0.5
    %v6122 = vmul.f32 %v5106, 0.5
    %v6123 = vmul.f32 %v5558, 0.5
    %v6124 = vmul.f32 %v6010, 0.5
    %v6125 = vmul.f32 %v4657, 0.5
    %v6126 = vmul.f32 %v5109, 0.5
    %v6127 = vmul.f32 %v5561, 0.5
    %v6128 = vmul.f32 %v6013, 0.5
    %v6129 = vmul.f32 %v4660, 0.5
    %v6130 = vmul.f32 %v5112, 0.5
    %v6131 = vmul.f32 %v5564, 0.5
    %v6132 = vmul.f32 %v6016, 0.5
    %v6133 = vmul.f32 %v4663, 0.5
    %v6134 = vmul.f32 %v5115, 0.5
    %v6135 = vmul.f32 %v5567, 0.5
    %v6136 = vmul.f32 %v6019, 0.5
    %v6137 = vmul.f32 %v4666, 0.5
    %v6138 = vmul.f32 %v5118, 0.5
    %v6139 = vmul.f32 %v5570, 0.5
    %v6140 = vmul.f32 %v6022, 0.5
    %v6141 = vmul.f32 %v4669, 0.5
    %v6142 = vmul.f32 %v5121, 0.5
    %v6143 = vmul.f32 %v5573, 0.5
    %v6144 = vmul.f32 %v6025, 0.5
    %v6145 = vmul.f32 %v4672, 0.5
    %v6146 = vmul.f32 %v5124, 0.5
    %v6147 = vmul.f32 %v5576, 0.5
    %v6148 = vmul.f32 %v6028, 0.5
    %v6149 = vmul.f32 %v4675, 0.5
    %v6150 = vmul.f32 %v5127, 0.5
    %v6151 = vmul.f32 %v5579, 0.5
    %v6152 = vmul.f32 %v6031, 0.5
    %v6153 = vmul.f32 %v4678, 0.5
    %v6154 = vmul.f32 %v5130, 0.5
    %v6155 = vmul.f32 %v5582, 0.5
    %v6156 = vmul.f32 %v6034, 0.5
    %v6157 = vmul.f32 %v4681, 0.5
    %v6158 = vmul.f32 %v5133, 0.5
    %v6159 = vmul.f32 %v5585, 0.5
    %v6160 = vmul.f32 %v6037, 0.5
    %v6161 = vmul.f32 %v4684, 0.5
    %v6162 = vmul.f32 %v5136, 0.5
    %v6163 = vmul.f32 %v5588, 0.5
    %v6164 = vmul.f32 %v6040, 0.5
    %v6165 = vmul.f32 %v4687, 0.5
    %v6166 = vmul.f32 %v5139, 0.5
    %v6167 = vmul.f32 %v5591, 0.5
    %v6168 = vmul.f32 %v6043, 0.5
    %v6169 = vmul.f32 %v4690, 0.5
    %v6170 = vmul.f32 %v5142, 0.5
    %v6171 = vmul.f32 %v5594, 0.5
    %v6172 = vmul.f32 %v6046, 0.5
    %v6173 = vmul.f32 %v4693, 0.5
    %v6174 = vmul.f32 %v5145, 0.5
    %v6175 = vmul.f32 %v5597, 0.5
    %v6176 = vmul.f32 %v6049, 0.5
    %v6177 = vmul.f32 %v4696, 0.5
    %v6178 = vmul.f32 %v5148, 0.5
    %v6179 = vmul.f32 %v5600, 0.5
    %v6180 = vmul.f32 %v6052, 0.5
    %v6181 = vmul.f32 %v4699, 0.5
    %v6182 = vmul.f32 %v5151, 0.5
    %v6183 = vmul.f32 %v5603, 0.5
    %v6184 = vmul.f32 %v6055, 0.5
    %v6185 = vtanh.pop %v6057
    %v6186 = vtanh.pop %v6058
    %v6187 = vtanh.pop %v6059
    %v6188 = vtanh.pop %v6060
    %v6189 = vtanh.pop %v6061
    %v6190 = vtanh.pop %v6062
    %v6191 = vtanh.pop %v6063
    %v6192 = vtanh.pop %v6064
    %v6193 = vtanh.pop %v6065
    %v6194 = vtanh.pop %v6066
    %v6195 = vtanh.pop %v6067
    %v6196 = vtanh.pop %v6068
    %v6197 = vtanh.pop %v6069
    %v6198 = vtanh.pop %v6070
    %v6199 = vtanh.pop %v6071
    %v6200 = vtanh.pop %v6072
    %v6201 = vtanh.pop %v6073
    %v6202 = vtanh.pop %v6074
    %v6203 = vtanh.pop %v6075
    %v6204 = vtanh.pop %v6076
    %v6205 = vtanh.pop %v6077
    %v6206 = vtanh.pop %v6078
    %v6207 = vtanh.pop %v6079
    %v6208 = vtanh.pop %v6080
    %v6209 = vtanh.pop %v6081
    %v6210 = vtanh.pop %v6082
    %v6211 = vtanh.pop %v6083
    %v6212 = vtanh.pop %v6084
    %v6213 = vtanh.pop %v6085
    %v6214 = vtanh.pop %v6086
    %v6215 = vtanh.pop %v6087
    %v6216 = vtanh.pop %v6088
    %v6217 = vtanh.pop %v6089
    %v6218 = vtanh.pop %v6090
    %v6219 = vtanh.pop %v6091
    %v6220 = vtanh.pop %v6092
    %v6221 = vtanh.pop %v6093
    %v6222 = vtanh.pop %v6094
    %v6223 = vtanh.pop %v6095
    %v6224 = vtanh.pop %v6096
    %v6225 = vtanh.pop %v6097
    %v6226 = vtanh.pop %v6098
    %v6227 = vtanh.pop %v6099
    %v6228 = vtanh.pop %v6100
    %v6229 = vtanh.pop %v6101
    %v6230 = vtanh.pop %v6102
    %v6231 = vtanh.pop %v6103
    %v6232 = vtanh.pop %v6104
    %v6233 = vtanh.pop %v6105
    %v6234 = vtanh.pop %v6106
    %v6235 = vtanh.pop %v6107
    %v6236 = vtanh.pop %v6108
    %v6237 = vtanh.pop %v6109
    %v6238 = vtanh.pop %v6110
    %v6239 = vtanh.pop %v6111
    %v6240 = vtanh.pop %v6112
    %v6241 = vtanh.pop %v6113
    %v6242 = vtanh.pop %v6114
    %v6243 = vtanh.pop %v6115
    %v6244 = vtanh.pop %v6116
    %v6245 = vtanh.pop %v6117
    %v6246 = vtanh.pop %v6118
    %v6247 = vtanh.pop %v6119
    %v6248 = vtanh.pop %v6120
    %v6249 = vtanh.pop %v6121
    %v6250 = vtanh.pop %v6122
    %v6251 = vtanh.pop %v6123
    %v6252 = vtanh.pop %v6124
    %v6253 = vtanh.pop %v6125
    %v6254 = vtanh.pop %v6126
    %v6255 = vtanh.pop %v6127
    %v6256 = vtanh.pop %v6128
    %v6257 = vtanh.pop %v6129
    %v6258 = vtanh.pop %v6130
    %v6259 = vtanh.pop %v6131
    %v6260 = vtanh.pop %v6132
    %v6261 = vtanh.pop %v6133
    %v6262 = vtanh.pop %v6134
    %v6263 = vtanh.pop %v6135
    %v6264 = vtanh.pop %v6136
    %v6265 = vtanh.pop %v6137
    %v6266 = vtanh.pop %v6138
    %v6267 = vtanh.pop %v6139
    %v6268 = vtanh.pop %v6140
    %v6269 = vtanh.pop %v6141
    %v6270 = vtanh.pop %v6142
    %v6271 = vtanh.pop %v6143
    %v6272 = vtanh.pop %v6144
    %v6273 = vtanh.pop %v6145
    %v6274 = vtanh.pop %v6146
    %v6275 = vtanh.pop %v6147
    %v6276 = vtanh.pop %v6148
    %v6277 = vtanh.pop %v6149
    %v6278 = vtanh.pop %v6150
    %v6279 = vtanh.pop %v6151
    %v6280 = vtanh.pop %v6152
    %v6281 = vtanh.pop %v6153
    %v6282 = vtanh.pop %v6154
    %v6283 = vtanh.pop %v6155
    %v6284 = vtanh.pop %v6156
    %v6285 = vtanh.pop %v6157
    %v6286 = vtanh.pop %v6158
    %v6287 = vtanh.pop %v6159
    %v6288 = vtanh.pop %v6160
    %v6289 = vtanh.pop %v6161
    %v6290 = vtanh.pop %v6162
    %v6291 = vtanh.pop %v6163
    %v6292 = vtanh.pop %v6164
    %v6293 = vtanh.pop %v6165
    %v6294 = vtanh.pop %v6166
    %v6295 = vtanh.pop %v6167
    %v6296 = vtanh.pop %v6168
    %v6297 = vtanh.pop %v6169
    %v6298 = vtanh.pop %v6170
    %v6299 = vtanh.pop %v6171
    %v6300 = vtanh.pop %v6172
    %v6301 = vtanh.pop %v6173
    %v6302 = vtanh.pop %v6174
    %v6303 = vtanh.pop %v6175
    %v6304 = vtanh.pop %v6176
    %v6305 = vtanh.pop %v6177
    %v6306 = vtanh.pop %v6178
    %v6307 = vtanh.pop %v6179
    %v6308 = vtanh.pop %v6180
    %v6309 = vtanh.pop %v6181
    %v6310 = vtanh.pop %v6182
    %v6311 = vtanh.pop %v6183
    %v6312 = vtanh.pop %v6184
    %v6313 = vmul.f32 %v6185, 0.5
    %v6314 = vmul.f32 %v6186, 0.5
    %v6315 = vmul.f32 %v6187, 0.5
    %v6316 = vmul.f32 %v6188, 0.5
    %v6317 = vmul.f32 %v6189, 0.5
    %v6318 = vmul.f32 %v6190, 0.5
    %v6319 = vmul.f32 %v6191, 0.5
    %v6320 = vmul.f32 %v6192, 0.5
    %v6321 = vmul.f32 %v6193, 0.5
    %v6322 = vmul.f32 %v6194, 0.5
    %v6323 = vmul.f32 %v6195, 0.5
    %v6324 = vmul.f32 %v6196, 0.5
    %v6325 = vmul.f32 %v6197, 0.5
    %v6326 = vmul.f32 %v6198, 0.5
    %v6327 = vmul.f32 %v6199, 0.5
    %v6328 = vmul.f32 %v6200, 0.5
    %v6329 = vmul.f32 %v6201, 0.5
    %v6330 = vmul.f32 %v6202, 0.5
    %v6331 = vmul.f32 %v6203, 0.5
    %v6332 = vmul.f32 %v6204, 0.5
    %v6333 = vmul.f32 %v6205, 0.5
    %v6334 = vmul.f32 %v6206, 0.5
    %v6335 = vmul.f32 %v6207, 0.5
    %v6336 = vmul.f32 %v6208, 0.5
    %v6337 = vmul.f32 %v6209, 0.5
    %v6338 = vmul.f32 %v6210, 0.5
    %v6339 = vmul.f32 %v6211, 0.5
    %v6340 = vmul.f32 %v6212, 0.5
    %v6341 = vmul.f32 %v6213, 0.5
    %v6342 = vmul.f32 %v6214, 0.5
    %v6343 = vmul.f32 %v6215, 0.5
    %v6344 = vmul.f32 %v6216, 0.5
    %v6345 = vmul.f32 %v6217, 0.5
    %v6346 = vmul.f32 %v6218, 0.5
    %v6347 = vmul.f32 %v6219, 0.5
    %v6348 = vmul.f32 %v6220, 0.5
    %v6349 = vmul.f32 %v6221, 0.5
    %v6350 = vmul.f32 %v6222, 0.5
    %v6351 = vmul.f32 %v6223, 0.5
    %v6352 = vmul.f32 %v6224, 0.5
    %v6353 = vmul.f32 %v6225, 0.5
    %v6354 = vmul.f32 %v6226, 0.5
    %v6355 = vmul.f32 %v6227, 0.5
    %v6356 = vmul.f32 %v6228, 0.5
    %v6357 = vmul.f32 %v6229, 0.5
    %v6358 = vmul.f32 %v6230, 0.5
    %v6359 = vmul.f32 %v6231, 0.5
    %v6360 = vmul.f32 %v6232, 0.5
    %v6361 = vmul.f32 %v6233, 0.5
    %v6362 = vmul.f32 %v6234, 0.5
    %v6363 = vmul.f32 %v6235, 0.5
    %v6364 = vmul.f32 %v6236, 0.5
    %v6365 = vmul.f32 %v6237, 0.5
    %v6366 = vmul.f32 %v6238, 0.5
    %v6367 = vmul.f32 %v6239, 0.5
    %v6368 = vmul.f32 %v6240, 0.5
    %v6369 = vmul.f32 %v6241, 0.5
    %v6370 = vmul.f32 %v6242, 0.5
    %v6371 = vmul.f32 %v6243, 0.5
    %v6372 = vmul.f32 %v6244, 0.5
    %v6373 = vmul.f32 %v6245, 0.5
    %v6374 = vmul.f32 %v6246, 0.5
    %v6375 = vmul.f32 %v6247, 0.5
    %v6376 = vmul.f32 %v6248, 0.5
    %v6377 = vmul.f32 %v6249, 0.5
    %v6378 = vmul.f32 %v6250, 0.5
    %v6379 = vmul.f32 %v6251, 0.5
    %v6380 = vmul.f32 %v6252, 0.5
    %v6381 = vmul.f32 %v6253, 0.5
    %v6382 = vmul.f32 %v6254, 0.5
    %v6383 = vmul.f32 %v6255, 0.5
    %v6384 = vmul.f32 %v6256, 0.5
    %v6385 = vmul.f32 %v6257, 0.5
    %v6386 = vmul.f32 %v6258, 0.5
    %v6387 = vmul.f32 %v6259, 0.5
    %v6388 = vmul.f32 %v6260, 0.5
    %v6389 = vmul.f32 %v6261, 0.5
    %v6390 = vmul.f32 %v6262, 0.5
    %v6391 = vmul.f32 %v6263, 0.5
    %v6392 = vmul.f32 %v6264, 0.5
    %v6393 = vmul.f32 %v6265, 0.5
    %v6394 = vmul.f32 %v6266, 0.5
    %v6395 = vmul.f32 %v6267, 0.5
    %v6396 = vmul.f32 %v6268, 0.5
    %v6397 = vmul.f32 %v6269, 0.5
    %v6398 = vmul.f32 %v6270, 0.5
    %v6399 = vmul.f32 %v6271, 0.5
    %v6400 = vmul.f32 %v6272, 0.5
    %v6401 = vmul.f32 %v6273, 0.5
    %v6402 = vmul.f32 %v6274, 0.5
    %v6403 = vmul.f32 %v6275, 0.5
    %v6404 = vmul.f32 %v6276, 0.5
    %v6405 = vmul.f32 %v6277, 0.5
    %v6406 = vmul.f32 %v6278, 0.5
    %v6407 = vmul.f32 %v6279, 0.5
    %v6408 = vmul.f32 %v6280, 0.5
    %v6409 = vmul.f32 %v6281, 0.5
    %v6410 = vmul.f32 %v6282, 0.5
    %v6411 = vmul.f32 %v6283, 0.5
    %v6412 = vmul.f32 %v6284, 0.5
    %v6413 = vmul.f32 %v6285, 0.5
    %v6414 = vmul.f32 %v6286, 0.5
    %v6415 = vmul.f32 %v6287, 0.5
    %v6416 = vmul.f32 %v6288, 0.5
    %v6417 = vmul.f32 %v6289, 0.5
    %v6418 = vmul.f32 %v6290, 0.5
    %v6419 = vmul.f32 %v6291, 0.5
    %v6420 = vmul.f32 %v6292, 0.5
    %v6421 = vmul.f32 %v6293, 0.5
    %v6422 = vmul.f32 %v6294, 0.5
    %v6423 = vmul.f32 %v6295, 0.5
    %v6424 = vmul.f32 %v6296, 0.5
    %v6425 = vmul.f32 %v6297, 0.5
    %v6426 = vmul.f32 %v6298, 0.5
    %v6427 = vmul.f32 %v6299, 0.5
    %v6428 = vmul.f32 %v6300, 0.5
    %v6429 = vmul.f32 %v6301, 0.5
    %v6430 = vmul.f32 %v6302, 0.5
    %v6431 = vmul.f32 %v6303, 0.5
    %v6432 = vmul.f32 %v6304, 0.5
    %v6433 = vmul.f32 %v6305, 0.5
    %v6434 = vmul.f32 %v6306, 0.5
    %v6435 = vmul.f32 %v6307, 0.5
    %v6436 = vmul.f32 %v6308, 0.5
    %v6437 = vmul.f32 %v6309, 0.5
    %v6438 = vmul.f32 %v6310, 0.5
    %v6439 = vmul.f32 %v6311, 0.5
    %v6440 = vmul.f32 %v6312, 0.5
    %v6441 = vadd.f32 %v6313, 0.5
    %v6442 = vadd.f32 %v6314, 0.5
    %v6443 = vadd.f32 %v6315, 0.5
    %v6444 = vadd.f32 %v6316, 0.5
    %v6445 = vadd.f32 %v6317, 0.5
    %v6446 = vadd.f32 %v6318, 0.5
    %v6447 = vadd.f32 %v6319, 0.5
    %v6448 = vadd.f32 %v6320, 0.5
    %v6449 = vadd.f32 %v6321, 0.5
    %v6450 = vadd.f32 %v6322, 0.5
    %v6451 = vadd.f32 %v6323, 0.5
    %v6452 = vadd.f32 %v6324, 0.5
    %v6453 = vadd.f32 %v6325, 0.5
    %v6454 = vadd.f32 %v6326, 0.5
    %v6455 = vadd.f32 %v6327, 0.5
    %v6456 = vadd.f32 %v6328, 0.5
    %v6457 = vadd.f32 %v6329, 0.5
    %v6458 = vadd.f32 %v6330, 0.5
    %v6459 = vadd.f32 %v6331, 0.5
    %v6460 = vadd.f32 %v6332, 0.5
    %v6461 = vadd.f32 %v6333, 0.5
    %v6462 = vadd.f32 %v6334, 0.5
    %v6463 = vadd.f32 %v6335, 0.5
    %v6464 = vadd.f32 %v6336, 0.5
    %v6465 = vadd.f32 %v6337, 0.5
    %v6466 = vadd.f32 %v6338, 0.5
    %v6467 = vadd.f32 %v6339, 0.5
    %v6468 = vadd.f32 %v6340, 0.5
    %v6469 = vadd.f32 %v6341, 0.5
    %v6470 = vadd.f32 %v6342, 0.5
    %v6471 = vadd.f32 %v6343, 0.5
    %v6472 = vadd.f32 %v6344, 0.5
    %v6473 = vadd.f32 %v6345, 0.5
    %v6474 = vadd.f32 %v6346, 0.5
    %v6475 = vadd.f32 %v6347, 0.5
    %v6476 = vadd.f32 %v6348, 0.5
    %v6477 = vadd.f32 %v6349, 0.5
    %v6478 = vadd.f32 %v6350, 0.5
    %v6479 = vadd.f32 %v6351, 0.5
    %v6480 = vadd.f32 %v6352, 0.5
    %v6481 = vadd.f32 %v6353, 0.5
    %v6482 = vadd.f32 %v6354, 0.5
    %v6483 = vadd.f32 %v6355, 0.5
    %v6484 = vadd.f32 %v6356, 0.5
    %v6485 = vadd.f32 %v6357, 0.5
    %v6486 = vadd.f32 %v6358, 0.5
    %v6487 = vadd.f32 %v6359, 0.5
    %v6488 = vadd.f32 %v6360, 0.5
    %v6489 = vadd.f32 %v6361, 0.5
    %v6490 = vadd.f32 %v6362, 0.5
    %v6491 = vadd.f32 %v6363, 0.5
    %v6492 = vadd.f32 %v6364, 0.5
    %v6493 = vadd.f32 %v6365, 0.5
    %v6494 = vadd.f32 %v6366, 0.5
    %v6495 = vadd.f32 %v6367, 0.5
    %v6496 = vadd.f32 %v6368, 0.5
    %v6497 = vadd.f32 %v6369, 0.5
    %v6498 = vadd.f32 %v6370, 0.5
    %v6499 = vadd.f32 %v6371, 0.5
    %v6500 = vadd.f32 %v6372, 0.5
    %v6501 = vadd.f32 %v6373, 0.5
    %v6502 = vadd.f32 %v6374, 0.5
    %v6503 = vadd.f32 %v6375, 0.5
    %v6504 = vadd.f32 %v6376, 0.5
    %v6505 = vadd.f32 %v6377, 0.5
    %v6506 = vadd.f32 %v6378, 0.5
    %v6507 = vadd.f32 %v6379, 0.5
    %v6508 = vadd.f32 %v6380, 0.5
    %v6509 = vadd.f32 %v6381, 0.5
    %v6510 = vadd.f32 %v6382, 0.5
    %v6511 = vadd.f32 %v6383, 0.5
    %v6512 = vadd.f32 %v6384, 0.5
    %v6513 = vadd.f32 %v6385, 0.5
    %v6514 = vadd.f32 %v6386, 0.5
    %v6515 = vadd.f32 %v6387, 0.5
    %v6516 = vadd.f32 %v6388, 0.5
    %v6517 = vadd.f32 %v6389, 0.5
    %v6518 = vadd.f32 %v6390, 0.5
    %v6519 = vadd.f32 %v6391, 0.5
    %v6520 = vadd.f32 %v6392, 0.5
    %v6521 = vadd.f32 %v6393, 0.5
    %v6522 = vadd.f32 %v6394, 0.5
    %v6523 = vadd.f32 %v6395, 0.5
    %v6524 = vadd.f32 %v6396, 0.5
    %v6525 = vadd.f32 %v6397, 0.5
    %v6526 = vadd.f32 %v6398, 0.5
    %v6527 = vadd.f32 %v6399, 0.5
    %v6528 = vadd.f32 %v6400, 0.5
    %v6529 = vadd.f32 %v6401, 0.5
    %v6530 = vadd.f32 %v6402, 0.5
    %v6531 = vadd.f32 %v6403, 0.5
    %v6532 = vadd.f32 %v6404, 0.5
    %v6533 = vadd.f32 %v6405, 0.5
    %v6534 = vadd.f32 %v6406, 0.5
    %v6535 = vadd.f32 %v6407, 0.5
    %v6536 = vadd.f32 %v6408, 0.5
    %v6537 = vadd.f32 %v6409, 0.5
    %v6538 = vadd.f32 %v6410, 0.5
    %v6539 = vadd.f32 %v6411, 0.5
    %v6540 = vadd.f32 %v6412, 0.5
    %v6541 = vadd.f32 %v6413, 0.5
    %v6542 = vadd.f32 %v6414, 0.5
    %v6543 = vadd.f32 %v6415, 0.5
    %v6544 = vadd.f32 %v6416, 0.5
    %v6545 = vadd.f32 %v6417, 0.5
    %v6546 = vadd.f32 %v6418, 0.5
    %v6547 = vadd.f32 %v6419, 0.5
    %v6548 = vadd.f32 %v6420, 0.5
    %v6549 = vadd.f32 %v6421, 0.5
    %v6550 = vadd.f32 %v6422, 0.5
    %v6551 = vadd.f32 %v6423, 0.5
    %v6552 = vadd.f32 %v6424, 0.5
    %v6553 = vadd.f32 %v6425, 0.5
    %v6554 = vadd.f32 %v6426, 0.5
    %v6555 = vadd.f32 %v6427, 0.5
    %v6556 = vadd.f32 %v6428, 0.5
    %v6557 = vadd.f32 %v6429, 0.5
    %v6558 = vadd.f32 %v6430, 0.5
    %v6559 = vadd.f32 %v6431, 0.5
    %v6560 = vadd.f32 %v6432, 0.5
    %v6561 = vadd.f32 %v6433, 0.5
    %v6562 = vadd.f32 %v6434, 0.5
    %v6563 = vadd.f32 %v6435, 0.5
    %v6564 = vadd.f32 %v6436, 0.5
    %v6565 = vadd.f32 %v6437, 0.5
    %v6566 = vadd.f32 %v6438, 0.5
    %v6567 = vadd.f32 %v6439, 0.5
    %v6568 = vadd.f32 %v6440, 0.5
    %6569 = vst [vmem:[#allocation8] sm:$0xff] %v6441
    %6570 = vst [vmem:[#allocation8 + $0x8] sm:$0xff] %v6442
    %6571 = vst [vmem:[#allocation8 + $0x10] sm:$0xff] %v6443
    %6572 = vst [vmem:[#allocation8 + $0x18] sm:$0xff] %v6444
    %6573 = vst [vmem:[#allocation8 + $0x20] sm:$0xff] %v6445
    %6574 = vst [vmem:[#allocation8 + $0x28] sm:$0xff] %v6446
    %6575 = vst [vmem:[#allocation8 + $0x30] sm:$0xff] %v6447
    %6576 = vst [vmem:[#allocation8 + $0x38] sm:$0xff] %v6448
    %6577 = vst [vmem:[#allocation8 + $0x40] sm:$0xff] %v6449
    %6578 = vst [vmem:[#allocation8 + $0x48] sm:$0xff] %v6450
    %6579 = vst [vmem:[#allocation8 + $0x50] sm:$0xff] %v6451
    %6580 = vst [vmem:[#allocation8 + $0x58] sm:$0xff] %v6452
    %6581 = vst [vmem:[#allocation8 + $0x60] sm:$0xff] %v6453
    %6582 = vst [vmem:[#allocation8 + $0x68] sm:$0xff] %v6454
    %6583 = vst [vmem:[#allocation8 + $0x70] sm:$0xff] %v6455
    %6584 = vst [vmem:[#allocation8 + $0x78] sm:$0xff] %v6456
    %6585 = vst [vmem:[#allocation8 + $0x80] sm:$0xff] %v6457
    %6586 = vst [vmem:[#allocation8 + $0x88] sm:$0xff] %v6458
    %6587 = vst [vmem:[#allocation8 + $0x90] sm:$0xff] %v6459
    %6588 = vst [vmem:[#allocation8 + $0x98] sm:$0xff] %v6460
    %6589 = vst [vmem:[#allocation8 + $0xa0] sm:$0xff] %v6461
    %6590 = vst [vmem:[#allocation8 + $0xa8] sm:$0xff] %v6462
    %6591 = vst [vmem:[#allocation8 + $0xb0] sm:$0xff] %v6463
    %6592 = vst [vmem:[#allocation8 + $0xb8] sm:$0xff] %v6464
    %6593 = vst [vmem:[#allocation8 + $0xc0] sm:$0xff] %v6465
    %6594 = vst [vmem:[#allocation8 + $0xc8] sm:$0xff] %v6466
    %6595 = vst [vmem:[#allocation8 + $0xd0] sm:$0xff] %v6467
    %6596 = vst [vmem:[#allocation8 + $0xd8] sm:$0xff] %v6468
    %6597 = vst [vmem:[#allocation8 + $0xe0] sm:$0xff] %v6469
    %6598 = vst [vmem:[#allocation8 + $0xe8] sm:$0xff] %v6470
    %6599 = vst [vmem:[#allocation8 + $0xf0] sm:$0xff] %v6471
    %6600 = vst [vmem:[#allocation8 + $0xf8] sm:$0xff] %v6472
    %6601 = vst [vmem:[#allocation8 + $0x100] sm:$0xff] %v6473
    %6602 = vst [vmem:[#allocation8 + $0x108] sm:$0xff] %v6474
    %6603 = vst [vmem:[#allocation8 + $0x110] sm:$0xff] %v6475
    %6604 = vst [vmem:[#allocation8 + $0x118] sm:$0xff] %v6476
    %6605 = vst [vmem:[#allocation8 + $0x120] sm:$0xff] %v6477
    %6606 = vst [vmem:[#allocation8 + $0x128] sm:$0xff] %v6478
    %6607 = vst [vmem:[#allocation8 + $0x130] sm:$0xff] %v6479
    %6608 = vst [vmem:[#allocation8 + $0x138] sm:$0xff] %v6480
    %6609 = vst [vmem:[#allocation8 + $0x140] sm:$0xff] %v6481
    %6610 = vst [vmem:[#allocation8 + $0x148] sm:$0xff] %v6482
    %6611 = vst [vmem:[#allocation8 + $0x150] sm:$0xff] %v6483
    %6612 = vst [vmem:[#allocation8 + $0x158] sm:$0xff] %v6484
    %6613 = vst [vmem:[#allocation8 + $0x160] sm:$0xff] %v6485
    %6614 = vst [vmem:[#allocation8 + $0x168] sm:$0xff] %v6486
    %6615 = vst [vmem:[#allocation8 + $0x170] sm:$0xff] %v6487
    %6616 = vst [vmem:[#allocation8 + $0x178] sm:$0xff] %v6488
    %6617 = vst [vmem:[#allocation8 + $0x180] sm:$0xff] %v6489
    %6618 = vst [vmem:[#allocation8 + $0x188] sm:$0xff] %v6490
    %6619 = vst [vmem:[#allocation8 + $0x190] sm:$0xff] %v6491
    %6620 = vst [vmem:[#allocation8 + $0x198] sm:$0xff] %v6492
    %6621 = vst [vmem:[#allocation8 + $0x1a0] sm:$0xff] %v6493
    %6622 = vst [vmem:[#allocation8 + $0x1a8] sm:$0xff] %v6494
    %6623 = vst [vmem:[#allocation8 + $0x1b0] sm:$0xff] %v6495
    %6624 = vst [vmem:[#allocation8 + $0x1b8] sm:$0xff] %v6496
    %6625 = vst [vmem:[#allocation8 + $0x1c0] sm:$0xff] %v6497
    %6626 = vst [vmem:[#allocation8 + $0x1c8] sm:$0xff] %v6498
    %6627 = vst [vmem:[#allocation8 + $0x1d0] sm:$0xff] %v6499
    %6628 = vst [vmem:[#allocation8 + $0x1d8] sm:$0xff] %v6500
    %6629 = vst [vmem:[#allocation8 + $0x1e0] sm:$0xff] %v6501
    %6630 = vst [vmem:[#allocation8 + $0x1e8] sm:$0xff] %v6502
    %6631 = vst [vmem:[#allocation8 + $0x1f0] sm:$0xff] %v6503
    %6632 = vst [vmem:[#allocation8 + $0x1f8] sm:$0xff] %v6504
    %6633 = vst [vmem:[#allocation8 + $0x200] sm:$0xff] %v6505
    %6634 = vst [vmem:[#allocation8 + $0x208] sm:$0xff] %v6506
    %6635 = vst [vmem:[#allocation8 + $0x210] sm:$0xff] %v6507
    %6636 = vst [vmem:[#allocation8 + $0x218] sm:$0xff] %v6508
    %6637 = vst [vmem:[#allocation8 + $0x220] sm:$0xff] %v6509
    %6638 = vst [vmem:[#allocation8 + $0x228] sm:$0xff] %v6510
    %6639 = vst [vmem:[#allocation8 + $0x230] sm:$0xff] %v6511
    %6640 = vst [vmem:[#allocation8 + $0x238] sm:$0xff] %v6512
    %6641 = vst [vmem:[#allocation8 + $0x240] sm:$0xff] %v6513
    %6642 = vst [vmem:[#allocation8 + $0x248] sm:$0xff] %v6514
    %6643 = vst [vmem:[#allocation8 + $0x250] sm:$0xff] %v6515
    %6644 = vst [vmem:[#allocation8 + $0x258] sm:$0xff] %v6516
    %6645 = vst [vmem:[#allocation8 + $0x260] sm:$0xff] %v6517
    %6646 = vst [vmem:[#allocation8 + $0x268] sm:$0xff] %v6518
    %6647 = vst [vmem:[#allocation8 + $0x270] sm:$0xff] %v6519
    %6648 = vst [vmem:[#allocation8 + $0x278] sm:$0xff] %v6520
    %6649 = vst [vmem:[#allocation8 + $0x280] sm:$0xff] %v6521
    %6650 = vst [vmem:[#allocation8 + $0x288] sm:$0xff] %v6522
    %6651 = vst [vmem:[#allocation8 + $0x290] sm:$0xff] %v6523
    %6652 = vst [vmem:[#allocation8 + $0x298] sm:$0xff] %v6524
    %6653 = vst [vmem:[#allocation8 + $0x2a0] sm:$0xff] %v6525
    %6654 = vst [vmem:[#allocation8 + $0x2a8] sm:$0xff] %v6526
    %6655 = vst [vmem:[#allocation8 + $0x2b0] sm:$0xff] %v6527
    %6656 = vst [vmem:[#allocation8 + $0x2b8] sm:$0xff] %v6528
    %6657 = vst [vmem:[#allocation8 + $0x2c0] sm:$0xff] %v6529
    %6658 = vst [vmem:[#allocation8 + $0x2c8] sm:$0xff] %v6530
    %6659 = vst [vmem:[#allocation8 + $0x2d0] sm:$0xff] %v6531
    %6660 = vst [vmem:[#allocation8 + $0x2d8] sm:$0xff] %v6532
    %6661 = vst [vmem:[#allocation8 + $0x2e0] sm:$0xff] %v6533
    %6662 = vst [vmem:[#allocation8 + $0x2e8] sm:$0xff] %v6534
    %6663 = vst [vmem:[#allocation8 + $0x2f0] sm:$0xff] %v6535
    %6664 = vst [vmem:[#allocation8 + $0x2f8] sm:$0xff] %v6536
    %6665 = vst [vmem:[#allocation8 + $0x300] sm:$0xff] %v6537
    %6666 = vst [vmem:[#allocation8 + $0x308] sm:$0xff] %v6538
    %6667 = vst [vmem:[#allocation8 + $0x310] sm:$0xff] %v6539
    %6668 = vst [vmem:[#allocation8 + $0x318] sm:$0xff] %v6540
    %6669 = vst [vmem:[#allocation8 + $0x320] sm:$0xff] %v6541
    %6670 = vst [vmem:[#allocation8 + $0x328] sm:$0xff] %v6542
    %6671 = vst [vmem:[#allocation8 + $0x330] sm:$0xff] %v6543
    %6672 = vst [vmem:[#allocation8 + $0x338] sm:$0xff] %v6544
    %6673 = vst [vmem:[#allocation8 + $0x340] sm:$0xff] %v6545
    %6674 = vst [vmem:[#allocation8 + $0x348] sm:$0xff] %v6546
    %6675 = vst [vmem:[#allocation8 + $0x350] sm:$0xff] %v6547
    %6676 = vst [vmem:[#allocation8 + $0x358] sm:$0xff] %v6548
    %6677 = vst [vmem:[#allocation8 + $0x360] sm:$0xff] %v6549
    %6678 = vst [vmem:[#allocation8 + $0x368] sm:$0xff] %v6550
    %6679 = vst [vmem:[#allocation8 + $0x370] sm:$0xff] %v6551
    %6680 = vst [vmem:[#allocation8 + $0x378] sm:$0xff] %v6552
    %6681 = vst [vmem:[#allocation8 + $0x380] sm:$0xff] %v6553
    %6682 = vst [vmem:[#allocation8 + $0x388] sm:$0xff] %v6554
    %6683 = vst [vmem:[#allocation8 + $0x390] sm:$0xff] %v6555
    %6684 = vst [vmem:[#allocation8 + $0x398] sm:$0xff] %v6556
    %6685 = vst [vmem:[#allocation8 + $0x3a0] sm:$0xff] %v6557
    %6686 = vst [vmem:[#allocation8 + $0x3a8] sm:$0xff] %v6558
    %6687 = vst [vmem:[#allocation8 + $0x3b0] sm:$0xff] %v6559
    %6688 = vst [vmem:[#allocation8 + $0x3b8] sm:$0xff] %v6560
    %6689 = vst [vmem:[#allocation8 + $0x3c0] sm:$0xff] %v6561
    %6690 = vst [vmem:[#allocation8 + $0x3c8] sm:$0xff] %v6562
    %6691 = vst [vmem:[#allocation8 + $0x3d0] sm:$0xff] %v6563
    %6692 = vst [vmem:[#allocation8 + $0x3d8] sm:$0xff] %v6564
    %6693 = vst [vmem:[#allocation8 + $0x3e0] sm:$0xff] %v6565
    %6694 = vst [vmem:[#allocation8 + $0x3e8] sm:$0xff] %v6566
    %6695 = vst [vmem:[#allocation8 + $0x3f0] sm:$0xff] %v6567
    %6696 = vst [vmem:[#allocation8 + $0x3f8] sm:$0xff] %v6568
    // Predicated region
    $region58: #{_decoder_forward_impl.1} parent=1 // pred_check
      _
    $region59: #{_decoder_forward_impl.1} parent=1 // pred_check_branch
      %6698 = sbr.rel (0) target = $region61
    $region60: #{_decoder_forward_impl.1} parent=1 // pred_region
      %6700 = vsyncadd [#allocation4], 0
      %s6701 = sshll.u32 [#allocation8], 4
      %s6702 = int_to_ptr.vmem [resolvable:$true] %s6701
      %s6703 = sshll.u32 %s11, 4
      %s6704 = int_to_ptr.hbm [resolvable:$true] %s6703
      %6709 = dma.vmem_to_hbm [thread:$0]  %s6702, 16384, %s6704, [#allocation4], 512, 512, 32
    $region61: #{_decoder_forward_impl.1} parent=1 // pred_fallthru
      _
    // Predicated region
    $region62: #{_decoder_forward_impl.1} parent=1 // pred_check
      _
    $region63: #{_decoder_forward_impl.1} parent=1 // pred_check_branch
      %6711 = sbr.rel (0) target = $region65
    $region64: #{_decoder_forward_impl.1} parent=1 // pred_region
      %6713 = dma.done [#allocation4], 16384
    $region65: #{_decoder_forward_impl.1} parent=1 // pred_fallthru
      _
    %6714 = vsyncpa [#allocation3], 1
    %6715 = vsyncpa [#allocation6], 1
    %6716 = vsyncpa [#allocation4], 1

</llo_original>
